<compile_context>
chip_gen: v5e
topology: v5e:2x2
jax: 0.10.0
libtpu: 0.0.40
codegen_flags: <defaults>
</compile_context>

<pallas_src>
import numpy as np
import jax
import jax.numpy as jnp
from jax.experimental import pallas as pl
from jax.experimental.pallas import tpu as pltpu

SEQ_LEN = 5          # module-level seq_len
FEAT = 10            # feature_dim (multi-channel input width)
C1, C2 = 16, 32      # conv_archs = ((1, 16), (1, 32))
H0, H1 = 32, 64      # hidden_sizes_multi
H2 = 32              # hidden_size_single
OUT_DIM = 1          # output_dim

K1 = SEQ_LEN * FEAT  # 50 = flattened conv-1 contraction width
K1_PAD = 56          # padded to a sublane multiple (zero rows/cols, exact math)

# Row offsets inside the packed K=32 weight sheet (wk).
R_T2 = 0                       # conv2 block-Toeplitz      (64 rows)
R_WIH0 = R_T2 + 2 * C2         # LSTM0 W_ih [i;g;o]        (96 rows)
R_WIH1 = R_WIH0 + 3 * H0       # LSTM1 W_ih [i;g;o]        (192 rows)
R_WHH2 = R_WIH1 + 3 * H1       # LSTM2 W_hh [i;f;g;o]      (128 rows)
WK_ROWS = R_WHH2 + 4 * H2      # 480
VEC_ROWS = 3 * H1              # 192 (tallest packed column vector)

HIGHEST = jax.lax.Precision.HIGHEST


def _dot(a, b):
    # f32 MXU matmul with f32 accumulation; HIGHEST keeps the 1e-4 check.
    return jnp.dot(a, b, preferred_element_type=jnp.float32, precision=HIGHEST)


def dc_kernel(xm_ref, xn_ref, t1_ref, wk_ref, rv_ref, vec_ref, o_ref):
    relu = lambda v: jnp.maximum(v, 0.0)
    sig = jax.nn.sigmoid
    tb = xm_ref.shape[1]                              # batch lanes per program

    # ---- unpack parameter sheets (static, tile-aligned slices) -------------
    t2   = wk_ref[R_T2:R_T2 + 2 * C2, :]              # (64, 32)  conv2 Toeplitz
    wih0 = wk_ref[R_WIH0:R_WIH0 + 3 * H0, :]          # (96, 32)  LSTM0 [i;g;o]
    wih1 = wk_ref[R_WIH1:R_WIH1 + 3 * H1, :]          # (192, 32) LSTM1 [i;g;o]
    whh2 = wk_ref[R_WHH2:R_WHH2 + 4 * H2, :]          # (128, 32) LSTM2 W_hh
    wsa  = rv_ref[0:1, 0:H2]                          # (1, 32)   SimpleAttention
    wfc1 = rv_ref[1:2, 0:H1]                          # (1, 64)   fc, channel-1 half
    wfc2 = rv_ref[2:3, 0:H2]                          # (1, 32)   fc, channel-2 half
    bc1  = vec_ref[0:4 * C1, 0:1]                     # (64, 1)
    bc2  = vec_ref[0:2 * C2, 1:2]                     # (64, 1)
    b0   = vec_ref[0:3 * H0, 2:3]                     # (96, 1)
    b1   = vec_ref[0:3 * H1, 3:4]                     # (192, 1)
    b2   = vec_ref[0:4 * H2, 4:5]                     # (128, 1)
    wih2 = vec_ref[0:4 * H2, 5:6]                     # (128, 1)  LSTM2 W_ih column
    bfc  = vec_ref[0:1, 6:7]                          # (1, 1)

    # ---- channel 1: Conv1d(10->16)+ReLU+MaxPool, Conv1d(16->32)+ReLU+MaxPool
    # Both conv stages are single block-Toeplitz matmuls; row blocks of t1 are
    # ordered (t0, t2, t1, t3) so each MaxPool1d(2,2) is one row-block maximum.
    c1 = relu(_dot(t1_ref[...], xm_ref[...]) + bc1)   # (64, tb)
    r01 = jnp.maximum(c1[0:2 * C1], c1[2 * C1:4 * C1])      # (32, tb) = [r0; r1]
    c2 = relu(_dot(t2, r01) + bc2)                    # (64, tb) = [c2_0; c2_1]
    p2 = jnp.maximum(c2[0:C2], c2[C2:2 * C2])         # (32, tb)

    # ---- channel 1: stacked LSTMs (seq len 1, zero initial state) ----------
    # W_hh multiplies h0 == 0 and the forget gate multiplies c0 == 0, so both
    # were dropped at init.  Packed gate order: [i; g; o].
    g0 = _dot(wih0, p2) + b0                          # (96, tb)
    h0 = sig(g0[2 * H0:3 * H0]) * jnp.tanh(sig(g0[0:H0]) * jnp.tanh(g0[H0:2 * H0]))
    g1 = _dot(wih1, h0) + b1                          # (192, tb)
    out1 = sig(g1[2 * H1:3 * H1]) * jnp.tanh(sig(g1[0:H1]) * jnp.tanh(g1[H1:2 * H1]))
    # Channel-1 Bahdanau attention over a length-1 sequence is the identity
    # (softmax of one finite score == 1); its parameters never reach the kernel.

    # ---- channel 2: LSTM(1->32) + SimpleAttention (deferred softmax) -------
    # Input-gate pre-activations are independent of h -> computed up front.
    gin = [wih2 * xn_ref[t:t + 1, :] + b2 for t in range(SEQ_LEN)]   # 5 x (128, tb)
    h = jnp.zeros((H2, tb), jnp.float32)
    c = jnp.zeros((H2, tb), jnp.float32)
    hs, ss = [], []
    for t in range(SEQ_LEN):                          # static unroll, SEQ_LEN == 5
        g = gin[t] + _dot(whh2, h)                    # (128, tb), gate order i,f,g,o
        i = sig(g[0:H2])
        f = sig(g[H2:2 * H2])
        gg = jnp.tanh(g[2 * H2:3 * H2])
        o = sig(g[3 * H2:4 * H2])
        c = f * c + i * gg
        h = o * jnp.tanh(c)
        hs.append(h)
        # score; scalar bias sab dropped (softmax shift-invariance)
        ss.append(_dot(wsa, h))                       # (1, tb)
    m = ss[0]
    for t in range(1, SEQ_LEN):
        m = jnp.maximum(m, ss[t])
    ps = [jnp.exp(ss[t] - m) for t in range(SEQ_LEN)]
    z = ps[0]
    ctx = ps[0] * hs[0]
    for t in range(1, SEQ_LEN):
        z = z + ps[t]
        ctx = ctx + ps[t] * hs[t]
    out2 = ctx / z                                    # (32, tb)

    # ---- fusion head: Linear(96 -> 1), lane-dense (1, tb) store -------------
    o_ref[0] = _dot(wfc1, out1) + _dot(wfc2, out2) + bfc


def _pick_tile_b(B):
    # >= 2 blocks when the batch allows (v7x: 2 TCs sharded via "parallel"),
    # blocks capped at 512 lanes (amortizes ~0.35us/step on single-TC v5e/v6e
    # while keeping the (192, tile_b) gate tensor's vreg footprint sane).
    b128 = max(128, ((B + 127) // 128) * 128)
    if b128 <= 128:
        return 128
    half = ((b128 // 2 + 127) // 128) * 128
    return min(512, half)


def dual_channel_forward(x_multi, x_nox, kp, tile_b=None):
    """x_multi: (B, SEQ_LEN, FEAT), x_nox: (B, SEQ_LEN, 1) -> (B, OUT_DIM)."""
    B = x_multi.shape[0]
    if tile_b is None:
        tile_b = _pick_tile_b(B)
    nblk = pl.cdiv(B, tile_b)
    b_pad = nblk * tile_b

    # Batch-on-lanes inputs: (T*F, B) and (T, B); zero-pad batch + conv-K rows.
    xm = jnp.transpose(x_multi, (1, 2, 0)).reshape(K1, B)        # [t*F+f, b]
    xm = jnp.pad(xm, ((0, K1_PAD - K1), (0, b_pad - B)))
    xn = jnp.transpose(x_nox[:, :, 0], (1, 0))                   # (T, B)
    xn = jnp.pad(xn, ((0, 0), (0, b_pad - B)))

    def rep(a):                       # replicated (grid-invariant) parameter
        nd = a.ndim
        return pl.BlockSpec(a.shape, lambda b, _nd=nd: (0,) * _nd)

    params = (kp["t1"], kp["wk"], kp["rv"], kp["vec"])
    out = pl.pallas_call(
        dc_kernel,
        out_shape=jax.ShapeDtypeStruct((nblk, 1, tile_b), jnp.float32),
        grid_spec=pltpu.PrefetchScalarGridSpec(
            num_scalar_prefetch=0,
            grid=(nblk,),
            in_specs=[pl.BlockSpec((K1_PAD, tile_b), lambda b: (0, b)),
                      pl.BlockSpec((SEQ_LEN, tile_b), lambda b: (0, b))]
                     + [rep(p) for p in params],
            out_specs=pl.BlockSpec((1, 1, tile_b), lambda b: (b, 0, 0)),
        ),
        compiler_params=pltpu.CompilerParams(
            dimension_semantics=("parallel",)),
    )(xm, xn, *params)
    return out.reshape(nblk * tile_b)[:B][:, None]               # (B, OUT_DIM)


def init_params(key):
    """Deterministic synthetic parameters: torch layout (tp) + packed kernel layout (kp)."""
    ks = iter(jax.random.split(key, 32))

    def rnd(shape, scale=0.2):
        return jax.random.uniform(next(ks), shape, jnp.float32, -scale, scale)

    tp = {
        "c1w": rnd((C1, FEAT, 3)), "c1b": rnd((C1,)),
        "c2w": rnd((C2, C1, 3)),   "c2b": rnd((C2,)),
        "l0_wih": rnd((4 * H0, C2)), "l0_whh": rnd((4 * H0, H0)),
        "l0_bih": rnd((4 * H0,)),    "l0_bhh": rnd((4 * H0,)),
        "l1_wih": rnd((4 * H1, H0)), "l1_whh": rnd((4 * H1, H1)),
        "l1_bih": rnd((4 * H1,)),    "l1_bhh": rnd((4 * H1,)),
        "aw": rnd((H1, 2 * H1)),     "ab": rnd((H1,)),
        "vw": rnd((1, H1)),
        "l2_wih": rnd((4 * H2, 1)),  "l2_whh": rnd((4 * H2, H2)),
        "l2_bih": rnd((4 * H2,)),    "l2_bhh": rnd((4 * H2,)),
        "saw": rnd((1, H2)),         "sab": rnd((1,)),
        "fcw": rnd((OUT_DIM, H1 + H2)), "fcb": rnd((OUT_DIM,)),
    }

    # Conv1 block-Toeplitz (64, 56); row blocks ordered (t0, t2, t1, t3) so the
    # in-kernel MaxPool1d(2,2) is a single row-block maximum.
    t1 = jnp.zeros((4 * C1, K1_PAD), jnp.float32)
    for rb, ts in enumerate((0, 2, 1, 3)):
        for t in range(SEQ_LEN):
            k = t - ts + 1                 # conv tap index (pad=1)
            if 0 <= k <= 2:
                t1 = t1.at[rb * C1:(rb + 1) * C1, t * FEAT:(t + 1) * FEAT].set(
                    tp["c1w"][:, :, k])

    # Conv2 block-Toeplitz (64, 32) over the pooled pair [r0; r1].
    t2 = jnp.zeros((2 * C2, 2 * C1), jnp.float32)
    t2 = t2.at[0:C2, 0:C1].set(tp["c2w"][:, :, 1])
    t2 = t2.at[0:C2, C1:].set(tp["c2w"][:, :, 2])
    t2 = t2.at[C2:, 0:C1].set(tp["c2w"][:, :, 0])
    t2 = t2.at[C2:, C1:].set(tp["c2w"][:, :, 1])

    def drop_f(w, H):                      # keep i, g, o row blocks of (4H, ...)
        return jnp.concatenate([w[0:H], w[2 * H:4 * H]], axis=0)

    wih0k = drop_f(tp["l0_wih"], H0)                        # (96, 32)
    wih1k = drop_f(tp["l1_wih"], H1)                        # (192, 32)
    b0k = drop_f((tp["l0_bih"] + tp["l0_bhh"])[:, None], H0)[:, 0]   # (96,)
    b1k = drop_f((tp["l1_bih"] + tp["l1_bhh"])[:, None], H1)[:, 0]   # (192,)

    # All K=32 weights in one sheet; the three (1, n) row weights in another;
    # all bias / column vectors in a (192, 8) column sheet.  Dead channel-1
    # attention params (aw, ab, vw) and sab are not packed at all.
    wk = jnp.concatenate([t2, wih0k, wih1k, tp["l2_whh"]], axis=0)   # (480, 32)

    rv = jnp.zeros((3, H1), jnp.float32)
    rv = rv.at[0, :H2].set(tp["saw"][0])
    rv = rv.at[1, :H1].set(tp["fcw"][0, :H1])
    rv = rv.at[2, :H2].set(tp["fcw"][0, H1:])

    vec = jnp.zeros((VEC_ROWS, 8), jnp.float32)
    vec = vec.at[0:4 * C1, 0].set(jnp.tile(tp["c1b"], 4))
    vec = vec.at[0:2 * C2, 1].set(jnp.tile(tp["c2b"], 2))
    vec = vec.at[0:3 * H0, 2].set(b0k)
    vec = vec.at[0:3 * H1, 3].set(b1k)
    vec = vec.at[0:4 * H2, 4].set(tp["l2_bih"] + tp["l2_bhh"])
    vec = vec.at[0:4 * H2, 5].set(tp["l2_wih"][:, 0])
    vec = vec.at[0, 6].set(tp["fcb"][0])

    kp = {"t1": t1, "wk": wk, "rv": rv, "vec": vec}
    return tp, kp


def reference_forward(x_multi, x_nox, tp):
    """Pure-JAX reference with torch-layout weights (mirrors the nn.Module)."""
    relu = lambda v: jnp.maximum(v, 0.0)
    P = HIGHEST

    def conv1d(x, w, b):                              # x: (B,L,I), w: (O,I,3), b: (O,)
        L = x.shape[1]
        xp = jnp.pad(x, ((0, 0), (1, 1), (0, 0)))
        patches = jnp.stack([xp[:, k:k + L, :] for k in range(3)], axis=-1)
        return jnp.einsum("blik,oik->blo", patches, w, precision=P) + b

    def maxpool2(x):                                  # (B,L,C) -> (B, L//2, C)
        B_, L, C = x.shape
        return x[:, :2 * (L // 2), :].reshape(B_, L // 2, 2, C).max(axis=2)

    def lstm(x, wih, whh, bih, bhh):
        B_, _, _ = x.shape
        H = whh.shape[1]
        def step(carry, xt):
            h, c = carry
            g = (jnp.dot(xt, wih.T, precision=P) + jnp.dot(h, whh.T, precision=P)
                 + bih + bhh)
            i, f, gg, o = jnp.split(g, 4, axis=-1)
            c = jax.nn.sigmoid(f) * c + jax.nn.sigmoid(i) * jnp.tanh(gg)
            h = jax.nn.sigmoid(o) * jnp.tanh(c)
            return (h, c), h
        init = (jnp.zeros((B_, H), jnp.float32), jnp.zeros((B_, H), jnp.float32))
        (hN, cN), hs = jax.lax.scan(step, init, jnp.swapaxes(x, 0, 1))
        return jnp.swapaxes(hs, 0, 1), hN, cN

    # channel 1
    a = maxpool2(relu(conv1d(x_multi, tp["c1w"], tp["c1b"])))
    a = maxpool2(relu(conv1d(a, tp["c2w"], tp["c2b"])))
    lo, _, _ = lstm(a, tp["l0_wih"], tp["l0_whh"], tp["l0_bih"], tp["l0_bhh"])
    lo, _, cN = lstm(lo, tp["l1_wih"], tp["l1_whh"], tp["l1_bih"], tp["l1_bhh"])
    rep = jnp.repeat(cN[:, None, :], lo.shape[1], axis=1)
    energy = jnp.tanh(jnp.einsum("blh,oh->blo",
                                 jnp.concatenate([rep, lo], axis=-1), tp["aw"],
                                 precision=P) + tp["ab"])
    scores = jnp.einsum("blh,oh->blo", energy, tp["vw"], precision=P)[..., 0]
    w = jax.nn.softmax(scores, axis=1)
    out1 = jnp.sum(lo * w[..., None], axis=1)

    # channel 2 (SimpleAttention from the spec)
    lo2, _, _ = lstm(x_nox, tp["l2_wih"], tp["l2_whh"], tp["l2_bih"], tp["l2_bhh"])
    s2 = (jnp.einsum("blh,oh->blo", lo2, tp["saw"], precision=P) + tp["sab"])[..., 0]
    w2 = jax.nn.softmax(s2, axis=1)
    out2 = jnp.sum(lo2 * w2[..., None], axis=1)

    fused = jnp.concatenate([out1, out2], axis=1)
    return jnp.dot(fused, tp["fcw"].T, precision=P) + tp["fcb"]


if __name__ == "__main__":
    key = jax.random.PRNGKey(0)
    k_in1, k_in2, k_par = jax.random.split(key, 3)
    B = 2
    x_multi = jax.random.normal(k_in1, (B, SEQ_LEN, FEAT), jnp.float32)
    x_nox = jax.random.normal(k_in2, (B, SEQ_LEN, 1), jnp.float32)
    tp, kp = init_params(k_par)

    out = jax.block_until_ready(dual_channel_forward(x_multi, x_nox, kp))
    ref = jax.block_until_ready(reference_forward(x_multi, x_nox, tp))
    np.testing.assert_allclose(np.asarray(out), np.asarray(ref), rtol=1e-4, atol=1e-4)
    print("KERNEL_OK")
</pallas_src>

<mosaic_0001>
module attributes {stable_mosaic.version = 11 : i64} {
  func.func @dc_kernel(%arg0: i32, %arg1: memref<56x128xf32, #tpu.memory_space<vmem>>, %arg2: memref<5x128xf32, #tpu.memory_space<vmem>>, %arg3: memref<64x56xf32, #tpu.memory_space<vmem>>, %arg4: memref<480x32xf32, #tpu.memory_space<vmem>>, %arg5: memref<3x64xf32, #tpu.memory_space<vmem>>, %arg6: memref<192x8xf32, #tpu.memory_space<vmem>>, %arg7: memref<1x1x128xf32, #tpu.memory_space<vmem>>) attributes {dimension_semantics = [#tpu.dimension_semantics<parallel>], iteration_bounds = array<i64: 1>, scalar_prefetch = 0 : i64, scratch_operands = 0 : i64, tpu.core_type = #tpu.core_type<tc>, window_params = [{transform_indices = @transform_0, window_bounds = array<i64: 56, 128>}, {transform_indices = @transform_1, window_bounds = array<i64: 5, 128>}, {pipeline_mode = #tpu.pipeline_mode<synchronous>, transform_indices = @transform_2, window_bounds = array<i64: 64, 56>}, {pipeline_mode = #tpu.pipeline_mode<synchronous>, transform_indices = @transform_3, window_bounds = array<i64: 480, 32>}, {pipeline_mode = #tpu.pipeline_mode<synchronous>, transform_indices = @transform_4, window_bounds = array<i64: 3, 64>}, {pipeline_mode = #tpu.pipeline_mode<synchronous>, transform_indices = @transform_5, window_bounds = array<i64: 192, 8>}, {transform_indices = @transform_6, window_bounds = array<i64: 1, 1, 128>}]} {
    %c0 = arith.constant 0 : index
    %c0_0 = arith.constant 0 : index
    %0 = vector.load %arg4[%c0, %c0_0] : memref<480x32xf32, #tpu.memory_space<vmem>>, vector<64x32xf32>
    %c64 = arith.constant 64 : index
    %c0_1 = arith.constant 0 : index
    %1 = vector.load %arg4[%c64, %c0_1] : memref<480x32xf32, #tpu.memory_space<vmem>>, vector<96x32xf32>
    %c160 = arith.constant 160 : index
    %c0_2 = arith.constant 0 : index
    %2 = vector.load %arg4[%c160, %c0_2] : memref<480x32xf32, #tpu.memory_space<vmem>>, vector<192x32xf32>
    %c352 = arith.constant 352 : index
    %c0_3 = arith.constant 0 : index
    %3 = vector.load %arg4[%c352, %c0_3] : memref<480x32xf32, #tpu.memory_space<vmem>>, vector<128x32xf32>
    %c0_4 = arith.constant 0 : index
    %c0_5 = arith.constant 0 : index
    %4 = vector.load %arg5[%c0_4, %c0_5] : memref<3x64xf32, #tpu.memory_space<vmem>>, vector<1x32xf32>
    %c1 = arith.constant 1 : index
    %c0_6 = arith.constant 0 : index
    %5 = vector.load %arg5[%c1, %c0_6] : memref<3x64xf32, #tpu.memory_space<vmem>>, vector<1x64xf32>
    %c2 = arith.constant 2 : index
    %c0_7 = arith.constant 0 : index
    %6 = vector.load %arg5[%c2, %c0_7] : memref<3x64xf32, #tpu.memory_space<vmem>>, vector<1x32xf32>
    %c0_8 = arith.constant 0 : index
    %c0_9 = arith.constant 0 : index
    %7 = vector.load %arg6[%c0_8, %c0_9] : memref<192x8xf32, #tpu.memory_space<vmem>>, vector<64x1xf32>
    %c0_10 = arith.constant 0 : index
    %c1_11 = arith.constant 1 : index
    %8 = vector.load %arg6[%c0_10, %c1_11] : memref<192x8xf32, #tpu.memory_space<vmem>>, vector<64x1xf32>
    %c0_12 = arith.constant 0 : index
    %c2_13 = arith.constant 2 : index
    %9 = vector.load %arg6[%c0_12, %c2_13] : memref<192x8xf32, #tpu.memory_space<vmem>>, vector<96x1xf32>
    %c0_14 = arith.constant 0 : index
    %c3 = arith.constant 3 : index
    %10 = vector.load %arg6[%c0_14, %c3] : memref<192x8xf32, #tpu.memory_space<vmem>>, vector<192x1xf32>
    %c0_15 = arith.constant 0 : index
    %c4 = arith.constant 4 : index
    %11 = vector.load %arg6[%c0_15, %c4] : memref<192x8xf32, #tpu.memory_space<vmem>>, vector<128x1xf32>
    %c0_16 = arith.constant 0 : index
    %c5 = arith.constant 5 : index
    %12 = vector.load %arg6[%c0_16, %c5] : memref<192x8xf32, #tpu.memory_space<vmem>>, vector<128x1xf32>
    %c0_17 = arith.constant 0 : index
    %c6 = arith.constant 6 : index
    %13 = vector.load %arg6[%c0_17, %c6] : memref<192x8xf32, #tpu.memory_space<vmem>>, vector<1x1xf32>
    %c0_18 = arith.constant 0 : index
    %c0_19 = arith.constant 0 : index
    %14 = vector.load %arg3[%c0_18, %c0_19] : memref<64x56xf32, #tpu.memory_space<vmem>>, vector<64x56xf32>
    %c0_20 = arith.constant 0 : index
    %c0_21 = arith.constant 0 : index
    %15 = vector.load %arg1[%c0_20, %c0_21] : memref<56x128xf32, #tpu.memory_space<vmem>>, vector<56x128xf32>
    %cst = arith.constant dense<0.000000e+00> : vector<64x128xf32>
    %16 = tpu.matmul %14, %15, %cst {dimension_numbers = #tpu.dot_dimension_numbers<[1], [0], [0], [1], [0, 0, 1, 1], [], []>, precision = #tpu.contract_precision<fp32>} : vector<64x56xf32>, vector<56x128xf32>, vector<64x128xf32> -> vector<64x128xf32>
    %17 = vector.broadcast %7 : vector<64x1xf32> to vector<64x128xf32>
    %18 = arith.addf %16, %17 : vector<64x128xf32>
    %cst_22 = arith.constant 0.000000e+00 : f32
    %19 = vector.broadcast %cst_22 : f32 to vector<64x128xf32>
    %20 = arith.maximumf %18, %19 : vector<64x128xf32>
    %21 = vector.extract_strided_slice %20 {offsets = [0, 0], sizes = [32, 128], strides = [1, 1]} : vector<64x128xf32> to vector<32x128xf32>
    %22 = vector.extract_strided_slice %20 {offsets = [32, 0], sizes = [32, 128], strides = [1, 1]} : vector<64x128xf32> to vector<32x128xf32>
    %23 = arith.maximumf %21, %22 : vector<32x128xf32>
    %cst_23 = arith.constant dense<0.000000e+00> : vector<64x128xf32>
    %24 = tpu.matmul %0, %23, %cst_23 {dimension_numbers = #tpu.dot_dimension_numbers<[1], [0], [0], [1], [0, 0, 1, 1], [], []>, precision = #tpu.contract_precision<fp32>} : vector<64x32xf32>, vector<32x128xf32>, vector<64x128xf32> -> vector<64x128xf32>
    %25 = vector.broadcast %8 : vector<64x1xf32> to vector<64x128xf32>
    %26 = arith.addf %24, %25 : vector<64x128xf32>
    %cst_24 = arith.constant 0.000000e+00 : f32
    %27 = vector.broadcast %cst_24 : f32 to vector<64x128xf32>
    %28 = arith.maximumf %26, %27 : vector<64x128xf32>
    %29 = vector.extract_strided_slice %28 {offsets = [0, 0], sizes = [32, 128], strides = [1, 1]} : vector<64x128xf32> to vector<32x128xf32>
    %30 = vector.extract_strided_slice %28 {offsets = [32, 0], sizes = [32, 128], strides = [1, 1]} : vector<64x128xf32> to vector<32x128xf32>
    %31 = arith.maximumf %29, %30 : vector<32x128xf32>
    %cst_25 = arith.constant dense<0.000000e+00> : vector<96x128xf32>
    %32 = tpu.matmul %1, %31, %cst_25 {dimension_numbers = #tpu.dot_dimension_numbers<[1], [0], [0], [1], [0, 0, 1, 1], [], []>, precision = #tpu.contract_precision<fp32>} : vector<96x32xf32>, vector<32x128xf32>, vector<96x128xf32> -> vector<96x128xf32>
    %33 = vector.broadcast %9 : vector<96x1xf32> to vector<96x128xf32>
    %34 = arith.addf %32, %33 : vector<96x128xf32>
    %35 = vector.extract_strided_slice %34 {offsets = [64, 0], sizes = [32, 128], strides = [1, 1]} : vector<96x128xf32> to vector<32x128xf32>
    %36 = arith.negf %35 : vector<32x128xf32>
    %37 = math.exp %36 : vector<32x128xf32>
    %cst_26 = arith.constant 1.000000e+00 : f32
    %38 = vector.broadcast %cst_26 : f32 to vector<32x128xf32>
    %39 = arith.addf %38, %37 : vector<32x128xf32>
    %40 = arith.divf %38, %39 : vector<32x128xf32>
    %41 = vector.extract_strided_slice %34 {offsets = [0, 0], sizes = [32, 128], strides = [1, 1]} : vector<96x128xf32> to vector<32x128xf32>
    %42 = arith.negf %41 : vector<32x128xf32>
    %43 = math.exp %42 : vector<32x128xf32>
    %cst_27 = arith.constant 1.000000e+00 : f32
    %44 = vector.broadcast %cst_27 : f32 to vector<32x128xf32>
    %45 = arith.addf %44, %43 : vector<32x128xf32>
    %46 = arith.divf %44, %45 : vector<32x128xf32>
    %47 = vector.extract_strided_slice %34 {offsets = [32, 0], sizes = [32, 128], strides = [1, 1]} : vector<96x128xf32> to vector<32x128xf32>
    %48 = math.tanh %47 : vector<32x128xf32>
    %49 = arith.mulf %46, %48 : vector<32x128xf32>
    %50 = math.tanh %49 : vector<32x128xf32>
    %51 = arith.mulf %40, %50 : vector<32x128xf32>
    %cst_28 = arith.constant dense<0.000000e+00> : vector<192x128xf32>
    %52 = tpu.matmul %2, %51, %cst_28 {dimension_numbers = #tpu.dot_dimension_numbers<[1], [0], [0], [1], [0, 0, 1, 1], [], []>, precision = #tpu.contract_precision<fp32>} : vector<192x32xf32>, vector<32x128xf32>, vector<192x128xf32> -> vector<192x128xf32>
    %53 = vector.broadcast %10 : vector<192x1xf32> to vector<192x128xf32>
    %54 = arith.addf %52, %53 : vector<192x128xf32>
    %55 = vector.extract_strided_slice %54 {offsets = [128, 0], sizes = [64, 128], strides = [1, 1]} : vector<192x128xf32> to vector<64x128xf32>
    %56 = arith.negf %55 : vector<64x128xf32>
    %57 = math.exp %56 : vector<64x128xf32>
    %cst_29 = arith.constant 1.000000e+00 : f32
    %58 = vector.broadcast %cst_29 : f32 to vector<64x128xf32>
    %59 = arith.addf %58, %57 : vector<64x128xf32>
    %60 = arith.divf %58, %59 : vector<64x128xf32>
    %61 = vector.extract_strided_slice %54 {offsets = [0, 0], sizes = [64, 128], strides = [1, 1]} : vector<192x128xf32> to vector<64x128xf32>
    %62 = arith.negf %61 : vector<64x128xf32>
    %63 = math.exp %62 : vector<64x128xf32>
    %cst_30 = arith.constant 1.000000e+00 : f32
    %64 = vector.broadcast %cst_30 : f32 to vector<64x128xf32>
    %65 = arith.addf %64, %63 : vector<64x128xf32>
    %66 = arith.divf %64, %65 : vector<64x128xf32>
    %67 = vector.extract_strided_slice %54 {offsets = [64, 0], sizes = [64, 128], strides = [1, 1]} : vector<192x128xf32> to vector<64x128xf32>
    %68 = math.tanh %67 : vector<64x128xf32>
    %69 = arith.mulf %66, %68 : vector<64x128xf32>
    %70 = math.tanh %69 : vector<64x128xf32>
    %71 = arith.mulf %60, %70 : vector<64x128xf32>
    %c0_31 = arith.constant 0 : index
    %c0_32 = arith.constant 0 : index
    %72 = vector.load %arg2[%c0_31, %c0_32] : memref<5x128xf32, #tpu.memory_space<vmem>>, vector<1x128xf32>
    %73 = vector.broadcast %12 : vector<128x1xf32> to vector<128x128xf32>
    %74 = vector.broadcast %72 : vector<1x128xf32> to vector<128x128xf32>
    %75 = arith.mulf %73, %74 : vector<128x128xf32>
    %76 = vector.broadcast %11 : vector<128x1xf32> to vector<128x128xf32>
    %77 = arith.addf %75, %76 : vector<128x128xf32>
    %c1_33 = arith.constant 1 : index
    %c0_34 = arith.constant 0 : index
    %78 = vector.load %arg2[%c1_33, %c0_34] : memref<5x128xf32, #tpu.memory_space<vmem>>, vector<1x128xf32>
    %79 = vector.broadcast %12 : vector<128x1xf32> to vector<128x128xf32>
    %80 = vector.broadcast %78 : vector<1x128xf32> to vector<128x128xf32>
    %81 = arith.mulf %79, %80 : vector<128x128xf32>
    %82 = vector.broadcast %11 : vector<128x1xf32> to vector<128x128xf32>
    %83 = arith.addf %81, %82 : vector<128x128xf32>
    %c2_35 = arith.constant 2 : index
    %c0_36 = arith.constant 0 : index
    %84 = vector.load %arg2[%c2_35, %c0_36] : memref<5x128xf32, #tpu.memory_space<vmem>>, vector<1x128xf32>
    %85 = vector.broadcast %12 : vector<128x1xf32> to vector<128x128xf32>
    %86 = vector.broadcast %84 : vector<1x128xf32> to vector<128x128xf32>
    %87 = arith.mulf %85, %86 : vector<128x128xf32>
    %88 = vector.broadcast %11 : vector<128x1xf32> to vector<128x128xf32>
    %89 = arith.addf %87, %88 : vector<128x128xf32>
    %c3_37 = arith.constant 3 : index
    %c0_38 = arith.constant 0 : index
    %90 = vector.load %arg2[%c3_37, %c0_38] : memref<5x128xf32, #tpu.memory_space<vmem>>, vector<1x128xf32>
    %91 = vector.broadcast %12 : vector<128x1xf32> to vector<128x128xf32>
    %92 = vector.broadcast %90 : vector<1x128xf32> to vector<128x128xf32>
    %93 = arith.mulf %91, %92 : vector<128x128xf32>
    %94 = vector.broadcast %11 : vector<128x1xf32> to vector<128x128xf32>
    %95 = arith.addf %93, %94 : vector<128x128xf32>
    %c4_39 = arith.constant 4 : index
    %c0_40 = arith.constant 0 : index
    %96 = vector.load %arg2[%c4_39, %c0_40] : memref<5x128xf32, #tpu.memory_space<vmem>>, vector<1x128xf32>
    %97 = vector.broadcast %12 : vector<128x1xf32> to vector<128x128xf32>
    %98 = vector.broadcast %96 : vector<1x128xf32> to vector<128x128xf32>
    %99 = arith.mulf %97, %98 : vector<128x128xf32>
    %100 = vector.broadcast %11 : vector<128x1xf32> to vector<128x128xf32>
    %101 = arith.addf %99, %100 : vector<128x128xf32>
    %cst_41 = arith.constant 0.000000e+00 : f32
    %102 = vector.broadcast %cst_41 : f32 to vector<32x128xf32>
    %cst_42 = arith.constant 0.000000e+00 : f32
    %103 = vector.broadcast %cst_42 : f32 to vector<32x128xf32>
    %cst_43 = arith.constant dense<0.000000e+00> : vector<128x128xf32>
    %104 = tpu.matmul %3, %102, %cst_43 {dimension_numbers = #tpu.dot_dimension_numbers<[1], [0], [0], [1], [0, 0, 1, 1], [], []>, precision = #tpu.contract_precision<fp32>} : vector<128x32xf32>, vector<32x128xf32>, vector<128x128xf32> -> vector<128x128xf32>
    %105 = arith.addf %77, %104 : vector<128x128xf32>
    %106 = vector.extract_strided_slice %105 {offsets = [0, 0], sizes = [32, 128], strides = [1, 1]} : vector<128x128xf32> to vector<32x128xf32>
    %107 = arith.negf %106 : vector<32x128xf32>
    %108 = math.exp %107 : vector<32x128xf32>
    %cst_44 = arith.constant 1.000000e+00 : f32
    %109 = vector.broadcast %cst_44 : f32 to vector<32x128xf32>
    %110 = arith.addf %109, %108 : vector<32x128xf32>
    %111 = arith.divf %109, %110 : vector<32x128xf32>
    %112 = vector.extract_strided_slice %105 {offsets = [32, 0], sizes = [32, 128], strides = [1, 1]} : vector<128x128xf32> to vector<32x128xf32>
    %113 = arith.negf %112 : vector<32x128xf32>
    %114 = math.exp %113 : vector<32x128xf32>
    %cst_45 = arith.constant 1.000000e+00 : f32
    %115 = vector.broadcast %cst_45 : f32 to vector<32x128xf32>
    %116 = arith.addf %115, %114 : vector<32x128xf32>
    %117 = arith.divf %115, %116 : vector<32x128xf32>
    %118 = vector.extract_strided_slice %105 {offsets = [64, 0], sizes = [32, 128], strides = [1, 1]} : vector<128x128xf32> to vector<32x128xf32>
    %119 = math.tanh %118 : vector<32x128xf32>
    %120 = vector.extract_strided_slice %105 {offsets = [96, 0], sizes = [32, 128], strides = [1, 1]} : vector<128x128xf32> to vector<32x128xf32>
    %121 = arith.negf %120 : vector<32x128xf32>
    %122 = math.exp %121 : vector<32x128xf32>
    %cst_46 = arith.constant 1.000000e+00 : f32
    %123 = vector.broadcast %cst_46 : f32 to vector<32x128xf32>
    %124 = arith.addf %123, %122 : vector<32x128xf32>
    %125 = arith.divf %123, %124 : vector<32x128xf32>
    %126 = arith.mulf %117, %103 : vector<32x128xf32>
    %127 = arith.mulf %111, %119 : vector<32x128xf32>
    %128 = arith.addf %126, %127 : vector<32x128xf32>
    %129 = math.tanh %128 : vector<32x128xf32>
    %130 = arith.mulf %125, %129 : vector<32x128xf32>
    %cst_47 = arith.constant dense<0.000000e+00> : vector<1x128xf32>
    %131 = tpu.matmul %4, %130, %cst_47 {dimension_numbers = #tpu.dot_dimension_numbers<[1], [0], [0], [1], [0, 0, 1, 1], [], []>, precision = #tpu.contract_precision<fp32>} : vector<1x32xf32>, vector<32x128xf32>, vector<1x128xf32> -> vector<1x128xf32>
    %cst_48 = arith.constant dense<0.000000e+00> : vector<128x128xf32>
    %132 = tpu.matmul %3, %130, %cst_48 {dimension_numbers = #tpu.dot_dimension_numbers<[1], [0], [0], [1], [0, 0, 1, 1], [], []>, precision = #tpu.contract_precision<fp32>} : vector<128x32xf32>, vector<32x128xf32>, vector<128x128xf32> -> vector<128x128xf32>
    %133 = arith.addf %83, %132 : vector<128x128xf32>
    %134 = vector.extract_strided_slice %133 {offsets = [0, 0], sizes = [32, 128], strides = [1, 1]} : vector<128x128xf32> to vector<32x128xf32>
    %135 = arith.negf %134 : vector<32x128xf32>
    %136 = math.exp %135 : vector<32x128xf32>
    %cst_49 = arith.constant 1.000000e+00 : f32
    %137 = vector.broadcast %cst_49 : f32 to vector<32x128xf32>
    %138 = arith.addf %137, %136 : vector<32x128xf32>
    %139 = arith.divf %137, %138 : vector<32x128xf32>
    %140 = vector.extract_strided_slice %133 {offsets = [32, 0], sizes = [32, 128], strides = [1, 1]} : vector<128x128xf32> to vector<32x128xf32>
    %141 = arith.negf %140 : vector<32x128xf32>
    %142 = math.exp %141 : vector<32x128xf32>
    %cst_50 = arith.constant 1.000000e+00 : f32
    %143 = vector.broadcast %cst_50 : f32 to vector<32x128xf32>
    %144 = arith.addf %143, %142 : vector<32x128xf32>
    %145 = arith.divf %143, %144 : vector<32x128xf32>
    %146 = vector.extract_strided_slice %133 {offsets = [64, 0], sizes = [32, 128], strides = [1, 1]} : vector<128x128xf32> to vector<32x128xf32>
    %147 = math.tanh %146 : vector<32x128xf32>
    %148 = vector.extract_strided_slice %133 {offsets = [96, 0], sizes = [32, 128], strides = [1, 1]} : vector<128x128xf32> to vector<32x128xf32>
    %149 = arith.negf %148 : vector<32x128xf32>
    %150 = math.exp %149 : vector<32x128xf32>
    %cst_51 = arith.constant 1.000000e+00 : f32
    %151 = vector.broadcast %cst_51 : f32 to vector<32x128xf32>
    %152 = arith.addf %151, %150 : vector<32x128xf32>
    %153 = arith.divf %151, %152 : vector<32x128xf32>
    %154 = arith.mulf %145, %128 : vector<32x128xf32>
    %155 = arith.mulf %139, %147 : vector<32x128xf32>
    %156 = arith.addf %154, %155 : vector<32x128xf32>
    %157 = math.tanh %156 : vector<32x128xf32>
    %158 = arith.mulf %153, %157 : vector<32x128xf32>
    %cst_52 = arith.constant dense<0.000000e+00> : vector<1x128xf32>
    %159 = tpu.matmul %4, %158, %cst_52 {dimension_numbers = #tpu.dot_dimension_numbers<[1], [0], [0], [1], [0, 0, 1, 1], [], []>, precision = #tpu.contract_precision<fp32>} : vector<1x32xf32>, vector<32x128xf32>, vector<1x128xf32> -> vector<1x128xf32>
    %cst_53 = arith.constant dense<0.000000e+00> : vector<128x128xf32>
    %160 = tpu.matmul %3, %158, %cst_53 {dimension_numbers = #tpu.dot_dimension_numbers<[1], [0], [0], [1], [0, 0, 1, 1], [], []>, precision = #tpu.contract_precision<fp32>} : vector<128x32xf32>, vector<32x128xf32>, vector<128x128xf32> -> vector<128x128xf32>
    %161 = arith.addf %89, %160 : vector<128x128xf32>
    %162 = vector.extract_strided_slice %161 {offsets = [0, 0], sizes = [32, 128], strides = [1, 1]} : vector<128x128xf32> to vector<32x128xf32>
    %163 = arith.negf %162 : vector<32x128xf32>
    %164 = math.exp %163 : vector<32x128xf32>
    %cst_54 = arith.constant 1.000000e+00 : f32
    %165 = vector.broadcast %cst_54 : f32 to vector<32x128xf32>
    %166 = arith.addf %165, %164 : vector<32x128xf32>
    %167 = arith.divf %165, %166 : vector<32x128xf32>
    %168 = vector.extract_strided_slice %161 {offsets = [32, 0], sizes = [32, 128], strides = [1, 1]} : vector<128x128xf32> to vector<32x128xf32>
    %169 = arith.negf %168 : vector<32x128xf32>
    %170 = math.exp %169 : vector<32x128xf32>
    %cst_55 = arith.constant 1.000000e+00 : f32
    %171 = vector.broadcast %cst_55 : f32 to vector<32x128xf32>
    %172 = arith.addf %171, %170 : vector<32x128xf32>
    %173 = arith.divf %171, %172 : vector<32x128xf32>
    %174 = vector.extract_strided_slice %161 {offsets = [64, 0], sizes = [32, 128], strides = [1, 1]} : vector<128x128xf32> to vector<32x128xf32>
    %175 = math.tanh %174 : vector<32x128xf32>
    %176 = vector.extract_strided_slice %161 {offsets = [96, 0], sizes = [32, 128], strides = [1, 1]} : vector<128x128xf32> to vector<32x128xf32>
    %177 = arith.negf %176 : vector<32x128xf32>
    %178 = math.exp %177 : vector<32x128xf32>
    %cst_56 = arith.constant 1.000000e+00 : f32
    %179 = vector.broadcast %cst_56 : f32 to vector<32x128xf32>
    %180 = arith.addf %179, %178 : vector<32x128xf32>
    %181 = arith.divf %179, %180 : vector<32x128xf32>
    %182 = arith.mulf %173, %156 : vector<32x128xf32>
    %183 = arith.mulf %167, %175 : vector<32x128xf32>
    %184 = arith.addf %182, %183 : vector<32x128xf32>
    %185 = math.tanh %184 : vector<32x128xf32>
    %186 = arith.mulf %181, %185 : vector<32x128xf32>
    %cst_57 = arith.constant dense<0.000000e+00> : vector<1x128xf32>
    %187 = tpu.matmul %4, %186, %cst_57 {dimension_numbers = #tpu.dot_dimension_numbers<[1], [0], [0], [1], [0, 0, 1, 1], [], []>, precision = #tpu.contract_precision<fp32>} : vector<1x32xf32>, vector<32x128xf32>, vector<1x128xf32> -> vector<1x128xf32>
    %cst_58 = arith.constant dense<0.000000e+00> : vector<128x128xf32>
    %188 = tpu.matmul %3, %186, %cst_58 {dimension_numbers = #tpu.dot_dimension_numbers<[1], [0], [0], [1], [0, 0, 1, 1], [], []>, precision = #tpu.contract_precision<fp32>} : vector<128x32xf32>, vector<32x128xf32>, vector<128x128xf32> -> vector<128x128xf32>
    %189 = arith.addf %95, %188 : vector<128x128xf32>
    %190 = vector.extract_strided_slice %189 {offsets = [0, 0], sizes = [32, 128], strides = [1, 1]} : vector<128x128xf32> to vector<32x128xf32>
    %191 = arith.negf %190 : vector<32x128xf32>
    %192 = math.exp %191 : vector<32x128xf32>
    %cst_59 = arith.constant 1.000000e+00 : f32
    %193 = vector.broadcast %cst_59 : f32 to vector<32x128xf32>
    %194 = arith.addf %193, %192 : vector<32x128xf32>
    %195 = arith.divf %193, %194 : vector<32x128xf32>
    %196 = vector.extract_strided_slice %189 {offsets = [32, 0], sizes = [32, 128], strides = [1, 1]} : vector<128x128xf32> to vector<32x128xf32>
    %197 = arith.negf %196 : vector<32x128xf32>
    %198 = math.exp %197 : vector<32x128xf32>
    %cst_60 = arith.constant 1.000000e+00 : f32
    %199 = vector.broadcast %cst_60 : f32 to vector<32x128xf32>
    %200 = arith.addf %199, %198 : vector<32x128xf32>
    %201 = arith.divf %199, %200 : vector<32x128xf32>
    %202 = vector.extract_strided_slice %189 {offsets = [64, 0], sizes = [32, 128], strides = [1, 1]} : vector<128x128xf32> to vector<32x128xf32>
    %203 = math.tanh %202 : vector<32x128xf32>
    %204 = vector.extract_strided_slice %189 {offsets = [96, 0], sizes = [32, 128], strides = [1, 1]} : vector<128x128xf32> to vector<32x128xf32>
    %205 = arith.negf %204 : vector<32x128xf32>
    %206 = math.exp %205 : vector<32x128xf32>
    %cst_61 = arith.constant 1.000000e+00 : f32
    %207 = vector.broadcast %cst_61 : f32 to vector<32x128xf32>
    %208 = arith.addf %207, %206 : vector<32x128xf32>
    %209 = arith.divf %207, %208 : vector<32x128xf32>
    %210 = arith.mulf %201, %184 : vector<32x128xf32>
    %211 = arith.mulf %195, %203 : vector<32x128xf32>
    %212 = arith.addf %210, %211 : vector<32x128xf32>
    %213 = math.tanh %212 : vector<32x128xf32>
    %214 = arith.mulf %209, %213 : vector<32x128xf32>
    %cst_62 = arith.constant dense<0.000000e+00> : vector<1x128xf32>
    %215 = tpu.matmul %4, %214, %cst_62 {dimension_numbers = #tpu.dot_dimension_numbers<[1], [0], [0], [1], [0, 0, 1, 1], [], []>, precision = #tpu.contract_precision<fp32>} : vector<1x32xf32>, vector<32x128xf32>, vector<1x128xf32> -> vector<1x128xf32>
    %cst_63 = arith.constant dense<0.000000e+00> : vector<128x128xf32>
    %216 = tpu.matmul %3, %214, %cst_63 {dimension_numbers = #tpu.dot_dimension_numbers<[1], [0], [0], [1], [0, 0, 1, 1], [], []>, precision = #tpu.contract_precision<fp32>} : vector<128x32xf32>, vector<32x128xf32>, vector<128x128xf32> -> vector<128x128xf32>
    %217 = arith.addf %101, %216 : vector<128x128xf32>
    %218 = vector.extract_strided_slice %217 {offsets = [0, 0], sizes = [32, 128], strides = [1, 1]} : vector<128x128xf32> to vector<32x128xf32>
    %219 = arith.negf %218 : vector<32x128xf32>
    %220 = math.exp %219 : vector<32x128xf32>
    %cst_64 = arith.constant 1.000000e+00 : f32
    %221 = vector.broadcast %cst_64 : f32 to vector<32x128xf32>
    %222 = arith.addf %221, %220 : vector<32x128xf32>
    %223 = arith.divf %221, %222 : vector<32x128xf32>
    %224 = vector.extract_strided_slice %217 {offsets = [32, 0], sizes = [32, 128], strides = [1, 1]} : vector<128x128xf32> to vector<32x128xf32>
    %225 = arith.negf %224 : vector<32x128xf32>
    %226 = math.exp %225 : vector<32x128xf32>
    %cst_65 = arith.constant 1.000000e+00 : f32
    %227 = vector.broadcast %cst_65 : f32 to vector<32x128xf32>
    %228 = arith.addf %227, %226 : vector<32x128xf32>
    %229 = arith.divf %227, %228 : vector<32x128xf32>
    %230 = vector.extract_strided_slice %217 {offsets = [64, 0], sizes = [32, 128], strides = [1, 1]} : vector<128x128xf32> to vector<32x128xf32>
    %231 = math.tanh %230 : vector<32x128xf32>
    %232 = vector.extract_strided_slice %217 {offsets = [96, 0], sizes = [32, 128], strides = [1, 1]} : vector<128x128xf32> to vector<32x128xf32>
    %233 = arith.negf %232 : vector<32x128xf32>
    %234 = math.exp %233 : vector<32x128xf32>
    %cst_66 = arith.constant 1.000000e+00 : f32
    %235 = vector.broadcast %cst_66 : f32 to vector<32x128xf32>
    %236 = arith.addf %235, %234 : vector<32x128xf32>
    %237 = arith.divf %235, %236 : vector<32x128xf32>
    %238 = arith.mulf %229, %212 : vector<32x128xf32>
    %239 = arith.mulf %223, %231 : vector<32x128xf32>
    %240 = arith.addf %238, %239 : vector<32x128xf32>
    %241 = math.tanh %240 : vector<32x128xf32>
    %242 = arith.mulf %237, %241 : vector<32x128xf32>
    %cst_67 = arith.constant dense<0.000000e+00> : vector<1x128xf32>
    %243 = tpu.matmul %4, %242, %cst_67 {dimension_numbers = #tpu.dot_dimension_numbers<[1], [0], [0], [1], [0, 0, 1, 1], [], []>, precision = #tpu.contract_precision<fp32>} : vector<1x32xf32>, vector<32x128xf32>, vector<1x128xf32> -> vector<1x128xf32>
    %244 = arith.maximumf %131, %159 : vector<1x128xf32>
    %245 = arith.maximumf %244, %187 : vector<1x128xf32>
    %246 = arith.maximumf %245, %215 : vector<1x128xf32>
    %247 = arith.maximumf %246, %243 : vector<1x128xf32>
    %248 = arith.subf %131, %247 : vector<1x128xf32>
    %249 = math.exp %248 : vector<1x128xf32>
    %250 = arith.subf %159, %247 : vector<1x128xf32>
    %251 = math.exp %250 : vector<1x128xf32>
    %252 = arith.subf %187, %247 : vector<1x128xf32>
    %253 = math.exp %252 : vector<1x128xf32>
    %254 = arith.subf %215, %247 : vector<1x128xf32>
    %255 = math.exp %254 : vector<1x128xf32>
    %256 = arith.subf %243, %247 : vector<1x128xf32>
    %257 = math.exp %256 : vector<1x128xf32>
    %258 = vector.broadcast %249 : vector<1x128xf32> to vector<32x128xf32>
    %259 = arith.mulf %258, %130 : vector<32x128xf32>
    %260 = arith.addf %249, %251 : vector<1x128xf32>
    %261 = vector.broadcast %251 : vector<1x128xf32> to vector<32x128xf32>
    %262 = arith.mulf %261, %158 : vector<32x128xf32>
    %263 = arith.addf %259, %262 : vector<32x128xf32>
    %264 = arith.addf %260, %253 : vector<1x128xf32>
    %265 = vector.broadcast %253 : vector<1x128xf32> to vector<32x128xf32>
    %266 = arith.mulf %265, %186 : vector<32x128xf32>
    %267 = arith.addf %263, %266 : vector<32x128xf32>
    %268 = arith.addf %264, %255 : vector<1x128xf32>
    %269 = vector.broadcast %255 : vector<1x128xf32> to vector<32x128xf32>
    %270 = arith.mulf %269, %214 : vector<32x128xf32>
    %271 = arith.addf %267, %270 : vector<32x128xf32>
    %272 = arith.addf %268, %257 : vector<1x128xf32>
    %273 = vector.broadcast %257 : vector<1x128xf32> to vector<32x128xf32>
    %274 = arith.mulf %273, %242 : vector<32x128xf32>
    %275 = arith.addf %271, %274 : vector<32x128xf32>
    %276 = vector.broadcast %272 : vector<1x128xf32> to vector<32x128xf32>
    %277 = arith.divf %275, %276 : vector<32x128xf32>
    %cst_68 = arith.constant dense<0.000000e+00> : vector<1x128xf32>
    %278 = tpu.matmul %5, %71, %cst_68 {dimension_numbers = #tpu.dot_dimension_numbers<[1], [0], [0], [1], [0, 0, 1, 1], [], []>, precision = #tpu.contract_precision<fp32>} : vector<1x64xf32>, vector<64x128xf32>, vector<1x128xf32> -> vector<1x128xf32>
    %cst_69 = arith.constant dense<0.000000e+00> : vector<1x128xf32>
    %279 = tpu.matmul %6, %277, %cst_69 {dimension_numbers = #tpu.dot_dimension_numbers<[1], [0], [0], [1], [0, 0, 1, 1], [], []>, precision = #tpu.contract_precision<fp32>} : vector<1x32xf32>, vector<32x128xf32>, vector<1x128xf32> -> vector<1x128xf32>
    %280 = arith.addf %278, %279 : vector<1x128xf32>
    %281 = vector.broadcast %13 : vector<1x1xf32> to vector<1x128xf32>
    %282 = arith.addf %280, %281 : vector<1x128xf32>
    %c0_70 = arith.constant 0 : index
    %c0_71 = arith.constant 0 : index
    %c0_72 = arith.constant 0 : index
    %283 = vector.load %arg7[%c0_70, %c0_71, %c0_72] : memref<1x1x128xf32, #tpu.memory_space<vmem>>, vector<1x1x128xf32>
    %284 = vector.shape_cast %283 : vector<1x1x128xf32> to vector<1x128xf32>
    %285 = vector.shape_cast %282 : vector<1x128xf32> to vector<1x1x128xf32>
    tpu.vector_store %arg7[%c0_70, %c0_71, %c0_72], %285 {strides = array<i32>} : memref<1x1x128xf32, #tpu.memory_space<vmem>>, vector<1x1x128xf32>,
    return
  }
  func.func @transform_0(%arg0: i32) -> (i32, i32) {
    %c0_i32 = arith.constant 0 : i32
    %c0_i32_0 = arith.constant 0 : i32
    return %c0_i32, %arg0 : i32, i32
  }
  func.func @transform_1(%arg0: i32) -> (i32, i32) {
    %c0_i32 = arith.constant 0 : i32
    %c0_i32_0 = arith.constant 0 : i32
    return %c0_i32, %arg0 : i32, i32
  }
  func.func @transform_2(%arg0: i32) -> (i32, i32) {
    %c0_i32 = arith.constant 0 : i32
    %c0_i32_0 = arith.constant 0 : i32
    %c0_i32_1 = arith.constant 0 : i32
    return %c0_i32, %c0_i32_0 : i32, i32
  }
  func.func @transform_3(%arg0: i32) -> (i32, i32) {
    %c0_i32 = arith.constant 0 : i32
    %c0_i32_0 = arith.constant 0 : i32
    %c0_i32_1 = arith.constant 0 : i32
    return %c0_i32, %c0_i32_0 : i32, i32
  }
  func.func @transform_4(%arg0: i32) -> (i32, i32) {
    %c0_i32 = arith.constant 0 : i32
    %c0_i32_0 = arith.constant 0 : i32
    %c0_i32_1 = arith.constant 0 : i32
    return %c0_i32, %c0_i32_0 : i32, i32
  }
  func.func @transform_5(%arg0: i32) -> (i32, i32) {
    %c0_i32 = arith.constant 0 : i32
    %c0_i32_0 = arith.constant 0 : i32
    %c0_i32_1 = arith.constant 0 : i32
    return %c0_i32, %c0_i32_0 : i32, i32
  }
  func.func @transform_6(%arg0: i32) -> (i32, i32, i32) {
    %c0_i32 = arith.constant 0 : i32
    %c0_i32_0 = arith.constant 0 : i32
    %c0_i32_1 = arith.constant 0 : i32
    return %arg0, %c0_i32, %c0_i32_0 : i32, i32, i32
  }
}

</mosaic_0001>

<llo_original>
// kernel: tpu_custom_call.1
$region0: #{tpu_custom_call.1}
  #allocation0 [shape = 'u32[]', space=smem, size = 0x4, offset = 0x4, fixed_abs, tag = 'smem constant byte address 0x4 - core index']
  #allocation1 [shape = 'u32[72,128]{1,0:T(1,128)}', space=vmem, size = 0x9000, scoped, tag = 'internal scratch']
  %s0 = inlined_call_operand.vmem [shape: f32[56,128], index: 0, kind: input, shape index: {}]
  %s1 = inlined_call_operand.vmem [shape: f32[5,128], index: 1, kind: input, shape index: {}]
  %s2 = inlined_call_operand.vmem [shape: f32[64,56], index: 2, kind: input, shape index: {}]
  %s3 = inlined_call_operand.vmem [shape: f32[480,32], index: 3, kind: input, shape index: {}]
  %s4 = inlined_call_operand.vmem [shape: f32[3,64], index: 4, kind: input, shape index: {}]
  %s5 = inlined_call_operand.vmem [shape: f32[192,8], index: 5, kind: input, shape index: {}]
  %s6 = inlined_call_operand.hbm [shape: f32[1,1,128], index: 6, kind: output, shape index: {}]
  %s7 = sld [smem:[#allocation0]]
  $region34: #{tpu_custom_call.1} parent=0
    _
  %s9 = ssub.s32 1, %s7
  %s10 = scalar_select 0, %s9, %s7
  $region1: #{tpu_custom_call.1} parent=0
    #allocation2 [shape = 'u8[512]{0}', space=vmem, size = 0x400, scoped, tag = 'output window, operand 0, single buffered']
    #allocation3 [shape = 's32[1]{0}', space=sflag, size = 0x4, scoped, tag = 'scoped memory for tpu_custom_call.1']
    %11 = vsyncpa [#allocation3], 0
    // Predicated region
    $region2: #{tpu_custom_call.1} parent=1 // pred_check
      _
    $region3: #{tpu_custom_call.1} parent=1 // pred_check_branch
      %13 = sbr.rel (0) target = $region5
    $region4: #{tpu_custom_call.1} parent=1 // pred_region
      _
    $region5: #{tpu_custom_call.1} parent=1 // pred_fallthru
      _
    // Predicated region
    $region6: #{tpu_custom_call.1} parent=1 // pred_check
      _
    $region7: #{tpu_custom_call.1} parent=1 // pred_check_branch
      %15 = sbr.rel (0) target = $region9
    $region8: #{tpu_custom_call.1} parent=1 // pred_region
      _
    $region9: #{tpu_custom_call.1} parent=1 // pred_fallthru
      _
    // Predicated region
    $region10: #{tpu_custom_call.1} parent=1 // pred_check
      _
    $region11: #{tpu_custom_call.1} parent=1 // pred_check_branch
      %17 = sbr.rel (0) target = $region13
    $region12: #{tpu_custom_call.1} parent=1 // pred_region
      _
    $region13: #{tpu_custom_call.1} parent=1 // pred_fallthru
      _
    // Predicated region
    $region14: #{tpu_custom_call.1} parent=1 // pred_check
      _
    $region15: #{tpu_custom_call.1} parent=1 // pred_check_branch
      %19 = sbr.rel (0) target = $region17
    $region16: #{tpu_custom_call.1} parent=1 // pred_region
      _
    $region17: #{tpu_custom_call.1} parent=1 // pred_fallthru
      _
    // Predicated region
    $region18: #{tpu_custom_call.1} parent=1 // pred_check
      _
    $region19: #{tpu_custom_call.1} parent=1 // pred_check_branch
      %21 = sbr.rel (0) target = $region21
    $region20: #{tpu_custom_call.1} parent=1 // pred_region
      _
    $region21: #{tpu_custom_call.1} parent=1 // pred_fallthru
      _
    // Predicated region
    $region22: #{tpu_custom_call.1} parent=1 // pred_check
      _
    $region23: #{tpu_custom_call.1} parent=1 // pred_check_branch
      %23 = sbr.rel (0) target = $region25
    $region24: #{tpu_custom_call.1} parent=1 // pred_region
      _
    $region25: #{tpu_custom_call.1} parent=1 // pred_fallthru
      _
    %v24 = vld [vmem:[%s3] sm:$0xff]
    %v25 = vld [vmem:[%s3 + $0x8] sm:$0xff]
    %v26 = vld [vmem:[%s3 + $0x10] sm:$0xff]
    %v27 = vld [vmem:[%s3 + $0x18] sm:$0xff]
    %v28 = vld [vmem:[%s3 + $0x20] sm:$0xff]
    %v29 = vld [vmem:[%s3 + $0x28] sm:$0xff]
    %v30 = vld [vmem:[%s3 + $0x30] sm:$0xff]
    %v31 = vld [vmem:[%s3 + $0x38] sm:$0xff]
    %v32 = vld [vmem:[%s3 + $0x40] sm:$0xff]
    %v33 = vld [vmem:[%s3 + $0x48] sm:$0xff]
    %v34 = vld [vmem:[%s3 + $0x50] sm:$0xff]
    %v35 = vld [vmem:[%s3 + $0x58] sm:$0xff]
    %v36 = vld [vmem:[%s3 + $0x60] sm:$0xff]
    %v37 = vld [vmem:[%s3 + $0x68] sm:$0xff]
    %v38 = vld [vmem:[%s3 + $0x70] sm:$0xff]
    %v39 = vld [vmem:[%s3 + $0x78] sm:$0xff]
    %v40 = vld [vmem:[%s3 + $0x80] sm:$0xff]
    %v41 = vld [vmem:[%s3 + $0x88] sm:$0xff]
    %v42 = vld [vmem:[%s3 + $0x90] sm:$0xff]
    %v43 = vld [vmem:[%s3 + $0x98] sm:$0xff]
    %v44 = vld [vmem:[%s3 + $0xa0] sm:$0xff]
    %v45 = vld [vmem:[%s3 + $0xa8] sm:$0xff]
    %v46 = vld [vmem:[%s3 + $0xb0] sm:$0xff]
    %v47 = vld [vmem:[%s3 + $0xb8] sm:$0xff]
    %v48 = vld [vmem:[%s3 + $0xc0] sm:$0xff]
    %v49 = vld [vmem:[%s3 + $0xc8] sm:$0xff]
    %v50 = vld [vmem:[%s3 + $0xd0] sm:$0xff]
    %v51 = vld [vmem:[%s3 + $0xd8] sm:$0xff]
    %v52 = vld [vmem:[%s3 + $0xe0] sm:$0xff]
    %v53 = vld [vmem:[%s3 + $0xe8] sm:$0xff]
    %v54 = vld [vmem:[%s3 + $0xf0] sm:$0xff]
    %v55 = vld [vmem:[%s3 + $0xf8] sm:$0xff]
    %v56 = vld [vmem:[%s3 + $0x100] sm:$0xff]
    %v57 = vld [vmem:[%s3 + $0x108] sm:$0xff]
    %v58 = vld [vmem:[%s3 + $0x110] sm:$0xff]
    %v59 = vld [vmem:[%s3 + $0x118] sm:$0xff]
    %v60 = vld [vmem:[%s3 + $0x120] sm:$0xff]
    %v61 = vld [vmem:[%s3 + $0x128] sm:$0xff]
    %v62 = vld [vmem:[%s3 + $0x130] sm:$0xff]
    %v63 = vld [vmem:[%s3 + $0x138] sm:$0xff]
    %v64 = vld [vmem:[%s3 + $0x140] sm:$0xff]
    %v65 = vld [vmem:[%s3 + $0x148] sm:$0xff]
    %v66 = vld [vmem:[%s3 + $0x150] sm:$0xff]
    %v67 = vld [vmem:[%s3 + $0x158] sm:$0xff]
    %v68 = vld [vmem:[%s3 + $0x160] sm:$0xff]
    %v69 = vld [vmem:[%s3 + $0x168] sm:$0xff]
    %v70 = vld [vmem:[%s3 + $0x170] sm:$0xff]
    %v71 = vld [vmem:[%s3 + $0x178] sm:$0xff]
    %v72 = vld [vmem:[%s3 + $0x180] sm:$0xff]
    %v73 = vld [vmem:[%s3 + $0x188] sm:$0xff]
    %v74 = vld [vmem:[%s3 + $0x190] sm:$0xff]
    %v75 = vld [vmem:[%s3 + $0x198] sm:$0xff]
    %v76 = vld [vmem:[%s3 + $0x1a0] sm:$0xff]
    %v77 = vld [vmem:[%s3 + $0x1a8] sm:$0xff]
    %v78 = vld [vmem:[%s3 + $0x1b0] sm:$0xff]
    %v79 = vld [vmem:[%s3 + $0x1b8] sm:$0xff]
    %v80 = vld [vmem:[%s3 + $0x1c0] sm:$0xff]
    %v81 = vld [vmem:[%s3 + $0x1c8] sm:$0xff]
    %v82 = vld [vmem:[%s3 + $0x1d0] sm:$0xff]
    %v83 = vld [vmem:[%s3 + $0x1d8] sm:$0xff]
    %v84 = vld [vmem:[%s4] sm:$0x1]
    %v85 = vld [vmem:[%s4 + $0x1] sm:$0x1]
    %v86 = vld [vmem:[%s4 + $0x2] sm:$0x1]
    %v87 = vld [vmem:[%s5] sm:$0xff]
    %v88 = vld [vmem:[%s5 + $0x8] sm:$0xff]
    %v89 = vld [vmem:[%s5 + $0x10] sm:$0xff]
    %v90 = vld [vmem:[%s5 + $0x18] sm:$0xff]
    %v91 = vld [vmem:[%s5 + $0x20] sm:$0xff]
    %v92 = vld [vmem:[%s5 + $0x28] sm:$0xff]
    %v93 = vld [vmem:[%s5 + $0x30] sm:$0xff]
    %v94 = vld [vmem:[%s5 + $0x38] sm:$0xff]
    %v95 = vld [vmem:[%s5 + $0x40] sm:$0xff]
    %v96 = vld [vmem:[%s5 + $0x48] sm:$0xff]
    %v97 = vld [vmem:[%s5 + $0x50] sm:$0xff]
    %v98 = vld [vmem:[%s5 + $0x58] sm:$0xff]
    %v99 = vld [vmem:[%s5 + $0x60] sm:$0xff]
    %v100 = vld [vmem:[%s5 + $0x68] sm:$0xff]
    %v101 = vld [vmem:[%s5 + $0x70] sm:$0xff]
    %v102 = vld [vmem:[%s5 + $0x78] sm:$0xff]
    %v103 = vld [vmem:[%s5 + $0x80] sm:$0xff]
    %v104 = vld [vmem:[%s5 + $0x88] sm:$0xff]
    %v105 = vld [vmem:[%s5 + $0x90] sm:$0xff]
    %v106 = vld [vmem:[%s5 + $0x98] sm:$0xff]
    %v107 = vld [vmem:[%s5 + $0xa0] sm:$0xff]
    %v108 = vld [vmem:[%s5 + $0xa8] sm:$0xff]
    %v109 = vld [vmem:[%s5 + $0xb0] sm:$0xff]
    %v110 = vld [vmem:[%s5 + $0xb8] sm:$0xff]
    %v111 = vld [vmem:[%s5] sm:$0x1]
    %v112 = vld [vmem:[%s2] sm:$0xff]
    %v113 = vld [vmem:[%s2 + $0x8] sm:$0xff]
    %v114 = vld [vmem:[%s2 + $0x10] sm:$0xff]
    %v115 = vld [vmem:[%s2 + $0x18] sm:$0xff]
    %v116 = vld [vmem:[%s2 + $0x20] sm:$0xff]
    %v117 = vld [vmem:[%s2 + $0x28] sm:$0xff]
    %v118 = vld [vmem:[%s2 + $0x30] sm:$0xff]
    %v119 = vld [vmem:[%s2 + $0x38] sm:$0xff]
    %v120 = vld [vmem:[%s0] sm:$0xff]
    %v121 = vld [vmem:[%s0 + $0x8] sm:$0xff]
    %v122 = vld [vmem:[%s0 + $0x10] sm:$0xff]
    %v123 = vld [vmem:[%s0 + $0x18] sm:$0xff]
    %v124 = vld [vmem:[%s0 + $0x20] sm:$0xff]
    %v125 = vld [vmem:[%s0 + $0x28] sm:$0xff]
    %v126 = vld [vmem:[%s0 + $0x30] sm:$0xff]
    %128 = vset.pattern.permute.xlu0 0
    %129 = vperm.xlu0 %128, %v87
    %v130 = vpop.permute.xlu0 %129
    %133 = vset.pattern.permute.xlu0 0
    %134 = vperm.xlu0 %133, %v88
    %v135 = vpop.permute.xlu0 %134
    %138 = vset.pattern.permute.xlu0 0
    %139 = vperm.xlu0 %138, %v89
    %v140 = vpop.permute.xlu0 %139
    %143 = vset.pattern.permute.xlu0 0
    %144 = vperm.xlu0 %143, %v90
    %v145 = vpop.permute.xlu0 %144
    %148 = vset.pattern.permute.xlu0 0
    %149 = vperm.xlu0 %148, %v91
    %v150 = vpop.permute.xlu0 %149
    %153 = vset.pattern.permute.xlu0 0
    %154 = vperm.xlu0 %153, %v92
    %v155 = vpop.permute.xlu0 %154
    %158 = vset.pattern.permute.xlu0 0
    %159 = vperm.xlu0 %158, %v93
    %v160 = vpop.permute.xlu0 %159
    %163 = vset.pattern.permute.xlu0 0
    %164 = vperm.xlu0 %163, %v94
    %v165 = vpop.permute.xlu0 %164
    %vm167 = vcmask 457728
    %v169 = vsel %vm167, %v112, 0
    %v172 = vsel %vm167, %v113, 0
    %v175 = vsel %vm167, %v114, 0
    %v178 = vsel %vm167, %v115, 0
    %v181 = vsel %vm167, %v116, 0
    %v184 = vsel %vm167, %v117, 0
    %v187 = vsel %vm167, %v118, 0
    %v190 = vsel %vm167, %v119, 0
    %192 = vmatpush.msra.mxu0 0.0
    %193 = vmatpush.msra.mxu0 0.0
    %194 = vmatpush.msra.mxu0 0.0
    %195 = vmatpush.msra.mxu0 0.0
    %196 = vmatpush.msra.mxu0 0.0
    %197 = vmatpush.msra.mxu0 0.0
    %198 = vmatpush.msra.mxu0 0.0
    %199 = vmatpush.msra.mxu0 0.0
    %200 = vmatpush.msra.mxu0 0.0
    %v201 = vand.u32 %v126, 4294901760
    %202 = vmatpush.msra.mxu0 %v201
    %v203 = vand.u32 %v125, 4294901760
    %204 = vmatpush.msra.mxu0 %v203
    %v205 = vand.u32 %v124, 4294901760
    %206 = vmatpush.msra.mxu0 %v205
    %v207 = vand.u32 %v123, 4294901760
    %208 = vmatpush.msra.mxu0 %v207
    %v209 = vand.u32 %v122, 4294901760
    %210 = vmatpush.msra.mxu0 %v209
    %v211 = vand.u32 %v121, 4294901760
    %212 = vmatpush.msra.mxu0 %v211
    %v213 = vand.u32 %v120, 4294901760
    %214 = vmatpush.msra.mxu0 %v213
    %v215 = vand.u32 %v169, 4294901760
    %v216 = vsub.f32 %v169, %v215
    %v217 = vand.u32 %v216, 4294901760
    %v218 = vsub.f32 %v216, %v217
    %v219 = vand.u32 %v218, 4294901760
    %220 = vmatmul.f32.gmra.mxu0 %v219
    %v221 = vpop.f32.mrf.mxu0
    %v222 = vadd.f32 %v130, %v221
    %v223 = vand.u32 %v172, 4294901760
    %v224 = vsub.f32 %v172, %v223
    %v225 = vand.u32 %v224, 4294901760
    %v226 = vsub.f32 %v224, %v225
    %v227 = vand.u32 %v226, 4294901760
    %228 = vmatmul.f32.gmra.mxu0 %v227
    %v229 = vpop.f32.mrf.mxu0
    %v230 = vadd.f32 %v135, %v229
    %v231 = vand.u32 %v175, 4294901760
    %v232 = vsub.f32 %v175, %v231
    %v233 = vand.u32 %v232, 4294901760
    %v234 = vsub.f32 %v232, %v233
    %v235 = vand.u32 %v234, 4294901760
    %236 = vmatmul.f32.gmra.mxu0 %v235
    %v237 = vpop.f32.mrf.mxu0
    %v238 = vadd.f32 %v140, %v237
    %v239 = vand.u32 %v178, 4294901760
    %v240 = vsub.f32 %v178, %v239
    %v241 = vand.u32 %v240, 4294901760
    %v242 = vsub.f32 %v240, %v241
    %v243 = vand.u32 %v242, 4294901760
    %244 = vmatmul.f32.gmra.mxu0 %v243
    %v245 = vpop.f32.mrf.mxu0
    %v246 = vadd.f32 %v145, %v245
    %v247 = vand.u32 %v181, 4294901760
    %v248 = vsub.f32 %v181, %v247
    %v249 = vand.u32 %v248, 4294901760
    %v250 = vsub.f32 %v248, %v249
    %v251 = vand.u32 %v250, 4294901760
    %252 = vmatmul.f32.gmra.mxu0 %v251
    %v253 = vpop.f32.mrf.mxu0
    %v254 = vadd.f32 %v150, %v253
    %v255 = vand.u32 %v184, 4294901760
    %v256 = vsub.f32 %v184, %v255
    %v257 = vand.u32 %v256, 4294901760
    %v258 = vsub.f32 %v256, %v257
    %v259 = vand.u32 %v258, 4294901760
    %260 = vmatmul.f32.gmra.mxu0 %v259
    %v261 = vpop.f32.mrf.mxu0
    %v262 = vadd.f32 %v155, %v261
    %v263 = vand.u32 %v187, 4294901760
    %v264 = vsub.f32 %v187, %v263
    %v265 = vand.u32 %v264, 4294901760
    %v266 = vsub.f32 %v264, %v265
    %v267 = vand.u32 %v266, 4294901760
    %268 = vmatmul.f32.gmra.mxu0 %v267
    %v269 = vpop.f32.mrf.mxu0
    %v270 = vadd.f32 %v160, %v269
    %v271 = vand.u32 %v190, 4294901760
    %v272 = vsub.f32 %v190, %v271
    %v273 = vand.u32 %v272, 4294901760
    %v274 = vsub.f32 %v272, %v273
    %v275 = vand.u32 %v274, 4294901760
    %276 = vmatmul.f32.gmra.mxu0 %v275
    %v277 = vpop.f32.mrf.mxu0
    %v278 = vadd.f32 %v165, %v277
    %279 = vdwg.mxu0
    %280 = vmatpush.msra.mxu0 0.0
    %281 = vmatpush.msra.mxu0 0.0
    %282 = vmatpush.msra.mxu0 0.0
    %283 = vmatpush.msra.mxu0 0.0
    %284 = vmatpush.msra.mxu0 0.0
    %285 = vmatpush.msra.mxu0 0.0
    %286 = vmatpush.msra.mxu0 0.0
    %287 = vmatpush.msra.mxu0 0.0
    %288 = vmatpush.msra.mxu0 0.0
    %v289 = vand.u32 %v126, 4294901760
    %v290 = vsub.f32 %v126, %v289
    %v291 = vand.u32 %v290, 4294901760
    %v292 = vsub.f32 %v290, %v291
    %v293 = vand.u32 %v292, 4294901760
    %294 = vmatpush.msra.mxu0 %v293
    %v295 = vand.u32 %v125, 4294901760
    %v296 = vsub.f32 %v125, %v295
    %v297 = vand.u32 %v296, 4294901760
    %v298 = vsub.f32 %v296, %v297
    %v299 = vand.u32 %v298, 4294901760
    %300 = vmatpush.msra.mxu0 %v299
    %v301 = vand.u32 %v124, 4294901760
    %v302 = vsub.f32 %v124, %v301
    %v303 = vand.u32 %v302, 4294901760
    %v304 = vsub.f32 %v302, %v303
    %v305 = vand.u32 %v304, 4294901760
    %306 = vmatpush.msra.mxu0 %v305
    %v307 = vand.u32 %v123, 4294901760
    %v308 = vsub.f32 %v123, %v307
    %v309 = vand.u32 %v308, 4294901760
    %v310 = vsub.f32 %v308, %v309
    %v311 = vand.u32 %v310, 4294901760
    %312 = vmatpush.msra.mxu0 %v311
    %v313 = vand.u32 %v122, 4294901760
    %v314 = vsub.f32 %v122, %v313
    %v315 = vand.u32 %v314, 4294901760
    %v316 = vsub.f32 %v314, %v315
    %v317 = vand.u32 %v316, 4294901760
    %318 = vmatpush.msra.mxu0 %v317
    %v319 = vand.u32 %v121, 4294901760
    %v320 = vsub.f32 %v121, %v319
    %v321 = vand.u32 %v320, 4294901760
    %v322 = vsub.f32 %v320, %v321
    %v323 = vand.u32 %v322, 4294901760
    %324 = vmatpush.msra.mxu0 %v323
    %v325 = vand.u32 %v120, 4294901760
    %v326 = vsub.f32 %v120, %v325
    %v327 = vand.u32 %v326, 4294901760
    %v328 = vsub.f32 %v326, %v327
    %v329 = vand.u32 %v328, 4294901760
    %330 = vmatpush.msra.mxu0 %v329
    %v331 = vand.u32 %v169, 4294901760
    %332 = vmatmul.f32.gmra.mxu0 %v331
    %v333 = vpop.f32.mrf.mxu0
    %v334 = vadd.f32 %v222, %v333
    %v335 = vand.u32 %v172, 4294901760
    %336 = vmatmul.f32.gmra.mxu0 %v335
    %v337 = vpop.f32.mrf.mxu0
    %v338 = vadd.f32 %v230, %v337
    %v339 = vand.u32 %v175, 4294901760
    %340 = vmatmul.f32.gmra.mxu0 %v339
    %v341 = vpop.f32.mrf.mxu0
    %v342 = vadd.f32 %v238, %v341
    %v343 = vand.u32 %v178, 4294901760
    %344 = vmatmul.f32.gmra.mxu0 %v343
    %v345 = vpop.f32.mrf.mxu0
    %v346 = vadd.f32 %v246, %v345
    %v347 = vand.u32 %v181, 4294901760
    %348 = vmatmul.f32.gmra.mxu0 %v347
    %v349 = vpop.f32.mrf.mxu0
    %v350 = vadd.f32 %v254, %v349
    %v351 = vand.u32 %v184, 4294901760
    %352 = vmatmul.f32.gmra.mxu0 %v351
    %v353 = vpop.f32.mrf.mxu0
    %v354 = vadd.f32 %v262, %v353
    %v355 = vand.u32 %v187, 4294901760
    %356 = vmatmul.f32.gmra.mxu0 %v355
    %v357 = vpop.f32.mrf.mxu0
    %v358 = vadd.f32 %v270, %v357
    %v359 = vand.u32 %v190, 4294901760
    %360 = vmatmul.f32.gmra.mxu0 %v359
    %v361 = vpop.f32.mrf.mxu0
    %v362 = vadd.f32 %v278, %v361
    %363 = vdwg.mxu0
    %364 = vmatpush.msra.mxu0 0.0
    %365 = vmatpush.msra.mxu0 0.0
    %366 = vmatpush.msra.mxu0 0.0
    %367 = vmatpush.msra.mxu0 0.0
    %368 = vmatpush.msra.mxu0 0.0
    %369 = vmatpush.msra.mxu0 0.0
    %370 = vmatpush.msra.mxu0 0.0
    %371 = vmatpush.msra.mxu0 0.0
    %372 = vmatpush.msra.mxu0 0.0
    %v373 = vand.u32 %v126, 4294901760
    %v374 = vsub.f32 %v126, %v373
    %375 = vmatpush.msra.mxu0 %v374
    %v376 = vand.u32 %v125, 4294901760
    %v377 = vsub.f32 %v125, %v376
    %378 = vmatpush.msra.mxu0 %v377
    %v379 = vand.u32 %v124, 4294901760
    %v380 = vsub.f32 %v124, %v379
    %381 = vmatpush.msra.mxu0 %v380
    %v382 = vand.u32 %v123, 4294901760
    %v383 = vsub.f32 %v123, %v382
    %384 = vmatpush.msra.mxu0 %v383
    %v385 = vand.u32 %v122, 4294901760
    %v386 = vsub.f32 %v122, %v385
    %387 = vmatpush.msra.mxu0 %v386
    %v388 = vand.u32 %v121, 4294901760
    %v389 = vsub.f32 %v121, %v388
    %390 = vmatpush.msra.mxu0 %v389
    %v391 = vand.u32 %v120, 4294901760
    %v392 = vsub.f32 %v120, %v391
    %393 = vmatpush.msra.mxu0 %v392
    %v394 = vand.u32 %v169, 4294901760
    %v395 = vsub.f32 %v169, %v394
    %396 = vmatmul.f32.gmra.mxu0 %v395
    %v397 = vpop.f32.mrf.mxu0
    %v398 = vadd.f32 %v334, %v397
    %v399 = vand.u32 %v172, 4294901760
    %v400 = vsub.f32 %v172, %v399
    %401 = vmatmul.f32.gmra.mxu0 %v400
    %v402 = vpop.f32.mrf.mxu0
    %v403 = vadd.f32 %v338, %v402
    %v404 = vand.u32 %v175, 4294901760
    %v405 = vsub.f32 %v175, %v404
    %406 = vmatmul.f32.gmra.mxu0 %v405
    %v407 = vpop.f32.mrf.mxu0
    %v408 = vadd.f32 %v342, %v407
    %v409 = vand.u32 %v178, 4294901760
    %v410 = vsub.f32 %v178, %v409
    %411 = vmatmul.f32.gmra.mxu0 %v410
    %v412 = vpop.f32.mrf.mxu0
    %v413 = vadd.f32 %v346, %v412
    %v414 = vand.u32 %v181, 4294901760
    %v415 = vsub.f32 %v181, %v414
    %416 = vmatmul.f32.gmra.mxu0 %v415
    %v417 = vpop.f32.mrf.mxu0
    %v418 = vadd.f32 %v350, %v417
    %v419 = vand.u32 %v184, 4294901760
    %v420 = vsub.f32 %v184, %v419
    %421 = vmatmul.f32.gmra.mxu0 %v420
    %v422 = vpop.f32.mrf.mxu0
    %v423 = vadd.f32 %v354, %v422
    %v424 = vand.u32 %v187, 4294901760
    %v425 = vsub.f32 %v187, %v424
    %426 = vmatmul.f32.gmra.mxu0 %v425
    %v427 = vpop.f32.mrf.mxu0
    %v428 = vadd.f32 %v358, %v427
    %v429 = vand.u32 %v190, 4294901760
    %v430 = vsub.f32 %v190, %v429
    %431 = vmatmul.f32.gmra.mxu0 %v430
    %v432 = vpop.f32.mrf.mxu0
    %v433 = vadd.f32 %v362, %v432
    %434 = vdwg.mxu0
    %435 = vmatpush.msra.mxu0 0.0
    %436 = vmatpush.msra.mxu0 0.0
    %437 = vmatpush.msra.mxu0 0.0
    %438 = vmatpush.msra.mxu0 0.0
    %439 = vmatpush.msra.mxu0 0.0
    %440 = vmatpush.msra.mxu0 0.0
    %441 = vmatpush.msra.mxu0 0.0
    %442 = vmatpush.msra.mxu0 0.0
    %443 = vmatpush.msra.mxu0 0.0
    %v444 = vand.u32 %v126, 4294901760
    %445 = vmatpush.msra.mxu0 %v444
    %v446 = vand.u32 %v125, 4294901760
    %447 = vmatpush.msra.mxu0 %v446
    %v448 = vand.u32 %v124, 4294901760
    %449 = vmatpush.msra.mxu0 %v448
    %v450 = vand.u32 %v123, 4294901760
    %451 = vmatpush.msra.mxu0 %v450
    %v452 = vand.u32 %v122, 4294901760
    %453 = vmatpush.msra.mxu0 %v452
    %v454 = vand.u32 %v121, 4294901760
    %455 = vmatpush.msra.mxu0 %v454
    %v456 = vand.u32 %v120, 4294901760
    %457 = vmatpush.msra.mxu0 %v456
    %v458 = vand.u32 %v169, 4294901760
    %v459 = vsub.f32 %v169, %v458
    %v460 = vand.u32 %v459, 4294901760
    %461 = vmatmul.f32.gmra.mxu0 %v460
    %v462 = vpop.f32.mrf.mxu0
    %v463 = vadd.f32 %v398, %v462
    %v464 = vand.u32 %v172, 4294901760
    %v465 = vsub.f32 %v172, %v464
    %v466 = vand.u32 %v465, 4294901760
    %467 = vmatmul.f32.gmra.mxu0 %v466
    %v468 = vpop.f32.mrf.mxu0
    %v469 = vadd.f32 %v403, %v468
    %v470 = vand.u32 %v175, 4294901760
    %v471 = vsub.f32 %v175, %v470
    %v472 = vand.u32 %v471, 4294901760
    %473 = vmatmul.f32.gmra.mxu0 %v472
    %v474 = vpop.f32.mrf.mxu0
    %v475 = vadd.f32 %v408, %v474
    %v476 = vand.u32 %v178, 4294901760
    %v477 = vsub.f32 %v178, %v476
    %v478 = vand.u32 %v477, 4294901760
    %479 = vmatmul.f32.gmra.mxu0 %v478
    %v480 = vpop.f32.mrf.mxu0
    %v481 = vadd.f32 %v413, %v480
    %v482 = vand.u32 %v181, 4294901760
    %v483 = vsub.f32 %v181, %v482
    %v484 = vand.u32 %v483, 4294901760
    %485 = vmatmul.f32.gmra.mxu0 %v484
    %v486 = vpop.f32.mrf.mxu0
    %v487 = vadd.f32 %v418, %v486
    %v488 = vand.u32 %v184, 4294901760
    %v489 = vsub.f32 %v184, %v488
    %v490 = vand.u32 %v489, 4294901760
    %491 = vmatmul.f32.gmra.mxu0 %v490
    %v492 = vpop.f32.mrf.mxu0
    %v493 = vadd.f32 %v423, %v492
    %v494 = vand.u32 %v187, 4294901760
    %v495 = vsub.f32 %v187, %v494
    %v496 = vand.u32 %v495, 4294901760
    %497 = vmatmul.f32.gmra.mxu0 %v496
    %v498 = vpop.f32.mrf.mxu0
    %v499 = vadd.f32 %v428, %v498
    %v500 = vand.u32 %v190, 4294901760
    %v501 = vsub.f32 %v190, %v500
    %v502 = vand.u32 %v501, 4294901760
    %503 = vmatmul.f32.gmra.mxu0 %v502
    %v504 = vpop.f32.mrf.mxu0
    %v505 = vadd.f32 %v433, %v504
    %506 = vdwg.mxu0
    %507 = vmatpush.msra.mxu0 0.0
    %508 = vmatpush.msra.mxu0 0.0
    %509 = vmatpush.msra.mxu0 0.0
    %510 = vmatpush.msra.mxu0 0.0
    %511 = vmatpush.msra.mxu0 0.0
    %512 = vmatpush.msra.mxu0 0.0
    %513 = vmatpush.msra.mxu0 0.0
    %514 = vmatpush.msra.mxu0 0.0
    %515 = vmatpush.msra.mxu0 0.0
    %v516 = vand.u32 %v126, 4294901760
    %v517 = vsub.f32 %v126, %v516
    %v518 = vand.u32 %v517, 4294901760
    %519 = vmatpush.msra.mxu0 %v518
    %v520 = vand.u32 %v125, 4294901760
    %v521 = vsub.f32 %v125, %v520
    %v522 = vand.u32 %v521, 4294901760
    %523 = vmatpush.msra.mxu0 %v522
    %v524 = vand.u32 %v124, 4294901760
    %v525 = vsub.f32 %v124, %v524
    %v526 = vand.u32 %v525, 4294901760
    %527 = vmatpush.msra.mxu0 %v526
    %v528 = vand.u32 %v123, 4294901760
    %v529 = vsub.f32 %v123, %v528
    %v530 = vand.u32 %v529, 4294901760
    %531 = vmatpush.msra.mxu0 %v530
    %v532 = vand.u32 %v122, 4294901760
    %v533 = vsub.f32 %v122, %v532
    %v534 = vand.u32 %v533, 4294901760
    %535 = vmatpush.msra.mxu0 %v534
    %v536 = vand.u32 %v121, 4294901760
    %v537 = vsub.f32 %v121, %v536
    %v538 = vand.u32 %v537, 4294901760
    %539 = vmatpush.msra.mxu0 %v538
    %v540 = vand.u32 %v120, 4294901760
    %v541 = vsub.f32 %v120, %v540
    %v542 = vand.u32 %v541, 4294901760
    %543 = vmatpush.msra.mxu0 %v542
    %v544 = vand.u32 %v169, 4294901760
    %545 = vmatmul.f32.gmra.mxu0 %v544
    %v546 = vpop.f32.mrf.mxu0
    %v547 = vadd.f32 %v463, %v546
    %v548 = vand.u32 %v172, 4294901760
    %549 = vmatmul.f32.gmra.mxu0 %v548
    %v550 = vpop.f32.mrf.mxu0
    %v551 = vadd.f32 %v469, %v550
    %v552 = vand.u32 %v175, 4294901760
    %553 = vmatmul.f32.gmra.mxu0 %v552
    %v554 = vpop.f32.mrf.mxu0
    %v555 = vadd.f32 %v475, %v554
    %v556 = vand.u32 %v178, 4294901760
    %557 = vmatmul.f32.gmra.mxu0 %v556
    %v558 = vpop.f32.mrf.mxu0
    %v559 = vadd.f32 %v481, %v558
    %v560 = vand.u32 %v181, 4294901760
    %561 = vmatmul.f32.gmra.mxu0 %v560
    %v562 = vpop.f32.mrf.mxu0
    %v563 = vadd.f32 %v487, %v562
    %v564 = vand.u32 %v184, 4294901760
    %565 = vmatmul.f32.gmra.mxu0 %v564
    %v566 = vpop.f32.mrf.mxu0
    %v567 = vadd.f32 %v493, %v566
    %v568 = vand.u32 %v187, 4294901760
    %569 = vmatmul.f32.gmra.mxu0 %v568
    %v570 = vpop.f32.mrf.mxu0
    %v571 = vadd.f32 %v499, %v570
    %v572 = vand.u32 %v190, 4294901760
    %573 = vmatmul.f32.gmra.mxu0 %v572
    %v574 = vpop.f32.mrf.mxu0
    %v575 = vadd.f32 %v505, %v574
    %576 = vdwg.mxu0
    %577 = vmatpush.msra.mxu0 0.0
    %578 = vmatpush.msra.mxu0 0.0
    %579 = vmatpush.msra.mxu0 0.0
    %580 = vmatpush.msra.mxu0 0.0
    %581 = vmatpush.msra.mxu0 0.0
    %582 = vmatpush.msra.mxu0 0.0
    %583 = vmatpush.msra.mxu0 0.0
    %584 = vmatpush.msra.mxu0 0.0
    %585 = vmatpush.msra.mxu0 0.0
    %v586 = vand.u32 %v126, 4294901760
    %587 = vmatpush.msra.mxu0 %v586
    %v588 = vand.u32 %v125, 4294901760
    %589 = vmatpush.msra.mxu0 %v588
    %v590 = vand.u32 %v124, 4294901760
    %591 = vmatpush.msra.mxu0 %v590
    %v592 = vand.u32 %v123, 4294901760
    %593 = vmatpush.msra.mxu0 %v592
    %v594 = vand.u32 %v122, 4294901760
    %595 = vmatpush.msra.mxu0 %v594
    %v596 = vand.u32 %v121, 4294901760
    %597 = vmatpush.msra.mxu0 %v596
    %v598 = vand.u32 %v120, 4294901760
    %599 = vmatpush.msra.mxu0 %v598
    %v600 = vand.u32 %v169, 4294901760
    %601 = vmatmul.f32.gmra.mxu0 %v600
    %v602 = vpop.f32.mrf.mxu0
    %v603 = vadd.f32 %v547, %v602
    %v604 = vand.u32 %v172, 4294901760
    %605 = vmatmul.f32.gmra.mxu0 %v604
    %v606 = vpop.f32.mrf.mxu0
    %v607 = vadd.f32 %v551, %v606
    %v608 = vand.u32 %v175, 4294901760
    %609 = vmatmul.f32.gmra.mxu0 %v608
    %v610 = vpop.f32.mrf.mxu0
    %v611 = vadd.f32 %v555, %v610
    %v612 = vand.u32 %v178, 4294901760
    %613 = vmatmul.f32.gmra.mxu0 %v612
    %v614 = vpop.f32.mrf.mxu0
    %v615 = vadd.f32 %v559, %v614
    %v616 = vand.u32 %v181, 4294901760
    %617 = vmatmul.f32.gmra.mxu0 %v616
    %v618 = vpop.f32.mrf.mxu0
    %v619 = vadd.f32 %v563, %v618
    %v620 = vand.u32 %v184, 4294901760
    %621 = vmatmul.f32.gmra.mxu0 %v620
    %v622 = vpop.f32.mrf.mxu0
    %v623 = vadd.f32 %v567, %v622
    %v624 = vand.u32 %v187, 4294901760
    %625 = vmatmul.f32.gmra.mxu0 %v624
    %v626 = vpop.f32.mrf.mxu0
    %v627 = vadd.f32 %v571, %v626
    %v628 = vand.u32 %v190, 4294901760
    %629 = vmatmul.f32.gmra.mxu0 %v628
    %v630 = vpop.f32.mrf.mxu0
    %v631 = vadd.f32 %v575, %v630
    %632 = vdwg.mxu0
    %v633 = vmax.f32 %v603, 0.0
    %v634 = vmax.f32 %v607, 0.0
    %v635 = vmax.f32 %v611, 0.0
    %v636 = vmax.f32 %v615, 0.0
    %v637 = vmax.f32 %v619, 0.0
    %v638 = vmax.f32 %v623, 0.0
    %v639 = vmax.f32 %v627, 0.0
    %v640 = vmax.f32 %v631, 0.0
    %v641 = vmax.f32 %v633, %v637
    %v642 = vmax.f32 %v634, %v638
    %v643 = vmax.f32 %v635, %v639
    %v644 = vmax.f32 %v636, %v640
    %645 = vset.pattern.permute.xlu0 1
    %646 = vperm.xlu0 %645, %v87
    %v647 = vpop.permute.xlu0 %646
    %649 = vset.pattern.permute.xlu0 1
    %650 = vperm.xlu0 %649, %v88
    %v651 = vpop.permute.xlu0 %650
    %653 = vset.pattern.permute.xlu0 1
    %654 = vperm.xlu0 %653, %v89
    %v655 = vpop.permute.xlu0 %654
    %657 = vset.pattern.permute.xlu0 1
    %658 = vperm.xlu0 %657, %v90
    %v659 = vpop.permute.xlu0 %658
    %661 = vset.pattern.permute.xlu0 1
    %662 = vperm.xlu0 %661, %v91
    %v663 = vpop.permute.xlu0 %662
    %665 = vset.pattern.permute.xlu0 1
    %666 = vperm.xlu0 %665, %v92
    %v667 = vpop.permute.xlu0 %666
    %669 = vset.pattern.permute.xlu0 1
    %670 = vperm.xlu0 %669, %v93
    %v671 = vpop.permute.xlu0 %670
    %673 = vset.pattern.permute.xlu0 1
    %674 = vperm.xlu0 %673, %v94
    %v675 = vpop.permute.xlu0 %674
    %vm677 = vcmask 261120
    %v679 = vsel %vm677, %v24, 0
    %v682 = vsel %vm677, %v25, 0
    %v685 = vsel %vm677, %v26, 0
    %v688 = vsel %vm677, %v27, 0
    %v691 = vsel %vm677, %v28, 0
    %v694 = vsel %vm677, %v29, 0
    %v697 = vsel %vm677, %v30, 0
    %v700 = vsel %vm677, %v31, 0
    %702 = vmatpush.msra.mxu0 0.0
    %703 = vmatpush.msra.mxu0 0.0
    %704 = vmatpush.msra.mxu0 0.0
    %705 = vmatpush.msra.mxu0 0.0
    %706 = vmatpush.msra.mxu0 0.0
    %707 = vmatpush.msra.mxu0 0.0
    %708 = vmatpush.msra.mxu0 0.0
    %709 = vmatpush.msra.mxu0 0.0
    %710 = vmatpush.msra.mxu0 0.0
    %711 = vmatpush.msra.mxu0 0.0
    %712 = vmatpush.msra.mxu0 0.0
    %713 = vmatpush.msra.mxu0 0.0
    %v714 = vand.u32 %v644, 4294901760
    %715 = vmatpush.msra.mxu0 %v714
    %v716 = vand.u32 %v643, 4294901760
    %717 = vmatpush.msra.mxu0 %v716
    %v718 = vand.u32 %v642, 4294901760
    %719 = vmatpush.msra.mxu0 %v718
    %v720 = vand.u32 %v641, 4294901760
    %721 = vmatpush.msra.mxu0 %v720
    %v722 = vand.u32 %v679, 4294901760
    %v723 = vsub.f32 %v679, %v722
    %v724 = vand.u32 %v723, 4294901760
    %v725 = vsub.f32 %v723, %v724
    %v726 = vand.u32 %v725, 4294901760
    %727 = vmatmul.f32.gmra.mxu0 %v726
    %v728 = vpop.f32.mrf.mxu0
    %v729 = vadd.f32 %v647, %v728
    %v730 = vand.u32 %v682, 4294901760
    %v731 = vsub.f32 %v682, %v730
    %v732 = vand.u32 %v731, 4294901760
    %v733 = vsub.f32 %v731, %v732
    %v734 = vand.u32 %v733, 4294901760
    %735 = vmatmul.f32.gmra.mxu0 %v734
    %v736 = vpop.f32.mrf.mxu0
    %v737 = vadd.f32 %v651, %v736
    %v738 = vand.u32 %v685, 4294901760
    %v739 = vsub.f32 %v685, %v738
    %v740 = vand.u32 %v739, 4294901760
    %v741 = vsub.f32 %v739, %v740
    %v742 = vand.u32 %v741, 4294901760
    %743 = vmatmul.f32.gmra.mxu0 %v742
    %v744 = vpop.f32.mrf.mxu0
    %v745 = vadd.f32 %v655, %v744
    %v746 = vand.u32 %v688, 4294901760
    %v747 = vsub.f32 %v688, %v746
    %v748 = vand.u32 %v747, 4294901760
    %v749 = vsub.f32 %v747, %v748
    %v750 = vand.u32 %v749, 4294901760
    %751 = vmatmul.f32.gmra.mxu0 %v750
    %v752 = vpop.f32.mrf.mxu0
    %v753 = vadd.f32 %v659, %v752
    %v754 = vand.u32 %v691, 4294901760
    %v755 = vsub.f32 %v691, %v754
    %v756 = vand.u32 %v755, 4294901760
    %v757 = vsub.f32 %v755, %v756
    %v758 = vand.u32 %v757, 4294901760
    %759 = vmatmul.f32.gmra.mxu0 %v758
    %v760 = vpop.f32.mrf.mxu0
    %v761 = vadd.f32 %v663, %v760
    %v762 = vand.u32 %v694, 4294901760
    %v763 = vsub.f32 %v694, %v762
    %v764 = vand.u32 %v763, 4294901760
    %v765 = vsub.f32 %v763, %v764
    %v766 = vand.u32 %v765, 4294901760
    %767 = vmatmul.f32.gmra.mxu0 %v766
    %v768 = vpop.f32.mrf.mxu0
    %v769 = vadd.f32 %v667, %v768
    %v770 = vand.u32 %v697, 4294901760
    %v771 = vsub.f32 %v697, %v770
    %v772 = vand.u32 %v771, 4294901760
    %v773 = vsub.f32 %v771, %v772
    %v774 = vand.u32 %v773, 4294901760
    %775 = vmatmul.f32.gmra.mxu0 %v774
    %v776 = vpop.f32.mrf.mxu0
    %v777 = vadd.f32 %v671, %v776
    %v778 = vand.u32 %v700, 4294901760
    %v779 = vsub.f32 %v700, %v778
    %v780 = vand.u32 %v779, 4294901760
    %v781 = vsub.f32 %v779, %v780
    %v782 = vand.u32 %v781, 4294901760
    %783 = vmatmul.f32.gmra.mxu0 %v782
    %v784 = vpop.f32.mrf.mxu0
    %v785 = vadd.f32 %v675, %v784
    %786 = vdwg.mxu0
    %787 = vmatpush.msra.mxu0 0.0
    %788 = vmatpush.msra.mxu0 0.0
    %789 = vmatpush.msra.mxu0 0.0
    %790 = vmatpush.msra.mxu0 0.0
    %791 = vmatpush.msra.mxu0 0.0
    %792 = vmatpush.msra.mxu0 0.0
    %793 = vmatpush.msra.mxu0 0.0
    %794 = vmatpush.msra.mxu0 0.0
    %795 = vmatpush.msra.mxu0 0.0
    %796 = vmatpush.msra.mxu0 0.0
    %797 = vmatpush.msra.mxu0 0.0
    %798 = vmatpush.msra.mxu0 0.0
    %v799 = vand.u32 %v644, 4294901760
    %v800 = vsub.f32 %v644, %v799
    %v801 = vand.u32 %v800, 4294901760
    %v802 = vsub.f32 %v800, %v801
    %v803 = vand.u32 %v802, 4294901760
    %804 = vmatpush.msra.mxu0 %v803
    %v805 = vand.u32 %v643, 4294901760
    %v806 = vsub.f32 %v643, %v805
    %v807 = vand.u32 %v806, 4294901760
    %v808 = vsub.f32 %v806, %v807
    %v809 = vand.u32 %v808, 4294901760
    %810 = vmatpush.msra.mxu0 %v809
    %v811 = vand.u32 %v642, 4294901760
    %v812 = vsub.f32 %v642, %v811
    %v813 = vand.u32 %v812, 4294901760
    %v814 = vsub.f32 %v812, %v813
    %v815 = vand.u32 %v814, 4294901760
    %816 = vmatpush.msra.mxu0 %v815
    %v817 = vand.u32 %v641, 4294901760
    %v818 = vsub.f32 %v641, %v817
    %v819 = vand.u32 %v818, 4294901760
    %v820 = vsub.f32 %v818, %v819
    %v821 = vand.u32 %v820, 4294901760
    %822 = vmatpush.msra.mxu0 %v821
    %v823 = vand.u32 %v679, 4294901760
    %824 = vmatmul.f32.gmra.mxu0 %v823
    %v825 = vpop.f32.mrf.mxu0
    %v826 = vadd.f32 %v729, %v825
    %v827 = vand.u32 %v682, 4294901760
    %828 = vmatmul.f32.gmra.mxu0 %v827
    %v829 = vpop.f32.mrf.mxu0
    %v830 = vadd.f32 %v737, %v829
    %v831 = vand.u32 %v685, 4294901760
    %832 = vmatmul.f32.gmra.mxu0 %v831
    %v833 = vpop.f32.mrf.mxu0
    %v834 = vadd.f32 %v745, %v833
    %v835 = vand.u32 %v688, 4294901760
    %836 = vmatmul.f32.gmra.mxu0 %v835
    %v837 = vpop.f32.mrf.mxu0
    %v838 = vadd.f32 %v753, %v837
    %v839 = vand.u32 %v691, 4294901760
    %840 = vmatmul.f32.gmra.mxu0 %v839
    %v841 = vpop.f32.mrf.mxu0
    %v842 = vadd.f32 %v761, %v841
    %v843 = vand.u32 %v694, 4294901760
    %844 = vmatmul.f32.gmra.mxu0 %v843
    %v845 = vpop.f32.mrf.mxu0
    %v846 = vadd.f32 %v769, %v845
    %v847 = vand.u32 %v697, 4294901760
    %848 = vmatmul.f32.gmra.mxu0 %v847
    %v849 = vpop.f32.mrf.mxu0
    %v850 = vadd.f32 %v777, %v849
    %v851 = vand.u32 %v700, 4294901760
    %852 = vmatmul.f32.gmra.mxu0 %v851
    %v853 = vpop.f32.mrf.mxu0
    %v854 = vadd.f32 %v785, %v853
    %855 = vdwg.mxu0
    %856 = vmatpush.msra.mxu0 0.0
    %857 = vmatpush.msra.mxu0 0.0
    %858 = vmatpush.msra.mxu0 0.0
    %859 = vmatpush.msra.mxu0 0.0
    %860 = vmatpush.msra.mxu0 0.0
    %861 = vmatpush.msra.mxu0 0.0
    %862 = vmatpush.msra.mxu0 0.0
    %863 = vmatpush.msra.mxu0 0.0
    %864 = vmatpush.msra.mxu0 0.0
    %865 = vmatpush.msra.mxu0 0.0
    %866 = vmatpush.msra.mxu0 0.0
    %867 = vmatpush.msra.mxu0 0.0
    %v868 = vand.u32 %v644, 4294901760
    %v869 = vsub.f32 %v644, %v868
    %870 = vmatpush.msra.mxu0 %v869
    %v871 = vand.u32 %v643, 4294901760
    %v872 = vsub.f32 %v643, %v871
    %873 = vmatpush.msra.mxu0 %v872
    %v874 = vand.u32 %v642, 4294901760
    %v875 = vsub.f32 %v642, %v874
    %876 = vmatpush.msra.mxu0 %v875
    %v877 = vand.u32 %v641, 4294901760
    %v878 = vsub.f32 %v641, %v877
    %879 = vmatpush.msra.mxu0 %v878
    %v880 = vand.u32 %v679, 4294901760
    %v881 = vsub.f32 %v679, %v880
    %882 = vmatmul.f32.gmra.mxu0 %v881
    %v883 = vpop.f32.mrf.mxu0
    %v884 = vadd.f32 %v826, %v883
    %v885 = vand.u32 %v682, 4294901760
    %v886 = vsub.f32 %v682, %v885
    %887 = vmatmul.f32.gmra.mxu0 %v886
    %v888 = vpop.f32.mrf.mxu0
    %v889 = vadd.f32 %v830, %v888
    %v890 = vand.u32 %v685, 4294901760
    %v891 = vsub.f32 %v685, %v890
    %892 = vmatmul.f32.gmra.mxu0 %v891
    %v893 = vpop.f32.mrf.mxu0
    %v894 = vadd.f32 %v834, %v893
    %v895 = vand.u32 %v688, 4294901760
    %v896 = vsub.f32 %v688, %v895
    %897 = vmatmul.f32.gmra.mxu0 %v896
    %v898 = vpop.f32.mrf.mxu0
    %v899 = vadd.f32 %v838, %v898
    %v900 = vand.u32 %v691, 4294901760
    %v901 = vsub.f32 %v691, %v900
    %902 = vmatmul.f32.gmra.mxu0 %v901
    %v903 = vpop.f32.mrf.mxu0
    %v904 = vadd.f32 %v842, %v903
    %v905 = vand.u32 %v694, 4294901760
    %v906 = vsub.f32 %v694, %v905
    %907 = vmatmul.f32.gmra.mxu0 %v906
    %v908 = vpop.f32.mrf.mxu0
    %v909 = vadd.f32 %v846, %v908
    %v910 = vand.u32 %v697, 4294901760
    %v911 = vsub.f32 %v697, %v910
    %912 = vmatmul.f32.gmra.mxu0 %v911
    %v913 = vpop.f32.mrf.mxu0
    %v914 = vadd.f32 %v850, %v913
    %v915 = vand.u32 %v700, 4294901760
    %v916 = vsub.f32 %v700, %v915
    %917 = vmatmul.f32.gmra.mxu0 %v916
    %v918 = vpop.f32.mrf.mxu0
    %v919 = vadd.f32 %v854, %v918
    %920 = vdwg.mxu0
    %921 = vmatpush.msra.mxu0 0.0
    %922 = vmatpush.msra.mxu0 0.0
    %923 = vmatpush.msra.mxu0 0.0
    %924 = vmatpush.msra.mxu0 0.0
    %925 = vmatpush.msra.mxu0 0.0
    %926 = vmatpush.msra.mxu0 0.0
    %927 = vmatpush.msra.mxu0 0.0
    %928 = vmatpush.msra.mxu0 0.0
    %929 = vmatpush.msra.mxu0 0.0
    %930 = vmatpush.msra.mxu0 0.0
    %931 = vmatpush.msra.mxu0 0.0
    %932 = vmatpush.msra.mxu0 0.0
    %v933 = vand.u32 %v644, 4294901760
    %934 = vmatpush.msra.mxu0 %v933
    %v935 = vand.u32 %v643, 4294901760
    %936 = vmatpush.msra.mxu0 %v935
    %v937 = vand.u32 %v642, 4294901760
    %938 = vmatpush.msra.mxu0 %v937
    %v939 = vand.u32 %v641, 4294901760
    %940 = vmatpush.msra.mxu0 %v939
    %v941 = vand.u32 %v679, 4294901760
    %v942 = vsub.f32 %v679, %v941
    %v943 = vand.u32 %v942, 4294901760
    %944 = vmatmul.f32.gmra.mxu0 %v943
    %v945 = vpop.f32.mrf.mxu0
    %v946 = vadd.f32 %v884, %v945
    %v947 = vand.u32 %v682, 4294901760
    %v948 = vsub.f32 %v682, %v947
    %v949 = vand.u32 %v948, 4294901760
    %950 = vmatmul.f32.gmra.mxu0 %v949
    %v951 = vpop.f32.mrf.mxu0
    %v952 = vadd.f32 %v889, %v951
    %v953 = vand.u32 %v685, 4294901760
    %v954 = vsub.f32 %v685, %v953
    %v955 = vand.u32 %v954, 4294901760
    %956 = vmatmul.f32.gmra.mxu0 %v955
    %v957 = vpop.f32.mrf.mxu0
    %v958 = vadd.f32 %v894, %v957
    %v959 = vand.u32 %v688, 4294901760
    %v960 = vsub.f32 %v688, %v959
    %v961 = vand.u32 %v960, 4294901760
    %962 = vmatmul.f32.gmra.mxu0 %v961
    %v963 = vpop.f32.mrf.mxu0
    %v964 = vadd.f32 %v899, %v963
    %v965 = vand.u32 %v691, 4294901760
    %v966 = vsub.f32 %v691, %v965
    %v967 = vand.u32 %v966, 4294901760
    %968 = vmatmul.f32.gmra.mxu0 %v967
    %v969 = vpop.f32.mrf.mxu0
    %v970 = vadd.f32 %v904, %v969
    %v971 = vand.u32 %v694, 4294901760
    %v972 = vsub.f32 %v694, %v971
    %v973 = vand.u32 %v972, 4294901760
    %974 = vmatmul.f32.gmra.mxu0 %v973
    %v975 = vpop.f32.mrf.mxu0
    %v976 = vadd.f32 %v909, %v975
    %v977 = vand.u32 %v697, 4294901760
    %v978 = vsub.f32 %v697, %v977
    %v979 = vand.u32 %v978, 4294901760
    %980 = vmatmul.f32.gmra.mxu0 %v979
    %v981 = vpop.f32.mrf.mxu0
    %v982 = vadd.f32 %v914, %v981
    %v983 = vand.u32 %v700, 4294901760
    %v984 = vsub.f32 %v700, %v983
    %v985 = vand.u32 %v984, 4294901760
    %986 = vmatmul.f32.gmra.mxu0 %v985
    %v987 = vpop.f32.mrf.mxu0
    %v988 = vadd.f32 %v919, %v987
    %989 = vdwg.mxu0
    %990 = vmatpush.msra.mxu0 0.0
    %991 = vmatpush.msra.mxu0 0.0
    %992 = vmatpush.msra.mxu0 0.0
    %993 = vmatpush.msra.mxu0 0.0
    %994 = vmatpush.msra.mxu0 0.0
    %995 = vmatpush.msra.mxu0 0.0
    %996 = vmatpush.msra.mxu0 0.0
    %997 = vmatpush.msra.mxu0 0.0
    %998 = vmatpush.msra.mxu0 0.0
    %999 = vmatpush.msra.mxu0 0.0
    %1000 = vmatpush.msra.mxu0 0.0
    %1001 = vmatpush.msra.mxu0 0.0
    %v1002 = vand.u32 %v644, 4294901760
    %v1003 = vsub.f32 %v644, %v1002
    %v1004 = vand.u32 %v1003, 4294901760
    %1005 = vmatpush.msra.mxu0 %v1004
    %v1006 = vand.u32 %v643, 4294901760
    %v1007 = vsub.f32 %v643, %v1006
    %v1008 = vand.u32 %v1007, 4294901760
    %1009 = vmatpush.msra.mxu0 %v1008
    %v1010 = vand.u32 %v642, 4294901760
    %v1011 = vsub.f32 %v642, %v1010
    %v1012 = vand.u32 %v1011, 4294901760
    %1013 = vmatpush.msra.mxu0 %v1012
    %v1014 = vand.u32 %v641, 4294901760
    %v1015 = vsub.f32 %v641, %v1014
    %v1016 = vand.u32 %v1015, 4294901760
    %1017 = vmatpush.msra.mxu0 %v1016
    %v1018 = vand.u32 %v679, 4294901760
    %1019 = vmatmul.f32.gmra.mxu0 %v1018
    %v1020 = vpop.f32.mrf.mxu0
    %v1021 = vadd.f32 %v946, %v1020
    %v1022 = vand.u32 %v682, 4294901760
    %1023 = vmatmul.f32.gmra.mxu0 %v1022
    %v1024 = vpop.f32.mrf.mxu0
    %v1025 = vadd.f32 %v952, %v1024
    %v1026 = vand.u32 %v685, 4294901760
    %1027 = vmatmul.f32.gmra.mxu0 %v1026
    %v1028 = vpop.f32.mrf.mxu0
    %v1029 = vadd.f32 %v958, %v1028
    %v1030 = vand.u32 %v688, 4294901760
    %1031 = vmatmul.f32.gmra.mxu0 %v1030
    %v1032 = vpop.f32.mrf.mxu0
    %v1033 = vadd.f32 %v964, %v1032
    %v1034 = vand.u32 %v691, 4294901760
    %1035 = vmatmul.f32.gmra.mxu0 %v1034
    %v1036 = vpop.f32.mrf.mxu0
    %v1037 = vadd.f32 %v970, %v1036
    %v1038 = vand.u32 %v694, 4294901760
    %1039 = vmatmul.f32.gmra.mxu0 %v1038
    %v1040 = vpop.f32.mrf.mxu0
    %v1041 = vadd.f32 %v976, %v1040
    %v1042 = vand.u32 %v697, 4294901760
    %1043 = vmatmul.f32.gmra.mxu0 %v1042
    %v1044 = vpop.f32.mrf.mxu0
    %v1045 = vadd.f32 %v982, %v1044
    %v1046 = vand.u32 %v700, 4294901760
    %1047 = vmatmul.f32.gmra.mxu0 %v1046
    %v1048 = vpop.f32.mrf.mxu0
    %v1049 = vadd.f32 %v988, %v1048
    %1050 = vdwg.mxu0
    %1051 = vmatpush.msra.mxu0 0.0
    %1052 = vmatpush.msra.mxu0 0.0
    %1053 = vmatpush.msra.mxu0 0.0
    %1054 = vmatpush.msra.mxu0 0.0
    %1055 = vmatpush.msra.mxu0 0.0
    %1056 = vmatpush.msra.mxu0 0.0
    %1057 = vmatpush.msra.mxu0 0.0
    %1058 = vmatpush.msra.mxu0 0.0
    %1059 = vmatpush.msra.mxu0 0.0
    %1060 = vmatpush.msra.mxu0 0.0
    %1061 = vmatpush.msra.mxu0 0.0
    %1062 = vmatpush.msra.mxu0 0.0
    %v1063 = vand.u32 %v644, 4294901760
    %1064 = vmatpush.msra.mxu0 %v1063
    %v1065 = vand.u32 %v643, 4294901760
    %1066 = vmatpush.msra.mxu0 %v1065
    %v1067 = vand.u32 %v642, 4294901760
    %1068 = vmatpush.msra.mxu0 %v1067
    %v1069 = vand.u32 %v641, 4294901760
    %1070 = vmatpush.msra.mxu0 %v1069
    %v1071 = vand.u32 %v679, 4294901760
    %1072 = vmatmul.f32.gmra.mxu0 %v1071
    %v1073 = vpop.f32.mrf.mxu0
    %v1074 = vadd.f32 %v1021, %v1073
    %v1075 = vand.u32 %v682, 4294901760
    %1076 = vmatmul.f32.gmra.mxu0 %v1075
    %v1077 = vpop.f32.mrf.mxu0
    %v1078 = vadd.f32 %v1025, %v1077
    %v1079 = vand.u32 %v685, 4294901760
    %1080 = vmatmul.f32.gmra.mxu0 %v1079
    %v1081 = vpop.f32.mrf.mxu0
    %v1082 = vadd.f32 %v1029, %v1081
    %v1083 = vand.u32 %v688, 4294901760
    %1084 = vmatmul.f32.gmra.mxu0 %v1083
    %v1085 = vpop.f32.mrf.mxu0
    %v1086 = vadd.f32 %v1033, %v1085
    %v1087 = vand.u32 %v691, 4294901760
    %1088 = vmatmul.f32.gmra.mxu0 %v1087
    %v1089 = vpop.f32.mrf.mxu0
    %v1090 = vadd.f32 %v1037, %v1089
    %v1091 = vand.u32 %v694, 4294901760
    %1092 = vmatmul.f32.gmra.mxu0 %v1091
    %v1093 = vpop.f32.mrf.mxu0
    %v1094 = vadd.f32 %v1041, %v1093
    %v1095 = vand.u32 %v697, 4294901760
    %1096 = vmatmul.f32.gmra.mxu0 %v1095
    %v1097 = vpop.f32.mrf.mxu0
    %v1098 = vadd.f32 %v1045, %v1097
    %v1099 = vand.u32 %v700, 4294901760
    %1100 = vmatmul.f32.gmra.mxu0 %v1099
    %v1101 = vpop.f32.mrf.mxu0
    %v1102 = vadd.f32 %v1049, %v1101
    %1103 = vdwg.mxu0
    %v1104 = vmax.f32 %v1074, 0.0
    %v1105 = vmax.f32 %v1078, 0.0
    %v1106 = vmax.f32 %v1082, 0.0
    %v1107 = vmax.f32 %v1086, 0.0
    %v1108 = vmax.f32 %v1090, 0.0
    %v1109 = vmax.f32 %v1094, 0.0
    %v1110 = vmax.f32 %v1098, 0.0
    %v1111 = vmax.f32 %v1102, 0.0
    %v1112 = vmax.f32 %v1104, %v1108
    %v1113 = vmax.f32 %v1105, %v1109
    %v1114 = vmax.f32 %v1106, %v1110
    %v1115 = vmax.f32 %v1107, %v1111
    %1116 = vset.pattern.permute.xlu0 2
    %1117 = vperm.xlu0 %1116, %v87
    %v1118 = vpop.permute.xlu0 %1117
    %1120 = vset.pattern.permute.xlu0 2
    %1121 = vperm.xlu0 %1120, %v88
    %v1122 = vpop.permute.xlu0 %1121
    %1124 = vset.pattern.permute.xlu0 2
    %1125 = vperm.xlu0 %1124, %v89
    %v1126 = vpop.permute.xlu0 %1125
    %1128 = vset.pattern.permute.xlu0 2
    %1129 = vperm.xlu0 %1128, %v90
    %v1130 = vpop.permute.xlu0 %1129
    %1132 = vset.pattern.permute.xlu0 2
    %1133 = vperm.xlu0 %1132, %v91
    %v1134 = vpop.permute.xlu0 %1133
    %1136 = vset.pattern.permute.xlu0 2
    %1137 = vperm.xlu0 %1136, %v92
    %v1138 = vpop.permute.xlu0 %1137
    %1140 = vset.pattern.permute.xlu0 2
    %1141 = vperm.xlu0 %1140, %v93
    %v1142 = vpop.permute.xlu0 %1141
    %1144 = vset.pattern.permute.xlu0 2
    %1145 = vperm.xlu0 %1144, %v94
    %v1146 = vpop.permute.xlu0 %1145
    %1149 = vset.pattern.permute.xlu0 2
    %1150 = vperm.xlu0 %1149, %v95
    %v1151 = vpop.permute.xlu0 %1150
    %1154 = vset.pattern.permute.xlu0 2
    %1155 = vperm.xlu0 %1154, %v96
    %v1156 = vpop.permute.xlu0 %1155
    %1159 = vset.pattern.permute.xlu0 2
    %1160 = vperm.xlu0 %1159, %v97
    %v1161 = vpop.permute.xlu0 %1160
    %1164 = vset.pattern.permute.xlu0 2
    %1165 = vperm.xlu0 %1164, %v98
    %v1166 = vpop.permute.xlu0 %1165
    %v1169 = vsel %vm677, %v32, 0
    %v1172 = vsel %vm677, %v33, 0
    %v1175 = vsel %vm677, %v34, 0
    %v1178 = vsel %vm677, %v35, 0
    %v1181 = vsel %vm677, %v36, 0
    %v1184 = vsel %vm677, %v37, 0
    %v1187 = vsel %vm677, %v38, 0
    %v1190 = vsel %vm677, %v39, 0
    %v1193 = vsel %vm677, %v40, 0
    %v1196 = vsel %vm677, %v41, 0
    %v1199 = vsel %vm677, %v42, 0
    %v1202 = vsel %vm677, %v43, 0
    %1204 = vmatpush.msra.mxu0 0.0
    %1205 = vmatpush.msra.mxu0 0.0
    %1206 = vmatpush.msra.mxu0 0.0
    %1207 = vmatpush.msra.mxu0 0.0
    %1208 = vmatpush.msra.mxu0 0.0
    %1209 = vmatpush.msra.mxu0 0.0
    %1210 = vmatpush.msra.mxu0 0.0
    %1211 = vmatpush.msra.mxu0 0.0
    %1212 = vmatpush.msra.mxu0 0.0
    %1213 = vmatpush.msra.mxu0 0.0
    %1214 = vmatpush.msra.mxu0 0.0
    %1215 = vmatpush.msra.mxu0 0.0
    %v1216 = vand.u32 %v1115, 4294901760
    %1217 = vmatpush.msra.mxu0 %v1216
    %v1218 = vand.u32 %v1114, 4294901760
    %1219 = vmatpush.msra.mxu0 %v1218
    %v1220 = vand.u32 %v1113, 4294901760
    %1221 = vmatpush.msra.mxu0 %v1220
    %v1222 = vand.u32 %v1112, 4294901760
    %1223 = vmatpush.msra.mxu0 %v1222
    %v1224 = vand.u32 %v1169, 4294901760
    %v1225 = vsub.f32 %v1169, %v1224
    %v1226 = vand.u32 %v1225, 4294901760
    %v1227 = vsub.f32 %v1225, %v1226
    %v1228 = vand.u32 %v1227, 4294901760
    %1229 = vmatmul.f32.gmra.mxu0 %v1228
    %v1230 = vpop.f32.mrf.mxu0
    %v1231 = vadd.f32 %v1118, %v1230
    %v1232 = vand.u32 %v1172, 4294901760
    %v1233 = vsub.f32 %v1172, %v1232
    %v1234 = vand.u32 %v1233, 4294901760
    %v1235 = vsub.f32 %v1233, %v1234
    %v1236 = vand.u32 %v1235, 4294901760
    %1237 = vmatmul.f32.gmra.mxu0 %v1236
    %v1238 = vpop.f32.mrf.mxu0
    %v1239 = vadd.f32 %v1122, %v1238
    %v1240 = vand.u32 %v1175, 4294901760
    %v1241 = vsub.f32 %v1175, %v1240
    %v1242 = vand.u32 %v1241, 4294901760
    %v1243 = vsub.f32 %v1241, %v1242
    %v1244 = vand.u32 %v1243, 4294901760
    %1245 = vmatmul.f32.gmra.mxu0 %v1244
    %v1246 = vpop.f32.mrf.mxu0
    %v1247 = vadd.f32 %v1126, %v1246
    %v1248 = vand.u32 %v1178, 4294901760
    %v1249 = vsub.f32 %v1178, %v1248
    %v1250 = vand.u32 %v1249, 4294901760
    %v1251 = vsub.f32 %v1249, %v1250
    %v1252 = vand.u32 %v1251, 4294901760
    %1253 = vmatmul.f32.gmra.mxu0 %v1252
    %v1254 = vpop.f32.mrf.mxu0
    %v1255 = vadd.f32 %v1130, %v1254
    %v1256 = vand.u32 %v1181, 4294901760
    %v1257 = vsub.f32 %v1181, %v1256
    %v1258 = vand.u32 %v1257, 4294901760
    %v1259 = vsub.f32 %v1257, %v1258
    %v1260 = vand.u32 %v1259, 4294901760
    %1261 = vmatmul.f32.gmra.mxu0 %v1260
    %v1262 = vpop.f32.mrf.mxu0
    %v1263 = vadd.f32 %v1134, %v1262
    %v1264 = vand.u32 %v1184, 4294901760
    %v1265 = vsub.f32 %v1184, %v1264
    %v1266 = vand.u32 %v1265, 4294901760
    %v1267 = vsub.f32 %v1265, %v1266
    %v1268 = vand.u32 %v1267, 4294901760
    %1269 = vmatmul.f32.gmra.mxu0 %v1268
    %v1270 = vpop.f32.mrf.mxu0
    %v1271 = vadd.f32 %v1138, %v1270
    %v1272 = vand.u32 %v1187, 4294901760
    %v1273 = vsub.f32 %v1187, %v1272
    %v1274 = vand.u32 %v1273, 4294901760
    %v1275 = vsub.f32 %v1273, %v1274
    %v1276 = vand.u32 %v1275, 4294901760
    %1277 = vmatmul.f32.gmra.mxu0 %v1276
    %v1278 = vpop.f32.mrf.mxu0
    %v1279 = vadd.f32 %v1142, %v1278
    %v1280 = vand.u32 %v1190, 4294901760
    %v1281 = vsub.f32 %v1190, %v1280
    %v1282 = vand.u32 %v1281, 4294901760
    %v1283 = vsub.f32 %v1281, %v1282
    %v1284 = vand.u32 %v1283, 4294901760
    %1285 = vmatmul.f32.gmra.mxu0 %v1284
    %v1286 = vpop.f32.mrf.mxu0
    %v1287 = vadd.f32 %v1146, %v1286
    %v1288 = vand.u32 %v1193, 4294901760
    %v1289 = vsub.f32 %v1193, %v1288
    %v1290 = vand.u32 %v1289, 4294901760
    %v1291 = vsub.f32 %v1289, %v1290
    %v1292 = vand.u32 %v1291, 4294901760
    %1293 = vmatmul.f32.gmra.mxu0 %v1292
    %v1294 = vpop.f32.mrf.mxu0
    %v1295 = vadd.f32 %v1151, %v1294
    %v1296 = vand.u32 %v1196, 4294901760
    %v1297 = vsub.f32 %v1196, %v1296
    %v1298 = vand.u32 %v1297, 4294901760
    %v1299 = vsub.f32 %v1297, %v1298
    %v1300 = vand.u32 %v1299, 4294901760
    %1301 = vmatmul.f32.gmra.mxu0 %v1300
    %v1302 = vpop.f32.mrf.mxu0
    %v1303 = vadd.f32 %v1156, %v1302
    %v1304 = vand.u32 %v1199, 4294901760
    %v1305 = vsub.f32 %v1199, %v1304
    %v1306 = vand.u32 %v1305, 4294901760
    %v1307 = vsub.f32 %v1305, %v1306
    %v1308 = vand.u32 %v1307, 4294901760
    %1309 = vmatmul.f32.gmra.mxu0 %v1308
    %v1310 = vpop.f32.mrf.mxu0
    %v1311 = vadd.f32 %v1161, %v1310
    %v1312 = vand.u32 %v1202, 4294901760
    %v1313 = vsub.f32 %v1202, %v1312
    %v1314 = vand.u32 %v1313, 4294901760
    %v1315 = vsub.f32 %v1313, %v1314
    %v1316 = vand.u32 %v1315, 4294901760
    %1317 = vmatmul.f32.gmra.mxu0 %v1316
    %v1318 = vpop.f32.mrf.mxu0
    %v1319 = vadd.f32 %v1166, %v1318
    %1320 = vdwg.mxu0
    %1321 = vmatpush.msra.mxu0 0.0
    %1322 = vmatpush.msra.mxu0 0.0
    %1323 = vmatpush.msra.mxu0 0.0
    %1324 = vmatpush.msra.mxu0 0.0
    %1325 = vmatpush.msra.mxu0 0.0
    %1326 = vmatpush.msra.mxu0 0.0
    %1327 = vmatpush.msra.mxu0 0.0
    %1328 = vmatpush.msra.mxu0 0.0
    %1329 = vmatpush.msra.mxu0 0.0
    %1330 = vmatpush.msra.mxu0 0.0
    %1331 = vmatpush.msra.mxu0 0.0
    %1332 = vmatpush.msra.mxu0 0.0
    %v1333 = vand.u32 %v1115, 4294901760
    %v1334 = vsub.f32 %v1115, %v1333
    %v1335 = vand.u32 %v1334, 4294901760
    %v1336 = vsub.f32 %v1334, %v1335
    %v1337 = vand.u32 %v1336, 4294901760
    %1338 = vmatpush.msra.mxu0 %v1337
    %v1339 = vand.u32 %v1114, 4294901760
    %v1340 = vsub.f32 %v1114, %v1339
    %v1341 = vand.u32 %v1340, 4294901760
    %v1342 = vsub.f32 %v1340, %v1341
    %v1343 = vand.u32 %v1342, 4294901760
    %1344 = vmatpush.msra.mxu0 %v1343
    %v1345 = vand.u32 %v1113, 4294901760
    %v1346 = vsub.f32 %v1113, %v1345
    %v1347 = vand.u32 %v1346, 4294901760
    %v1348 = vsub.f32 %v1346, %v1347
    %v1349 = vand.u32 %v1348, 4294901760
    %1350 = vmatpush.msra.mxu0 %v1349
    %v1351 = vand.u32 %v1112, 4294901760
    %v1352 = vsub.f32 %v1112, %v1351
    %v1353 = vand.u32 %v1352, 4294901760
    %v1354 = vsub.f32 %v1352, %v1353
    %v1355 = vand.u32 %v1354, 4294901760
    %1356 = vmatpush.msra.mxu0 %v1355
    %v1357 = vand.u32 %v1169, 4294901760
    %1358 = vmatmul.f32.gmra.mxu0 %v1357
    %v1359 = vpop.f32.mrf.mxu0
    %v1360 = vadd.f32 %v1231, %v1359
    %v1361 = vand.u32 %v1172, 4294901760
    %1362 = vmatmul.f32.gmra.mxu0 %v1361
    %v1363 = vpop.f32.mrf.mxu0
    %v1364 = vadd.f32 %v1239, %v1363
    %v1365 = vand.u32 %v1175, 4294901760
    %1366 = vmatmul.f32.gmra.mxu0 %v1365
    %v1367 = vpop.f32.mrf.mxu0
    %v1368 = vadd.f32 %v1247, %v1367
    %v1369 = vand.u32 %v1178, 4294901760
    %1370 = vmatmul.f32.gmra.mxu0 %v1369
    %v1371 = vpop.f32.mrf.mxu0
    %v1372 = vadd.f32 %v1255, %v1371
    %v1373 = vand.u32 %v1181, 4294901760
    %1374 = vmatmul.f32.gmra.mxu0 %v1373
    %v1375 = vpop.f32.mrf.mxu0
    %v1376 = vadd.f32 %v1263, %v1375
    %v1377 = vand.u32 %v1184, 4294901760
    %1378 = vmatmul.f32.gmra.mxu0 %v1377
    %v1379 = vpop.f32.mrf.mxu0
    %v1380 = vadd.f32 %v1271, %v1379
    %v1381 = vand.u32 %v1187, 4294901760
    %1382 = vmatmul.f32.gmra.mxu0 %v1381
    %v1383 = vpop.f32.mrf.mxu0
    %v1384 = vadd.f32 %v1279, %v1383
    %v1385 = vand.u32 %v1190, 4294901760
    %1386 = vmatmul.f32.gmra.mxu0 %v1385
    %v1387 = vpop.f32.mrf.mxu0
    %v1388 = vadd.f32 %v1287, %v1387
    %v1389 = vand.u32 %v1193, 4294901760
    %1390 = vmatmul.f32.gmra.mxu0 %v1389
    %v1391 = vpop.f32.mrf.mxu0
    %v1392 = vadd.f32 %v1295, %v1391
    %v1393 = vand.u32 %v1196, 4294901760
    %1394 = vmatmul.f32.gmra.mxu0 %v1393
    %v1395 = vpop.f32.mrf.mxu0
    %v1396 = vadd.f32 %v1303, %v1395
    %v1397 = vand.u32 %v1199, 4294901760
    %1398 = vmatmul.f32.gmra.mxu0 %v1397
    %v1399 = vpop.f32.mrf.mxu0
    %v1400 = vadd.f32 %v1311, %v1399
    %v1401 = vand.u32 %v1202, 4294901760
    %1402 = vmatmul.f32.gmra.mxu0 %v1401
    %v1403 = vpop.f32.mrf.mxu0
    %v1404 = vadd.f32 %v1319, %v1403
    %1405 = vdwg.mxu0
    %1406 = vmatpush.msra.mxu0 0.0
    %1407 = vmatpush.msra.mxu0 0.0
    %1408 = vmatpush.msra.mxu0 0.0
    %1409 = vmatpush.msra.mxu0 0.0
    %1410 = vmatpush.msra.mxu0 0.0
    %1411 = vmatpush.msra.mxu0 0.0
    %1412 = vmatpush.msra.mxu0 0.0
    %1413 = vmatpush.msra.mxu0 0.0
    %1414 = vmatpush.msra.mxu0 0.0
    %1415 = vmatpush.msra.mxu0 0.0
    %1416 = vmatpush.msra.mxu0 0.0
    %1417 = vmatpush.msra.mxu0 0.0
    %v1418 = vand.u32 %v1115, 4294901760
    %v1419 = vsub.f32 %v1115, %v1418
    %1420 = vmatpush.msra.mxu0 %v1419
    %v1421 = vand.u32 %v1114, 4294901760
    %v1422 = vsub.f32 %v1114, %v1421
    %1423 = vmatpush.msra.mxu0 %v1422
    %v1424 = vand.u32 %v1113, 4294901760
    %v1425 = vsub.f32 %v1113, %v1424
    %1426 = vmatpush.msra.mxu0 %v1425
    %v1427 = vand.u32 %v1112, 4294901760
    %v1428 = vsub.f32 %v1112, %v1427
    %1429 = vmatpush.msra.mxu0 %v1428
    %v1430 = vand.u32 %v1169, 4294901760
    %v1431 = vsub.f32 %v1169, %v1430
    %1432 = vmatmul.f32.gmra.mxu0 %v1431
    %v1433 = vpop.f32.mrf.mxu0
    %v1434 = vadd.f32 %v1360, %v1433
    %v1435 = vand.u32 %v1172, 4294901760
    %v1436 = vsub.f32 %v1172, %v1435
    %1437 = vmatmul.f32.gmra.mxu0 %v1436
    %v1438 = vpop.f32.mrf.mxu0
    %v1439 = vadd.f32 %v1364, %v1438
    %v1440 = vand.u32 %v1175, 4294901760
    %v1441 = vsub.f32 %v1175, %v1440
    %1442 = vmatmul.f32.gmra.mxu0 %v1441
    %v1443 = vpop.f32.mrf.mxu0
    %v1444 = vadd.f32 %v1368, %v1443
    %v1445 = vand.u32 %v1178, 4294901760
    %v1446 = vsub.f32 %v1178, %v1445
    %1447 = vmatmul.f32.gmra.mxu0 %v1446
    %v1448 = vpop.f32.mrf.mxu0
    %v1449 = vadd.f32 %v1372, %v1448
    %v1450 = vand.u32 %v1181, 4294901760
    %v1451 = vsub.f32 %v1181, %v1450
    %1452 = vmatmul.f32.gmra.mxu0 %v1451
    %v1453 = vpop.f32.mrf.mxu0
    %v1454 = vadd.f32 %v1376, %v1453
    %v1455 = vand.u32 %v1184, 4294901760
    %v1456 = vsub.f32 %v1184, %v1455
    %1457 = vmatmul.f32.gmra.mxu0 %v1456
    %v1458 = vpop.f32.mrf.mxu0
    %v1459 = vadd.f32 %v1380, %v1458
    %v1460 = vand.u32 %v1187, 4294901760
    %v1461 = vsub.f32 %v1187, %v1460
    %1462 = vmatmul.f32.gmra.mxu0 %v1461
    %v1463 = vpop.f32.mrf.mxu0
    %v1464 = vadd.f32 %v1384, %v1463
    %v1465 = vand.u32 %v1190, 4294901760
    %v1466 = vsub.f32 %v1190, %v1465
    %1467 = vmatmul.f32.gmra.mxu0 %v1466
    %v1468 = vpop.f32.mrf.mxu0
    %v1469 = vadd.f32 %v1388, %v1468
    %v1470 = vand.u32 %v1193, 4294901760
    %v1471 = vsub.f32 %v1193, %v1470
    %1472 = vmatmul.f32.gmra.mxu0 %v1471
    %v1473 = vpop.f32.mrf.mxu0
    %v1474 = vadd.f32 %v1392, %v1473
    %v1475 = vand.u32 %v1196, 4294901760
    %v1476 = vsub.f32 %v1196, %v1475
    %1477 = vmatmul.f32.gmra.mxu0 %v1476
    %v1478 = vpop.f32.mrf.mxu0
    %v1479 = vadd.f32 %v1396, %v1478
    %v1480 = vand.u32 %v1199, 4294901760
    %v1481 = vsub.f32 %v1199, %v1480
    %1482 = vmatmul.f32.gmra.mxu0 %v1481
    %v1483 = vpop.f32.mrf.mxu0
    %v1484 = vadd.f32 %v1400, %v1483
    %v1485 = vand.u32 %v1202, 4294901760
    %v1486 = vsub.f32 %v1202, %v1485
    %1487 = vmatmul.f32.gmra.mxu0 %v1486
    %v1488 = vpop.f32.mrf.mxu0
    %v1489 = vadd.f32 %v1404, %v1488
    %1490 = vdwg.mxu0
    %1491 = vmatpush.msra.mxu0 0.0
    %1492 = vmatpush.msra.mxu0 0.0
    %1493 = vmatpush.msra.mxu0 0.0
    %1494 = vmatpush.msra.mxu0 0.0
    %1495 = vmatpush.msra.mxu0 0.0
    %1496 = vmatpush.msra.mxu0 0.0
    %1497 = vmatpush.msra.mxu0 0.0
    %1498 = vmatpush.msra.mxu0 0.0
    %1499 = vmatpush.msra.mxu0 0.0
    %1500 = vmatpush.msra.mxu0 0.0
    %1501 = vmatpush.msra.mxu0 0.0
    %1502 = vmatpush.msra.mxu0 0.0
    %v1503 = vand.u32 %v1115, 4294901760
    %1504 = vmatpush.msra.mxu0 %v1503
    %v1505 = vand.u32 %v1114, 4294901760
    %1506 = vmatpush.msra.mxu0 %v1505
    %v1507 = vand.u32 %v1113, 4294901760
    %1508 = vmatpush.msra.mxu0 %v1507
    %v1509 = vand.u32 %v1112, 4294901760
    %1510 = vmatpush.msra.mxu0 %v1509
    %v1511 = vand.u32 %v1169, 4294901760
    %v1512 = vsub.f32 %v1169, %v1511
    %v1513 = vand.u32 %v1512, 4294901760
    %1514 = vmatmul.f32.gmra.mxu0 %v1513
    %v1515 = vpop.f32.mrf.mxu0
    %v1516 = vadd.f32 %v1434, %v1515
    %v1517 = vand.u32 %v1172, 4294901760
    %v1518 = vsub.f32 %v1172, %v1517
    %v1519 = vand.u32 %v1518, 4294901760
    %1520 = vmatmul.f32.gmra.mxu0 %v1519
    %v1521 = vpop.f32.mrf.mxu0
    %v1522 = vadd.f32 %v1439, %v1521
    %v1523 = vand.u32 %v1175, 4294901760
    %v1524 = vsub.f32 %v1175, %v1523
    %v1525 = vand.u32 %v1524, 4294901760
    %1526 = vmatmul.f32.gmra.mxu0 %v1525
    %v1527 = vpop.f32.mrf.mxu0
    %v1528 = vadd.f32 %v1444, %v1527
    %v1529 = vand.u32 %v1178, 4294901760
    %v1530 = vsub.f32 %v1178, %v1529
    %v1531 = vand.u32 %v1530, 4294901760
    %1532 = vmatmul.f32.gmra.mxu0 %v1531
    %v1533 = vpop.f32.mrf.mxu0
    %v1534 = vadd.f32 %v1449, %v1533
    %v1535 = vand.u32 %v1181, 4294901760
    %v1536 = vsub.f32 %v1181, %v1535
    %v1537 = vand.u32 %v1536, 4294901760
    %1538 = vmatmul.f32.gmra.mxu0 %v1537
    %v1539 = vpop.f32.mrf.mxu0
    %v1540 = vadd.f32 %v1454, %v1539
    %v1541 = vand.u32 %v1184, 4294901760
    %v1542 = vsub.f32 %v1184, %v1541
    %v1543 = vand.u32 %v1542, 4294901760
    %1544 = vmatmul.f32.gmra.mxu0 %v1543
    %v1545 = vpop.f32.mrf.mxu0
    %v1546 = vadd.f32 %v1459, %v1545
    %v1547 = vand.u32 %v1187, 4294901760
    %v1548 = vsub.f32 %v1187, %v1547
    %v1549 = vand.u32 %v1548, 4294901760
    %1550 = vmatmul.f32.gmra.mxu0 %v1549
    %v1551 = vpop.f32.mrf.mxu0
    %v1552 = vadd.f32 %v1464, %v1551
    %v1553 = vand.u32 %v1190, 4294901760
    %v1554 = vsub.f32 %v1190, %v1553
    %v1555 = vand.u32 %v1554, 4294901760
    %1556 = vmatmul.f32.gmra.mxu0 %v1555
    %v1557 = vpop.f32.mrf.mxu0
    %v1558 = vadd.f32 %v1469, %v1557
    %v1559 = vand.u32 %v1193, 4294901760
    %v1560 = vsub.f32 %v1193, %v1559
    %v1561 = vand.u32 %v1560, 4294901760
    %1562 = vmatmul.f32.gmra.mxu0 %v1561
    %v1563 = vpop.f32.mrf.mxu0
    %v1564 = vadd.f32 %v1474, %v1563
    %v1565 = vand.u32 %v1196, 4294901760
    %v1566 = vsub.f32 %v1196, %v1565
    %v1567 = vand.u32 %v1566, 4294901760
    %1568 = vmatmul.f32.gmra.mxu0 %v1567
    %v1569 = vpop.f32.mrf.mxu0
    %v1570 = vadd.f32 %v1479, %v1569
    %v1571 = vand.u32 %v1199, 4294901760
    %v1572 = vsub.f32 %v1199, %v1571
    %v1573 = vand.u32 %v1572, 4294901760
    %1574 = vmatmul.f32.gmra.mxu0 %v1573
    %v1575 = vpop.f32.mrf.mxu0
    %v1576 = vadd.f32 %v1484, %v1575
    %v1577 = vand.u32 %v1202, 4294901760
    %v1578 = vsub.f32 %v1202, %v1577
    %v1579 = vand.u32 %v1578, 4294901760
    %1580 = vmatmul.f32.gmra.mxu0 %v1579
    %v1581 = vpop.f32.mrf.mxu0
    %v1582 = vadd.f32 %v1489, %v1581
    %1583 = vdwg.mxu0
    %1584 = vmatpush.msra.mxu0 0.0
    %1585 = vmatpush.msra.mxu0 0.0
    %1586 = vmatpush.msra.mxu0 0.0
    %1587 = vmatpush.msra.mxu0 0.0
    %1588 = vmatpush.msra.mxu0 0.0
    %1589 = vmatpush.msra.mxu0 0.0
    %1590 = vmatpush.msra.mxu0 0.0
    %1591 = vmatpush.msra.mxu0 0.0
    %1592 = vmatpush.msra.mxu0 0.0
    %1593 = vmatpush.msra.mxu0 0.0
    %1594 = vmatpush.msra.mxu0 0.0
    %1595 = vmatpush.msra.mxu0 0.0
    %v1596 = vand.u32 %v1115, 4294901760
    %v1597 = vsub.f32 %v1115, %v1596
    %v1598 = vand.u32 %v1597, 4294901760
    %1599 = vmatpush.msra.mxu0 %v1598
    %v1600 = vand.u32 %v1114, 4294901760
    %v1601 = vsub.f32 %v1114, %v1600
    %v1602 = vand.u32 %v1601, 4294901760
    %1603 = vmatpush.msra.mxu0 %v1602
    %v1604 = vand.u32 %v1113, 4294901760
    %v1605 = vsub.f32 %v1113, %v1604
    %v1606 = vand.u32 %v1605, 4294901760
    %1607 = vmatpush.msra.mxu0 %v1606
    %v1608 = vand.u32 %v1112, 4294901760
    %v1609 = vsub.f32 %v1112, %v1608
    %v1610 = vand.u32 %v1609, 4294901760
    %1611 = vmatpush.msra.mxu0 %v1610
    %v1612 = vand.u32 %v1169, 4294901760
    %1613 = vmatmul.f32.gmra.mxu0 %v1612
    %v1614 = vpop.f32.mrf.mxu0
    %v1615 = vadd.f32 %v1516, %v1614
    %v1616 = vand.u32 %v1172, 4294901760
    %1617 = vmatmul.f32.gmra.mxu0 %v1616
    %v1618 = vpop.f32.mrf.mxu0
    %v1619 = vadd.f32 %v1522, %v1618
    %v1620 = vand.u32 %v1175, 4294901760
    %1621 = vmatmul.f32.gmra.mxu0 %v1620
    %v1622 = vpop.f32.mrf.mxu0
    %v1623 = vadd.f32 %v1528, %v1622
    %v1624 = vand.u32 %v1178, 4294901760
    %1625 = vmatmul.f32.gmra.mxu0 %v1624
    %v1626 = vpop.f32.mrf.mxu0
    %v1627 = vadd.f32 %v1534, %v1626
    %v1628 = vand.u32 %v1181, 4294901760
    %1629 = vmatmul.f32.gmra.mxu0 %v1628
    %v1630 = vpop.f32.mrf.mxu0
    %v1631 = vadd.f32 %v1540, %v1630
    %v1632 = vand.u32 %v1184, 4294901760
    %1633 = vmatmul.f32.gmra.mxu0 %v1632
    %v1634 = vpop.f32.mrf.mxu0
    %v1635 = vadd.f32 %v1546, %v1634
    %v1636 = vand.u32 %v1187, 4294901760
    %1637 = vmatmul.f32.gmra.mxu0 %v1636
    %v1638 = vpop.f32.mrf.mxu0
    %v1639 = vadd.f32 %v1552, %v1638
    %v1640 = vand.u32 %v1190, 4294901760
    %1641 = vmatmul.f32.gmra.mxu0 %v1640
    %v1642 = vpop.f32.mrf.mxu0
    %v1643 = vadd.f32 %v1558, %v1642
    %v1644 = vand.u32 %v1193, 4294901760
    %1645 = vmatmul.f32.gmra.mxu0 %v1644
    %v1646 = vpop.f32.mrf.mxu0
    %v1647 = vadd.f32 %v1564, %v1646
    %v1648 = vand.u32 %v1196, 4294901760
    %1649 = vmatmul.f32.gmra.mxu0 %v1648
    %v1650 = vpop.f32.mrf.mxu0
    %v1651 = vadd.f32 %v1570, %v1650
    %v1652 = vand.u32 %v1199, 4294901760
    %1653 = vmatmul.f32.gmra.mxu0 %v1652
    %v1654 = vpop.f32.mrf.mxu0
    %v1655 = vadd.f32 %v1576, %v1654
    %v1656 = vand.u32 %v1202, 4294901760
    %1657 = vmatmul.f32.gmra.mxu0 %v1656
    %v1658 = vpop.f32.mrf.mxu0
    %v1659 = vadd.f32 %v1582, %v1658
    %1660 = vdwg.mxu0
    %1661 = vmatpush.msra.mxu0 0.0
    %1662 = vmatpush.msra.mxu0 0.0
    %1663 = vmatpush.msra.mxu0 0.0
    %1664 = vmatpush.msra.mxu0 0.0
    %1665 = vmatpush.msra.mxu0 0.0
    %1666 = vmatpush.msra.mxu0 0.0
    %1667 = vmatpush.msra.mxu0 0.0
    %1668 = vmatpush.msra.mxu0 0.0
    %1669 = vmatpush.msra.mxu0 0.0
    %1670 = vmatpush.msra.mxu0 0.0
    %1671 = vmatpush.msra.mxu0 0.0
    %1672 = vmatpush.msra.mxu0 0.0
    %v1673 = vand.u32 %v1115, 4294901760
    %1674 = vmatpush.msra.mxu0 %v1673
    %v1675 = vand.u32 %v1114, 4294901760
    %1676 = vmatpush.msra.mxu0 %v1675
    %v1677 = vand.u32 %v1113, 4294901760
    %1678 = vmatpush.msra.mxu0 %v1677
    %v1679 = vand.u32 %v1112, 4294901760
    %1680 = vmatpush.msra.mxu0 %v1679
    %v1681 = vand.u32 %v1169, 4294901760
    %1682 = vmatmul.f32.gmra.mxu0 %v1681
    %v1683 = vpop.f32.mrf.mxu0
    %v1684 = vadd.f32 %v1615, %v1683
    %v1685 = vand.u32 %v1172, 4294901760
    %1686 = vmatmul.f32.gmra.mxu0 %v1685
    %v1687 = vpop.f32.mrf.mxu0
    %v1688 = vadd.f32 %v1619, %v1687
    %v1689 = vand.u32 %v1175, 4294901760
    %1690 = vmatmul.f32.gmra.mxu0 %v1689
    %v1691 = vpop.f32.mrf.mxu0
    %v1692 = vadd.f32 %v1623, %v1691
    %v1693 = vand.u32 %v1178, 4294901760
    %1694 = vmatmul.f32.gmra.mxu0 %v1693
    %v1695 = vpop.f32.mrf.mxu0
    %v1696 = vadd.f32 %v1627, %v1695
    %v1697 = vand.u32 %v1181, 4294901760
    %1698 = vmatmul.f32.gmra.mxu0 %v1697
    %v1699 = vpop.f32.mrf.mxu0
    %v1700 = vadd.f32 %v1631, %v1699
    %v1701 = vand.u32 %v1184, 4294901760
    %1702 = vmatmul.f32.gmra.mxu0 %v1701
    %v1703 = vpop.f32.mrf.mxu0
    %v1704 = vadd.f32 %v1635, %v1703
    %v1705 = vand.u32 %v1187, 4294901760
    %1706 = vmatmul.f32.gmra.mxu0 %v1705
    %v1707 = vpop.f32.mrf.mxu0
    %v1708 = vadd.f32 %v1639, %v1707
    %v1709 = vand.u32 %v1190, 4294901760
    %1710 = vmatmul.f32.gmra.mxu0 %v1709
    %v1711 = vpop.f32.mrf.mxu0
    %v1712 = vadd.f32 %v1643, %v1711
    %v1713 = vand.u32 %v1193, 4294901760
    %1714 = vmatmul.f32.gmra.mxu0 %v1713
    %v1715 = vpop.f32.mrf.mxu0
    %v1716 = vadd.f32 %v1647, %v1715
    %v1717 = vand.u32 %v1196, 4294901760
    %1718 = vmatmul.f32.gmra.mxu0 %v1717
    %v1719 = vpop.f32.mrf.mxu0
    %v1720 = vadd.f32 %v1651, %v1719
    %v1721 = vand.u32 %v1199, 4294901760
    %1722 = vmatmul.f32.gmra.mxu0 %v1721
    %v1723 = vpop.f32.mrf.mxu0
    %v1724 = vadd.f32 %v1655, %v1723
    %v1725 = vand.u32 %v1202, 4294901760
    %1726 = vmatmul.f32.gmra.mxu0 %v1725
    %v1727 = vpop.f32.mrf.mxu0
    %v1728 = vadd.f32 %v1659, %v1727
    %1729 = vdwg.mxu0
    %v1730 = vxor.u32 %v1716, 2147483648
    %v1731 = vxor.u32 %v1720, 2147483648
    %v1732 = vxor.u32 %v1724, 2147483648
    %v1733 = vxor.u32 %v1728, 2147483648
    %v1734 = vmul.f32 %v1730, 1.442695
    %v1735 = vpow.pop %v1734
    %v1736 = vmul.f32 %v1731, 1.442695
    %v1737 = vpow.pop %v1736
    %v1738 = vmul.f32 %v1732, 1.442695
    %v1739 = vpow.pop %v1738
    %v1740 = vmul.f32 %v1733, 1.442695
    %v1741 = vpow.pop %v1740
    %v1742 = vadd.f32 %v1735, 1.0
    %v1743 = vadd.f32 %v1737, 1.0
    %v1744 = vadd.f32 %v1739, 1.0
    %v1745 = vadd.f32 %v1741, 1.0
    %v1746 = vrcp.pop %v1742
    %v1747 = vmul.f32 %v1742, %v1746
    %v1748 = vsub.f32 1.0, %v1747
    %v1749 = vmul.f32 %v1746, %v1748
    %v1750 = vadd.f32 %v1746, %v1749
    %vm1751 = vweird.f32 %v1742
    %vm1752 = vweird.f32 %v1746
    %vm1753 = vmor %vm1751, %vm1752
    %v1754 = vsel %vm1753, %v1746, %v1750
    %v1755 = vand.u32 2147483647, %v1742
    %vm1756 = vcmp.eq.f32.partialorder %v1755, 8.507059e+37
    %v1757 = vand.u32 %v1742, 2147483648
    %v1758 = vor.u32 1.1754944e-38, %v1757
    %v1759 = vsel %vm1756, %v1758, %v1754
    %v1760 = vmul.f32 1.0, %v1759
    %v1761 = vrcp.pop %v1743
    %v1762 = vmul.f32 %v1743, %v1761
    %v1763 = vsub.f32 1.0, %v1762
    %v1764 = vmul.f32 %v1761, %v1763
    %v1765 = vadd.f32 %v1761, %v1764
    %vm1766 = vweird.f32 %v1743
    %vm1767 = vweird.f32 %v1761
    %vm1768 = vmor %vm1766, %vm1767
    %v1769 = vsel %vm1768, %v1761, %v1765
    %v1770 = vand.u32 2147483647, %v1743
    %vm1771 = vcmp.eq.f32.partialorder %v1770, 8.507059e+37
    %v1772 = vand.u32 %v1743, 2147483648
    %v1773 = vor.u32 1.1754944e-38, %v1772
    %v1774 = vsel %vm1771, %v1773, %v1769
    %v1775 = vmul.f32 1.0, %v1774
    %v1776 = vrcp.pop %v1744
    %v1777 = vmul.f32 %v1744, %v1776
    %v1778 = vsub.f32 1.0, %v1777
    %v1779 = vmul.f32 %v1776, %v1778
    %v1780 = vadd.f32 %v1776, %v1779
    %vm1781 = vweird.f32 %v1744
    %vm1782 = vweird.f32 %v1776
    %vm1783 = vmor %vm1781, %vm1782
    %v1784 = vsel %vm1783, %v1776, %v1780
    %v1785 = vand.u32 2147483647, %v1744
    %vm1786 = vcmp.eq.f32.partialorder %v1785, 8.507059e+37
    %v1787 = vand.u32 %v1744, 2147483648
    %v1788 = vor.u32 1.1754944e-38, %v1787
    %v1789 = vsel %vm1786, %v1788, %v1784
    %v1790 = vmul.f32 1.0, %v1789
    %v1791 = vrcp.pop %v1745
    %v1792 = vmul.f32 %v1745, %v1791
    %v1793 = vsub.f32 1.0, %v1792
    %v1794 = vmul.f32 %v1791, %v1793
    %v1795 = vadd.f32 %v1791, %v1794
    %vm1796 = vweird.f32 %v1745
    %vm1797 = vweird.f32 %v1791
    %vm1798 = vmor %vm1796, %vm1797
    %v1799 = vsel %vm1798, %v1791, %v1795
    %v1800 = vand.u32 2147483647, %v1745
    %vm1801 = vcmp.eq.f32.partialorder %v1800, 8.507059e+37
    %v1802 = vand.u32 %v1745, 2147483648
    %v1803 = vor.u32 1.1754944e-38, %v1802
    %v1804 = vsel %vm1801, %v1803, %v1799
    %v1805 = vmul.f32 1.0, %v1804
    %v1806 = vxor.u32 %v1684, 2147483648
    %v1807 = vxor.u32 %v1688, 2147483648
    %v1808 = vxor.u32 %v1692, 2147483648
    %v1809 = vxor.u32 %v1696, 2147483648
    %v1810 = vmul.f32 %v1806, 1.442695
    %v1811 = vpow.pop %v1810
    %v1812 = vmul.f32 %v1807, 1.442695
    %v1813 = vpow.pop %v1812
    %v1814 = vmul.f32 %v1808, 1.442695
    %v1815 = vpow.pop %v1814
    %v1816 = vmul.f32 %v1809, 1.442695
    %v1817 = vpow.pop %v1816
    %v1818 = vadd.f32 %v1811, 1.0
    %v1819 = vadd.f32 %v1813, 1.0
    %v1820 = vadd.f32 %v1815, 1.0
    %v1821 = vadd.f32 %v1817, 1.0
    %v1822 = vrcp.pop %v1818
    %v1823 = vmul.f32 %v1818, %v1822
    %v1824 = vsub.f32 1.0, %v1823
    %v1825 = vmul.f32 %v1822, %v1824
    %v1826 = vadd.f32 %v1822, %v1825
    %vm1827 = vweird.f32 %v1818
    %vm1828 = vweird.f32 %v1822
    %vm1829 = vmor %vm1827, %vm1828
    %v1830 = vsel %vm1829, %v1822, %v1826
    %v1831 = vand.u32 2147483647, %v1818
    %vm1832 = vcmp.eq.f32.partialorder %v1831, 8.507059e+37
    %v1833 = vand.u32 %v1818, 2147483648
    %v1834 = vor.u32 1.1754944e-38, %v1833
    %v1835 = vsel %vm1832, %v1834, %v1830
    %v1836 = vmul.f32 1.0, %v1835
    %v1837 = vrcp.pop %v1819
    %v1838 = vmul.f32 %v1819, %v1837
    %v1839 = vsub.f32 1.0, %v1838
    %v1840 = vmul.f32 %v1837, %v1839
    %v1841 = vadd.f32 %v1837, %v1840
    %vm1842 = vweird.f32 %v1819
    %vm1843 = vweird.f32 %v1837
    %vm1844 = vmor %vm1842, %vm1843
    %v1845 = vsel %vm1844, %v1837, %v1841
    %v1846 = vand.u32 2147483647, %v1819
    %vm1847 = vcmp.eq.f32.partialorder %v1846, 8.507059e+37
    %v1848 = vand.u32 %v1819, 2147483648
    %v1849 = vor.u32 1.1754944e-38, %v1848
    %v1850 = vsel %vm1847, %v1849, %v1845
    %v1851 = vmul.f32 1.0, %v1850
    %v1852 = vrcp.pop %v1820
    %v1853 = vmul.f32 %v1820, %v1852
    %v1854 = vsub.f32 1.0, %v1853
    %v1855 = vmul.f32 %v1852, %v1854
    %v1856 = vadd.f32 %v1852, %v1855
    %vm1857 = vweird.f32 %v1820
    %vm1858 = vweird.f32 %v1852
    %vm1859 = vmor %vm1857, %vm1858
    %v1860 = vsel %vm1859, %v1852, %v1856
    %v1861 = vand.u32 2147483647, %v1820
    %vm1862 = vcmp.eq.f32.partialorder %v1861, 8.507059e+37
    %v1863 = vand.u32 %v1820, 2147483648
    %v1864 = vor.u32 1.1754944e-38, %v1863
    %v1865 = vsel %vm1862, %v1864, %v1860
    %v1866 = vmul.f32 1.0, %v1865
    %v1867 = vrcp.pop %v1821
    %v1868 = vmul.f32 %v1821, %v1867
    %v1869 = vsub.f32 1.0, %v1868
    %v1870 = vmul.f32 %v1867, %v1869
    %v1871 = vadd.f32 %v1867, %v1870
    %vm1872 = vweird.f32 %v1821
    %vm1873 = vweird.f32 %v1867
    %vm1874 = vmor %vm1872, %vm1873
    %v1875 = vsel %vm1874, %v1867, %v1871
    %v1876 = vand.u32 2147483647, %v1821
    %vm1877 = vcmp.eq.f32.partialorder %v1876, 8.507059e+37
    %v1878 = vand.u32 %v1821, 2147483648
    %v1879 = vor.u32 1.1754944e-38, %v1878
    %v1880 = vsel %vm1877, %v1879, %v1875
    %v1881 = vmul.f32 1.0, %v1880
    %v1882 = vtanh.pop %v1700
    %v1883 = vtanh.pop %v1704
    %v1884 = vtanh.pop %v1708
    %v1885 = vtanh.pop %v1712
    %v1886 = vmul.f32 %v1836, %v1882
    %v1887 = vmul.f32 %v1851, %v1883
    %v1888 = vmul.f32 %v1866, %v1884
    %v1889 = vmul.f32 %v1881, %v1885
    %v1890 = vtanh.pop %v1886
    %v1891 = vtanh.pop %v1887
    %v1892 = vtanh.pop %v1888
    %v1893 = vtanh.pop %v1889
    %v1894 = vmul.f32 %v1760, %v1890
    %v1895 = vmul.f32 %v1775, %v1891
    %v1896 = vmul.f32 %v1790, %v1892
    %v1897 = vmul.f32 %v1805, %v1893
    %1898 = vset.pattern.permute.xlu0 3
    %1899 = vperm.xlu0 %1898, %v87
    %v1900 = vpop.permute.xlu0 %1899
    %1902 = vset.pattern.permute.xlu0 3
    %1903 = vperm.xlu0 %1902, %v88
    %v1904 = vpop.permute.xlu0 %1903
    %1906 = vset.pattern.permute.xlu0 3
    %1907 = vperm.xlu0 %1906, %v89
    %v1908 = vpop.permute.xlu0 %1907
    %1910 = vset.pattern.permute.xlu0 3
    %1911 = vperm.xlu0 %1910, %v90
    %v1912 = vpop.permute.xlu0 %1911
    %1914 = vset.pattern.permute.xlu0 3
    %1915 = vperm.xlu0 %1914, %v91
    %v1916 = vpop.permute.xlu0 %1915
    %1918 = vset.pattern.permute.xlu0 3
    %1919 = vperm.xlu0 %1918, %v92
    %v1920 = vpop.permute.xlu0 %1919
    %1922 = vset.pattern.permute.xlu0 3
    %1923 = vperm.xlu0 %1922, %v93
    %v1924 = vpop.permute.xlu0 %1923
    %1926 = vset.pattern.permute.xlu0 3
    %1927 = vperm.xlu0 %1926, %v94
    %v1928 = vpop.permute.xlu0 %1927
    %1930 = vset.pattern.permute.xlu0 3
    %1931 = vperm.xlu0 %1930, %v95
    %v1932 = vpop.permute.xlu0 %1931
    %1934 = vset.pattern.permute.xlu0 3
    %1935 = vperm.xlu0 %1934, %v96
    %v1936 = vpop.permute.xlu0 %1935
    %1938 = vset.pattern.permute.xlu0 3
    %1939 = vperm.xlu0 %1938, %v97
    %v1940 = vpop.permute.xlu0 %1939
    %1942 = vset.pattern.permute.xlu0 3
    %1943 = vperm.xlu0 %1942, %v98
    %v1944 = vpop.permute.xlu0 %1943
    %1947 = vset.pattern.permute.xlu0 3
    %1948 = vperm.xlu0 %1947, %v99
    %v1949 = vpop.permute.xlu0 %1948
    %1952 = vset.pattern.permute.xlu0 3
    %1953 = vperm.xlu0 %1952, %v100
    %v1954 = vpop.permute.xlu0 %1953
    %1957 = vset.pattern.permute.xlu0 3
    %1958 = vperm.xlu0 %1957, %v101
    %v1959 = vpop.permute.xlu0 %1958
    %1962 = vset.pattern.permute.xlu0 3
    %1963 = vperm.xlu0 %1962, %v102
    %v1964 = vpop.permute.xlu0 %1963
    %1967 = vset.pattern.permute.xlu0 3
    %1968 = vperm.xlu0 %1967, %v103
    %v1969 = vpop.permute.xlu0 %1968
    %1972 = vset.pattern.permute.xlu0 3
    %1973 = vperm.xlu0 %1972, %v104
    %v1974 = vpop.permute.xlu0 %1973
    %1977 = vset.pattern.permute.xlu0 3
    %1978 = vperm.xlu0 %1977, %v105
    %v1979 = vpop.permute.xlu0 %1978
    %1982 = vset.pattern.permute.xlu0 3
    %1983 = vperm.xlu0 %1982, %v106
    %v1984 = vpop.permute.xlu0 %1983
    %1987 = vset.pattern.permute.xlu0 3
    %1988 = vperm.xlu0 %1987, %v107
    %v1989 = vpop.permute.xlu0 %1988
    %1992 = vset.pattern.permute.xlu0 3
    %1993 = vperm.xlu0 %1992, %v108
    %v1994 = vpop.permute.xlu0 %1993
    %1997 = vset.pattern.permute.xlu0 3
    %1998 = vperm.xlu0 %1997, %v109
    %v1999 = vpop.permute.xlu0 %1998
    %2002 = vset.pattern.permute.xlu0 3
    %2003 = vperm.xlu0 %2002, %v110
    %v2004 = vpop.permute.xlu0 %2003
    %v2007 = vsel %vm677, %v44, 0
    %v2010 = vsel %vm677, %v45, 0
    %v2013 = vsel %vm677, %v46, 0
    %v2016 = vsel %vm677, %v47, 0
    %v2019 = vsel %vm677, %v48, 0
    %v2022 = vsel %vm677, %v49, 0
    %v2025 = vsel %vm677, %v50, 0
    %v2028 = vsel %vm677, %v51, 0
    %v2031 = vsel %vm677, %v52, 0
    %v2034 = vsel %vm677, %v53, 0
    %v2037 = vsel %vm677, %v54, 0
    %v2040 = vsel %vm677, %v55, 0
    %v2043 = vsel %vm677, %v56, 0
    %v2046 = vsel %vm677, %v57, 0
    %v2049 = vsel %vm677, %v58, 0
    %v2052 = vsel %vm677, %v59, 0
    %v2055 = vsel %vm677, %v60, 0
    %v2058 = vsel %vm677, %v61, 0
    %v2061 = vsel %vm677, %v62, 0
    %v2064 = vsel %vm677, %v63, 0
    %v2067 = vsel %vm677, %v64, 0
    %v2070 = vsel %vm677, %v65, 0
    %v2073 = vsel %vm677, %v66, 0
    %v2076 = vsel %vm677, %v67, 0
    %2078 = vmatpush.msra.mxu0 0.0
    %2079 = vmatpush.msra.mxu0 0.0
    %2080 = vmatpush.msra.mxu0 0.0
    %2081 = vmatpush.msra.mxu0 0.0
    %2082 = vmatpush.msra.mxu0 0.0
    %2083 = vmatpush.msra.mxu0 0.0
    %2084 = vmatpush.msra.mxu0 0.0
    %2085 = vmatpush.msra.mxu0 0.0
    %2086 = vmatpush.msra.mxu0 0.0
    %2087 = vmatpush.msra.mxu0 0.0
    %2088 = vmatpush.msra.mxu0 0.0
    %2089 = vmatpush.msra.mxu0 0.0
    %v2090 = vand.u32 %v1897, 4294901760
    %2091 = vmatpush.msra.mxu0 %v2090
    %v2092 = vand.u32 %v1896, 4294901760
    %2093 = vmatpush.msra.mxu0 %v2092
    %v2094 = vand.u32 %v1895, 4294901760
    %2095 = vmatpush.msra.mxu0 %v2094
    %v2096 = vand.u32 %v1894, 4294901760
    %2097 = vmatpush.msra.mxu0 %v2096
    %v2098 = vand.u32 %v2007, 4294901760
    %v2099 = vsub.f32 %v2007, %v2098
    %v2100 = vand.u32 %v2099, 4294901760
    %v2101 = vsub.f32 %v2099, %v2100
    %v2102 = vand.u32 %v2101, 4294901760
    %2103 = vmatmul.f32.gmra.mxu0 %v2102
    %v2104 = vpop.f32.mrf.mxu0
    %v2105 = vadd.f32 %v1900, %v2104
    %v2106 = vand.u32 %v2010, 4294901760
    %v2107 = vsub.f32 %v2010, %v2106
    %v2108 = vand.u32 %v2107, 4294901760
    %v2109 = vsub.f32 %v2107, %v2108
    %v2110 = vand.u32 %v2109, 4294901760
    %2111 = vmatmul.f32.gmra.mxu0 %v2110
    %v2112 = vpop.f32.mrf.mxu0
    %v2113 = vadd.f32 %v1904, %v2112
    %v2114 = vand.u32 %v2013, 4294901760
    %v2115 = vsub.f32 %v2013, %v2114
    %v2116 = vand.u32 %v2115, 4294901760
    %v2117 = vsub.f32 %v2115, %v2116
    %v2118 = vand.u32 %v2117, 4294901760
    %2119 = vmatmul.f32.gmra.mxu0 %v2118
    %v2120 = vpop.f32.mrf.mxu0
    %v2121 = vadd.f32 %v1908, %v2120
    %v2122 = vand.u32 %v2016, 4294901760
    %v2123 = vsub.f32 %v2016, %v2122
    %v2124 = vand.u32 %v2123, 4294901760
    %v2125 = vsub.f32 %v2123, %v2124
    %v2126 = vand.u32 %v2125, 4294901760
    %2127 = vmatmul.f32.gmra.mxu0 %v2126
    %v2128 = vpop.f32.mrf.mxu0
    %v2129 = vadd.f32 %v1912, %v2128
    %v2130 = vand.u32 %v2019, 4294901760
    %v2131 = vsub.f32 %v2019, %v2130
    %v2132 = vand.u32 %v2131, 4294901760
    %v2133 = vsub.f32 %v2131, %v2132
    %v2134 = vand.u32 %v2133, 4294901760
    %2135 = vmatmul.f32.gmra.mxu0 %v2134
    %v2136 = vpop.f32.mrf.mxu0
    %v2137 = vadd.f32 %v1916, %v2136
    %v2138 = vand.u32 %v2022, 4294901760
    %v2139 = vsub.f32 %v2022, %v2138
    %v2140 = vand.u32 %v2139, 4294901760
    %v2141 = vsub.f32 %v2139, %v2140
    %v2142 = vand.u32 %v2141, 4294901760
    %2143 = vmatmul.f32.gmra.mxu0 %v2142
    %v2144 = vpop.f32.mrf.mxu0
    %v2145 = vadd.f32 %v1920, %v2144
    %v2146 = vand.u32 %v2025, 4294901760
    %v2147 = vsub.f32 %v2025, %v2146
    %v2148 = vand.u32 %v2147, 4294901760
    %v2149 = vsub.f32 %v2147, %v2148
    %v2150 = vand.u32 %v2149, 4294901760
    %2151 = vmatmul.f32.gmra.mxu0 %v2150
    %v2152 = vpop.f32.mrf.mxu0
    %v2153 = vadd.f32 %v1924, %v2152
    %v2154 = vand.u32 %v2028, 4294901760
    %v2155 = vsub.f32 %v2028, %v2154
    %v2156 = vand.u32 %v2155, 4294901760
    %v2157 = vsub.f32 %v2155, %v2156
    %v2158 = vand.u32 %v2157, 4294901760
    %2159 = vmatmul.f32.gmra.mxu0 %v2158
    %v2160 = vpop.f32.mrf.mxu0
    %v2161 = vadd.f32 %v1928, %v2160
    %v2162 = vand.u32 %v2031, 4294901760
    %v2163 = vsub.f32 %v2031, %v2162
    %v2164 = vand.u32 %v2163, 4294901760
    %v2165 = vsub.f32 %v2163, %v2164
    %v2166 = vand.u32 %v2165, 4294901760
    %2167 = vmatmul.f32.gmra.mxu0 %v2166
    %v2168 = vpop.f32.mrf.mxu0
    %v2169 = vadd.f32 %v1932, %v2168
    %v2170 = vand.u32 %v2034, 4294901760
    %v2171 = vsub.f32 %v2034, %v2170
    %v2172 = vand.u32 %v2171, 4294901760
    %v2173 = vsub.f32 %v2171, %v2172
    %v2174 = vand.u32 %v2173, 4294901760
    %2175 = vmatmul.f32.gmra.mxu0 %v2174
    %v2176 = vpop.f32.mrf.mxu0
    %v2177 = vadd.f32 %v1936, %v2176
    %v2178 = vand.u32 %v2037, 4294901760
    %v2179 = vsub.f32 %v2037, %v2178
    %v2180 = vand.u32 %v2179, 4294901760
    %v2181 = vsub.f32 %v2179, %v2180
    %v2182 = vand.u32 %v2181, 4294901760
    %2183 = vmatmul.f32.gmra.mxu0 %v2182
    %v2184 = vpop.f32.mrf.mxu0
    %v2185 = vadd.f32 %v1940, %v2184
    %v2186 = vand.u32 %v2040, 4294901760
    %v2187 = vsub.f32 %v2040, %v2186
    %v2188 = vand.u32 %v2187, 4294901760
    %v2189 = vsub.f32 %v2187, %v2188
    %v2190 = vand.u32 %v2189, 4294901760
    %2191 = vmatmul.f32.gmra.mxu0 %v2190
    %v2192 = vpop.f32.mrf.mxu0
    %v2193 = vadd.f32 %v1944, %v2192
    %v2194 = vand.u32 %v2043, 4294901760
    %v2195 = vsub.f32 %v2043, %v2194
    %v2196 = vand.u32 %v2195, 4294901760
    %v2197 = vsub.f32 %v2195, %v2196
    %v2198 = vand.u32 %v2197, 4294901760
    %2199 = vmatmul.f32.gmra.mxu0 %v2198
    %v2200 = vpop.f32.mrf.mxu0
    %v2201 = vadd.f32 %v1949, %v2200
    %v2202 = vand.u32 %v2046, 4294901760
    %v2203 = vsub.f32 %v2046, %v2202
    %v2204 = vand.u32 %v2203, 4294901760
    %v2205 = vsub.f32 %v2203, %v2204
    %v2206 = vand.u32 %v2205, 4294901760
    %2207 = vmatmul.f32.gmra.mxu0 %v2206
    %v2208 = vpop.f32.mrf.mxu0
    %v2209 = vadd.f32 %v1954, %v2208
    %v2210 = vand.u32 %v2049, 4294901760
    %v2211 = vsub.f32 %v2049, %v2210
    %v2212 = vand.u32 %v2211, 4294901760
    %v2213 = vsub.f32 %v2211, %v2212
    %v2214 = vand.u32 %v2213, 4294901760
    %2215 = vmatmul.f32.gmra.mxu0 %v2214
    %v2216 = vpop.f32.mrf.mxu0
    %v2217 = vadd.f32 %v1959, %v2216
    %v2218 = vand.u32 %v2052, 4294901760
    %v2219 = vsub.f32 %v2052, %v2218
    %v2220 = vand.u32 %v2219, 4294901760
    %v2221 = vsub.f32 %v2219, %v2220
    %v2222 = vand.u32 %v2221, 4294901760
    %2223 = vmatmul.f32.gmra.mxu0 %v2222
    %v2224 = vpop.f32.mrf.mxu0
    %v2225 = vadd.f32 %v1964, %v2224
    %v2226 = vand.u32 %v2055, 4294901760
    %v2227 = vsub.f32 %v2055, %v2226
    %v2228 = vand.u32 %v2227, 4294901760
    %v2229 = vsub.f32 %v2227, %v2228
    %v2230 = vand.u32 %v2229, 4294901760
    %2231 = vmatmul.f32.gmra.mxu0 %v2230
    %v2232 = vpop.f32.mrf.mxu0
    %v2233 = vadd.f32 %v1969, %v2232
    %v2234 = vand.u32 %v2058, 4294901760
    %v2235 = vsub.f32 %v2058, %v2234
    %v2236 = vand.u32 %v2235, 4294901760
    %v2237 = vsub.f32 %v2235, %v2236
    %v2238 = vand.u32 %v2237, 4294901760
    %2239 = vmatmul.f32.gmra.mxu0 %v2238
    %v2240 = vpop.f32.mrf.mxu0
    %v2241 = vadd.f32 %v1974, %v2240
    %v2242 = vand.u32 %v2061, 4294901760
    %v2243 = vsub.f32 %v2061, %v2242
    %v2244 = vand.u32 %v2243, 4294901760
    %v2245 = vsub.f32 %v2243, %v2244
    %v2246 = vand.u32 %v2245, 4294901760
    %2247 = vmatmul.f32.gmra.mxu0 %v2246
    %v2248 = vpop.f32.mrf.mxu0
    %v2249 = vadd.f32 %v1979, %v2248
    %v2250 = vand.u32 %v2064, 4294901760
    %v2251 = vsub.f32 %v2064, %v2250
    %v2252 = vand.u32 %v2251, 4294901760
    %v2253 = vsub.f32 %v2251, %v2252
    %v2254 = vand.u32 %v2253, 4294901760
    %2255 = vmatmul.f32.gmra.mxu0 %v2254
    %v2256 = vpop.f32.mrf.mxu0
    %v2257 = vadd.f32 %v1984, %v2256
    %v2258 = vand.u32 %v2067, 4294901760
    %v2259 = vsub.f32 %v2067, %v2258
    %v2260 = vand.u32 %v2259, 4294901760
    %v2261 = vsub.f32 %v2259, %v2260
    %v2262 = vand.u32 %v2261, 4294901760
    %2263 = vmatmul.f32.gmra.mxu0 %v2262
    %v2264 = vpop.f32.mrf.mxu0
    %v2265 = vadd.f32 %v1989, %v2264
    %v2266 = vand.u32 %v2070, 4294901760
    %v2267 = vsub.f32 %v2070, %v2266
    %v2268 = vand.u32 %v2267, 4294901760
    %v2269 = vsub.f32 %v2267, %v2268
    %v2270 = vand.u32 %v2269, 4294901760
    %2271 = vmatmul.f32.gmra.mxu0 %v2270
    %v2272 = vpop.f32.mrf.mxu0
    %v2273 = vadd.f32 %v1994, %v2272
    %v2274 = vand.u32 %v2073, 4294901760
    %v2275 = vsub.f32 %v2073, %v2274
    %v2276 = vand.u32 %v2275, 4294901760
    %v2277 = vsub.f32 %v2275, %v2276
    %v2278 = vand.u32 %v2277, 4294901760
    %2279 = vmatmul.f32.gmra.mxu0 %v2278
    %v2280 = vpop.f32.mrf.mxu0
    %v2281 = vadd.f32 %v1999, %v2280
    %v2282 = vand.u32 %v2076, 4294901760
    %v2283 = vsub.f32 %v2076, %v2282
    %v2284 = vand.u32 %v2283, 4294901760
    %v2285 = vsub.f32 %v2283, %v2284
    %v2286 = vand.u32 %v2285, 4294901760
    %2287 = vmatmul.f32.gmra.mxu0 %v2286
    %v2288 = vpop.f32.mrf.mxu0
    %v2289 = vadd.f32 %v2004, %v2288
    %2290 = vdwg.mxu0
    %2291 = vmatpush.msra.mxu0 0.0
    %2292 = vmatpush.msra.mxu0 0.0
    %2293 = vmatpush.msra.mxu0 0.0
    %2294 = vmatpush.msra.mxu0 0.0
    %2295 = vmatpush.msra.mxu0 0.0
    %2296 = vmatpush.msra.mxu0 0.0
    %2297 = vmatpush.msra.mxu0 0.0
    %2298 = vmatpush.msra.mxu0 0.0
    %2299 = vmatpush.msra.mxu0 0.0
    %2300 = vmatpush.msra.mxu0 0.0
    %2301 = vmatpush.msra.mxu0 0.0
    %2302 = vmatpush.msra.mxu0 0.0
    %v2303 = vand.u32 %v1897, 4294901760
    %v2304 = vsub.f32 %v1897, %v2303
    %v2305 = vand.u32 %v2304, 4294901760
    %v2306 = vsub.f32 %v2304, %v2305
    %v2307 = vand.u32 %v2306, 4294901760
    %2308 = vmatpush.msra.mxu0 %v2307
    %v2309 = vand.u32 %v1896, 4294901760
    %v2310 = vsub.f32 %v1896, %v2309
    %v2311 = vand.u32 %v2310, 4294901760
    %v2312 = vsub.f32 %v2310, %v2311
    %v2313 = vand.u32 %v2312, 4294901760
    %2314 = vmatpush.msra.mxu0 %v2313
    %v2315 = vand.u32 %v1895, 4294901760
    %v2316 = vsub.f32 %v1895, %v2315
    %v2317 = vand.u32 %v2316, 4294901760
    %v2318 = vsub.f32 %v2316, %v2317
    %v2319 = vand.u32 %v2318, 4294901760
    %2320 = vmatpush.msra.mxu0 %v2319
    %v2321 = vand.u32 %v1894, 4294901760
    %v2322 = vsub.f32 %v1894, %v2321
    %v2323 = vand.u32 %v2322, 4294901760
    %v2324 = vsub.f32 %v2322, %v2323
    %v2325 = vand.u32 %v2324, 4294901760
    %2326 = vmatpush.msra.mxu0 %v2325
    %v2327 = vand.u32 %v2007, 4294901760
    %2328 = vmatmul.f32.gmra.mxu0 %v2327
    %v2329 = vpop.f32.mrf.mxu0
    %v2330 = vadd.f32 %v2105, %v2329
    %v2331 = vand.u32 %v2010, 4294901760
    %2332 = vmatmul.f32.gmra.mxu0 %v2331
    %v2333 = vpop.f32.mrf.mxu0
    %v2334 = vadd.f32 %v2113, %v2333
    %v2335 = vand.u32 %v2013, 4294901760
    %2336 = vmatmul.f32.gmra.mxu0 %v2335
    %v2337 = vpop.f32.mrf.mxu0
    %v2338 = vadd.f32 %v2121, %v2337
    %v2339 = vand.u32 %v2016, 4294901760
    %2340 = vmatmul.f32.gmra.mxu0 %v2339
    %v2341 = vpop.f32.mrf.mxu0
    %v2342 = vadd.f32 %v2129, %v2341
    %v2343 = vand.u32 %v2019, 4294901760
    %2344 = vmatmul.f32.gmra.mxu0 %v2343
    %v2345 = vpop.f32.mrf.mxu0
    %v2346 = vadd.f32 %v2137, %v2345
    %v2347 = vand.u32 %v2022, 4294901760
    %2348 = vmatmul.f32.gmra.mxu0 %v2347
    %v2349 = vpop.f32.mrf.mxu0
    %v2350 = vadd.f32 %v2145, %v2349
    %v2351 = vand.u32 %v2025, 4294901760
    %2352 = vmatmul.f32.gmra.mxu0 %v2351
    %v2353 = vpop.f32.mrf.mxu0
    %v2354 = vadd.f32 %v2153, %v2353
    %v2355 = vand.u32 %v2028, 4294901760
    %2356 = vmatmul.f32.gmra.mxu0 %v2355
    %v2357 = vpop.f32.mrf.mxu0
    %v2358 = vadd.f32 %v2161, %v2357
    %v2359 = vand.u32 %v2031, 4294901760
    %2360 = vmatmul.f32.gmra.mxu0 %v2359
    %v2361 = vpop.f32.mrf.mxu0
    %v2362 = vadd.f32 %v2169, %v2361
    %v2363 = vand.u32 %v2034, 4294901760
    %2364 = vmatmul.f32.gmra.mxu0 %v2363
    %v2365 = vpop.f32.mrf.mxu0
    %v2366 = vadd.f32 %v2177, %v2365
    %v2367 = vand.u32 %v2037, 4294901760
    %2368 = vmatmul.f32.gmra.mxu0 %v2367
    %v2369 = vpop.f32.mrf.mxu0
    %v2370 = vadd.f32 %v2185, %v2369
    %v2371 = vand.u32 %v2040, 4294901760
    %2372 = vmatmul.f32.gmra.mxu0 %v2371
    %v2373 = vpop.f32.mrf.mxu0
    %v2374 = vadd.f32 %v2193, %v2373
    %v2375 = vand.u32 %v2043, 4294901760
    %2376 = vmatmul.f32.gmra.mxu0 %v2375
    %v2377 = vpop.f32.mrf.mxu0
    %v2378 = vadd.f32 %v2201, %v2377
    %v2379 = vand.u32 %v2046, 4294901760
    %2380 = vmatmul.f32.gmra.mxu0 %v2379
    %v2381 = vpop.f32.mrf.mxu0
    %v2382 = vadd.f32 %v2209, %v2381
    %v2383 = vand.u32 %v2049, 4294901760
    %2384 = vmatmul.f32.gmra.mxu0 %v2383
    %v2385 = vpop.f32.mrf.mxu0
    %v2386 = vadd.f32 %v2217, %v2385
    %v2387 = vand.u32 %v2052, 4294901760
    %2388 = vmatmul.f32.gmra.mxu0 %v2387
    %v2389 = vpop.f32.mrf.mxu0
    %v2390 = vadd.f32 %v2225, %v2389
    %v2391 = vand.u32 %v2055, 4294901760
    %2392 = vmatmul.f32.gmra.mxu0 %v2391
    %v2393 = vpop.f32.mrf.mxu0
    %v2394 = vadd.f32 %v2233, %v2393
    %v2395 = vand.u32 %v2058, 4294901760
    %2396 = vmatmul.f32.gmra.mxu0 %v2395
    %v2397 = vpop.f32.mrf.mxu0
    %v2398 = vadd.f32 %v2241, %v2397
    %v2399 = vand.u32 %v2061, 4294901760
    %2400 = vmatmul.f32.gmra.mxu0 %v2399
    %v2401 = vpop.f32.mrf.mxu0
    %v2402 = vadd.f32 %v2249, %v2401
    %v2403 = vand.u32 %v2064, 4294901760
    %2404 = vmatmul.f32.gmra.mxu0 %v2403
    %v2405 = vpop.f32.mrf.mxu0
    %v2406 = vadd.f32 %v2257, %v2405
    %v2407 = vand.u32 %v2067, 4294901760
    %2408 = vmatmul.f32.gmra.mxu0 %v2407
    %v2409 = vpop.f32.mrf.mxu0
    %v2410 = vadd.f32 %v2265, %v2409
    %v2411 = vand.u32 %v2070, 4294901760
    %2412 = vmatmul.f32.gmra.mxu0 %v2411
    %v2413 = vpop.f32.mrf.mxu0
    %v2414 = vadd.f32 %v2273, %v2413
    %v2415 = vand.u32 %v2073, 4294901760
    %2416 = vmatmul.f32.gmra.mxu0 %v2415
    %v2417 = vpop.f32.mrf.mxu0
    %v2418 = vadd.f32 %v2281, %v2417
    %v2419 = vand.u32 %v2076, 4294901760
    %2420 = vmatmul.f32.gmra.mxu0 %v2419
    %v2421 = vpop.f32.mrf.mxu0
    %v2422 = vadd.f32 %v2289, %v2421
    %2423 = vdwg.mxu0
    %2424 = vmatpush.msra.mxu0 0.0
    %2425 = vmatpush.msra.mxu0 0.0
    %2426 = vmatpush.msra.mxu0 0.0
    %2427 = vmatpush.msra.mxu0 0.0
    %2428 = vmatpush.msra.mxu0 0.0
    %2429 = vmatpush.msra.mxu0 0.0
    %2430 = vmatpush.msra.mxu0 0.0
    %2431 = vmatpush.msra.mxu0 0.0
    %2432 = vmatpush.msra.mxu0 0.0
    %2433 = vmatpush.msra.mxu0 0.0
    %2434 = vmatpush.msra.mxu0 0.0
    %2435 = vmatpush.msra.mxu0 0.0
    %v2436 = vand.u32 %v1897, 4294901760
    %v2437 = vsub.f32 %v1897, %v2436
    %2438 = vmatpush.msra.mxu0 %v2437
    %v2439 = vand.u32 %v1896, 4294901760
    %v2440 = vsub.f32 %v1896, %v2439
    %2441 = vmatpush.msra.mxu0 %v2440
    %v2442 = vand.u32 %v1895, 4294901760
    %v2443 = vsub.f32 %v1895, %v2442
    %2444 = vmatpush.msra.mxu0 %v2443
    %v2445 = vand.u32 %v1894, 4294901760
    %v2446 = vsub.f32 %v1894, %v2445
    %2447 = vmatpush.msra.mxu0 %v2446
    %v2448 = vand.u32 %v2007, 4294901760
    %v2449 = vsub.f32 %v2007, %v2448
    %2450 = vmatmul.f32.gmra.mxu0 %v2449
    %v2451 = vpop.f32.mrf.mxu0
    %v2452 = vadd.f32 %v2330, %v2451
    %v2453 = vand.u32 %v2010, 4294901760
    %v2454 = vsub.f32 %v2010, %v2453
    %2455 = vmatmul.f32.gmra.mxu0 %v2454
    %v2456 = vpop.f32.mrf.mxu0
    %v2457 = vadd.f32 %v2334, %v2456
    %v2458 = vand.u32 %v2013, 4294901760
    %v2459 = vsub.f32 %v2013, %v2458
    %2460 = vmatmul.f32.gmra.mxu0 %v2459
    %v2461 = vpop.f32.mrf.mxu0
    %v2462 = vadd.f32 %v2338, %v2461
    %v2463 = vand.u32 %v2016, 4294901760
    %v2464 = vsub.f32 %v2016, %v2463
    %2465 = vmatmul.f32.gmra.mxu0 %v2464
    %v2466 = vpop.f32.mrf.mxu0
    %v2467 = vadd.f32 %v2342, %v2466
    %v2468 = vand.u32 %v2019, 4294901760
    %v2469 = vsub.f32 %v2019, %v2468
    %2470 = vmatmul.f32.gmra.mxu0 %v2469
    %v2471 = vpop.f32.mrf.mxu0
    %v2472 = vadd.f32 %v2346, %v2471
    %v2473 = vand.u32 %v2022, 4294901760
    %v2474 = vsub.f32 %v2022, %v2473
    %2475 = vmatmul.f32.gmra.mxu0 %v2474
    %v2476 = vpop.f32.mrf.mxu0
    %v2477 = vadd.f32 %v2350, %v2476
    %v2478 = vand.u32 %v2025, 4294901760
    %v2479 = vsub.f32 %v2025, %v2478
    %2480 = vmatmul.f32.gmra.mxu0 %v2479
    %v2481 = vpop.f32.mrf.mxu0
    %v2482 = vadd.f32 %v2354, %v2481
    %v2483 = vand.u32 %v2028, 4294901760
    %v2484 = vsub.f32 %v2028, %v2483
    %2485 = vmatmul.f32.gmra.mxu0 %v2484
    %v2486 = vpop.f32.mrf.mxu0
    %v2487 = vadd.f32 %v2358, %v2486
    %v2488 = vand.u32 %v2031, 4294901760
    %v2489 = vsub.f32 %v2031, %v2488
    %2490 = vmatmul.f32.gmra.mxu0 %v2489
    %v2491 = vpop.f32.mrf.mxu0
    %v2492 = vadd.f32 %v2362, %v2491
    %v2493 = vand.u32 %v2034, 4294901760
    %v2494 = vsub.f32 %v2034, %v2493
    %2495 = vmatmul.f32.gmra.mxu0 %v2494
    %v2496 = vpop.f32.mrf.mxu0
    %v2497 = vadd.f32 %v2366, %v2496
    %v2498 = vand.u32 %v2037, 4294901760
    %v2499 = vsub.f32 %v2037, %v2498
    %2500 = vmatmul.f32.gmra.mxu0 %v2499
    %v2501 = vpop.f32.mrf.mxu0
    %v2502 = vadd.f32 %v2370, %v2501
    %v2503 = vand.u32 %v2040, 4294901760
    %v2504 = vsub.f32 %v2040, %v2503
    %2505 = vmatmul.f32.gmra.mxu0 %v2504
    %v2506 = vpop.f32.mrf.mxu0
    %v2507 = vadd.f32 %v2374, %v2506
    %v2508 = vand.u32 %v2043, 4294901760
    %v2509 = vsub.f32 %v2043, %v2508
    %2510 = vmatmul.f32.gmra.mxu0 %v2509
    %v2511 = vpop.f32.mrf.mxu0
    %v2512 = vadd.f32 %v2378, %v2511
    %v2513 = vand.u32 %v2046, 4294901760
    %v2514 = vsub.f32 %v2046, %v2513
    %2515 = vmatmul.f32.gmra.mxu0 %v2514
    %v2516 = vpop.f32.mrf.mxu0
    %v2517 = vadd.f32 %v2382, %v2516
    %v2518 = vand.u32 %v2049, 4294901760
    %v2519 = vsub.f32 %v2049, %v2518
    %2520 = vmatmul.f32.gmra.mxu0 %v2519
    %v2521 = vpop.f32.mrf.mxu0
    %v2522 = vadd.f32 %v2386, %v2521
    %v2523 = vand.u32 %v2052, 4294901760
    %v2524 = vsub.f32 %v2052, %v2523
    %2525 = vmatmul.f32.gmra.mxu0 %v2524
    %v2526 = vpop.f32.mrf.mxu0
    %v2527 = vadd.f32 %v2390, %v2526
    %v2528 = vand.u32 %v2055, 4294901760
    %v2529 = vsub.f32 %v2055, %v2528
    %2530 = vmatmul.f32.gmra.mxu0 %v2529
    %v2531 = vpop.f32.mrf.mxu0
    %v2532 = vadd.f32 %v2394, %v2531
    %v2533 = vand.u32 %v2058, 4294901760
    %v2534 = vsub.f32 %v2058, %v2533
    %2535 = vmatmul.f32.gmra.mxu0 %v2534
    %v2536 = vpop.f32.mrf.mxu0
    %v2537 = vadd.f32 %v2398, %v2536
    %v2538 = vand.u32 %v2061, 4294901760
    %v2539 = vsub.f32 %v2061, %v2538
    %2540 = vmatmul.f32.gmra.mxu0 %v2539
    %v2541 = vpop.f32.mrf.mxu0
    %v2542 = vadd.f32 %v2402, %v2541
    %v2543 = vand.u32 %v2064, 4294901760
    %v2544 = vsub.f32 %v2064, %v2543
    %2545 = vmatmul.f32.gmra.mxu0 %v2544
    %v2546 = vpop.f32.mrf.mxu0
    %v2547 = vadd.f32 %v2406, %v2546
    %v2548 = vand.u32 %v2067, 4294901760
    %v2549 = vsub.f32 %v2067, %v2548
    %2550 = vmatmul.f32.gmra.mxu0 %v2549
    %v2551 = vpop.f32.mrf.mxu0
    %v2552 = vadd.f32 %v2410, %v2551
    %v2553 = vand.u32 %v2070, 4294901760
    %v2554 = vsub.f32 %v2070, %v2553
    %2555 = vmatmul.f32.gmra.mxu0 %v2554
    %v2556 = vpop.f32.mrf.mxu0
    %v2557 = vadd.f32 %v2414, %v2556
    %v2558 = vand.u32 %v2073, 4294901760
    %v2559 = vsub.f32 %v2073, %v2558
    %2560 = vmatmul.f32.gmra.mxu0 %v2559
    %v2561 = vpop.f32.mrf.mxu0
    %v2562 = vadd.f32 %v2418, %v2561
    %v2563 = vand.u32 %v2076, 4294901760
    %v2564 = vsub.f32 %v2076, %v2563
    %2565 = vmatmul.f32.gmra.mxu0 %v2564
    %v2566 = vpop.f32.mrf.mxu0
    %v2567 = vadd.f32 %v2422, %v2566
    %2568 = vdwg.mxu0
    %2569 = vmatpush.msra.mxu0 0.0
    %2570 = vmatpush.msra.mxu0 0.0
    %2571 = vmatpush.msra.mxu0 0.0
    %2572 = vmatpush.msra.mxu0 0.0
    %2573 = vmatpush.msra.mxu0 0.0
    %2574 = vmatpush.msra.mxu0 0.0
    %2575 = vmatpush.msra.mxu0 0.0
    %2576 = vmatpush.msra.mxu0 0.0
    %2577 = vmatpush.msra.mxu0 0.0
    %2578 = vmatpush.msra.mxu0 0.0
    %2579 = vmatpush.msra.mxu0 0.0
    %2580 = vmatpush.msra.mxu0 0.0
    %v2581 = vand.u32 %v1897, 4294901760
    %2582 = vmatpush.msra.mxu0 %v2581
    %v2583 = vand.u32 %v1896, 4294901760
    %2584 = vmatpush.msra.mxu0 %v2583
    %v2585 = vand.u32 %v1895, 4294901760
    %2586 = vmatpush.msra.mxu0 %v2585
    %v2587 = vand.u32 %v1894, 4294901760
    %2588 = vmatpush.msra.mxu0 %v2587
    %v2589 = vand.u32 %v2007, 4294901760
    %v2590 = vsub.f32 %v2007, %v2589
    %v2591 = vand.u32 %v2590, 4294901760
    %2592 = vmatmul.f32.gmra.mxu0 %v2591
    %v2593 = vpop.f32.mrf.mxu0
    %v2594 = vadd.f32 %v2452, %v2593
    %v2595 = vand.u32 %v2010, 4294901760
    %v2596 = vsub.f32 %v2010, %v2595
    %v2597 = vand.u32 %v2596, 4294901760
    %2598 = vmatmul.f32.gmra.mxu0 %v2597
    %v2599 = vpop.f32.mrf.mxu0
    %v2600 = vadd.f32 %v2457, %v2599
    %v2601 = vand.u32 %v2013, 4294901760
    %v2602 = vsub.f32 %v2013, %v2601
    %v2603 = vand.u32 %v2602, 4294901760
    %2604 = vmatmul.f32.gmra.mxu0 %v2603
    %v2605 = vpop.f32.mrf.mxu0
    %v2606 = vadd.f32 %v2462, %v2605
    %v2607 = vand.u32 %v2016, 4294901760
    %v2608 = vsub.f32 %v2016, %v2607
    %v2609 = vand.u32 %v2608, 4294901760
    %2610 = vmatmul.f32.gmra.mxu0 %v2609
    %v2611 = vpop.f32.mrf.mxu0
    %v2612 = vadd.f32 %v2467, %v2611
    %v2613 = vand.u32 %v2019, 4294901760
    %v2614 = vsub.f32 %v2019, %v2613
    %v2615 = vand.u32 %v2614, 4294901760
    %2616 = vmatmul.f32.gmra.mxu0 %v2615
    %v2617 = vpop.f32.mrf.mxu0
    %v2618 = vadd.f32 %v2472, %v2617
    %v2619 = vand.u32 %v2022, 4294901760
    %v2620 = vsub.f32 %v2022, %v2619
    %v2621 = vand.u32 %v2620, 4294901760
    %2622 = vmatmul.f32.gmra.mxu0 %v2621
    %v2623 = vpop.f32.mrf.mxu0
    %v2624 = vadd.f32 %v2477, %v2623
    %v2625 = vand.u32 %v2025, 4294901760
    %v2626 = vsub.f32 %v2025, %v2625
    %v2627 = vand.u32 %v2626, 4294901760
    %2628 = vmatmul.f32.gmra.mxu0 %v2627
    %v2629 = vpop.f32.mrf.mxu0
    %v2630 = vadd.f32 %v2482, %v2629
    %v2631 = vand.u32 %v2028, 4294901760
    %v2632 = vsub.f32 %v2028, %v2631
    %v2633 = vand.u32 %v2632, 4294901760
    %2634 = vmatmul.f32.gmra.mxu0 %v2633
    %v2635 = vpop.f32.mrf.mxu0
    %v2636 = vadd.f32 %v2487, %v2635
    %v2637 = vand.u32 %v2031, 4294901760
    %v2638 = vsub.f32 %v2031, %v2637
    %v2639 = vand.u32 %v2638, 4294901760
    %2640 = vmatmul.f32.gmra.mxu0 %v2639
    %v2641 = vpop.f32.mrf.mxu0
    %v2642 = vadd.f32 %v2492, %v2641
    %v2643 = vand.u32 %v2034, 4294901760
    %v2644 = vsub.f32 %v2034, %v2643
    %v2645 = vand.u32 %v2644, 4294901760
    %2646 = vmatmul.f32.gmra.mxu0 %v2645
    %v2647 = vpop.f32.mrf.mxu0
    %v2648 = vadd.f32 %v2497, %v2647
    %v2649 = vand.u32 %v2037, 4294901760
    %v2650 = vsub.f32 %v2037, %v2649
    %v2651 = vand.u32 %v2650, 4294901760
    %2652 = vmatmul.f32.gmra.mxu0 %v2651
    %v2653 = vpop.f32.mrf.mxu0
    %v2654 = vadd.f32 %v2502, %v2653
    %v2655 = vand.u32 %v2040, 4294901760
    %v2656 = vsub.f32 %v2040, %v2655
    %v2657 = vand.u32 %v2656, 4294901760
    %2658 = vmatmul.f32.gmra.mxu0 %v2657
    %v2659 = vpop.f32.mrf.mxu0
    %v2660 = vadd.f32 %v2507, %v2659
    %v2661 = vand.u32 %v2043, 4294901760
    %v2662 = vsub.f32 %v2043, %v2661
    %v2663 = vand.u32 %v2662, 4294901760
    %2664 = vmatmul.f32.gmra.mxu0 %v2663
    %v2665 = vpop.f32.mrf.mxu0
    %v2666 = vadd.f32 %v2512, %v2665
    %v2667 = vand.u32 %v2046, 4294901760
    %v2668 = vsub.f32 %v2046, %v2667
    %v2669 = vand.u32 %v2668, 4294901760
    %2670 = vmatmul.f32.gmra.mxu0 %v2669
    %v2671 = vpop.f32.mrf.mxu0
    %v2672 = vadd.f32 %v2517, %v2671
    %v2673 = vand.u32 %v2049, 4294901760
    %v2674 = vsub.f32 %v2049, %v2673
    %v2675 = vand.u32 %v2674, 4294901760
    %2676 = vmatmul.f32.gmra.mxu0 %v2675
    %v2677 = vpop.f32.mrf.mxu0
    %v2678 = vadd.f32 %v2522, %v2677
    %v2679 = vand.u32 %v2052, 4294901760
    %v2680 = vsub.f32 %v2052, %v2679
    %v2681 = vand.u32 %v2680, 4294901760
    %2682 = vmatmul.f32.gmra.mxu0 %v2681
    %v2683 = vpop.f32.mrf.mxu0
    %v2684 = vadd.f32 %v2527, %v2683
    %v2685 = vand.u32 %v2055, 4294901760
    %v2686 = vsub.f32 %v2055, %v2685
    %v2687 = vand.u32 %v2686, 4294901760
    %2688 = vmatmul.f32.gmra.mxu0 %v2687
    %v2689 = vpop.f32.mrf.mxu0
    %v2690 = vadd.f32 %v2532, %v2689
    %v2691 = vand.u32 %v2058, 4294901760
    %v2692 = vsub.f32 %v2058, %v2691
    %v2693 = vand.u32 %v2692, 4294901760
    %2694 = vmatmul.f32.gmra.mxu0 %v2693
    %v2695 = vpop.f32.mrf.mxu0
    %v2696 = vadd.f32 %v2537, %v2695
    %v2697 = vand.u32 %v2061, 4294901760
    %v2698 = vsub.f32 %v2061, %v2697
    %v2699 = vand.u32 %v2698, 4294901760
    %2700 = vmatmul.f32.gmra.mxu0 %v2699
    %v2701 = vpop.f32.mrf.mxu0
    %v2702 = vadd.f32 %v2542, %v2701
    %v2703 = vand.u32 %v2064, 4294901760
    %v2704 = vsub.f32 %v2064, %v2703
    %v2705 = vand.u32 %v2704, 4294901760
    %2706 = vmatmul.f32.gmra.mxu0 %v2705
    %v2707 = vpop.f32.mrf.mxu0
    %v2708 = vadd.f32 %v2547, %v2707
    %v2709 = vand.u32 %v2067, 4294901760
    %v2710 = vsub.f32 %v2067, %v2709
    %v2711 = vand.u32 %v2710, 4294901760
    %2712 = vmatmul.f32.gmra.mxu0 %v2711
    %v2713 = vpop.f32.mrf.mxu0
    %v2714 = vadd.f32 %v2552, %v2713
    %v2715 = vand.u32 %v2070, 4294901760
    %v2716 = vsub.f32 %v2070, %v2715
    %v2717 = vand.u32 %v2716, 4294901760
    %2718 = vmatmul.f32.gmra.mxu0 %v2717
    %v2719 = vpop.f32.mrf.mxu0
    %v2720 = vadd.f32 %v2557, %v2719
    %v2721 = vand.u32 %v2073, 4294901760
    %v2722 = vsub.f32 %v2073, %v2721
    %v2723 = vand.u32 %v2722, 4294901760
    %2724 = vmatmul.f32.gmra.mxu0 %v2723
    %v2725 = vpop.f32.mrf.mxu0
    %v2726 = vadd.f32 %v2562, %v2725
    %v2727 = vand.u32 %v2076, 4294901760
    %v2728 = vsub.f32 %v2076, %v2727
    %v2729 = vand.u32 %v2728, 4294901760
    %2730 = vmatmul.f32.gmra.mxu0 %v2729
    %v2731 = vpop.f32.mrf.mxu0
    %v2732 = vadd.f32 %v2567, %v2731
    %2733 = vdwg.mxu0
    %2734 = vmatpush.msra.mxu0 0.0
    %2735 = vmatpush.msra.mxu0 0.0
    %2736 = vmatpush.msra.mxu0 0.0
    %2737 = vmatpush.msra.mxu0 0.0
    %2738 = vmatpush.msra.mxu0 0.0
    %2739 = vmatpush.msra.mxu0 0.0
    %2740 = vmatpush.msra.mxu0 0.0
    %2741 = vmatpush.msra.mxu0 0.0
    %2742 = vmatpush.msra.mxu0 0.0
    %2743 = vmatpush.msra.mxu0 0.0
    %2744 = vmatpush.msra.mxu0 0.0
    %2745 = vmatpush.msra.mxu0 0.0
    %v2746 = vand.u32 %v1897, 4294901760
    %v2747 = vsub.f32 %v1897, %v2746
    %v2748 = vand.u32 %v2747, 4294901760
    %2749 = vmatpush.msra.mxu0 %v2748
    %v2750 = vand.u32 %v1896, 4294901760
    %v2751 = vsub.f32 %v1896, %v2750
    %v2752 = vand.u32 %v2751, 4294901760
    %2753 = vmatpush.msra.mxu0 %v2752
    %v2754 = vand.u32 %v1895, 4294901760
    %v2755 = vsub.f32 %v1895, %v2754
    %v2756 = vand.u32 %v2755, 4294901760
    %2757 = vmatpush.msra.mxu0 %v2756
    %v2758 = vand.u32 %v1894, 4294901760
    %v2759 = vsub.f32 %v1894, %v2758
    %v2760 = vand.u32 %v2759, 4294901760
    %2761 = vmatpush.msra.mxu0 %v2760
    %v2762 = vand.u32 %v2007, 4294901760
    %2763 = vmatmul.f32.gmra.mxu0 %v2762
    %v2764 = vpop.f32.mrf.mxu0
    %v2765 = vadd.f32 %v2594, %v2764
    %v2766 = vand.u32 %v2010, 4294901760
    %2767 = vmatmul.f32.gmra.mxu0 %v2766
    %v2768 = vpop.f32.mrf.mxu0
    %v2769 = vadd.f32 %v2600, %v2768
    %v2770 = vand.u32 %v2013, 4294901760
    %2771 = vmatmul.f32.gmra.mxu0 %v2770
    %v2772 = vpop.f32.mrf.mxu0
    %v2773 = vadd.f32 %v2606, %v2772
    %v2774 = vand.u32 %v2016, 4294901760
    %2775 = vmatmul.f32.gmra.mxu0 %v2774
    %v2776 = vpop.f32.mrf.mxu0
    %v2777 = vadd.f32 %v2612, %v2776
    %v2778 = vand.u32 %v2019, 4294901760
    %2779 = vmatmul.f32.gmra.mxu0 %v2778
    %v2780 = vpop.f32.mrf.mxu0
    %v2781 = vadd.f32 %v2618, %v2780
    %v2782 = vand.u32 %v2022, 4294901760
    %2783 = vmatmul.f32.gmra.mxu0 %v2782
    %v2784 = vpop.f32.mrf.mxu0
    %v2785 = vadd.f32 %v2624, %v2784
    %v2786 = vand.u32 %v2025, 4294901760
    %2787 = vmatmul.f32.gmra.mxu0 %v2786
    %v2788 = vpop.f32.mrf.mxu0
    %v2789 = vadd.f32 %v2630, %v2788
    %v2790 = vand.u32 %v2028, 4294901760
    %2791 = vmatmul.f32.gmra.mxu0 %v2790
    %v2792 = vpop.f32.mrf.mxu0
    %v2793 = vadd.f32 %v2636, %v2792
    %v2794 = vand.u32 %v2031, 4294901760
    %2795 = vmatmul.f32.gmra.mxu0 %v2794
    %v2796 = vpop.f32.mrf.mxu0
    %v2797 = vadd.f32 %v2642, %v2796
    %v2798 = vand.u32 %v2034, 4294901760
    %2799 = vmatmul.f32.gmra.mxu0 %v2798
    %v2800 = vpop.f32.mrf.mxu0
    %v2801 = vadd.f32 %v2648, %v2800
    %v2802 = vand.u32 %v2037, 4294901760
    %2803 = vmatmul.f32.gmra.mxu0 %v2802
    %v2804 = vpop.f32.mrf.mxu0
    %v2805 = vadd.f32 %v2654, %v2804
    %v2806 = vand.u32 %v2040, 4294901760
    %2807 = vmatmul.f32.gmra.mxu0 %v2806
    %v2808 = vpop.f32.mrf.mxu0
    %v2809 = vadd.f32 %v2660, %v2808
    %v2810 = vand.u32 %v2043, 4294901760
    %2811 = vmatmul.f32.gmra.mxu0 %v2810
    %v2812 = vpop.f32.mrf.mxu0
    %v2813 = vadd.f32 %v2666, %v2812
    %v2814 = vand.u32 %v2046, 4294901760
    %2815 = vmatmul.f32.gmra.mxu0 %v2814
    %v2816 = vpop.f32.mrf.mxu0
    %v2817 = vadd.f32 %v2672, %v2816
    %v2818 = vand.u32 %v2049, 4294901760
    %2819 = vmatmul.f32.gmra.mxu0 %v2818
    %v2820 = vpop.f32.mrf.mxu0
    %v2821 = vadd.f32 %v2678, %v2820
    %v2822 = vand.u32 %v2052, 4294901760
    %2823 = vmatmul.f32.gmra.mxu0 %v2822
    %v2824 = vpop.f32.mrf.mxu0
    %v2825 = vadd.f32 %v2684, %v2824
    %v2826 = vand.u32 %v2055, 4294901760
    %2827 = vmatmul.f32.gmra.mxu0 %v2826
    %v2828 = vpop.f32.mrf.mxu0
    %v2829 = vadd.f32 %v2690, %v2828
    %v2830 = vand.u32 %v2058, 4294901760
    %2831 = vmatmul.f32.gmra.mxu0 %v2830
    %v2832 = vpop.f32.mrf.mxu0
    %v2833 = vadd.f32 %v2696, %v2832
    %v2834 = vand.u32 %v2061, 4294901760
    %2835 = vmatmul.f32.gmra.mxu0 %v2834
    %v2836 = vpop.f32.mrf.mxu0
    %v2837 = vadd.f32 %v2702, %v2836
    %v2838 = vand.u32 %v2064, 4294901760
    %2839 = vmatmul.f32.gmra.mxu0 %v2838
    %v2840 = vpop.f32.mrf.mxu0
    %v2841 = vadd.f32 %v2708, %v2840
    %v2842 = vand.u32 %v2067, 4294901760
    %2843 = vmatmul.f32.gmra.mxu0 %v2842
    %v2844 = vpop.f32.mrf.mxu0
    %v2845 = vadd.f32 %v2714, %v2844
    %v2846 = vand.u32 %v2070, 4294901760
    %2847 = vmatmul.f32.gmra.mxu0 %v2846
    %v2848 = vpop.f32.mrf.mxu0
    %v2849 = vadd.f32 %v2720, %v2848
    %v2850 = vand.u32 %v2073, 4294901760
    %2851 = vmatmul.f32.gmra.mxu0 %v2850
    %v2852 = vpop.f32.mrf.mxu0
    %v2853 = vadd.f32 %v2726, %v2852
    %v2854 = vand.u32 %v2076, 4294901760
    %2855 = vmatmul.f32.gmra.mxu0 %v2854
    %v2856 = vpop.f32.mrf.mxu0
    %v2857 = vadd.f32 %v2732, %v2856
    %2858 = vdwg.mxu0
    %2859 = vmatpush.msra.mxu0 0.0
    %2860 = vmatpush.msra.mxu0 0.0
    %2861 = vmatpush.msra.mxu0 0.0
    %2862 = vmatpush.msra.mxu0 0.0
    %2863 = vmatpush.msra.mxu0 0.0
    %2864 = vmatpush.msra.mxu0 0.0
    %2865 = vmatpush.msra.mxu0 0.0
    %2866 = vmatpush.msra.mxu0 0.0
    %2867 = vmatpush.msra.mxu0 0.0
    %2868 = vmatpush.msra.mxu0 0.0
    %2869 = vmatpush.msra.mxu0 0.0
    %2870 = vmatpush.msra.mxu0 0.0
    %v2871 = vand.u32 %v1897, 4294901760
    %2872 = vmatpush.msra.mxu0 %v2871
    %v2873 = vand.u32 %v1896, 4294901760
    %2874 = vmatpush.msra.mxu0 %v2873
    %v2875 = vand.u32 %v1895, 4294901760
    %2876 = vmatpush.msra.mxu0 %v2875
    %v2877 = vand.u32 %v1894, 4294901760
    %2878 = vmatpush.msra.mxu0 %v2877
    %v2879 = vand.u32 %v2007, 4294901760
    %2880 = vmatmul.f32.gmra.mxu0 %v2879
    %v2881 = vpop.f32.mrf.mxu0
    %v2882 = vadd.f32 %v2765, %v2881
    %v2883 = vand.u32 %v2010, 4294901760
    %2884 = vmatmul.f32.gmra.mxu0 %v2883
    %v2885 = vpop.f32.mrf.mxu0
    %v2886 = vadd.f32 %v2769, %v2885
    %v2887 = vand.u32 %v2013, 4294901760
    %2888 = vmatmul.f32.gmra.mxu0 %v2887
    %v2889 = vpop.f32.mrf.mxu0
    %v2890 = vadd.f32 %v2773, %v2889
    %v2891 = vand.u32 %v2016, 4294901760
    %2892 = vmatmul.f32.gmra.mxu0 %v2891
    %v2893 = vpop.f32.mrf.mxu0
    %v2894 = vadd.f32 %v2777, %v2893
    %v2895 = vand.u32 %v2019, 4294901760
    %2896 = vmatmul.f32.gmra.mxu0 %v2895
    %v2897 = vpop.f32.mrf.mxu0
    %v2898 = vadd.f32 %v2781, %v2897
    %v2899 = vand.u32 %v2022, 4294901760
    %2900 = vmatmul.f32.gmra.mxu0 %v2899
    %v2901 = vpop.f32.mrf.mxu0
    %v2902 = vadd.f32 %v2785, %v2901
    %v2903 = vand.u32 %v2025, 4294901760
    %2904 = vmatmul.f32.gmra.mxu0 %v2903
    %v2905 = vpop.f32.mrf.mxu0
    %v2906 = vadd.f32 %v2789, %v2905
    %v2907 = vand.u32 %v2028, 4294901760
    %2908 = vmatmul.f32.gmra.mxu0 %v2907
    %v2909 = vpop.f32.mrf.mxu0
    %v2910 = vadd.f32 %v2793, %v2909
    %v2911 = vand.u32 %v2031, 4294901760
    %2912 = vmatmul.f32.gmra.mxu0 %v2911
    %v2913 = vpop.f32.mrf.mxu0
    %v2914 = vadd.f32 %v2797, %v2913
    %v2915 = vand.u32 %v2034, 4294901760
    %2916 = vmatmul.f32.gmra.mxu0 %v2915
    %v2917 = vpop.f32.mrf.mxu0
    %v2918 = vadd.f32 %v2801, %v2917
    %v2919 = vand.u32 %v2037, 4294901760
    %2920 = vmatmul.f32.gmra.mxu0 %v2919
    %v2921 = vpop.f32.mrf.mxu0
    %v2922 = vadd.f32 %v2805, %v2921
    %v2923 = vand.u32 %v2040, 4294901760
    %2924 = vmatmul.f32.gmra.mxu0 %v2923
    %v2925 = vpop.f32.mrf.mxu0
    %v2926 = vadd.f32 %v2809, %v2925
    %v2927 = vand.u32 %v2043, 4294901760
    %2928 = vmatmul.f32.gmra.mxu0 %v2927
    %v2929 = vpop.f32.mrf.mxu0
    %v2930 = vadd.f32 %v2813, %v2929
    %v2931 = vand.u32 %v2046, 4294901760
    %2932 = vmatmul.f32.gmra.mxu0 %v2931
    %v2933 = vpop.f32.mrf.mxu0
    %v2934 = vadd.f32 %v2817, %v2933
    %v2935 = vand.u32 %v2049, 4294901760
    %2936 = vmatmul.f32.gmra.mxu0 %v2935
    %v2937 = vpop.f32.mrf.mxu0
    %v2938 = vadd.f32 %v2821, %v2937
    %v2939 = vand.u32 %v2052, 4294901760
    %2940 = vmatmul.f32.gmra.mxu0 %v2939
    %v2941 = vpop.f32.mrf.mxu0
    %v2942 = vadd.f32 %v2825, %v2941
    %v2943 = vand.u32 %v2055, 4294901760
    %2944 = vmatmul.f32.gmra.mxu0 %v2943
    %v2945 = vpop.f32.mrf.mxu0
    %v2946 = vadd.f32 %v2829, %v2945
    %v2947 = vand.u32 %v2058, 4294901760
    %2948 = vmatmul.f32.gmra.mxu0 %v2947
    %v2949 = vpop.f32.mrf.mxu0
    %v2950 = vadd.f32 %v2833, %v2949
    %v2951 = vand.u32 %v2061, 4294901760
    %2952 = vmatmul.f32.gmra.mxu0 %v2951
    %v2953 = vpop.f32.mrf.mxu0
    %v2954 = vadd.f32 %v2837, %v2953
    %v2955 = vand.u32 %v2064, 4294901760
    %2956 = vmatmul.f32.gmra.mxu0 %v2955
    %v2957 = vpop.f32.mrf.mxu0
    %v2958 = vadd.f32 %v2841, %v2957
    %v2959 = vand.u32 %v2067, 4294901760
    %2960 = vmatmul.f32.gmra.mxu0 %v2959
    %v2961 = vpop.f32.mrf.mxu0
    %v2962 = vadd.f32 %v2845, %v2961
    %v2963 = vand.u32 %v2070, 4294901760
    %2964 = vmatmul.f32.gmra.mxu0 %v2963
    %v2965 = vpop.f32.mrf.mxu0
    %v2966 = vadd.f32 %v2849, %v2965
    %v2967 = vand.u32 %v2073, 4294901760
    %2968 = vmatmul.f32.gmra.mxu0 %v2967
    %v2969 = vpop.f32.mrf.mxu0
    %v2970 = vadd.f32 %v2853, %v2969
    %v2971 = vand.u32 %v2076, 4294901760
    %2972 = vmatmul.f32.gmra.mxu0 %v2971
    %v2973 = vpop.f32.mrf.mxu0
    %v2974 = vadd.f32 %v2857, %v2973
    %2975 = vdwg.mxu0
    %v2976 = vxor.u32 %v2946, 2147483648
    %v2977 = vxor.u32 %v2950, 2147483648
    %v2978 = vxor.u32 %v2954, 2147483648
    %v2979 = vxor.u32 %v2958, 2147483648
    %v2980 = vxor.u32 %v2962, 2147483648
    %v2981 = vxor.u32 %v2966, 2147483648
    %v2982 = vxor.u32 %v2970, 2147483648
    %v2983 = vxor.u32 %v2974, 2147483648
    %v2984 = vmul.f32 %v2976, 1.442695
    %v2985 = vpow.pop %v2984
    %v2986 = vmul.f32 %v2977, 1.442695
    %v2987 = vpow.pop %v2986
    %v2988 = vmul.f32 %v2978, 1.442695
    %v2989 = vpow.pop %v2988
    %v2990 = vmul.f32 %v2979, 1.442695
    %v2991 = vpow.pop %v2990
    %v2992 = vmul.f32 %v2980, 1.442695
    %v2993 = vpow.pop %v2992
    %v2994 = vmul.f32 %v2981, 1.442695
    %v2995 = vpow.pop %v2994
    %v2996 = vmul.f32 %v2982, 1.442695
    %v2997 = vpow.pop %v2996
    %v2998 = vmul.f32 %v2983, 1.442695
    %v2999 = vpow.pop %v2998
    %v3000 = vadd.f32 %v2985, 1.0
    %v3001 = vadd.f32 %v2987, 1.0
    %v3002 = vadd.f32 %v2989, 1.0
    %v3003 = vadd.f32 %v2991, 1.0
    %v3004 = vadd.f32 %v2993, 1.0
    %v3005 = vadd.f32 %v2995, 1.0
    %v3006 = vadd.f32 %v2997, 1.0
    %v3007 = vadd.f32 %v2999, 1.0
    %v3008 = vrcp.pop %v3000
    %v3009 = vmul.f32 %v3000, %v3008
    %v3010 = vsub.f32 1.0, %v3009
    %v3011 = vmul.f32 %v3008, %v3010
    %v3012 = vadd.f32 %v3008, %v3011
    %vm3013 = vweird.f32 %v3000
    %vm3014 = vweird.f32 %v3008
    %vm3015 = vmor %vm3013, %vm3014
    %v3016 = vsel %vm3015, %v3008, %v3012
    %v3017 = vand.u32 2147483647, %v3000
    %vm3018 = vcmp.eq.f32.partialorder %v3017, 8.507059e+37
    %v3019 = vand.u32 %v3000, 2147483648
    %v3020 = vor.u32 1.1754944e-38, %v3019
    %v3021 = vsel %vm3018, %v3020, %v3016
    %v3022 = vmul.f32 1.0, %v3021
    %v3023 = vrcp.pop %v3001
    %v3024 = vmul.f32 %v3001, %v3023
    %v3025 = vsub.f32 1.0, %v3024
    %v3026 = vmul.f32 %v3023, %v3025
    %v3027 = vadd.f32 %v3023, %v3026
    %vm3028 = vweird.f32 %v3001
    %vm3029 = vweird.f32 %v3023
    %vm3030 = vmor %vm3028, %vm3029
    %v3031 = vsel %vm3030, %v3023, %v3027
    %v3032 = vand.u32 2147483647, %v3001
    %vm3033 = vcmp.eq.f32.partialorder %v3032, 8.507059e+37
    %v3034 = vand.u32 %v3001, 2147483648
    %v3035 = vor.u32 1.1754944e-38, %v3034
    %v3036 = vsel %vm3033, %v3035, %v3031
    %v3037 = vmul.f32 1.0, %v3036
    %v3038 = vrcp.pop %v3002
    %v3039 = vmul.f32 %v3002, %v3038
    %v3040 = vsub.f32 1.0, %v3039
    %v3041 = vmul.f32 %v3038, %v3040
    %v3042 = vadd.f32 %v3038, %v3041
    %vm3043 = vweird.f32 %v3002
    %vm3044 = vweird.f32 %v3038
    %vm3045 = vmor %vm3043, %vm3044
    %v3046 = vsel %vm3045, %v3038, %v3042
    %v3047 = vand.u32 2147483647, %v3002
    %vm3048 = vcmp.eq.f32.partialorder %v3047, 8.507059e+37
    %v3049 = vand.u32 %v3002, 2147483648
    %v3050 = vor.u32 1.1754944e-38, %v3049
    %v3051 = vsel %vm3048, %v3050, %v3046
    %v3052 = vmul.f32 1.0, %v3051
    %v3053 = vrcp.pop %v3003
    %v3054 = vmul.f32 %v3003, %v3053
    %v3055 = vsub.f32 1.0, %v3054
    %v3056 = vmul.f32 %v3053, %v3055
    %v3057 = vadd.f32 %v3053, %v3056
    %vm3058 = vweird.f32 %v3003
    %vm3059 = vweird.f32 %v3053
    %vm3060 = vmor %vm3058, %vm3059
    %v3061 = vsel %vm3060, %v3053, %v3057
    %v3062 = vand.u32 2147483647, %v3003
    %vm3063 = vcmp.eq.f32.partialorder %v3062, 8.507059e+37
    %v3064 = vand.u32 %v3003, 2147483648
    %v3065 = vor.u32 1.1754944e-38, %v3064
    %v3066 = vsel %vm3063, %v3065, %v3061
    %v3067 = vmul.f32 1.0, %v3066
    %v3068 = vrcp.pop %v3004
    %v3069 = vmul.f32 %v3004, %v3068
    %v3070 = vsub.f32 1.0, %v3069
    %v3071 = vmul.f32 %v3068, %v3070
    %v3072 = vadd.f32 %v3068, %v3071
    %vm3073 = vweird.f32 %v3004
    %vm3074 = vweird.f32 %v3068
    %vm3075 = vmor %vm3073, %vm3074
    %v3076 = vsel %vm3075, %v3068, %v3072
    %v3077 = vand.u32 2147483647, %v3004
    %vm3078 = vcmp.eq.f32.partialorder %v3077, 8.507059e+37
    %v3079 = vand.u32 %v3004, 2147483648
    %v3080 = vor.u32 1.1754944e-38, %v3079
    %v3081 = vsel %vm3078, %v3080, %v3076
    %v3082 = vmul.f32 1.0, %v3081
    %v3083 = vrcp.pop %v3005
    %v3084 = vmul.f32 %v3005, %v3083
    %v3085 = vsub.f32 1.0, %v3084
    %v3086 = vmul.f32 %v3083, %v3085
    %v3087 = vadd.f32 %v3083, %v3086
    %vm3088 = vweird.f32 %v3005
    %vm3089 = vweird.f32 %v3083
    %vm3090 = vmor %vm3088, %vm3089
    %v3091 = vsel %vm3090, %v3083, %v3087
    %v3092 = vand.u32 2147483647, %v3005
    %vm3093 = vcmp.eq.f32.partialorder %v3092, 8.507059e+37
    %v3094 = vand.u32 %v3005, 2147483648
    %v3095 = vor.u32 1.1754944e-38, %v3094
    %v3096 = vsel %vm3093, %v3095, %v3091
    %v3097 = vmul.f32 1.0, %v3096
    %v3098 = vrcp.pop %v3006
    %v3099 = vmul.f32 %v3006, %v3098
    %v3100 = vsub.f32 1.0, %v3099
    %v3101 = vmul.f32 %v3098, %v3100
    %v3102 = vadd.f32 %v3098, %v3101
    %vm3103 = vweird.f32 %v3006
    %vm3104 = vweird.f32 %v3098
    %vm3105 = vmor %vm3103, %vm3104
    %v3106 = vsel %vm3105, %v3098, %v3102
    %v3107 = vand.u32 2147483647, %v3006
    %vm3108 = vcmp.eq.f32.partialorder %v3107, 8.507059e+37
    %v3109 = vand.u32 %v3006, 2147483648
    %v3110 = vor.u32 1.1754944e-38, %v3109
    %v3111 = vsel %vm3108, %v3110, %v3106
    %v3112 = vmul.f32 1.0, %v3111
    %v3113 = vrcp.pop %v3007
    %v3114 = vmul.f32 %v3007, %v3113
    %v3115 = vsub.f32 1.0, %v3114
    %v3116 = vmul.f32 %v3113, %v3115
    %v3117 = vadd.f32 %v3113, %v3116
    %vm3118 = vweird.f32 %v3007
    %vm3119 = vweird.f32 %v3113
    %vm3120 = vmor %vm3118, %vm3119
    %v3121 = vsel %vm3120, %v3113, %v3117
    %v3122 = vand.u32 2147483647, %v3007
    %vm3123 = vcmp.eq.f32.partialorder %v3122, 8.507059e+37
    %v3124 = vand.u32 %v3007, 2147483648
    %v3125 = vor.u32 1.1754944e-38, %v3124
    %v3126 = vsel %vm3123, %v3125, %v3121
    %v3127 = vmul.f32 1.0, %v3126
    %v3128 = vxor.u32 %v2882, 2147483648
    %v3129 = vxor.u32 %v2886, 2147483648
    %v3130 = vxor.u32 %v2890, 2147483648
    %v3131 = vxor.u32 %v2894, 2147483648
    %v3132 = vxor.u32 %v2898, 2147483648
    %v3133 = vxor.u32 %v2902, 2147483648
    %v3134 = vxor.u32 %v2906, 2147483648
    %v3135 = vxor.u32 %v2910, 2147483648
    %v3136 = vmul.f32 %v3128, 1.442695
    %v3137 = vpow.pop %v3136
    %v3138 = vmul.f32 %v3129, 1.442695
    %v3139 = vpow.pop %v3138
    %v3140 = vmul.f32 %v3130, 1.442695
    %v3141 = vpow.pop %v3140
    %v3142 = vmul.f32 %v3131, 1.442695
    %v3143 = vpow.pop %v3142
    %v3144 = vmul.f32 %v3132, 1.442695
    %v3145 = vpow.pop %v3144
    %v3146 = vmul.f32 %v3133, 1.442695
    %v3147 = vpow.pop %v3146
    %v3148 = vmul.f32 %v3134, 1.442695
    %v3149 = vpow.pop %v3148
    %v3150 = vmul.f32 %v3135, 1.442695
    %v3151 = vpow.pop %v3150
    %v3152 = vadd.f32 %v3137, 1.0
    %v3153 = vadd.f32 %v3139, 1.0
    %v3154 = vadd.f32 %v3141, 1.0
    %v3155 = vadd.f32 %v3143, 1.0
    %v3156 = vadd.f32 %v3145, 1.0
    %v3157 = vadd.f32 %v3147, 1.0
    %v3158 = vadd.f32 %v3149, 1.0
    %v3159 = vadd.f32 %v3151, 1.0
    %v3160 = vrcp.pop %v3152
    %v3161 = vmul.f32 %v3152, %v3160
    %v3162 = vsub.f32 1.0, %v3161
    %v3163 = vmul.f32 %v3160, %v3162
    %v3164 = vadd.f32 %v3160, %v3163
    %vm3165 = vweird.f32 %v3152
    %vm3166 = vweird.f32 %v3160
    %vm3167 = vmor %vm3165, %vm3166
    %v3168 = vsel %vm3167, %v3160, %v3164
    %v3169 = vand.u32 2147483647, %v3152
    %vm3170 = vcmp.eq.f32.partialorder %v3169, 8.507059e+37
    %v3171 = vand.u32 %v3152, 2147483648
    %v3172 = vor.u32 1.1754944e-38, %v3171
    %v3173 = vsel %vm3170, %v3172, %v3168
    %v3174 = vmul.f32 1.0, %v3173
    %v3175 = vrcp.pop %v3153
    %v3176 = vmul.f32 %v3153, %v3175
    %v3177 = vsub.f32 1.0, %v3176
    %v3178 = vmul.f32 %v3175, %v3177
    %v3179 = vadd.f32 %v3175, %v3178
    %vm3180 = vweird.f32 %v3153
    %vm3181 = vweird.f32 %v3175
    %vm3182 = vmor %vm3180, %vm3181
    %v3183 = vsel %vm3182, %v3175, %v3179
    %v3184 = vand.u32 2147483647, %v3153
    %vm3185 = vcmp.eq.f32.partialorder %v3184, 8.507059e+37
    %v3186 = vand.u32 %v3153, 2147483648
    %v3187 = vor.u32 1.1754944e-38, %v3186
    %v3188 = vsel %vm3185, %v3187, %v3183
    %v3189 = vmul.f32 1.0, %v3188
    %v3190 = vrcp.pop %v3154
    %v3191 = vmul.f32 %v3154, %v3190
    %v3192 = vsub.f32 1.0, %v3191
    %v3193 = vmul.f32 %v3190, %v3192
    %v3194 = vadd.f32 %v3190, %v3193
    %vm3195 = vweird.f32 %v3154
    %vm3196 = vweird.f32 %v3190
    %vm3197 = vmor %vm3195, %vm3196
    %v3198 = vsel %vm3197, %v3190, %v3194
    %v3199 = vand.u32 2147483647, %v3154
    %vm3200 = vcmp.eq.f32.partialorder %v3199, 8.507059e+37
    %v3201 = vand.u32 %v3154, 2147483648
    %v3202 = vor.u32 1.1754944e-38, %v3201
    %v3203 = vsel %vm3200, %v3202, %v3198
    %v3204 = vmul.f32 1.0, %v3203
    %v3205 = vrcp.pop %v3155
    %v3206 = vmul.f32 %v3155, %v3205
    %v3207 = vsub.f32 1.0, %v3206
    %v3208 = vmul.f32 %v3205, %v3207
    %v3209 = vadd.f32 %v3205, %v3208
    %vm3210 = vweird.f32 %v3155
    %vm3211 = vweird.f32 %v3205
    %vm3212 = vmor %vm3210, %vm3211
    %v3213 = vsel %vm3212, %v3205, %v3209
    %v3214 = vand.u32 2147483647, %v3155
    %vm3215 = vcmp.eq.f32.partialorder %v3214, 8.507059e+37
    %v3216 = vand.u32 %v3155, 2147483648
    %v3217 = vor.u32 1.1754944e-38, %v3216
    %v3218 = vsel %vm3215, %v3217, %v3213
    %v3219 = vmul.f32 1.0, %v3218
    %v3220 = vrcp.pop %v3156
    %v3221 = vmul.f32 %v3156, %v3220
    %v3222 = vsub.f32 1.0, %v3221
    %v3223 = vmul.f32 %v3220, %v3222
    %v3224 = vadd.f32 %v3220, %v3223
    %vm3225 = vweird.f32 %v3156
    %vm3226 = vweird.f32 %v3220
    %vm3227 = vmor %vm3225, %vm3226
    %v3228 = vsel %vm3227, %v3220, %v3224
    %v3229 = vand.u32 2147483647, %v3156
    %vm3230 = vcmp.eq.f32.partialorder %v3229, 8.507059e+37
    %v3231 = vand.u32 %v3156, 2147483648
    %v3232 = vor.u32 1.1754944e-38, %v3231
    %v3233 = vsel %vm3230, %v3232, %v3228
    %v3234 = vmul.f32 1.0, %v3233
    %v3235 = vrcp.pop %v3157
    %v3236 = vmul.f32 %v3157, %v3235
    %v3237 = vsub.f32 1.0, %v3236
    %v3238 = vmul.f32 %v3235, %v3237
    %v3239 = vadd.f32 %v3235, %v3238
    %vm3240 = vweird.f32 %v3157
    %vm3241 = vweird.f32 %v3235
    %vm3242 = vmor %vm3240, %vm3241
    %v3243 = vsel %vm3242, %v3235, %v3239
    %v3244 = vand.u32 2147483647, %v3157
    %vm3245 = vcmp.eq.f32.partialorder %v3244, 8.507059e+37
    %v3246 = vand.u32 %v3157, 2147483648
    %v3247 = vor.u32 1.1754944e-38, %v3246
    %v3248 = vsel %vm3245, %v3247, %v3243
    %v3249 = vmul.f32 1.0, %v3248
    %v3250 = vrcp.pop %v3158
    %v3251 = vmul.f32 %v3158, %v3250
    %v3252 = vsub.f32 1.0, %v3251
    %v3253 = vmul.f32 %v3250, %v3252
    %v3254 = vadd.f32 %v3250, %v3253
    %vm3255 = vweird.f32 %v3158
    %vm3256 = vweird.f32 %v3250
    %vm3257 = vmor %vm3255, %vm3256
    %v3258 = vsel %vm3257, %v3250, %v3254
    %v3259 = vand.u32 2147483647, %v3158
    %vm3260 = vcmp.eq.f32.partialorder %v3259, 8.507059e+37
    %v3261 = vand.u32 %v3158, 2147483648
    %v3262 = vor.u32 1.1754944e-38, %v3261
    %v3263 = vsel %vm3260, %v3262, %v3258
    %v3264 = vmul.f32 1.0, %v3263
    %v3265 = vrcp.pop %v3159
    %v3266 = vmul.f32 %v3159, %v3265
    %v3267 = vsub.f32 1.0, %v3266
    %v3268 = vmul.f32 %v3265, %v3267
    %v3269 = vadd.f32 %v3265, %v3268
    %vm3270 = vweird.f32 %v3159
    %vm3271 = vweird.f32 %v3265
    %vm3272 = vmor %vm3270, %vm3271
    %v3273 = vsel %vm3272, %v3265, %v3269
    %v3274 = vand.u32 2147483647, %v3159
    %vm3275 = vcmp.eq.f32.partialorder %v3274, 8.507059e+37
    %v3276 = vand.u32 %v3159, 2147483648
    %v3277 = vor.u32 1.1754944e-38, %v3276
    %v3278 = vsel %vm3275, %v3277, %v3273
    %v3279 = vmul.f32 1.0, %v3278
    %v3280 = vtanh.pop %v2914
    %v3281 = vtanh.pop %v2918
    %v3282 = vtanh.pop %v2922
    %v3283 = vtanh.pop %v2926
    %v3284 = vtanh.pop %v2930
    %v3285 = vtanh.pop %v2934
    %v3286 = vtanh.pop %v2938
    %v3287 = vtanh.pop %v2942
    %v3288 = vmul.f32 %v3174, %v3280
    %v3289 = vmul.f32 %v3189, %v3281
    %v3290 = vmul.f32 %v3204, %v3282
    %v3291 = vmul.f32 %v3219, %v3283
    %v3292 = vmul.f32 %v3234, %v3284
    %v3293 = vmul.f32 %v3249, %v3285
    %v3294 = vmul.f32 %v3264, %v3286
    %v3295 = vmul.f32 %v3279, %v3287
    %v3296 = vtanh.pop %v3288
    %v3297 = vtanh.pop %v3289
    %v3298 = vtanh.pop %v3290
    %v3299 = vtanh.pop %v3291
    %v3300 = vtanh.pop %v3292
    %v3301 = vtanh.pop %v3293
    %v3302 = vtanh.pop %v3294
    %v3303 = vtanh.pop %v3295
    %v3304 = vmul.f32 %v3022, %v3296
    %v3305 = vmul.f32 %v3037, %v3297
    %v3306 = vmul.f32 %v3052, %v3298
    %v3307 = vmul.f32 %v3067, %v3299
    %v3308 = vmul.f32 %v3082, %v3300
    %v3309 = vmul.f32 %v3097, %v3301
    %v3310 = vmul.f32 %v3112, %v3302
    %v3311 = vmul.f32 %v3127, %v3303
    %v3312 = vld [vmem:[%s1] sm:$0x1]
    %3313 = vset.pattern.permute.xlu0 5
    %3314 = vperm.xlu0 %3313, %v87
    %v3315 = vpop.permute.xlu0 %3314
    %3317 = vset.pattern.permute.xlu0 5
    %3318 = vperm.xlu0 %3317, %v88
    %v3319 = vpop.permute.xlu0 %3318
    %3321 = vset.pattern.permute.xlu0 5
    %3322 = vperm.xlu0 %3321, %v89
    %v3323 = vpop.permute.xlu0 %3322
    %3325 = vset.pattern.permute.xlu0 5
    %3326 = vperm.xlu0 %3325, %v90
    %v3327 = vpop.permute.xlu0 %3326
    %3329 = vset.pattern.permute.xlu0 5
    %3330 = vperm.xlu0 %3329, %v91
    %v3331 = vpop.permute.xlu0 %3330
    %3333 = vset.pattern.permute.xlu0 5
    %3334 = vperm.xlu0 %3333, %v92
    %v3335 = vpop.permute.xlu0 %3334
    %3337 = vset.pattern.permute.xlu0 5
    %3338 = vperm.xlu0 %3337, %v93
    %v3339 = vpop.permute.xlu0 %3338
    %3341 = vset.pattern.permute.xlu0 5
    %3342 = vperm.xlu0 %3341, %v94
    %v3343 = vpop.permute.xlu0 %3342
    %3345 = vset.pattern.permute.xlu0 5
    %3346 = vperm.xlu0 %3345, %v95
    %v3347 = vpop.permute.xlu0 %3346
    %3349 = vset.pattern.permute.xlu0 5
    %3350 = vperm.xlu0 %3349, %v96
    %v3351 = vpop.permute.xlu0 %3350
    %3353 = vset.pattern.permute.xlu0 5
    %3354 = vperm.xlu0 %3353, %v97
    %v3355 = vpop.permute.xlu0 %3354
    %3357 = vset.pattern.permute.xlu0 5
    %3358 = vperm.xlu0 %3357, %v98
    %v3359 = vpop.permute.xlu0 %3358
    %3361 = vset.pattern.permute.xlu0 5
    %3362 = vperm.xlu0 %3361, %v99
    %v3363 = vpop.permute.xlu0 %3362
    %3365 = vset.pattern.permute.xlu0 5
    %3366 = vperm.xlu0 %3365, %v100
    %v3367 = vpop.permute.xlu0 %3366
    %3369 = vset.pattern.permute.xlu0 5
    %3370 = vperm.xlu0 %3369, %v101
    %v3371 = vpop.permute.xlu0 %3370
    %3373 = vset.pattern.permute.xlu0 5
    %3374 = vperm.xlu0 %3373, %v102
    %v3375 = vpop.permute.xlu0 %3374
    %v3377 = vperm.slane %v3312, 0
    %v3378 = vmul.f32 %v3315, %v3377
    %v3379 = vmul.f32 %v3319, %v3377
    %v3380 = vmul.f32 %v3323, %v3377
    %v3381 = vmul.f32 %v3327, %v3377
    %v3382 = vmul.f32 %v3331, %v3377
    %v3383 = vmul.f32 %v3335, %v3377
    %v3384 = vmul.f32 %v3339, %v3377
    %v3385 = vmul.f32 %v3343, %v3377
    %v3386 = vmul.f32 %v3347, %v3377
    %v3387 = vmul.f32 %v3351, %v3377
    %v3388 = vmul.f32 %v3355, %v3377
    %v3389 = vmul.f32 %v3359, %v3377
    %v3390 = vmul.f32 %v3363, %v3377
    %v3391 = vmul.f32 %v3367, %v3377
    %v3392 = vmul.f32 %v3371, %v3377
    %v3393 = vmul.f32 %v3375, %v3377
    %3394 = vset.pattern.permute.xlu0 4
    %3395 = vperm.xlu0 %3394, %v87
    %v3396 = vpop.permute.xlu0 %3395
    %3398 = vset.pattern.permute.xlu0 4
    %3399 = vperm.xlu0 %3398, %v88
    %v3400 = vpop.permute.xlu0 %3399
    %3402 = vset.pattern.permute.xlu0 4
    %3403 = vperm.xlu0 %3402, %v89
    %v3404 = vpop.permute.xlu0 %3403
    %3406 = vset.pattern.permute.xlu0 4
    %3407 = vperm.xlu0 %3406, %v90
    %v3408 = vpop.permute.xlu0 %3407
    %3410 = vset.pattern.permute.xlu0 4
    %3411 = vperm.xlu0 %3410, %v91
    %v3412 = vpop.permute.xlu0 %3411
    %3414 = vset.pattern.permute.xlu0 4
    %3415 = vperm.xlu0 %3414, %v92
    %v3416 = vpop.permute.xlu0 %3415
    %3418 = vset.pattern.permute.xlu0 4
    %3419 = vperm.xlu0 %3418, %v93
    %v3420 = vpop.permute.xlu0 %3419
    %3422 = vset.pattern.permute.xlu0 4
    %3423 = vperm.xlu0 %3422, %v94
    %v3424 = vpop.permute.xlu0 %3423
    %3426 = vset.pattern.permute.xlu0 4
    %3427 = vperm.xlu0 %3426, %v95
    %v3428 = vpop.permute.xlu0 %3427
    %3430 = vset.pattern.permute.xlu0 4
    %3431 = vperm.xlu0 %3430, %v96
    %v3432 = vpop.permute.xlu0 %3431
    %3434 = vset.pattern.permute.xlu0 4
    %3435 = vperm.xlu0 %3434, %v97
    %v3436 = vpop.permute.xlu0 %3435
    %3438 = vset.pattern.permute.xlu0 4
    %3439 = vperm.xlu0 %3438, %v98
    %v3440 = vpop.permute.xlu0 %3439
    %3442 = vset.pattern.permute.xlu0 4
    %3443 = vperm.xlu0 %3442, %v99
    %v3444 = vpop.permute.xlu0 %3443
    %3446 = vset.pattern.permute.xlu0 4
    %3447 = vperm.xlu0 %3446, %v100
    %v3448 = vpop.permute.xlu0 %3447
    %3450 = vset.pattern.permute.xlu0 4
    %3451 = vperm.xlu0 %3450, %v101
    %v3452 = vpop.permute.xlu0 %3451
    %3454 = vset.pattern.permute.xlu0 4
    %3455 = vperm.xlu0 %3454, %v102
    %v3456 = vpop.permute.xlu0 %3455
    %v3458 = vadd.f32 %v3378, %v3396
    %v3459 = vadd.f32 %v3379, %v3400
    %v3460 = vadd.f32 %v3380, %v3404
    %v3461 = vadd.f32 %v3381, %v3408
    %v3462 = vadd.f32 %v3382, %v3412
    %v3463 = vadd.f32 %v3383, %v3416
    %v3464 = vadd.f32 %v3384, %v3420
    %v3465 = vadd.f32 %v3385, %v3424
    %v3466 = vadd.f32 %v3386, %v3428
    %v3467 = vadd.f32 %v3387, %v3432
    %v3468 = vadd.f32 %v3388, %v3436
    %v3469 = vadd.f32 %v3389, %v3440
    %v3470 = vadd.f32 %v3390, %v3444
    %v3471 = vadd.f32 %v3391, %v3448
    %v3472 = vadd.f32 %v3392, %v3452
    %v3473 = vadd.f32 %v3393, %v3456
    %v3474 = vld [vmem:[%s1 + $0x1] sm:$0x1]
    %v3475 = vperm.slane %v3474, 0
    %v3476 = vmul.f32 %v3315, %v3475
    %v3477 = vmul.f32 %v3319, %v3475
    %v3478 = vmul.f32 %v3323, %v3475
    %v3479 = vmul.f32 %v3327, %v3475
    %v3480 = vmul.f32 %v3331, %v3475
    %v3481 = vmul.f32 %v3335, %v3475
    %v3482 = vmul.f32 %v3339, %v3475
    %v3483 = vmul.f32 %v3343, %v3475
    %v3484 = vmul.f32 %v3347, %v3475
    %v3485 = vmul.f32 %v3351, %v3475
    %v3486 = vmul.f32 %v3355, %v3475
    %v3487 = vmul.f32 %v3359, %v3475
    %v3488 = vmul.f32 %v3363, %v3475
    %v3489 = vmul.f32 %v3367, %v3475
    %v3490 = vmul.f32 %v3371, %v3475
    %v3491 = vmul.f32 %v3375, %v3475
    %v3492 = vadd.f32 %v3476, %v3396
    %v3493 = vadd.f32 %v3477, %v3400
    %v3494 = vadd.f32 %v3478, %v3404
    %v3495 = vadd.f32 %v3479, %v3408
    %v3496 = vadd.f32 %v3480, %v3412
    %v3497 = vadd.f32 %v3481, %v3416
    %v3498 = vadd.f32 %v3482, %v3420
    %v3499 = vadd.f32 %v3483, %v3424
    %v3500 = vadd.f32 %v3484, %v3428
    %v3501 = vadd.f32 %v3485, %v3432
    %v3502 = vadd.f32 %v3486, %v3436
    %v3503 = vadd.f32 %v3487, %v3440
    %v3504 = vadd.f32 %v3488, %v3444
    %v3505 = vadd.f32 %v3489, %v3448
    %v3506 = vadd.f32 %v3490, %v3452
    %v3507 = vadd.f32 %v3491, %v3456
    %v3508 = vld [vmem:[%s1 + $0x2] sm:$0x1]
    %v3509 = vperm.slane %v3508, 0
    %v3510 = vmul.f32 %v3315, %v3509
    %v3511 = vmul.f32 %v3319, %v3509
    %v3512 = vmul.f32 %v3323, %v3509
    %v3513 = vmul.f32 %v3327, %v3509
    %v3514 = vmul.f32 %v3331, %v3509
    %v3515 = vmul.f32 %v3335, %v3509
    %v3516 = vmul.f32 %v3339, %v3509
    %v3517 = vmul.f32 %v3343, %v3509
    %v3518 = vmul.f32 %v3347, %v3509
    %v3519 = vmul.f32 %v3351, %v3509
    %v3520 = vmul.f32 %v3355, %v3509
    %v3521 = vmul.f32 %v3359, %v3509
    %v3522 = vmul.f32 %v3363, %v3509
    %v3523 = vmul.f32 %v3367, %v3509
    %v3524 = vmul.f32 %v3371, %v3509
    %v3525 = vmul.f32 %v3375, %v3509
    %v3526 = vadd.f32 %v3510, %v3396
    %v3527 = vadd.f32 %v3511, %v3400
    %v3528 = vadd.f32 %v3512, %v3404
    %v3529 = vadd.f32 %v3513, %v3408
    %v3530 = vadd.f32 %v3514, %v3412
    %v3531 = vadd.f32 %v3515, %v3416
    %v3532 = vadd.f32 %v3516, %v3420
    %v3533 = vadd.f32 %v3517, %v3424
    %v3534 = vadd.f32 %v3518, %v3428
    %v3535 = vadd.f32 %v3519, %v3432
    %v3536 = vadd.f32 %v3520, %v3436
    %v3537 = vadd.f32 %v3521, %v3440
    %v3538 = vadd.f32 %v3522, %v3444
    %v3539 = vadd.f32 %v3523, %v3448
    %v3540 = vadd.f32 %v3524, %v3452
    %v3541 = vadd.f32 %v3525, %v3456
    %v3542 = vld [vmem:[%s1 + $0x3] sm:$0x1]
    %v3543 = vperm.slane %v3542, 0
    %v3544 = vmul.f32 %v3315, %v3543
    %v3545 = vmul.f32 %v3319, %v3543
    %v3546 = vmul.f32 %v3323, %v3543
    %v3547 = vmul.f32 %v3327, %v3543
    %v3548 = vmul.f32 %v3331, %v3543
    %v3549 = vmul.f32 %v3335, %v3543
    %v3550 = vmul.f32 %v3339, %v3543
    %v3551 = vmul.f32 %v3343, %v3543
    %v3552 = vmul.f32 %v3347, %v3543
    %v3553 = vmul.f32 %v3351, %v3543
    %v3554 = vmul.f32 %v3355, %v3543
    %v3555 = vmul.f32 %v3359, %v3543
    %v3556 = vmul.f32 %v3363, %v3543
    %v3557 = vmul.f32 %v3367, %v3543
    %v3558 = vmul.f32 %v3371, %v3543
    %v3559 = vmul.f32 %v3375, %v3543
    %v3560 = vadd.f32 %v3544, %v3396
    %v3561 = vadd.f32 %v3545, %v3400
    %v3562 = vadd.f32 %v3546, %v3404
    %v3563 = vadd.f32 %v3547, %v3408
    %v3564 = vadd.f32 %v3548, %v3412
    %v3565 = vadd.f32 %v3549, %v3416
    %v3566 = vadd.f32 %v3550, %v3420
    %v3567 = vadd.f32 %v3551, %v3424
    %v3568 = vadd.f32 %v3552, %v3428
    %v3569 = vadd.f32 %v3553, %v3432
    %v3570 = vadd.f32 %v3554, %v3436
    %v3571 = vadd.f32 %v3555, %v3440
    %v3572 = vadd.f32 %v3556, %v3444
    %v3573 = vadd.f32 %v3557, %v3448
    %v3574 = vadd.f32 %v3558, %v3452
    %v3575 = vadd.f32 %v3559, %v3456
    %v3576 = vld [vmem:[%s1 + $0x4] sm:$0x1]
    %v3577 = vperm.slane %v3576, 0
    %v3578 = vmul.f32 %v3315, %v3577
    %v3579 = vmul.f32 %v3319, %v3577
    %v3580 = vmul.f32 %v3323, %v3577
    %v3581 = vmul.f32 %v3327, %v3577
    %v3582 = vmul.f32 %v3331, %v3577
    %v3583 = vmul.f32 %v3335, %v3577
    %v3584 = vmul.f32 %v3339, %v3577
    %v3585 = vmul.f32 %v3343, %v3577
    %v3586 = vmul.f32 %v3347, %v3577
    %v3587 = vmul.f32 %v3351, %v3577
    %v3588 = vmul.f32 %v3355, %v3577
    %v3589 = vmul.f32 %v3359, %v3577
    %v3590 = vmul.f32 %v3363, %v3577
    %v3591 = vmul.f32 %v3367, %v3577
    %v3592 = vmul.f32 %v3371, %v3577
    %v3593 = vmul.f32 %v3375, %v3577
    %v3594 = vadd.f32 %v3578, %v3396
    %v3595 = vadd.f32 %v3579, %v3400
    %v3596 = vadd.f32 %v3580, %v3404
    %v3597 = vadd.f32 %v3581, %v3408
    %v3598 = vadd.f32 %v3582, %v3412
    %v3599 = vadd.f32 %v3583, %v3416
    %v3600 = vadd.f32 %v3584, %v3420
    %v3601 = vadd.f32 %v3585, %v3424
    %v3602 = vadd.f32 %v3586, %v3428
    %v3603 = vadd.f32 %v3587, %v3432
    %v3604 = vadd.f32 %v3588, %v3436
    %v3605 = vadd.f32 %v3589, %v3440
    %v3606 = vadd.f32 %v3590, %v3444
    %v3607 = vadd.f32 %v3591, %v3448
    %v3608 = vadd.f32 %v3592, %v3452
    %v3609 = vadd.f32 %v3593, %v3456
    %v3611 = vsel %vm677, %v68, 0
    %v3614 = vsel %vm677, %v69, 0
    %v3617 = vsel %vm677, %v70, 0
    %v3620 = vsel %vm677, %v71, 0
    %v3623 = vsel %vm677, %v72, 0
    %v3626 = vsel %vm677, %v73, 0
    %v3629 = vsel %vm677, %v74, 0
    %v3632 = vsel %vm677, %v75, 0
    %v3635 = vsel %vm677, %v76, 0
    %v3638 = vsel %vm677, %v77, 0
    %v3641 = vsel %vm677, %v78, 0
    %v3644 = vsel %vm677, %v79, 0
    %v3647 = vsel %vm677, %v80, 0
    %v3650 = vsel %vm677, %v81, 0
    %v3653 = vsel %vm677, %v82, 0
    %v3656 = vsel %vm677, %v83, 0
    %3658 = vmatpush.msra.mxu0 0.0
    %3659 = vmatpush.msra.mxu0 0.0
    %3660 = vmatpush.msra.mxu0 0.0
    %3661 = vmatpush.msra.mxu0 0.0
    %3662 = vmatpush.msra.mxu0 0.0
    %3663 = vmatpush.msra.mxu0 0.0
    %3664 = vmatpush.msra.mxu0 0.0
    %3665 = vmatpush.msra.mxu0 0.0
    %3666 = vmatpush.msra.mxu0 0.0
    %3667 = vmatpush.msra.mxu0 0.0
    %3668 = vmatpush.msra.mxu0 0.0
    %3669 = vmatpush.msra.mxu0 0.0
    %3670 = vmatpush.msra.mxu0 0.0
    %3671 = vmatpush.msra.mxu0 0.0
    %3672 = vmatpush.msra.mxu0 0.0
    %3673 = vmatpush.msra.mxu0 0.0
    %v3674 = vand.u32 %v3611, 4294901760
    %v3675 = vsub.f32 %v3611, %v3674
    %v3676 = vand.u32 %v3675, 4294901760
    %v3677 = vsub.f32 %v3675, %v3676
    %v3678 = vand.u32 %v3677, 4294901760
    %3679 = vmatmul.f32.gmra.mxu0 %v3678
    %v3680 = vpop.f32.mrf.mxu0
    %v3681 = vadd.f32 0.0, %v3680
    %v3682 = vand.u32 %v3614, 4294901760
    %v3683 = vsub.f32 %v3614, %v3682
    %v3684 = vand.u32 %v3683, 4294901760
    %v3685 = vsub.f32 %v3683, %v3684
    %v3686 = vand.u32 %v3685, 4294901760
    %3687 = vmatmul.f32.gmra.mxu0 %v3686
    %v3688 = vpop.f32.mrf.mxu0
    %v3689 = vadd.f32 0.0, %v3688
    %v3690 = vand.u32 %v3617, 4294901760
    %v3691 = vsub.f32 %v3617, %v3690
    %v3692 = vand.u32 %v3691, 4294901760
    %v3693 = vsub.f32 %v3691, %v3692
    %v3694 = vand.u32 %v3693, 4294901760
    %3695 = vmatmul.f32.gmra.mxu0 %v3694
    %v3696 = vpop.f32.mrf.mxu0
    %v3697 = vadd.f32 0.0, %v3696
    %v3698 = vand.u32 %v3620, 4294901760
    %v3699 = vsub.f32 %v3620, %v3698
    %v3700 = vand.u32 %v3699, 4294901760
    %v3701 = vsub.f32 %v3699, %v3700
    %v3702 = vand.u32 %v3701, 4294901760
    %3703 = vmatmul.f32.gmra.mxu0 %v3702
    %v3704 = vpop.f32.mrf.mxu0
    %v3705 = vadd.f32 0.0, %v3704
    %v3706 = vand.u32 %v3623, 4294901760
    %v3707 = vsub.f32 %v3623, %v3706
    %v3708 = vand.u32 %v3707, 4294901760
    %v3709 = vsub.f32 %v3707, %v3708
    %v3710 = vand.u32 %v3709, 4294901760
    %3711 = vmatmul.f32.gmra.mxu0 %v3710
    %v3712 = vpop.f32.mrf.mxu0
    %v3713 = vadd.f32 0.0, %v3712
    %v3714 = vand.u32 %v3626, 4294901760
    %v3715 = vsub.f32 %v3626, %v3714
    %v3716 = vand.u32 %v3715, 4294901760
    %v3717 = vsub.f32 %v3715, %v3716
    %v3718 = vand.u32 %v3717, 4294901760
    %3719 = vmatmul.f32.gmra.mxu0 %v3718
    %v3720 = vpop.f32.mrf.mxu0
    %v3721 = vadd.f32 0.0, %v3720
    %v3722 = vand.u32 %v3629, 4294901760
    %v3723 = vsub.f32 %v3629, %v3722
    %v3724 = vand.u32 %v3723, 4294901760
    %v3725 = vsub.f32 %v3723, %v3724
    %v3726 = vand.u32 %v3725, 4294901760
    %3727 = vmatmul.f32.gmra.mxu0 %v3726
    %v3728 = vpop.f32.mrf.mxu0
    %v3729 = vadd.f32 0.0, %v3728
    %v3730 = vand.u32 %v3632, 4294901760
    %v3731 = vsub.f32 %v3632, %v3730
    %v3732 = vand.u32 %v3731, 4294901760
    %v3733 = vsub.f32 %v3731, %v3732
    %v3734 = vand.u32 %v3733, 4294901760
    %3735 = vmatmul.f32.gmra.mxu0 %v3734
    %v3736 = vpop.f32.mrf.mxu0
    %v3737 = vadd.f32 0.0, %v3736
    %v3738 = vand.u32 %v3635, 4294901760
    %v3739 = vsub.f32 %v3635, %v3738
    %v3740 = vand.u32 %v3739, 4294901760
    %v3741 = vsub.f32 %v3739, %v3740
    %v3742 = vand.u32 %v3741, 4294901760
    %3743 = vmatmul.f32.gmra.mxu0 %v3742
    %v3744 = vpop.f32.mrf.mxu0
    %v3745 = vadd.f32 0.0, %v3744
    %v3746 = vand.u32 %v3638, 4294901760
    %v3747 = vsub.f32 %v3638, %v3746
    %v3748 = vand.u32 %v3747, 4294901760
    %v3749 = vsub.f32 %v3747, %v3748
    %v3750 = vand.u32 %v3749, 4294901760
    %3751 = vmatmul.f32.gmra.mxu0 %v3750
    %v3752 = vpop.f32.mrf.mxu0
    %v3753 = vadd.f32 0.0, %v3752
    %v3754 = vand.u32 %v3641, 4294901760
    %v3755 = vsub.f32 %v3641, %v3754
    %v3756 = vand.u32 %v3755, 4294901760
    %v3757 = vsub.f32 %v3755, %v3756
    %v3758 = vand.u32 %v3757, 4294901760
    %3759 = vmatmul.f32.gmra.mxu0 %v3758
    %v3760 = vpop.f32.mrf.mxu0
    %v3761 = vadd.f32 0.0, %v3760
    %v3762 = vand.u32 %v3644, 4294901760
    %v3763 = vsub.f32 %v3644, %v3762
    %v3764 = vand.u32 %v3763, 4294901760
    %v3765 = vsub.f32 %v3763, %v3764
    %v3766 = vand.u32 %v3765, 4294901760
    %3767 = vmatmul.f32.gmra.mxu0 %v3766
    %v3768 = vpop.f32.mrf.mxu0
    %v3769 = vadd.f32 0.0, %v3768
    %v3770 = vand.u32 %v3647, 4294901760
    %v3771 = vsub.f32 %v3647, %v3770
    %v3772 = vand.u32 %v3771, 4294901760
    %v3773 = vsub.f32 %v3771, %v3772
    %v3774 = vand.u32 %v3773, 4294901760
    %3775 = vmatmul.f32.gmra.mxu0 %v3774
    %v3776 = vpop.f32.mrf.mxu0
    %v3777 = vadd.f32 0.0, %v3776
    %v3778 = vand.u32 %v3650, 4294901760
    %v3779 = vsub.f32 %v3650, %v3778
    %v3780 = vand.u32 %v3779, 4294901760
    %v3781 = vsub.f32 %v3779, %v3780
    %v3782 = vand.u32 %v3781, 4294901760
    %3783 = vmatmul.f32.gmra.mxu0 %v3782
    %v3784 = vpop.f32.mrf.mxu0
    %v3785 = vadd.f32 0.0, %v3784
    %v3786 = vand.u32 %v3653, 4294901760
    %v3787 = vsub.f32 %v3653, %v3786
    %v3788 = vand.u32 %v3787, 4294901760
    %v3789 = vsub.f32 %v3787, %v3788
    %v3790 = vand.u32 %v3789, 4294901760
    %3791 = vmatmul.f32.gmra.mxu0 %v3790
    %v3792 = vpop.f32.mrf.mxu0
    %v3793 = vadd.f32 0.0, %v3792
    %v3794 = vand.u32 %v3656, 4294901760
    %v3795 = vsub.f32 %v3656, %v3794
    %v3796 = vand.u32 %v3795, 4294901760
    %v3797 = vsub.f32 %v3795, %v3796
    %v3798 = vand.u32 %v3797, 4294901760
    %3799 = vmatmul.f32.gmra.mxu0 %v3798
    %v3800 = vpop.f32.mrf.mxu0
    %v3801 = vadd.f32 0.0, %v3800
    %3802 = vdwg.mxu0
    %3803 = vmatpush.msra.mxu0 0.0
    %3804 = vmatpush.msra.mxu0 0.0
    %3805 = vmatpush.msra.mxu0 0.0
    %3806 = vmatpush.msra.mxu0 0.0
    %3807 = vmatpush.msra.mxu0 0.0
    %3808 = vmatpush.msra.mxu0 0.0
    %3809 = vmatpush.msra.mxu0 0.0
    %3810 = vmatpush.msra.mxu0 0.0
    %3811 = vmatpush.msra.mxu0 0.0
    %3812 = vmatpush.msra.mxu0 0.0
    %3813 = vmatpush.msra.mxu0 0.0
    %3814 = vmatpush.msra.mxu0 0.0
    %3815 = vmatpush.msra.mxu0 0.0
    %3816 = vmatpush.msra.mxu0 0.0
    %3817 = vmatpush.msra.mxu0 0.0
    %3818 = vmatpush.msra.mxu0 0.0
    %v3819 = vand.u32 %v3611, 4294901760
    %3820 = vmatmul.f32.gmra.mxu0 %v3819
    %v3821 = vpop.f32.mrf.mxu0
    %v3822 = vadd.f32 %v3681, %v3821
    %v3823 = vand.u32 %v3614, 4294901760
    %3824 = vmatmul.f32.gmra.mxu0 %v3823
    %v3825 = vpop.f32.mrf.mxu0
    %v3826 = vadd.f32 %v3689, %v3825
    %v3827 = vand.u32 %v3617, 4294901760
    %3828 = vmatmul.f32.gmra.mxu0 %v3827
    %v3829 = vpop.f32.mrf.mxu0
    %v3830 = vadd.f32 %v3697, %v3829
    %v3831 = vand.u32 %v3620, 4294901760
    %3832 = vmatmul.f32.gmra.mxu0 %v3831
    %v3833 = vpop.f32.mrf.mxu0
    %v3834 = vadd.f32 %v3705, %v3833
    %v3835 = vand.u32 %v3623, 4294901760
    %3836 = vmatmul.f32.gmra.mxu0 %v3835
    %v3837 = vpop.f32.mrf.mxu0
    %v3838 = vadd.f32 %v3713, %v3837
    %v3839 = vand.u32 %v3626, 4294901760
    %3840 = vmatmul.f32.gmra.mxu0 %v3839
    %v3841 = vpop.f32.mrf.mxu0
    %v3842 = vadd.f32 %v3721, %v3841
    %v3843 = vand.u32 %v3629, 4294901760
    %3844 = vmatmul.f32.gmra.mxu0 %v3843
    %v3845 = vpop.f32.mrf.mxu0
    %v3846 = vadd.f32 %v3729, %v3845
    %v3847 = vand.u32 %v3632, 4294901760
    %3848 = vmatmul.f32.gmra.mxu0 %v3847
    %v3849 = vpop.f32.mrf.mxu0
    %v3850 = vadd.f32 %v3737, %v3849
    %v3851 = vand.u32 %v3635, 4294901760
    %3852 = vmatmul.f32.gmra.mxu0 %v3851
    %v3853 = vpop.f32.mrf.mxu0
    %v3854 = vadd.f32 %v3745, %v3853
    %v3855 = vand.u32 %v3638, 4294901760
    %3856 = vmatmul.f32.gmra.mxu0 %v3855
    %v3857 = vpop.f32.mrf.mxu0
    %v3858 = vadd.f32 %v3753, %v3857
    %v3859 = vand.u32 %v3641, 4294901760
    %3860 = vmatmul.f32.gmra.mxu0 %v3859
    %v3861 = vpop.f32.mrf.mxu0
    %v3862 = vadd.f32 %v3761, %v3861
    %v3863 = vand.u32 %v3644, 4294901760
    %3864 = vmatmul.f32.gmra.mxu0 %v3863
    %v3865 = vpop.f32.mrf.mxu0
    %v3866 = vadd.f32 %v3769, %v3865
    %v3867 = vand.u32 %v3647, 4294901760
    %3868 = vmatmul.f32.gmra.mxu0 %v3867
    %v3869 = vpop.f32.mrf.mxu0
    %v3870 = vadd.f32 %v3777, %v3869
    %v3871 = vand.u32 %v3650, 4294901760
    %3872 = vmatmul.f32.gmra.mxu0 %v3871
    %v3873 = vpop.f32.mrf.mxu0
    %v3874 = vadd.f32 %v3785, %v3873
    %v3875 = vand.u32 %v3653, 4294901760
    %3876 = vmatmul.f32.gmra.mxu0 %v3875
    %v3877 = vpop.f32.mrf.mxu0
    %v3878 = vadd.f32 %v3793, %v3877
    %v3879 = vand.u32 %v3656, 4294901760
    %3880 = vmatmul.f32.gmra.mxu0 %v3879
    %v3881 = vpop.f32.mrf.mxu0
    %v3882 = vadd.f32 %v3801, %v3881
    %3883 = vdwg.mxu0
    %3884 = vmatpush.msra.mxu0 0.0
    %3885 = vmatpush.msra.mxu0 0.0
    %3886 = vmatpush.msra.mxu0 0.0
    %3887 = vmatpush.msra.mxu0 0.0
    %3888 = vmatpush.msra.mxu0 0.0
    %3889 = vmatpush.msra.mxu0 0.0
    %3890 = vmatpush.msra.mxu0 0.0
    %3891 = vmatpush.msra.mxu0 0.0
    %3892 = vmatpush.msra.mxu0 0.0
    %3893 = vmatpush.msra.mxu0 0.0
    %3894 = vmatpush.msra.mxu0 0.0
    %3895 = vmatpush.msra.mxu0 0.0
    %3896 = vmatpush.msra.mxu0 0.0
    %3897 = vmatpush.msra.mxu0 0.0
    %3898 = vmatpush.msra.mxu0 0.0
    %3899 = vmatpush.msra.mxu0 0.0
    %v3900 = vand.u32 %v3611, 4294901760
    %v3901 = vsub.f32 %v3611, %v3900
    %3902 = vmatmul.f32.gmra.mxu0 %v3901
    %v3903 = vpop.f32.mrf.mxu0
    %v3904 = vadd.f32 %v3822, %v3903
    %v3905 = vand.u32 %v3614, 4294901760
    %v3906 = vsub.f32 %v3614, %v3905
    %3907 = vmatmul.f32.gmra.mxu0 %v3906
    %v3908 = vpop.f32.mrf.mxu0
    %v3909 = vadd.f32 %v3826, %v3908
    %v3910 = vand.u32 %v3617, 4294901760
    %v3911 = vsub.f32 %v3617, %v3910
    %3912 = vmatmul.f32.gmra.mxu0 %v3911
    %v3913 = vpop.f32.mrf.mxu0
    %v3914 = vadd.f32 %v3830, %v3913
    %v3915 = vand.u32 %v3620, 4294901760
    %v3916 = vsub.f32 %v3620, %v3915
    %3917 = vmatmul.f32.gmra.mxu0 %v3916
    %v3918 = vpop.f32.mrf.mxu0
    %v3919 = vadd.f32 %v3834, %v3918
    %v3920 = vand.u32 %v3623, 4294901760
    %v3921 = vsub.f32 %v3623, %v3920
    %3922 = vmatmul.f32.gmra.mxu0 %v3921
    %v3923 = vpop.f32.mrf.mxu0
    %v3924 = vadd.f32 %v3838, %v3923
    %v3925 = vand.u32 %v3626, 4294901760
    %v3926 = vsub.f32 %v3626, %v3925
    %3927 = vmatmul.f32.gmra.mxu0 %v3926
    %v3928 = vpop.f32.mrf.mxu0
    %v3929 = vadd.f32 %v3842, %v3928
    %v3930 = vand.u32 %v3629, 4294901760
    %v3931 = vsub.f32 %v3629, %v3930
    %3932 = vmatmul.f32.gmra.mxu0 %v3931
    %v3933 = vpop.f32.mrf.mxu0
    %v3934 = vadd.f32 %v3846, %v3933
    %v3935 = vand.u32 %v3632, 4294901760
    %v3936 = vsub.f32 %v3632, %v3935
    %3937 = vmatmul.f32.gmra.mxu0 %v3936
    %v3938 = vpop.f32.mrf.mxu0
    %v3939 = vadd.f32 %v3850, %v3938
    %v3940 = vand.u32 %v3635, 4294901760
    %v3941 = vsub.f32 %v3635, %v3940
    %3942 = vmatmul.f32.gmra.mxu0 %v3941
    %v3943 = vpop.f32.mrf.mxu0
    %v3944 = vadd.f32 %v3854, %v3943
    %v3945 = vand.u32 %v3638, 4294901760
    %v3946 = vsub.f32 %v3638, %v3945
    %3947 = vmatmul.f32.gmra.mxu0 %v3946
    %v3948 = vpop.f32.mrf.mxu0
    %v3949 = vadd.f32 %v3858, %v3948
    %v3950 = vand.u32 %v3641, 4294901760
    %v3951 = vsub.f32 %v3641, %v3950
    %3952 = vmatmul.f32.gmra.mxu0 %v3951
    %v3953 = vpop.f32.mrf.mxu0
    %v3954 = vadd.f32 %v3862, %v3953
    %v3955 = vand.u32 %v3644, 4294901760
    %v3956 = vsub.f32 %v3644, %v3955
    %3957 = vmatmul.f32.gmra.mxu0 %v3956
    %v3958 = vpop.f32.mrf.mxu0
    %v3959 = vadd.f32 %v3866, %v3958
    %v3960 = vand.u32 %v3647, 4294901760
    %v3961 = vsub.f32 %v3647, %v3960
    %3962 = vmatmul.f32.gmra.mxu0 %v3961
    %v3963 = vpop.f32.mrf.mxu0
    %v3964 = vadd.f32 %v3870, %v3963
    %v3965 = vand.u32 %v3650, 4294901760
    %v3966 = vsub.f32 %v3650, %v3965
    %3967 = vmatmul.f32.gmra.mxu0 %v3966
    %v3968 = vpop.f32.mrf.mxu0
    %v3969 = vadd.f32 %v3874, %v3968
    %v3970 = vand.u32 %v3653, 4294901760
    %v3971 = vsub.f32 %v3653, %v3970
    %3972 = vmatmul.f32.gmra.mxu0 %v3971
    %v3973 = vpop.f32.mrf.mxu0
    %v3974 = vadd.f32 %v3878, %v3973
    %v3975 = vand.u32 %v3656, 4294901760
    %v3976 = vsub.f32 %v3656, %v3975
    %3977 = vmatmul.f32.gmra.mxu0 %v3976
    %v3978 = vpop.f32.mrf.mxu0
    %v3979 = vadd.f32 %v3882, %v3978
    %3980 = vdwg.mxu0
    %3981 = vmatpush.msra.mxu0 0.0
    %3982 = vmatpush.msra.mxu0 0.0
    %3983 = vmatpush.msra.mxu0 0.0
    %3984 = vmatpush.msra.mxu0 0.0
    %3985 = vmatpush.msra.mxu0 0.0
    %3986 = vmatpush.msra.mxu0 0.0
    %3987 = vmatpush.msra.mxu0 0.0
    %3988 = vmatpush.msra.mxu0 0.0
    %3989 = vmatpush.msra.mxu0 0.0
    %3990 = vmatpush.msra.mxu0 0.0
    %3991 = vmatpush.msra.mxu0 0.0
    %3992 = vmatpush.msra.mxu0 0.0
    %3993 = vmatpush.msra.mxu0 0.0
    %3994 = vmatpush.msra.mxu0 0.0
    %3995 = vmatpush.msra.mxu0 0.0
    %3996 = vmatpush.msra.mxu0 0.0
    %v3997 = vand.u32 %v3611, 4294901760
    %v3998 = vsub.f32 %v3611, %v3997
    %v3999 = vand.u32 %v3998, 4294901760
    %4000 = vmatmul.f32.gmra.mxu0 %v3999
    %v4001 = vpop.f32.mrf.mxu0
    %v4002 = vadd.f32 %v3904, %v4001
    %v4003 = vand.u32 %v3614, 4294901760
    %v4004 = vsub.f32 %v3614, %v4003
    %v4005 = vand.u32 %v4004, 4294901760
    %4006 = vmatmul.f32.gmra.mxu0 %v4005
    %v4007 = vpop.f32.mrf.mxu0
    %v4008 = vadd.f32 %v3909, %v4007
    %v4009 = vand.u32 %v3617, 4294901760
    %v4010 = vsub.f32 %v3617, %v4009
    %v4011 = vand.u32 %v4010, 4294901760
    %4012 = vmatmul.f32.gmra.mxu0 %v4011
    %v4013 = vpop.f32.mrf.mxu0
    %v4014 = vadd.f32 %v3914, %v4013
    %v4015 = vand.u32 %v3620, 4294901760
    %v4016 = vsub.f32 %v3620, %v4015
    %v4017 = vand.u32 %v4016, 4294901760
    %4018 = vmatmul.f32.gmra.mxu0 %v4017
    %v4019 = vpop.f32.mrf.mxu0
    %v4020 = vadd.f32 %v3919, %v4019
    %v4021 = vand.u32 %v3623, 4294901760
    %v4022 = vsub.f32 %v3623, %v4021
    %v4023 = vand.u32 %v4022, 4294901760
    %4024 = vmatmul.f32.gmra.mxu0 %v4023
    %v4025 = vpop.f32.mrf.mxu0
    %v4026 = vadd.f32 %v3924, %v4025
    %v4027 = vand.u32 %v3626, 4294901760
    %v4028 = vsub.f32 %v3626, %v4027
    %v4029 = vand.u32 %v4028, 4294901760
    %4030 = vmatmul.f32.gmra.mxu0 %v4029
    %v4031 = vpop.f32.mrf.mxu0
    %v4032 = vadd.f32 %v3929, %v4031
    %v4033 = vand.u32 %v3629, 4294901760
    %v4034 = vsub.f32 %v3629, %v4033
    %v4035 = vand.u32 %v4034, 4294901760
    %4036 = vmatmul.f32.gmra.mxu0 %v4035
    %v4037 = vpop.f32.mrf.mxu0
    %v4038 = vadd.f32 %v3934, %v4037
    %v4039 = vand.u32 %v3632, 4294901760
    %v4040 = vsub.f32 %v3632, %v4039
    %v4041 = vand.u32 %v4040, 4294901760
    %4042 = vmatmul.f32.gmra.mxu0 %v4041
    %v4043 = vpop.f32.mrf.mxu0
    %v4044 = vadd.f32 %v3939, %v4043
    %v4045 = vand.u32 %v3635, 4294901760
    %v4046 = vsub.f32 %v3635, %v4045
    %v4047 = vand.u32 %v4046, 4294901760
    %4048 = vmatmul.f32.gmra.mxu0 %v4047
    %v4049 = vpop.f32.mrf.mxu0
    %v4050 = vadd.f32 %v3944, %v4049
    %v4051 = vand.u32 %v3638, 4294901760
    %v4052 = vsub.f32 %v3638, %v4051
    %v4053 = vand.u32 %v4052, 4294901760
    %4054 = vmatmul.f32.gmra.mxu0 %v4053
    %v4055 = vpop.f32.mrf.mxu0
    %v4056 = vadd.f32 %v3949, %v4055
    %v4057 = vand.u32 %v3641, 4294901760
    %v4058 = vsub.f32 %v3641, %v4057
    %v4059 = vand.u32 %v4058, 4294901760
    %4060 = vmatmul.f32.gmra.mxu0 %v4059
    %v4061 = vpop.f32.mrf.mxu0
    %v4062 = vadd.f32 %v3954, %v4061
    %v4063 = vand.u32 %v3644, 4294901760
    %v4064 = vsub.f32 %v3644, %v4063
    %v4065 = vand.u32 %v4064, 4294901760
    %4066 = vmatmul.f32.gmra.mxu0 %v4065
    %v4067 = vpop.f32.mrf.mxu0
    %v4068 = vadd.f32 %v3959, %v4067
    %v4069 = vand.u32 %v3647, 4294901760
    %v4070 = vsub.f32 %v3647, %v4069
    %v4071 = vand.u32 %v4070, 4294901760
    %4072 = vmatmul.f32.gmra.mxu0 %v4071
    %v4073 = vpop.f32.mrf.mxu0
    %v4074 = vadd.f32 %v3964, %v4073
    %v4075 = vand.u32 %v3650, 4294901760
    %v4076 = vsub.f32 %v3650, %v4075
    %v4077 = vand.u32 %v4076, 4294901760
    %4078 = vmatmul.f32.gmra.mxu0 %v4077
    %v4079 = vpop.f32.mrf.mxu0
    %v4080 = vadd.f32 %v3969, %v4079
    %v4081 = vand.u32 %v3653, 4294901760
    %v4082 = vsub.f32 %v3653, %v4081
    %v4083 = vand.u32 %v4082, 4294901760
    %4084 = vmatmul.f32.gmra.mxu0 %v4083
    %v4085 = vpop.f32.mrf.mxu0
    %v4086 = vadd.f32 %v3974, %v4085
    %v4087 = vand.u32 %v3656, 4294901760
    %v4088 = vsub.f32 %v3656, %v4087
    %v4089 = vand.u32 %v4088, 4294901760
    %4090 = vmatmul.f32.gmra.mxu0 %v4089
    %v4091 = vpop.f32.mrf.mxu0
    %v4092 = vadd.f32 %v3979, %v4091
    %4093 = vdwg.mxu0
    %4094 = vmatpush.msra.mxu0 0.0
    %4095 = vmatpush.msra.mxu0 0.0
    %4096 = vmatpush.msra.mxu0 0.0
    %4097 = vmatpush.msra.mxu0 0.0
    %4098 = vmatpush.msra.mxu0 0.0
    %4099 = vmatpush.msra.mxu0 0.0
    %4100 = vmatpush.msra.mxu0 0.0
    %4101 = vmatpush.msra.mxu0 0.0
    %4102 = vmatpush.msra.mxu0 0.0
    %4103 = vmatpush.msra.mxu0 0.0
    %4104 = vmatpush.msra.mxu0 0.0
    %4105 = vmatpush.msra.mxu0 0.0
    %4106 = vmatpush.msra.mxu0 0.0
    %4107 = vmatpush.msra.mxu0 0.0
    %4108 = vmatpush.msra.mxu0 0.0
    %4109 = vmatpush.msra.mxu0 0.0
    %v4110 = vand.u32 %v3611, 4294901760
    %4111 = vmatmul.f32.gmra.mxu0 %v4110
    %v4112 = vpop.f32.mrf.mxu0
    %v4113 = vadd.f32 %v4002, %v4112
    %v4114 = vand.u32 %v3614, 4294901760
    %4115 = vmatmul.f32.gmra.mxu0 %v4114
    %v4116 = vpop.f32.mrf.mxu0
    %v4117 = vadd.f32 %v4008, %v4116
    %v4118 = vand.u32 %v3617, 4294901760
    %4119 = vmatmul.f32.gmra.mxu0 %v4118
    %v4120 = vpop.f32.mrf.mxu0
    %v4121 = vadd.f32 %v4014, %v4120
    %v4122 = vand.u32 %v3620, 4294901760
    %4123 = vmatmul.f32.gmra.mxu0 %v4122
    %v4124 = vpop.f32.mrf.mxu0
    %v4125 = vadd.f32 %v4020, %v4124
    %v4126 = vand.u32 %v3623, 4294901760
    %4127 = vmatmul.f32.gmra.mxu0 %v4126
    %v4128 = vpop.f32.mrf.mxu0
    %v4129 = vadd.f32 %v4026, %v4128
    %v4130 = vand.u32 %v3626, 4294901760
    %4131 = vmatmul.f32.gmra.mxu0 %v4130
    %v4132 = vpop.f32.mrf.mxu0
    %v4133 = vadd.f32 %v4032, %v4132
    %v4134 = vand.u32 %v3629, 4294901760
    %4135 = vmatmul.f32.gmra.mxu0 %v4134
    %v4136 = vpop.f32.mrf.mxu0
    %v4137 = vadd.f32 %v4038, %v4136
    %v4138 = vand.u32 %v3632, 4294901760
    %4139 = vmatmul.f32.gmra.mxu0 %v4138
    %v4140 = vpop.f32.mrf.mxu0
    %v4141 = vadd.f32 %v4044, %v4140
    %v4142 = vand.u32 %v3635, 4294901760
    %4143 = vmatmul.f32.gmra.mxu0 %v4142
    %v4144 = vpop.f32.mrf.mxu0
    %v4145 = vadd.f32 %v4050, %v4144
    %v4146 = vand.u32 %v3638, 4294901760
    %4147 = vmatmul.f32.gmra.mxu0 %v4146
    %v4148 = vpop.f32.mrf.mxu0
    %v4149 = vadd.f32 %v4056, %v4148
    %v4150 = vand.u32 %v3641, 4294901760
    %4151 = vmatmul.f32.gmra.mxu0 %v4150
    %v4152 = vpop.f32.mrf.mxu0
    %v4153 = vadd.f32 %v4062, %v4152
    %v4154 = vand.u32 %v3644, 4294901760
    %4155 = vmatmul.f32.gmra.mxu0 %v4154
    %v4156 = vpop.f32.mrf.mxu0
    %v4157 = vadd.f32 %v4068, %v4156
    %v4158 = vand.u32 %v3647, 4294901760
    %4159 = vmatmul.f32.gmra.mxu0 %v4158
    %v4160 = vpop.f32.mrf.mxu0
    %v4161 = vadd.f32 %v4074, %v4160
    %v4162 = vand.u32 %v3650, 4294901760
    %4163 = vmatmul.f32.gmra.mxu0 %v4162
    %v4164 = vpop.f32.mrf.mxu0
    %v4165 = vadd.f32 %v4080, %v4164
    %v4166 = vand.u32 %v3653, 4294901760
    %4167 = vmatmul.f32.gmra.mxu0 %v4166
    %v4168 = vpop.f32.mrf.mxu0
    %v4169 = vadd.f32 %v4086, %v4168
    %v4170 = vand.u32 %v3656, 4294901760
    %4171 = vmatmul.f32.gmra.mxu0 %v4170
    %v4172 = vpop.f32.mrf.mxu0
    %v4173 = vadd.f32 %v4092, %v4172
    %4174 = vdwg.mxu0
    %4175 = vmatpush.msra.mxu0 0.0
    %4176 = vmatpush.msra.mxu0 0.0
    %4177 = vmatpush.msra.mxu0 0.0
    %4178 = vmatpush.msra.mxu0 0.0
    %4179 = vmatpush.msra.mxu0 0.0
    %4180 = vmatpush.msra.mxu0 0.0
    %4181 = vmatpush.msra.mxu0 0.0
    %4182 = vmatpush.msra.mxu0 0.0
    %4183 = vmatpush.msra.mxu0 0.0
    %4184 = vmatpush.msra.mxu0 0.0
    %4185 = vmatpush.msra.mxu0 0.0
    %4186 = vmatpush.msra.mxu0 0.0
    %4187 = vmatpush.msra.mxu0 0.0
    %4188 = vmatpush.msra.mxu0 0.0
    %4189 = vmatpush.msra.mxu0 0.0
    %4190 = vmatpush.msra.mxu0 0.0
    %v4191 = vand.u32 %v3611, 4294901760
    %4192 = vmatmul.f32.gmra.mxu0 %v4191
    %v4193 = vpop.f32.mrf.mxu0
    %v4194 = vadd.f32 %v4113, %v4193
    %v4195 = vand.u32 %v3614, 4294901760
    %4196 = vmatmul.f32.gmra.mxu0 %v4195
    %v4197 = vpop.f32.mrf.mxu0
    %v4198 = vadd.f32 %v4117, %v4197
    %v4199 = vand.u32 %v3617, 4294901760
    %4200 = vmatmul.f32.gmra.mxu0 %v4199
    %v4201 = vpop.f32.mrf.mxu0
    %v4202 = vadd.f32 %v4121, %v4201
    %v4203 = vand.u32 %v3620, 4294901760
    %4204 = vmatmul.f32.gmra.mxu0 %v4203
    %v4205 = vpop.f32.mrf.mxu0
    %v4206 = vadd.f32 %v4125, %v4205
    %v4207 = vand.u32 %v3623, 4294901760
    %4208 = vmatmul.f32.gmra.mxu0 %v4207
    %v4209 = vpop.f32.mrf.mxu0
    %v4210 = vadd.f32 %v4129, %v4209
    %v4211 = vand.u32 %v3626, 4294901760
    %4212 = vmatmul.f32.gmra.mxu0 %v4211
    %v4213 = vpop.f32.mrf.mxu0
    %v4214 = vadd.f32 %v4133, %v4213
    %v4215 = vand.u32 %v3629, 4294901760
    %4216 = vmatmul.f32.gmra.mxu0 %v4215
    %v4217 = vpop.f32.mrf.mxu0
    %v4218 = vadd.f32 %v4137, %v4217
    %v4219 = vand.u32 %v3632, 4294901760
    %4220 = vmatmul.f32.gmra.mxu0 %v4219
    %v4221 = vpop.f32.mrf.mxu0
    %v4222 = vadd.f32 %v4141, %v4221
    %v4223 = vand.u32 %v3635, 4294901760
    %4224 = vmatmul.f32.gmra.mxu0 %v4223
    %v4225 = vpop.f32.mrf.mxu0
    %v4226 = vadd.f32 %v4145, %v4225
    %v4227 = vand.u32 %v3638, 4294901760
    %4228 = vmatmul.f32.gmra.mxu0 %v4227
    %v4229 = vpop.f32.mrf.mxu0
    %v4230 = vadd.f32 %v4149, %v4229
    %v4231 = vand.u32 %v3641, 4294901760
    %4232 = vmatmul.f32.gmra.mxu0 %v4231
    %v4233 = vpop.f32.mrf.mxu0
    %v4234 = vadd.f32 %v4153, %v4233
    %v4235 = vand.u32 %v3644, 4294901760
    %4236 = vmatmul.f32.gmra.mxu0 %v4235
    %v4237 = vpop.f32.mrf.mxu0
    %v4238 = vadd.f32 %v4157, %v4237
    %v4239 = vand.u32 %v3647, 4294901760
    %4240 = vmatmul.f32.gmra.mxu0 %v4239
    %v4241 = vpop.f32.mrf.mxu0
    %v4242 = vadd.f32 %v4161, %v4241
    %v4243 = vand.u32 %v3650, 4294901760
    %4244 = vmatmul.f32.gmra.mxu0 %v4243
    %v4245 = vpop.f32.mrf.mxu0
    %v4246 = vadd.f32 %v4165, %v4245
    %v4247 = vand.u32 %v3653, 4294901760
    %4248 = vmatmul.f32.gmra.mxu0 %v4247
    %v4249 = vpop.f32.mrf.mxu0
    %v4250 = vadd.f32 %v4169, %v4249
    %v4251 = vand.u32 %v3656, 4294901760
    %4252 = vmatmul.f32.gmra.mxu0 %v4251
    %v4253 = vpop.f32.mrf.mxu0
    %v4254 = vadd.f32 %v4173, %v4253
    %4255 = vdwg.mxu0
    %v4256 = vadd.f32 %v3458, %v4194
    %v4257 = vadd.f32 %v3459, %v4198
    %v4258 = vadd.f32 %v3460, %v4202
    %v4259 = vadd.f32 %v3461, %v4206
    %v4260 = vadd.f32 %v3462, %v4210
    %v4261 = vadd.f32 %v3463, %v4214
    %v4262 = vadd.f32 %v3464, %v4218
    %v4263 = vadd.f32 %v3465, %v4222
    %v4264 = vadd.f32 %v3466, %v4226
    %v4265 = vadd.f32 %v3467, %v4230
    %v4266 = vadd.f32 %v3468, %v4234
    %v4267 = vadd.f32 %v3469, %v4238
    %v4268 = vadd.f32 %v3470, %v4242
    %v4269 = vadd.f32 %v3471, %v4246
    %v4270 = vadd.f32 %v3472, %v4250
    %v4271 = vadd.f32 %v3473, %v4254
    %v4272 = vxor.u32 %v4256, 2147483648
    %v4273 = vxor.u32 %v4257, 2147483648
    %v4274 = vxor.u32 %v4258, 2147483648
    %v4275 = vxor.u32 %v4259, 2147483648
    %v4276 = vmul.f32 %v4272, 1.442695
    %v4277 = vpow.pop %v4276
    %v4278 = vmul.f32 %v4273, 1.442695
    %v4279 = vpow.pop %v4278
    %v4280 = vmul.f32 %v4274, 1.442695
    %v4281 = vpow.pop %v4280
    %v4282 = vmul.f32 %v4275, 1.442695
    %v4283 = vpow.pop %v4282
    %v4284 = vadd.f32 %v4277, 1.0
    %v4285 = vadd.f32 %v4279, 1.0
    %v4286 = vadd.f32 %v4281, 1.0
    %v4287 = vadd.f32 %v4283, 1.0
    %v4288 = vrcp.pop %v4284
    %v4289 = vmul.f32 %v4284, %v4288
    %v4290 = vsub.f32 1.0, %v4289
    %v4291 = vmul.f32 %v4288, %v4290
    %v4292 = vadd.f32 %v4288, %v4291
    %vm4293 = vweird.f32 %v4284
    %vm4294 = vweird.f32 %v4288
    %vm4295 = vmor %vm4293, %vm4294
    %v4296 = vsel %vm4295, %v4288, %v4292
    %v4297 = vand.u32 2147483647, %v4284
    %vm4298 = vcmp.eq.f32.partialorder %v4297, 8.507059e+37
    %v4299 = vand.u32 %v4284, 2147483648
    %v4300 = vor.u32 1.1754944e-38, %v4299
    %v4301 = vsel %vm4298, %v4300, %v4296
    %v4302 = vmul.f32 1.0, %v4301
    %v4303 = vrcp.pop %v4285
    %v4304 = vmul.f32 %v4285, %v4303
    %v4305 = vsub.f32 1.0, %v4304
    %v4306 = vmul.f32 %v4303, %v4305
    %v4307 = vadd.f32 %v4303, %v4306
    %vm4308 = vweird.f32 %v4285
    %vm4309 = vweird.f32 %v4303
    %vm4310 = vmor %vm4308, %vm4309
    %v4311 = vsel %vm4310, %v4303, %v4307
    %v4312 = vand.u32 2147483647, %v4285
    %vm4313 = vcmp.eq.f32.partialorder %v4312, 8.507059e+37
    %v4314 = vand.u32 %v4285, 2147483648
    %v4315 = vor.u32 1.1754944e-38, %v4314
    %v4316 = vsel %vm4313, %v4315, %v4311
    %v4317 = vmul.f32 1.0, %v4316
    %v4318 = vrcp.pop %v4286
    %v4319 = vmul.f32 %v4286, %v4318
    %v4320 = vsub.f32 1.0, %v4319
    %v4321 = vmul.f32 %v4318, %v4320
    %v4322 = vadd.f32 %v4318, %v4321
    %vm4323 = vweird.f32 %v4286
    %vm4324 = vweird.f32 %v4318
    %vm4325 = vmor %vm4323, %vm4324
    %v4326 = vsel %vm4325, %v4318, %v4322
    %v4327 = vand.u32 2147483647, %v4286
    %vm4328 = vcmp.eq.f32.partialorder %v4327, 8.507059e+37
    %v4329 = vand.u32 %v4286, 2147483648
    %v4330 = vor.u32 1.1754944e-38, %v4329
    %v4331 = vsel %vm4328, %v4330, %v4326
    %v4332 = vmul.f32 1.0, %v4331
    %v4333 = vrcp.pop %v4287
    %v4334 = vmul.f32 %v4287, %v4333
    %v4335 = vsub.f32 1.0, %v4334
    %v4336 = vmul.f32 %v4333, %v4335
    %v4337 = vadd.f32 %v4333, %v4336
    %vm4338 = vweird.f32 %v4287
    %vm4339 = vweird.f32 %v4333
    %vm4340 = vmor %vm4338, %vm4339
    %v4341 = vsel %vm4340, %v4333, %v4337
    %v4342 = vand.u32 2147483647, %v4287
    %vm4343 = vcmp.eq.f32.partialorder %v4342, 8.507059e+37
    %v4344 = vand.u32 %v4287, 2147483648
    %v4345 = vor.u32 1.1754944e-38, %v4344
    %v4346 = vsel %vm4343, %v4345, %v4341
    %v4347 = vmul.f32 1.0, %v4346
    %v4348 = vxor.u32 %v4260, 2147483648
    %v4349 = vxor.u32 %v4261, 2147483648
    %v4350 = vxor.u32 %v4262, 2147483648
    %v4351 = vxor.u32 %v4263, 2147483648
    %v4352 = vmul.f32 %v4348, 1.442695
    %v4353 = vpow.pop %v4352
    %v4354 = vmul.f32 %v4349, 1.442695
    %v4355 = vpow.pop %v4354
    %v4356 = vmul.f32 %v4350, 1.442695
    %v4357 = vpow.pop %v4356
    %v4358 = vmul.f32 %v4351, 1.442695
    %v4359 = vpow.pop %v4358
    %v4360 = vadd.f32 %v4353, 1.0
    %v4361 = vadd.f32 %v4355, 1.0
    %v4362 = vadd.f32 %v4357, 1.0
    %v4363 = vadd.f32 %v4359, 1.0
    %v4364 = vrcp.pop %v4360
    %v4365 = vmul.f32 %v4360, %v4364
    %v4366 = vsub.f32 1.0, %v4365
    %v4367 = vmul.f32 %v4364, %v4366
    %v4368 = vadd.f32 %v4364, %v4367
    %vm4369 = vweird.f32 %v4360
    %vm4370 = vweird.f32 %v4364
    %vm4371 = vmor %vm4369, %vm4370
    %v4372 = vsel %vm4371, %v4364, %v4368
    %v4373 = vand.u32 2147483647, %v4360
    %vm4374 = vcmp.eq.f32.partialorder %v4373, 8.507059e+37
    %v4375 = vand.u32 %v4360, 2147483648
    %v4376 = vor.u32 1.1754944e-38, %v4375
    %v4377 = vsel %vm4374, %v4376, %v4372
    %v4378 = vmul.f32 1.0, %v4377
    %v4379 = vrcp.pop %v4361
    %v4380 = vmul.f32 %v4361, %v4379
    %v4381 = vsub.f32 1.0, %v4380
    %v4382 = vmul.f32 %v4379, %v4381
    %v4383 = vadd.f32 %v4379, %v4382
    %vm4384 = vweird.f32 %v4361
    %vm4385 = vweird.f32 %v4379
    %vm4386 = vmor %vm4384, %vm4385
    %v4387 = vsel %vm4386, %v4379, %v4383
    %v4388 = vand.u32 2147483647, %v4361
    %vm4389 = vcmp.eq.f32.partialorder %v4388, 8.507059e+37
    %v4390 = vand.u32 %v4361, 2147483648
    %v4391 = vor.u32 1.1754944e-38, %v4390
    %v4392 = vsel %vm4389, %v4391, %v4387
    %v4393 = vmul.f32 1.0, %v4392
    %v4394 = vrcp.pop %v4362
    %v4395 = vmul.f32 %v4362, %v4394
    %v4396 = vsub.f32 1.0, %v4395
    %v4397 = vmul.f32 %v4394, %v4396
    %v4398 = vadd.f32 %v4394, %v4397
    %vm4399 = vweird.f32 %v4362
    %vm4400 = vweird.f32 %v4394
    %vm4401 = vmor %vm4399, %vm4400
    %v4402 = vsel %vm4401, %v4394, %v4398
    %v4403 = vand.u32 2147483647, %v4362
    %vm4404 = vcmp.eq.f32.partialorder %v4403, 8.507059e+37
    %v4405 = vand.u32 %v4362, 2147483648
    %v4406 = vor.u32 1.1754944e-38, %v4405
    %v4407 = vsel %vm4404, %v4406, %v4402
    %v4408 = vmul.f32 1.0, %v4407
    %v4409 = vrcp.pop %v4363
    %v4410 = vmul.f32 %v4363, %v4409
    %v4411 = vsub.f32 1.0, %v4410
    %v4412 = vmul.f32 %v4409, %v4411
    %v4413 = vadd.f32 %v4409, %v4412
    %vm4414 = vweird.f32 %v4363
    %vm4415 = vweird.f32 %v4409
    %vm4416 = vmor %vm4414, %vm4415
    %v4417 = vsel %vm4416, %v4409, %v4413
    %v4418 = vand.u32 2147483647, %v4363
    %vm4419 = vcmp.eq.f32.partialorder %v4418, 8.507059e+37
    %v4420 = vand.u32 %v4363, 2147483648
    %v4421 = vor.u32 1.1754944e-38, %v4420
    %v4422 = vsel %vm4419, %v4421, %v4417
    %v4423 = vmul.f32 1.0, %v4422
    %v4424 = vtanh.pop %v4264
    %v4425 = vtanh.pop %v4265
    %v4426 = vtanh.pop %v4266
    %v4427 = vtanh.pop %v4267
    %v4428 = vxor.u32 %v4268, 2147483648
    %v4429 = vxor.u32 %v4269, 2147483648
    %v4430 = vxor.u32 %v4270, 2147483648
    %v4431 = vxor.u32 %v4271, 2147483648
    %v4432 = vmul.f32 %v4428, 1.442695
    %v4433 = vpow.pop %v4432
    %v4434 = vmul.f32 %v4429, 1.442695
    %v4435 = vpow.pop %v4434
    %v4436 = vmul.f32 %v4430, 1.442695
    %v4437 = vpow.pop %v4436
    %v4438 = vmul.f32 %v4431, 1.442695
    %v4439 = vpow.pop %v4438
    %v4440 = vadd.f32 %v4433, 1.0
    %v4441 = vadd.f32 %v4435, 1.0
    %v4442 = vadd.f32 %v4437, 1.0
    %v4443 = vadd.f32 %v4439, 1.0
    %v4444 = vrcp.pop %v4440
    %v4445 = vmul.f32 %v4440, %v4444
    %v4446 = vsub.f32 1.0, %v4445
    %v4447 = vmul.f32 %v4444, %v4446
    %v4448 = vadd.f32 %v4444, %v4447
    %vm4449 = vweird.f32 %v4440
    %vm4450 = vweird.f32 %v4444
    %vm4451 = vmor %vm4449, %vm4450
    %v4452 = vsel %vm4451, %v4444, %v4448
    %v4453 = vand.u32 2147483647, %v4440
    %vm4454 = vcmp.eq.f32.partialorder %v4453, 8.507059e+37
    %v4455 = vand.u32 %v4440, 2147483648
    %v4456 = vor.u32 1.1754944e-38, %v4455
    %v4457 = vsel %vm4454, %v4456, %v4452
    %v4458 = vmul.f32 1.0, %v4457
    %v4459 = vrcp.pop %v4441
    %v4460 = vmul.f32 %v4441, %v4459
    %v4461 = vsub.f32 1.0, %v4460
    %v4462 = vmul.f32 %v4459, %v4461
    %v4463 = vadd.f32 %v4459, %v4462
    %vm4464 = vweird.f32 %v4441
    %vm4465 = vweird.f32 %v4459
    %vm4466 = vmor %vm4464, %vm4465
    %v4467 = vsel %vm4466, %v4459, %v4463
    %v4468 = vand.u32 2147483647, %v4441
    %vm4469 = vcmp.eq.f32.partialorder %v4468, 8.507059e+37
    %v4470 = vand.u32 %v4441, 2147483648
    %v4471 = vor.u32 1.1754944e-38, %v4470
    %v4472 = vsel %vm4469, %v4471, %v4467
    %v4473 = vmul.f32 1.0, %v4472
    %v4474 = vrcp.pop %v4442
    %v4475 = vmul.f32 %v4442, %v4474
    %v4476 = vsub.f32 1.0, %v4475
    %v4477 = vmul.f32 %v4474, %v4476
    %v4478 = vadd.f32 %v4474, %v4477
    %vm4479 = vweird.f32 %v4442
    %vm4480 = vweird.f32 %v4474
    %vm4481 = vmor %vm4479, %vm4480
    %v4482 = vsel %vm4481, %v4474, %v4478
    %v4483 = vand.u32 2147483647, %v4442
    %vm4484 = vcmp.eq.f32.partialorder %v4483, 8.507059e+37
    %v4485 = vand.u32 %v4442, 2147483648
    %v4486 = vor.u32 1.1754944e-38, %v4485
    %v4487 = vsel %vm4484, %v4486, %v4482
    %v4488 = vmul.f32 1.0, %v4487
    %v4489 = vrcp.pop %v4443
    %v4490 = vmul.f32 %v4443, %v4489
    %v4491 = vsub.f32 1.0, %v4490
    %v4492 = vmul.f32 %v4489, %v4491
    %v4493 = vadd.f32 %v4489, %v4492
    %vm4494 = vweird.f32 %v4443
    %vm4495 = vweird.f32 %v4489
    %vm4496 = vmor %vm4494, %vm4495
    %v4497 = vsel %vm4496, %v4489, %v4493
    %v4498 = vand.u32 2147483647, %v4443
    %vm4499 = vcmp.eq.f32.partialorder %v4498, 8.507059e+37
    %v4500 = vand.u32 %v4443, 2147483648
    %v4501 = vor.u32 1.1754944e-38, %v4500
    %v4502 = vsel %vm4499, %v4501, %v4497
    %v4503 = vmul.f32 1.0, %v4502
    %v4504 = vmul.f32 %v4378, 0.0
    %v4505 = vmul.f32 %v4393, 0.0
    %v4506 = vmul.f32 %v4408, 0.0
    %v4507 = vmul.f32 %v4423, 0.0
    %v4508 = vmul.f32 %v4302, %v4424
    %v4509 = vmul.f32 %v4317, %v4425
    %v4510 = vmul.f32 %v4332, %v4426
    %v4511 = vmul.f32 %v4347, %v4427
    %v4512 = vadd.f32 %v4504, %v4508
    %v4513 = vadd.f32 %v4505, %v4509
    %v4514 = vadd.f32 %v4506, %v4510
    %v4515 = vadd.f32 %v4507, %v4511
    %v4516 = vtanh.pop %v4512
    %v4517 = vtanh.pop %v4513
    %v4518 = vtanh.pop %v4514
    %v4519 = vtanh.pop %v4515
    %v4520 = vmul.f32 %v4458, %v4516
    %v4521 = vmul.f32 %v4473, %v4517
    %v4522 = vmul.f32 %v4488, %v4518
    %v4523 = vmul.f32 %v4503, %v4519
    %v4525 = vsel %vm677, %v84, 0
    %4527 = vmatpush.msra.mxu0 0.0
    %4528 = vmatpush.msra.mxu0 0.0
    %4529 = vmatpush.msra.mxu0 0.0
    %4530 = vmatpush.msra.mxu0 0.0
    %4531 = vmatpush.msra.mxu0 0.0
    %4532 = vmatpush.msra.mxu0 0.0
    %4533 = vmatpush.msra.mxu0 0.0
    %4534 = vmatpush.msra.mxu0 0.0
    %4535 = vmatpush.msra.mxu0 0.0
    %4536 = vmatpush.msra.mxu0 0.0
    %4537 = vmatpush.msra.mxu0 0.0
    %4538 = vmatpush.msra.mxu0 0.0
    %v4539 = vand.u32 %v4523, 4294901760
    %4540 = vmatpush.msra.mxu0 %v4539
    %v4541 = vand.u32 %v4522, 4294901760
    %4542 = vmatpush.msra.mxu0 %v4541
    %v4543 = vand.u32 %v4521, 4294901760
    %4544 = vmatpush.msra.mxu0 %v4543
    %v4545 = vand.u32 %v4520, 4294901760
    %4546 = vmatpush.msra.mxu0 %v4545
    %v4547 = vand.u32 %v4525, 4294901760
    %v4548 = vsub.f32 %v4525, %v4547
    %v4549 = vand.u32 %v4548, 4294901760
    %v4550 = vsub.f32 %v4548, %v4549
    %v4551 = vand.u32 %v4550, 4294901760
    %4552 = vmatmul.f32.gmra.mxu0 %v4551
    %v4553 = vpop.f32.mrf.mxu0
    %v4554 = vadd.f32 0.0, %v4553
    %4555 = vdwg.mxu0
    %4556 = vmatpush.msra.mxu0 0.0
    %4557 = vmatpush.msra.mxu0 0.0
    %4558 = vmatpush.msra.mxu0 0.0
    %4559 = vmatpush.msra.mxu0 0.0
    %4560 = vmatpush.msra.mxu0 0.0
    %4561 = vmatpush.msra.mxu0 0.0
    %4562 = vmatpush.msra.mxu0 0.0
    %4563 = vmatpush.msra.mxu0 0.0
    %4564 = vmatpush.msra.mxu0 0.0
    %4565 = vmatpush.msra.mxu0 0.0
    %4566 = vmatpush.msra.mxu0 0.0
    %4567 = vmatpush.msra.mxu0 0.0
    %v4568 = vand.u32 %v4523, 4294901760
    %v4569 = vsub.f32 %v4523, %v4568
    %v4570 = vand.u32 %v4569, 4294901760
    %v4571 = vsub.f32 %v4569, %v4570
    %v4572 = vand.u32 %v4571, 4294901760
    %4573 = vmatpush.msra.mxu0 %v4572
    %v4574 = vand.u32 %v4522, 4294901760
    %v4575 = vsub.f32 %v4522, %v4574
    %v4576 = vand.u32 %v4575, 4294901760
    %v4577 = vsub.f32 %v4575, %v4576
    %v4578 = vand.u32 %v4577, 4294901760
    %4579 = vmatpush.msra.mxu0 %v4578
    %v4580 = vand.u32 %v4521, 4294901760
    %v4581 = vsub.f32 %v4521, %v4580
    %v4582 = vand.u32 %v4581, 4294901760
    %v4583 = vsub.f32 %v4581, %v4582
    %v4584 = vand.u32 %v4583, 4294901760
    %4585 = vmatpush.msra.mxu0 %v4584
    %v4586 = vand.u32 %v4520, 4294901760
    %v4587 = vsub.f32 %v4520, %v4586
    %v4588 = vand.u32 %v4587, 4294901760
    %v4589 = vsub.f32 %v4587, %v4588
    %v4590 = vand.u32 %v4589, 4294901760
    %4591 = vmatpush.msra.mxu0 %v4590
    %v4592 = vand.u32 %v4525, 4294901760
    %4593 = vmatmul.f32.gmra.mxu0 %v4592
    %v4594 = vpop.f32.mrf.mxu0
    %v4595 = vadd.f32 %v4554, %v4594
    %4596 = vdwg.mxu0
    %4597 = vmatpush.msra.mxu0 0.0
    %4598 = vmatpush.msra.mxu0 0.0
    %4599 = vmatpush.msra.mxu0 0.0
    %4600 = vmatpush.msra.mxu0 0.0
    %4601 = vmatpush.msra.mxu0 0.0
    %4602 = vmatpush.msra.mxu0 0.0
    %4603 = vmatpush.msra.mxu0 0.0
    %4604 = vmatpush.msra.mxu0 0.0
    %4605 = vmatpush.msra.mxu0 0.0
    %4606 = vmatpush.msra.mxu0 0.0
    %4607 = vmatpush.msra.mxu0 0.0
    %4608 = vmatpush.msra.mxu0 0.0
    %v4609 = vand.u32 %v4523, 4294901760
    %v4610 = vsub.f32 %v4523, %v4609
    %4611 = vmatpush.msra.mxu0 %v4610
    %v4612 = vand.u32 %v4522, 4294901760
    %v4613 = vsub.f32 %v4522, %v4612
    %4614 = vmatpush.msra.mxu0 %v4613
    %v4615 = vand.u32 %v4521, 4294901760
    %v4616 = vsub.f32 %v4521, %v4615
    %4617 = vmatpush.msra.mxu0 %v4616
    %v4618 = vand.u32 %v4520, 4294901760
    %v4619 = vsub.f32 %v4520, %v4618
    %4620 = vmatpush.msra.mxu0 %v4619
    %v4621 = vand.u32 %v4525, 4294901760
    %v4622 = vsub.f32 %v4525, %v4621
    %4623 = vmatmul.f32.gmra.mxu0 %v4622
    %v4624 = vpop.f32.mrf.mxu0
    %v4625 = vadd.f32 %v4595, %v4624
    %4626 = vdwg.mxu0
    %4627 = vmatpush.msra.mxu0 0.0
    %4628 = vmatpush.msra.mxu0 0.0
    %4629 = vmatpush.msra.mxu0 0.0
    %4630 = vmatpush.msra.mxu0 0.0
    %4631 = vmatpush.msra.mxu0 0.0
    %4632 = vmatpush.msra.mxu0 0.0
    %4633 = vmatpush.msra.mxu0 0.0
    %4634 = vmatpush.msra.mxu0 0.0
    %4635 = vmatpush.msra.mxu0 0.0
    %4636 = vmatpush.msra.mxu0 0.0
    %4637 = vmatpush.msra.mxu0 0.0
    %4638 = vmatpush.msra.mxu0 0.0
    %v4639 = vand.u32 %v4523, 4294901760
    %4640 = vmatpush.msra.mxu0 %v4639
    %v4641 = vand.u32 %v4522, 4294901760
    %4642 = vmatpush.msra.mxu0 %v4641
    %v4643 = vand.u32 %v4521, 4294901760
    %4644 = vmatpush.msra.mxu0 %v4643
    %v4645 = vand.u32 %v4520, 4294901760
    %4646 = vmatpush.msra.mxu0 %v4645
    %v4647 = vand.u32 %v4525, 4294901760
    %v4648 = vsub.f32 %v4525, %v4647
    %v4649 = vand.u32 %v4648, 4294901760
    %4650 = vmatmul.f32.gmra.mxu0 %v4649
    %v4651 = vpop.f32.mrf.mxu0
    %v4652 = vadd.f32 %v4625, %v4651
    %4653 = vdwg.mxu0
    %4654 = vmatpush.msra.mxu0 0.0
    %4655 = vmatpush.msra.mxu0 0.0
    %4656 = vmatpush.msra.mxu0 0.0
    %4657 = vmatpush.msra.mxu0 0.0
    %4658 = vmatpush.msra.mxu0 0.0
    %4659 = vmatpush.msra.mxu0 0.0
    %4660 = vmatpush.msra.mxu0 0.0
    %4661 = vmatpush.msra.mxu0 0.0
    %4662 = vmatpush.msra.mxu0 0.0
    %4663 = vmatpush.msra.mxu0 0.0
    %4664 = vmatpush.msra.mxu0 0.0
    %4665 = vmatpush.msra.mxu0 0.0
    %v4666 = vand.u32 %v4523, 4294901760
    %v4667 = vsub.f32 %v4523, %v4666
    %v4668 = vand.u32 %v4667, 4294901760
    %4669 = vmatpush.msra.mxu0 %v4668
    %v4670 = vand.u32 %v4522, 4294901760
    %v4671 = vsub.f32 %v4522, %v4670
    %v4672 = vand.u32 %v4671, 4294901760
    %4673 = vmatpush.msra.mxu0 %v4672
    %v4674 = vand.u32 %v4521, 4294901760
    %v4675 = vsub.f32 %v4521, %v4674
    %v4676 = vand.u32 %v4675, 4294901760
    %4677 = vmatpush.msra.mxu0 %v4676
    %v4678 = vand.u32 %v4520, 4294901760
    %v4679 = vsub.f32 %v4520, %v4678
    %v4680 = vand.u32 %v4679, 4294901760
    %4681 = vmatpush.msra.mxu0 %v4680
    %v4682 = vand.u32 %v4525, 4294901760
    %4683 = vmatmul.f32.gmra.mxu0 %v4682
    %v4684 = vpop.f32.mrf.mxu0
    %v4685 = vadd.f32 %v4652, %v4684
    %4686 = vdwg.mxu0
    %4687 = vmatpush.msra.mxu0 0.0
    %4688 = vmatpush.msra.mxu0 0.0
    %4689 = vmatpush.msra.mxu0 0.0
    %4690 = vmatpush.msra.mxu0 0.0
    %4691 = vmatpush.msra.mxu0 0.0
    %4692 = vmatpush.msra.mxu0 0.0
    %4693 = vmatpush.msra.mxu0 0.0
    %4694 = vmatpush.msra.mxu0 0.0
    %4695 = vmatpush.msra.mxu0 0.0
    %4696 = vmatpush.msra.mxu0 0.0
    %4697 = vmatpush.msra.mxu0 0.0
    %4698 = vmatpush.msra.mxu0 0.0
    %v4699 = vand.u32 %v4523, 4294901760
    %4700 = vmatpush.msra.mxu0 %v4699
    %v4701 = vand.u32 %v4522, 4294901760
    %4702 = vmatpush.msra.mxu0 %v4701
    %v4703 = vand.u32 %v4521, 4294901760
    %4704 = vmatpush.msra.mxu0 %v4703
    %v4705 = vand.u32 %v4520, 4294901760
    %4706 = vmatpush.msra.mxu0 %v4705
    %v4707 = vand.u32 %v4525, 4294901760
    %4708 = vmatmul.f32.gmra.mxu0 %v4707
    %v4709 = vpop.f32.mrf.mxu0
    %v4710 = vadd.f32 %v4685, %v4709
    %4711 = vdwg.mxu0
    %4712 = vmatpush.msra.mxu0 0.0
    %4713 = vmatpush.msra.mxu0 0.0
    %4714 = vmatpush.msra.mxu0 0.0
    %4715 = vmatpush.msra.mxu0 0.0
    %4716 = vmatpush.msra.mxu0 0.0
    %4717 = vmatpush.msra.mxu0 0.0
    %4718 = vmatpush.msra.mxu0 0.0
    %4719 = vmatpush.msra.mxu0 0.0
    %4720 = vmatpush.msra.mxu0 0.0
    %4721 = vmatpush.msra.mxu0 0.0
    %4722 = vmatpush.msra.mxu0 0.0
    %4723 = vmatpush.msra.mxu0 0.0
    %v4724 = vand.u32 %v4523, 4294901760
    %4725 = vmatpush.msra.mxu0 %v4724
    %v4726 = vand.u32 %v4522, 4294901760
    %4727 = vmatpush.msra.mxu0 %v4726
    %v4728 = vand.u32 %v4521, 4294901760
    %4729 = vmatpush.msra.mxu0 %v4728
    %v4730 = vand.u32 %v4520, 4294901760
    %4731 = vmatpush.msra.mxu0 %v4730
    %v4732 = vand.u32 %v3611, 4294901760
    %v4733 = vsub.f32 %v3611, %v4732
    %v4734 = vand.u32 %v4733, 4294901760
    %v4735 = vsub.f32 %v4733, %v4734
    %v4736 = vand.u32 %v4735, 4294901760
    %4737 = vmatmul.f32.gmra.mxu0 %v4736
    %v4738 = vpop.f32.mrf.mxu0
    %v4739 = vadd.f32 0.0, %v4738
    %v4740 = vand.u32 %v3614, 4294901760
    %v4741 = vsub.f32 %v3614, %v4740
    %v4742 = vand.u32 %v4741, 4294901760
    %v4743 = vsub.f32 %v4741, %v4742
    %v4744 = vand.u32 %v4743, 4294901760
    %4745 = vmatmul.f32.gmra.mxu0 %v4744
    %v4746 = vpop.f32.mrf.mxu0
    %v4747 = vadd.f32 0.0, %v4746
    %v4748 = vand.u32 %v3617, 4294901760
    %v4749 = vsub.f32 %v3617, %v4748
    %v4750 = vand.u32 %v4749, 4294901760
    %v4751 = vsub.f32 %v4749, %v4750
    %v4752 = vand.u32 %v4751, 4294901760
    %4753 = vmatmul.f32.gmra.mxu0 %v4752
    %v4754 = vpop.f32.mrf.mxu0
    %v4755 = vadd.f32 0.0, %v4754
    %v4756 = vand.u32 %v3620, 4294901760
    %v4757 = vsub.f32 %v3620, %v4756
    %v4758 = vand.u32 %v4757, 4294901760
    %v4759 = vsub.f32 %v4757, %v4758
    %v4760 = vand.u32 %v4759, 4294901760
    %4761 = vmatmul.f32.gmra.mxu0 %v4760
    %v4762 = vpop.f32.mrf.mxu0
    %v4763 = vadd.f32 0.0, %v4762
    %v4764 = vand.u32 %v3623, 4294901760
    %v4765 = vsub.f32 %v3623, %v4764
    %v4766 = vand.u32 %v4765, 4294901760
    %v4767 = vsub.f32 %v4765, %v4766
    %v4768 = vand.u32 %v4767, 4294901760
    %4769 = vmatmul.f32.gmra.mxu0 %v4768
    %v4770 = vpop.f32.mrf.mxu0
    %v4771 = vadd.f32 0.0, %v4770
    %v4772 = vand.u32 %v3626, 4294901760
    %v4773 = vsub.f32 %v3626, %v4772
    %v4774 = vand.u32 %v4773, 4294901760
    %v4775 = vsub.f32 %v4773, %v4774
    %v4776 = vand.u32 %v4775, 4294901760
    %4777 = vmatmul.f32.gmra.mxu0 %v4776
    %v4778 = vpop.f32.mrf.mxu0
    %v4779 = vadd.f32 0.0, %v4778
    %v4780 = vand.u32 %v3629, 4294901760
    %v4781 = vsub.f32 %v3629, %v4780
    %v4782 = vand.u32 %v4781, 4294901760
    %v4783 = vsub.f32 %v4781, %v4782
    %v4784 = vand.u32 %v4783, 4294901760
    %4785 = vmatmul.f32.gmra.mxu0 %v4784
    %v4786 = vpop.f32.mrf.mxu0
    %v4787 = vadd.f32 0.0, %v4786
    %v4788 = vand.u32 %v3632, 4294901760
    %v4789 = vsub.f32 %v3632, %v4788
    %v4790 = vand.u32 %v4789, 4294901760
    %v4791 = vsub.f32 %v4789, %v4790
    %v4792 = vand.u32 %v4791, 4294901760
    %4793 = vmatmul.f32.gmra.mxu0 %v4792
    %v4794 = vpop.f32.mrf.mxu0
    %v4795 = vadd.f32 0.0, %v4794
    %v4796 = vand.u32 %v3635, 4294901760
    %v4797 = vsub.f32 %v3635, %v4796
    %v4798 = vand.u32 %v4797, 4294901760
    %v4799 = vsub.f32 %v4797, %v4798
    %v4800 = vand.u32 %v4799, 4294901760
    %4801 = vmatmul.f32.gmra.mxu0 %v4800
    %v4802 = vpop.f32.mrf.mxu0
    %v4803 = vadd.f32 0.0, %v4802
    %v4804 = vand.u32 %v3638, 4294901760
    %v4805 = vsub.f32 %v3638, %v4804
    %v4806 = vand.u32 %v4805, 4294901760
    %v4807 = vsub.f32 %v4805, %v4806
    %v4808 = vand.u32 %v4807, 4294901760
    %4809 = vmatmul.f32.gmra.mxu0 %v4808
    %v4810 = vpop.f32.mrf.mxu0
    %v4811 = vadd.f32 0.0, %v4810
    %v4812 = vand.u32 %v3641, 4294901760
    %v4813 = vsub.f32 %v3641, %v4812
    %v4814 = vand.u32 %v4813, 4294901760
    %v4815 = vsub.f32 %v4813, %v4814
    %v4816 = vand.u32 %v4815, 4294901760
    %4817 = vmatmul.f32.gmra.mxu0 %v4816
    %v4818 = vpop.f32.mrf.mxu0
    %v4819 = vadd.f32 0.0, %v4818
    %v4820 = vand.u32 %v3644, 4294901760
    %v4821 = vsub.f32 %v3644, %v4820
    %v4822 = vand.u32 %v4821, 4294901760
    %v4823 = vsub.f32 %v4821, %v4822
    %v4824 = vand.u32 %v4823, 4294901760
    %4825 = vmatmul.f32.gmra.mxu0 %v4824
    %v4826 = vpop.f32.mrf.mxu0
    %v4827 = vadd.f32 0.0, %v4826
    %v4828 = vand.u32 %v3647, 4294901760
    %v4829 = vsub.f32 %v3647, %v4828
    %v4830 = vand.u32 %v4829, 4294901760
    %v4831 = vsub.f32 %v4829, %v4830
    %v4832 = vand.u32 %v4831, 4294901760
    %4833 = vmatmul.f32.gmra.mxu0 %v4832
    %v4834 = vpop.f32.mrf.mxu0
    %v4835 = vadd.f32 0.0, %v4834
    %v4836 = vand.u32 %v3650, 4294901760
    %v4837 = vsub.f32 %v3650, %v4836
    %v4838 = vand.u32 %v4837, 4294901760
    %v4839 = vsub.f32 %v4837, %v4838
    %v4840 = vand.u32 %v4839, 4294901760
    %4841 = vmatmul.f32.gmra.mxu0 %v4840
    %v4842 = vpop.f32.mrf.mxu0
    %v4843 = vadd.f32 0.0, %v4842
    %v4844 = vand.u32 %v3653, 4294901760
    %v4845 = vsub.f32 %v3653, %v4844
    %v4846 = vand.u32 %v4845, 4294901760
    %v4847 = vsub.f32 %v4845, %v4846
    %v4848 = vand.u32 %v4847, 4294901760
    %4849 = vmatmul.f32.gmra.mxu0 %v4848
    %v4850 = vpop.f32.mrf.mxu0
    %v4851 = vadd.f32 0.0, %v4850
    %v4852 = vand.u32 %v3656, 4294901760
    %v4853 = vsub.f32 %v3656, %v4852
    %v4854 = vand.u32 %v4853, 4294901760
    %v4855 = vsub.f32 %v4853, %v4854
    %v4856 = vand.u32 %v4855, 4294901760
    %4857 = vmatmul.f32.gmra.mxu0 %v4856
    %v4858 = vpop.f32.mrf.mxu0
    %v4859 = vadd.f32 0.0, %v4858
    %4860 = vdwg.mxu0
    %4861 = vmatpush.msra.mxu0 0.0
    %4862 = vmatpush.msra.mxu0 0.0
    %4863 = vmatpush.msra.mxu0 0.0
    %4864 = vmatpush.msra.mxu0 0.0
    %4865 = vmatpush.msra.mxu0 0.0
    %4866 = vmatpush.msra.mxu0 0.0
    %4867 = vmatpush.msra.mxu0 0.0
    %4868 = vmatpush.msra.mxu0 0.0
    %4869 = vmatpush.msra.mxu0 0.0
    %4870 = vmatpush.msra.mxu0 0.0
    %4871 = vmatpush.msra.mxu0 0.0
    %4872 = vmatpush.msra.mxu0 0.0
    %v4873 = vand.u32 %v4523, 4294901760
    %v4874 = vsub.f32 %v4523, %v4873
    %v4875 = vand.u32 %v4874, 4294901760
    %v4876 = vsub.f32 %v4874, %v4875
    %v4877 = vand.u32 %v4876, 4294901760
    %4878 = vmatpush.msra.mxu0 %v4877
    %v4879 = vand.u32 %v4522, 4294901760
    %v4880 = vsub.f32 %v4522, %v4879
    %v4881 = vand.u32 %v4880, 4294901760
    %v4882 = vsub.f32 %v4880, %v4881
    %v4883 = vand.u32 %v4882, 4294901760
    %4884 = vmatpush.msra.mxu0 %v4883
    %v4885 = vand.u32 %v4521, 4294901760
    %v4886 = vsub.f32 %v4521, %v4885
    %v4887 = vand.u32 %v4886, 4294901760
    %v4888 = vsub.f32 %v4886, %v4887
    %v4889 = vand.u32 %v4888, 4294901760
    %4890 = vmatpush.msra.mxu0 %v4889
    %v4891 = vand.u32 %v4520, 4294901760
    %v4892 = vsub.f32 %v4520, %v4891
    %v4893 = vand.u32 %v4892, 4294901760
    %v4894 = vsub.f32 %v4892, %v4893
    %v4895 = vand.u32 %v4894, 4294901760
    %4896 = vmatpush.msra.mxu0 %v4895
    %v4897 = vand.u32 %v3611, 4294901760
    %4898 = vmatmul.f32.gmra.mxu0 %v4897
    %v4899 = vpop.f32.mrf.mxu0
    %v4900 = vadd.f32 %v4739, %v4899
    %v4901 = vand.u32 %v3614, 4294901760
    %4902 = vmatmul.f32.gmra.mxu0 %v4901
    %v4903 = vpop.f32.mrf.mxu0
    %v4904 = vadd.f32 %v4747, %v4903
    %v4905 = vand.u32 %v3617, 4294901760
    %4906 = vmatmul.f32.gmra.mxu0 %v4905
    %v4907 = vpop.f32.mrf.mxu0
    %v4908 = vadd.f32 %v4755, %v4907
    %v4909 = vand.u32 %v3620, 4294901760
    %4910 = vmatmul.f32.gmra.mxu0 %v4909
    %v4911 = vpop.f32.mrf.mxu0
    %v4912 = vadd.f32 %v4763, %v4911
    %v4913 = vand.u32 %v3623, 4294901760
    %4914 = vmatmul.f32.gmra.mxu0 %v4913
    %v4915 = vpop.f32.mrf.mxu0
    %v4916 = vadd.f32 %v4771, %v4915
    %v4917 = vand.u32 %v3626, 4294901760
    %4918 = vmatmul.f32.gmra.mxu0 %v4917
    %v4919 = vpop.f32.mrf.mxu0
    %v4920 = vadd.f32 %v4779, %v4919
    %v4921 = vand.u32 %v3629, 4294901760
    %4922 = vmatmul.f32.gmra.mxu0 %v4921
    %v4923 = vpop.f32.mrf.mxu0
    %v4924 = vadd.f32 %v4787, %v4923
    %v4925 = vand.u32 %v3632, 4294901760
    %4926 = vmatmul.f32.gmra.mxu0 %v4925
    %v4927 = vpop.f32.mrf.mxu0
    %v4928 = vadd.f32 %v4795, %v4927
    %v4929 = vand.u32 %v3635, 4294901760
    %4930 = vmatmul.f32.gmra.mxu0 %v4929
    %v4931 = vpop.f32.mrf.mxu0
    %v4932 = vadd.f32 %v4803, %v4931
    %v4933 = vand.u32 %v3638, 4294901760
    %4934 = vmatmul.f32.gmra.mxu0 %v4933
    %v4935 = vpop.f32.mrf.mxu0
    %v4936 = vadd.f32 %v4811, %v4935
    %v4937 = vand.u32 %v3641, 4294901760
    %4938 = vmatmul.f32.gmra.mxu0 %v4937
    %v4939 = vpop.f32.mrf.mxu0
    %v4940 = vadd.f32 %v4819, %v4939
    %v4941 = vand.u32 %v3644, 4294901760
    %4942 = vmatmul.f32.gmra.mxu0 %v4941
    %v4943 = vpop.f32.mrf.mxu0
    %v4944 = vadd.f32 %v4827, %v4943
    %v4945 = vand.u32 %v3647, 4294901760
    %4946 = vmatmul.f32.gmra.mxu0 %v4945
    %v4947 = vpop.f32.mrf.mxu0
    %v4948 = vadd.f32 %v4835, %v4947
    %v4949 = vand.u32 %v3650, 4294901760
    %4950 = vmatmul.f32.gmra.mxu0 %v4949
    %v4951 = vpop.f32.mrf.mxu0
    %v4952 = vadd.f32 %v4843, %v4951
    %v4953 = vand.u32 %v3653, 4294901760
    %4954 = vmatmul.f32.gmra.mxu0 %v4953
    %v4955 = vpop.f32.mrf.mxu0
    %v4956 = vadd.f32 %v4851, %v4955
    %v4957 = vand.u32 %v3656, 4294901760
    %4958 = vmatmul.f32.gmra.mxu0 %v4957
    %v4959 = vpop.f32.mrf.mxu0
    %v4960 = vadd.f32 %v4859, %v4959
    %4961 = vdwg.mxu0
    %4962 = vmatpush.msra.mxu0 0.0
    %4963 = vmatpush.msra.mxu0 0.0
    %4964 = vmatpush.msra.mxu0 0.0
    %4965 = vmatpush.msra.mxu0 0.0
    %4966 = vmatpush.msra.mxu0 0.0
    %4967 = vmatpush.msra.mxu0 0.0
    %4968 = vmatpush.msra.mxu0 0.0
    %4969 = vmatpush.msra.mxu0 0.0
    %4970 = vmatpush.msra.mxu0 0.0
    %4971 = vmatpush.msra.mxu0 0.0
    %4972 = vmatpush.msra.mxu0 0.0
    %4973 = vmatpush.msra.mxu0 0.0
    %v4974 = vand.u32 %v4523, 4294901760
    %v4975 = vsub.f32 %v4523, %v4974
    %4976 = vmatpush.msra.mxu0 %v4975
    %v4977 = vand.u32 %v4522, 4294901760
    %v4978 = vsub.f32 %v4522, %v4977
    %4979 = vmatpush.msra.mxu0 %v4978
    %v4980 = vand.u32 %v4521, 4294901760
    %v4981 = vsub.f32 %v4521, %v4980
    %4982 = vmatpush.msra.mxu0 %v4981
    %v4983 = vand.u32 %v4520, 4294901760
    %v4984 = vsub.f32 %v4520, %v4983
    %4985 = vmatpush.msra.mxu0 %v4984
    %v4986 = vand.u32 %v3611, 4294901760
    %v4987 = vsub.f32 %v3611, %v4986
    %4988 = vmatmul.f32.gmra.mxu0 %v4987
    %v4989 = vpop.f32.mrf.mxu0
    %v4990 = vadd.f32 %v4900, %v4989
    %v4991 = vand.u32 %v3614, 4294901760
    %v4992 = vsub.f32 %v3614, %v4991
    %4993 = vmatmul.f32.gmra.mxu0 %v4992
    %v4994 = vpop.f32.mrf.mxu0
    %v4995 = vadd.f32 %v4904, %v4994
    %v4996 = vand.u32 %v3617, 4294901760
    %v4997 = vsub.f32 %v3617, %v4996
    %4998 = vmatmul.f32.gmra.mxu0 %v4997
    %v4999 = vpop.f32.mrf.mxu0
    %v5000 = vadd.f32 %v4908, %v4999
    %v5001 = vand.u32 %v3620, 4294901760
    %v5002 = vsub.f32 %v3620, %v5001
    %5003 = vmatmul.f32.gmra.mxu0 %v5002
    %v5004 = vpop.f32.mrf.mxu0
    %v5005 = vadd.f32 %v4912, %v5004
    %v5006 = vand.u32 %v3623, 4294901760
    %v5007 = vsub.f32 %v3623, %v5006
    %5008 = vmatmul.f32.gmra.mxu0 %v5007
    %v5009 = vpop.f32.mrf.mxu0
    %v5010 = vadd.f32 %v4916, %v5009
    %v5011 = vand.u32 %v3626, 4294901760
    %v5012 = vsub.f32 %v3626, %v5011
    %5013 = vmatmul.f32.gmra.mxu0 %v5012
    %v5014 = vpop.f32.mrf.mxu0
    %v5015 = vadd.f32 %v4920, %v5014
    %v5016 = vand.u32 %v3629, 4294901760
    %v5017 = vsub.f32 %v3629, %v5016
    %5018 = vmatmul.f32.gmra.mxu0 %v5017
    %v5019 = vpop.f32.mrf.mxu0
    %v5020 = vadd.f32 %v4924, %v5019
    %v5021 = vand.u32 %v3632, 4294901760
    %v5022 = vsub.f32 %v3632, %v5021
    %5023 = vmatmul.f32.gmra.mxu0 %v5022
    %v5024 = vpop.f32.mrf.mxu0
    %v5025 = vadd.f32 %v4928, %v5024
    %v5026 = vand.u32 %v3635, 4294901760
    %v5027 = vsub.f32 %v3635, %v5026
    %5028 = vmatmul.f32.gmra.mxu0 %v5027
    %v5029 = vpop.f32.mrf.mxu0
    %v5030 = vadd.f32 %v4932, %v5029
    %v5031 = vand.u32 %v3638, 4294901760
    %v5032 = vsub.f32 %v3638, %v5031
    %5033 = vmatmul.f32.gmra.mxu0 %v5032
    %v5034 = vpop.f32.mrf.mxu0
    %v5035 = vadd.f32 %v4936, %v5034
    %v5036 = vand.u32 %v3641, 4294901760
    %v5037 = vsub.f32 %v3641, %v5036
    %5038 = vmatmul.f32.gmra.mxu0 %v5037
    %v5039 = vpop.f32.mrf.mxu0
    %v5040 = vadd.f32 %v4940, %v5039
    %v5041 = vand.u32 %v3644, 4294901760
    %v5042 = vsub.f32 %v3644, %v5041
    %5043 = vmatmul.f32.gmra.mxu0 %v5042
    %v5044 = vpop.f32.mrf.mxu0
    %v5045 = vadd.f32 %v4944, %v5044
    %v5046 = vand.u32 %v3647, 4294901760
    %v5047 = vsub.f32 %v3647, %v5046
    %5048 = vmatmul.f32.gmra.mxu0 %v5047
    %v5049 = vpop.f32.mrf.mxu0
    %v5050 = vadd.f32 %v4948, %v5049
    %v5051 = vand.u32 %v3650, 4294901760
    %v5052 = vsub.f32 %v3650, %v5051
    %5053 = vmatmul.f32.gmra.mxu0 %v5052
    %v5054 = vpop.f32.mrf.mxu0
    %v5055 = vadd.f32 %v4952, %v5054
    %v5056 = vand.u32 %v3653, 4294901760
    %v5057 = vsub.f32 %v3653, %v5056
    %5058 = vmatmul.f32.gmra.mxu0 %v5057
    %v5059 = vpop.f32.mrf.mxu0
    %v5060 = vadd.f32 %v4956, %v5059
    %v5061 = vand.u32 %v3656, 4294901760
    %v5062 = vsub.f32 %v3656, %v5061
    %5063 = vmatmul.f32.gmra.mxu0 %v5062
    %v5064 = vpop.f32.mrf.mxu0
    %v5065 = vadd.f32 %v4960, %v5064
    %5066 = vdwg.mxu0
    %5067 = vmatpush.msra.mxu0 0.0
    %5068 = vmatpush.msra.mxu0 0.0
    %5069 = vmatpush.msra.mxu0 0.0
    %5070 = vmatpush.msra.mxu0 0.0
    %5071 = vmatpush.msra.mxu0 0.0
    %5072 = vmatpush.msra.mxu0 0.0
    %5073 = vmatpush.msra.mxu0 0.0
    %5074 = vmatpush.msra.mxu0 0.0
    %5075 = vmatpush.msra.mxu0 0.0
    %5076 = vmatpush.msra.mxu0 0.0
    %5077 = vmatpush.msra.mxu0 0.0
    %5078 = vmatpush.msra.mxu0 0.0
    %v5079 = vand.u32 %v4523, 4294901760
    %5080 = vmatpush.msra.mxu0 %v5079
    %v5081 = vand.u32 %v4522, 4294901760
    %5082 = vmatpush.msra.mxu0 %v5081
    %v5083 = vand.u32 %v4521, 4294901760
    %5084 = vmatpush.msra.mxu0 %v5083
    %v5085 = vand.u32 %v4520, 4294901760
    %5086 = vmatpush.msra.mxu0 %v5085
    %v5087 = vand.u32 %v3611, 4294901760
    %v5088 = vsub.f32 %v3611, %v5087
    %v5089 = vand.u32 %v5088, 4294901760
    %5090 = vmatmul.f32.gmra.mxu0 %v5089
    %v5091 = vpop.f32.mrf.mxu0
    %v5092 = vadd.f32 %v4990, %v5091
    %v5093 = vand.u32 %v3614, 4294901760
    %v5094 = vsub.f32 %v3614, %v5093
    %v5095 = vand.u32 %v5094, 4294901760
    %5096 = vmatmul.f32.gmra.mxu0 %v5095
    %v5097 = vpop.f32.mrf.mxu0
    %v5098 = vadd.f32 %v4995, %v5097
    %v5099 = vand.u32 %v3617, 4294901760
    %v5100 = vsub.f32 %v3617, %v5099
    %v5101 = vand.u32 %v5100, 4294901760
    %5102 = vmatmul.f32.gmra.mxu0 %v5101
    %v5103 = vpop.f32.mrf.mxu0
    %v5104 = vadd.f32 %v5000, %v5103
    %v5105 = vand.u32 %v3620, 4294901760
    %v5106 = vsub.f32 %v3620, %v5105
    %v5107 = vand.u32 %v5106, 4294901760
    %5108 = vmatmul.f32.gmra.mxu0 %v5107
    %v5109 = vpop.f32.mrf.mxu0
    %v5110 = vadd.f32 %v5005, %v5109
    %v5111 = vand.u32 %v3623, 4294901760
    %v5112 = vsub.f32 %v3623, %v5111
    %v5113 = vand.u32 %v5112, 4294901760
    %5114 = vmatmul.f32.gmra.mxu0 %v5113
    %v5115 = vpop.f32.mrf.mxu0
    %v5116 = vadd.f32 %v5010, %v5115
    %v5117 = vand.u32 %v3626, 4294901760
    %v5118 = vsub.f32 %v3626, %v5117
    %v5119 = vand.u32 %v5118, 4294901760
    %5120 = vmatmul.f32.gmra.mxu0 %v5119
    %v5121 = vpop.f32.mrf.mxu0
    %v5122 = vadd.f32 %v5015, %v5121
    %v5123 = vand.u32 %v3629, 4294901760
    %v5124 = vsub.f32 %v3629, %v5123
    %v5125 = vand.u32 %v5124, 4294901760
    %5126 = vmatmul.f32.gmra.mxu0 %v5125
    %v5127 = vpop.f32.mrf.mxu0
    %v5128 = vadd.f32 %v5020, %v5127
    %v5129 = vand.u32 %v3632, 4294901760
    %v5130 = vsub.f32 %v3632, %v5129
    %v5131 = vand.u32 %v5130, 4294901760
    %5132 = vmatmul.f32.gmra.mxu0 %v5131
    %v5133 = vpop.f32.mrf.mxu0
    %v5134 = vadd.f32 %v5025, %v5133
    %v5135 = vand.u32 %v3635, 4294901760
    %v5136 = vsub.f32 %v3635, %v5135
    %v5137 = vand.u32 %v5136, 4294901760
    %5138 = vmatmul.f32.gmra.mxu0 %v5137
    %v5139 = vpop.f32.mrf.mxu0
    %v5140 = vadd.f32 %v5030, %v5139
    %v5141 = vand.u32 %v3638, 4294901760
    %v5142 = vsub.f32 %v3638, %v5141
    %v5143 = vand.u32 %v5142, 4294901760
    %5144 = vmatmul.f32.gmra.mxu0 %v5143
    %v5145 = vpop.f32.mrf.mxu0
    %v5146 = vadd.f32 %v5035, %v5145
    %v5147 = vand.u32 %v3641, 4294901760
    %v5148 = vsub.f32 %v3641, %v5147
    %v5149 = vand.u32 %v5148, 4294901760
    %5150 = vmatmul.f32.gmra.mxu0 %v5149
    %v5151 = vpop.f32.mrf.mxu0
    %v5152 = vadd.f32 %v5040, %v5151
    %v5153 = vand.u32 %v3644, 4294901760
    %v5154 = vsub.f32 %v3644, %v5153
    %v5155 = vand.u32 %v5154, 4294901760
    %5156 = vmatmul.f32.gmra.mxu0 %v5155
    %v5157 = vpop.f32.mrf.mxu0
    %v5158 = vadd.f32 %v5045, %v5157
    %v5159 = vand.u32 %v3647, 4294901760
    %v5160 = vsub.f32 %v3647, %v5159
    %v5161 = vand.u32 %v5160, 4294901760
    %5162 = vmatmul.f32.gmra.mxu0 %v5161
    %v5163 = vpop.f32.mrf.mxu0
    %v5164 = vadd.f32 %v5050, %v5163
    %v5165 = vand.u32 %v3650, 4294901760
    %v5166 = vsub.f32 %v3650, %v5165
    %v5167 = vand.u32 %v5166, 4294901760
    %5168 = vmatmul.f32.gmra.mxu0 %v5167
    %v5169 = vpop.f32.mrf.mxu0
    %v5170 = vadd.f32 %v5055, %v5169
    %v5171 = vand.u32 %v3653, 4294901760
    %v5172 = vsub.f32 %v3653, %v5171
    %v5173 = vand.u32 %v5172, 4294901760
    %5174 = vmatmul.f32.gmra.mxu0 %v5173
    %v5175 = vpop.f32.mrf.mxu0
    %v5176 = vadd.f32 %v5060, %v5175
    %v5177 = vand.u32 %v3656, 4294901760
    %v5178 = vsub.f32 %v3656, %v5177
    %v5179 = vand.u32 %v5178, 4294901760
    %5180 = vmatmul.f32.gmra.mxu0 %v5179
    %v5181 = vpop.f32.mrf.mxu0
    %v5182 = vadd.f32 %v5065, %v5181
    %5183 = vdwg.mxu0
    %5184 = vmatpush.msra.mxu0 0.0
    %5185 = vmatpush.msra.mxu0 0.0
    %5186 = vmatpush.msra.mxu0 0.0
    %5187 = vmatpush.msra.mxu0 0.0
    %5188 = vmatpush.msra.mxu0 0.0
    %5189 = vmatpush.msra.mxu0 0.0
    %5190 = vmatpush.msra.mxu0 0.0
    %5191 = vmatpush.msra.mxu0 0.0
    %5192 = vmatpush.msra.mxu0 0.0
    %5193 = vmatpush.msra.mxu0 0.0
    %5194 = vmatpush.msra.mxu0 0.0
    %5195 = vmatpush.msra.mxu0 0.0
    %v5196 = vand.u32 %v4523, 4294901760
    %v5197 = vsub.f32 %v4523, %v5196
    %v5198 = vand.u32 %v5197, 4294901760
    %5199 = vmatpush.msra.mxu0 %v5198
    %v5200 = vand.u32 %v4522, 4294901760
    %v5201 = vsub.f32 %v4522, %v5200
    %v5202 = vand.u32 %v5201, 4294901760
    %5203 = vmatpush.msra.mxu0 %v5202
    %v5204 = vand.u32 %v4521, 4294901760
    %v5205 = vsub.f32 %v4521, %v5204
    %v5206 = vand.u32 %v5205, 4294901760
    %5207 = vmatpush.msra.mxu0 %v5206
    %v5208 = vand.u32 %v4520, 4294901760
    %v5209 = vsub.f32 %v4520, %v5208
    %v5210 = vand.u32 %v5209, 4294901760
    %5211 = vmatpush.msra.mxu0 %v5210
    %v5212 = vand.u32 %v3611, 4294901760
    %5213 = vmatmul.f32.gmra.mxu0 %v5212
    %v5214 = vpop.f32.mrf.mxu0
    %v5215 = vadd.f32 %v5092, %v5214
    %v5216 = vand.u32 %v3614, 4294901760
    %5217 = vmatmul.f32.gmra.mxu0 %v5216
    %v5218 = vpop.f32.mrf.mxu0
    %v5219 = vadd.f32 %v5098, %v5218
    %v5220 = vand.u32 %v3617, 4294901760
    %5221 = vmatmul.f32.gmra.mxu0 %v5220
    %v5222 = vpop.f32.mrf.mxu0
    %v5223 = vadd.f32 %v5104, %v5222
    %v5224 = vand.u32 %v3620, 4294901760
    %5225 = vmatmul.f32.gmra.mxu0 %v5224
    %v5226 = vpop.f32.mrf.mxu0
    %v5227 = vadd.f32 %v5110, %v5226
    %v5228 = vand.u32 %v3623, 4294901760
    %5229 = vmatmul.f32.gmra.mxu0 %v5228
    %v5230 = vpop.f32.mrf.mxu0
    %v5231 = vadd.f32 %v5116, %v5230
    %v5232 = vand.u32 %v3626, 4294901760
    %5233 = vmatmul.f32.gmra.mxu0 %v5232
    %v5234 = vpop.f32.mrf.mxu0
    %v5235 = vadd.f32 %v5122, %v5234
    %v5236 = vand.u32 %v3629, 4294901760
    %5237 = vmatmul.f32.gmra.mxu0 %v5236
    %v5238 = vpop.f32.mrf.mxu0
    %v5239 = vadd.f32 %v5128, %v5238
    %v5240 = vand.u32 %v3632, 4294901760
    %5241 = vmatmul.f32.gmra.mxu0 %v5240
    %v5242 = vpop.f32.mrf.mxu0
    %v5243 = vadd.f32 %v5134, %v5242
    %v5244 = vand.u32 %v3635, 4294901760
    %5245 = vmatmul.f32.gmra.mxu0 %v5244
    %v5246 = vpop.f32.mrf.mxu0
    %v5247 = vadd.f32 %v5140, %v5246
    %v5248 = vand.u32 %v3638, 4294901760
    %5249 = vmatmul.f32.gmra.mxu0 %v5248
    %v5250 = vpop.f32.mrf.mxu0
    %v5251 = vadd.f32 %v5146, %v5250
    %v5252 = vand.u32 %v3641, 4294901760
    %5253 = vmatmul.f32.gmra.mxu0 %v5252
    %v5254 = vpop.f32.mrf.mxu0
    %v5255 = vadd.f32 %v5152, %v5254
    %v5256 = vand.u32 %v3644, 4294901760
    %5257 = vmatmul.f32.gmra.mxu0 %v5256
    %v5258 = vpop.f32.mrf.mxu0
    %v5259 = vadd.f32 %v5158, %v5258
    %v5260 = vand.u32 %v3647, 4294901760
    %5261 = vmatmul.f32.gmra.mxu0 %v5260
    %v5262 = vpop.f32.mrf.mxu0
    %v5263 = vadd.f32 %v5164, %v5262
    %v5264 = vand.u32 %v3650, 4294901760
    %5265 = vmatmul.f32.gmra.mxu0 %v5264
    %v5266 = vpop.f32.mrf.mxu0
    %v5267 = vadd.f32 %v5170, %v5266
    %v5268 = vand.u32 %v3653, 4294901760
    %5269 = vmatmul.f32.gmra.mxu0 %v5268
    %v5270 = vpop.f32.mrf.mxu0
    %v5271 = vadd.f32 %v5176, %v5270
    %v5272 = vand.u32 %v3656, 4294901760
    %5273 = vmatmul.f32.gmra.mxu0 %v5272
    %v5274 = vpop.f32.mrf.mxu0
    %v5275 = vadd.f32 %v5182, %v5274
    %5276 = vdwg.mxu0
    %5277 = vmatpush.msra.mxu0 0.0
    %5278 = vmatpush.msra.mxu0 0.0
    %5279 = vmatpush.msra.mxu0 0.0
    %5280 = vmatpush.msra.mxu0 0.0
    %5281 = vmatpush.msra.mxu0 0.0
    %5282 = vmatpush.msra.mxu0 0.0
    %5283 = vmatpush.msra.mxu0 0.0
    %5284 = vmatpush.msra.mxu0 0.0
    %5285 = vmatpush.msra.mxu0 0.0
    %5286 = vmatpush.msra.mxu0 0.0
    %5287 = vmatpush.msra.mxu0 0.0
    %5288 = vmatpush.msra.mxu0 0.0
    %v5289 = vand.u32 %v4523, 4294901760
    %5290 = vmatpush.msra.mxu0 %v5289
    %v5291 = vand.u32 %v4522, 4294901760
    %5292 = vmatpush.msra.mxu0 %v5291
    %v5293 = vand.u32 %v4521, 4294901760
    %5294 = vmatpush.msra.mxu0 %v5293
    %v5295 = vand.u32 %v4520, 4294901760
    %5296 = vmatpush.msra.mxu0 %v5295
    %v5297 = vand.u32 %v3611, 4294901760
    %5298 = vmatmul.f32.gmra.mxu0 %v5297
    %v5299 = vpop.f32.mrf.mxu0
    %v5300 = vadd.f32 %v5215, %v5299
    %v5301 = vand.u32 %v3614, 4294901760
    %5302 = vmatmul.f32.gmra.mxu0 %v5301
    %v5303 = vpop.f32.mrf.mxu0
    %v5304 = vadd.f32 %v5219, %v5303
    %v5305 = vand.u32 %v3617, 4294901760
    %5306 = vmatmul.f32.gmra.mxu0 %v5305
    %v5307 = vpop.f32.mrf.mxu0
    %v5308 = vadd.f32 %v5223, %v5307
    %v5309 = vand.u32 %v3620, 4294901760
    %5310 = vmatmul.f32.gmra.mxu0 %v5309
    %v5311 = vpop.f32.mrf.mxu0
    %v5312 = vadd.f32 %v5227, %v5311
    %v5313 = vand.u32 %v3623, 4294901760
    %5314 = vmatmul.f32.gmra.mxu0 %v5313
    %v5315 = vpop.f32.mrf.mxu0
    %v5316 = vadd.f32 %v5231, %v5315
    %v5317 = vand.u32 %v3626, 4294901760
    %5318 = vmatmul.f32.gmra.mxu0 %v5317
    %v5319 = vpop.f32.mrf.mxu0
    %v5320 = vadd.f32 %v5235, %v5319
    %v5321 = vand.u32 %v3629, 4294901760
    %5322 = vmatmul.f32.gmra.mxu0 %v5321
    %v5323 = vpop.f32.mrf.mxu0
    %v5324 = vadd.f32 %v5239, %v5323
    %v5325 = vand.u32 %v3632, 4294901760
    %5326 = vmatmul.f32.gmra.mxu0 %v5325
    %v5327 = vpop.f32.mrf.mxu0
    %v5328 = vadd.f32 %v5243, %v5327
    %v5329 = vand.u32 %v3635, 4294901760
    %5330 = vmatmul.f32.gmra.mxu0 %v5329
    %v5331 = vpop.f32.mrf.mxu0
    %v5332 = vadd.f32 %v5247, %v5331
    %v5333 = vand.u32 %v3638, 4294901760
    %5334 = vmatmul.f32.gmra.mxu0 %v5333
    %v5335 = vpop.f32.mrf.mxu0
    %v5336 = vadd.f32 %v5251, %v5335
    %v5337 = vand.u32 %v3641, 4294901760
    %5338 = vmatmul.f32.gmra.mxu0 %v5337
    %v5339 = vpop.f32.mrf.mxu0
    %v5340 = vadd.f32 %v5255, %v5339
    %v5341 = vand.u32 %v3644, 4294901760
    %5342 = vmatmul.f32.gmra.mxu0 %v5341
    %v5343 = vpop.f32.mrf.mxu0
    %v5344 = vadd.f32 %v5259, %v5343
    %v5345 = vand.u32 %v3647, 4294901760
    %5346 = vmatmul.f32.gmra.mxu0 %v5345
    %v5347 = vpop.f32.mrf.mxu0
    %v5348 = vadd.f32 %v5263, %v5347
    %v5349 = vand.u32 %v3650, 4294901760
    %5350 = vmatmul.f32.gmra.mxu0 %v5349
    %v5351 = vpop.f32.mrf.mxu0
    %v5352 = vadd.f32 %v5267, %v5351
    %v5353 = vand.u32 %v3653, 4294901760
    %5354 = vmatmul.f32.gmra.mxu0 %v5353
    %v5355 = vpop.f32.mrf.mxu0
    %v5356 = vadd.f32 %v5271, %v5355
    %v5357 = vand.u32 %v3656, 4294901760
    %5358 = vmatmul.f32.gmra.mxu0 %v5357
    %v5359 = vpop.f32.mrf.mxu0
    %v5360 = vadd.f32 %v5275, %v5359
    %5361 = vdwg.mxu0
    %v5362 = vadd.f32 %v3492, %v5300
    %v5363 = vadd.f32 %v3493, %v5304
    %v5364 = vadd.f32 %v3494, %v5308
    %v5365 = vadd.f32 %v3495, %v5312
    %v5366 = vadd.f32 %v3496, %v5316
    %v5367 = vadd.f32 %v3497, %v5320
    %v5368 = vadd.f32 %v3498, %v5324
    %v5369 = vadd.f32 %v3499, %v5328
    %v5370 = vadd.f32 %v3500, %v5332
    %v5371 = vadd.f32 %v3501, %v5336
    %v5372 = vadd.f32 %v3502, %v5340
    %v5373 = vadd.f32 %v3503, %v5344
    %v5374 = vadd.f32 %v3504, %v5348
    %v5375 = vadd.f32 %v3505, %v5352
    %v5376 = vadd.f32 %v3506, %v5356
    %v5377 = vadd.f32 %v3507, %v5360
    %v5378 = vxor.u32 %v5362, 2147483648
    %v5379 = vxor.u32 %v5363, 2147483648
    %v5380 = vxor.u32 %v5364, 2147483648
    %v5381 = vxor.u32 %v5365, 2147483648
    %v5382 = vmul.f32 %v5378, 1.442695
    %v5383 = vpow.pop %v5382
    %v5384 = vmul.f32 %v5379, 1.442695
    %v5385 = vpow.pop %v5384
    %v5386 = vmul.f32 %v5380, 1.442695
    %v5387 = vpow.pop %v5386
    %v5388 = vmul.f32 %v5381, 1.442695
    %v5389 = vpow.pop %v5388
    %v5390 = vadd.f32 %v5383, 1.0
    %v5391 = vadd.f32 %v5385, 1.0
    %v5392 = vadd.f32 %v5387, 1.0
    %v5393 = vadd.f32 %v5389, 1.0
    %v5394 = vrcp.pop %v5390
    %v5395 = vmul.f32 %v5390, %v5394
    %v5396 = vsub.f32 1.0, %v5395
    %v5397 = vmul.f32 %v5394, %v5396
    %v5398 = vadd.f32 %v5394, %v5397
    %vm5399 = vweird.f32 %v5390
    %vm5400 = vweird.f32 %v5394
    %vm5401 = vmor %vm5399, %vm5400
    %v5402 = vsel %vm5401, %v5394, %v5398
    %v5403 = vand.u32 2147483647, %v5390
    %vm5404 = vcmp.eq.f32.partialorder %v5403, 8.507059e+37
    %v5405 = vand.u32 %v5390, 2147483648
    %v5406 = vor.u32 1.1754944e-38, %v5405
    %v5407 = vsel %vm5404, %v5406, %v5402
    %v5408 = vmul.f32 1.0, %v5407
    %v5409 = vrcp.pop %v5391
    %v5410 = vmul.f32 %v5391, %v5409
    %v5411 = vsub.f32 1.0, %v5410
    %v5412 = vmul.f32 %v5409, %v5411
    %v5413 = vadd.f32 %v5409, %v5412
    %vm5414 = vweird.f32 %v5391
    %vm5415 = vweird.f32 %v5409
    %vm5416 = vmor %vm5414, %vm5415
    %v5417 = vsel %vm5416, %v5409, %v5413
    %v5418 = vand.u32 2147483647, %v5391
    %vm5419 = vcmp.eq.f32.partialorder %v5418, 8.507059e+37
    %v5420 = vand.u32 %v5391, 2147483648
    %v5421 = vor.u32 1.1754944e-38, %v5420
    %v5422 = vsel %vm5419, %v5421, %v5417
    %v5423 = vmul.f32 1.0, %v5422
    %v5424 = vrcp.pop %v5392
    %v5425 = vmul.f32 %v5392, %v5424
    %v5426 = vsub.f32 1.0, %v5425
    %v5427 = vmul.f32 %v5424, %v5426
    %v5428 = vadd.f32 %v5424, %v5427
    %vm5429 = vweird.f32 %v5392
    %vm5430 = vweird.f32 %v5424
    %vm5431 = vmor %vm5429, %vm5430
    %v5432 = vsel %vm5431, %v5424, %v5428
    %v5433 = vand.u32 2147483647, %v5392
    %vm5434 = vcmp.eq.f32.partialorder %v5433, 8.507059e+37
    %v5435 = vand.u32 %v5392, 2147483648
    %v5436 = vor.u32 1.1754944e-38, %v5435
    %v5437 = vsel %vm5434, %v5436, %v5432
    %v5438 = vmul.f32 1.0, %v5437
    %v5439 = vrcp.pop %v5393
    %v5440 = vmul.f32 %v5393, %v5439
    %v5441 = vsub.f32 1.0, %v5440
    %v5442 = vmul.f32 %v5439, %v5441
    %v5443 = vadd.f32 %v5439, %v5442
    %vm5444 = vweird.f32 %v5393
    %vm5445 = vweird.f32 %v5439
    %vm5446 = vmor %vm5444, %vm5445
    %v5447 = vsel %vm5446, %v5439, %v5443
    %v5448 = vand.u32 2147483647, %v5393
    %vm5449 = vcmp.eq.f32.partialorder %v5448, 8.507059e+37
    %v5450 = vand.u32 %v5393, 2147483648
    %v5451 = vor.u32 1.1754944e-38, %v5450
    %v5452 = vsel %vm5449, %v5451, %v5447
    %v5453 = vmul.f32 1.0, %v5452
    %v5454 = vxor.u32 %v5366, 2147483648
    %v5455 = vxor.u32 %v5367, 2147483648
    %v5456 = vxor.u32 %v5368, 2147483648
    %v5457 = vxor.u32 %v5369, 2147483648
    %v5458 = vmul.f32 %v5454, 1.442695
    %v5459 = vpow.pop %v5458
    %v5460 = vmul.f32 %v5455, 1.442695
    %v5461 = vpow.pop %v5460
    %v5462 = vmul.f32 %v5456, 1.442695
    %v5463 = vpow.pop %v5462
    %v5464 = vmul.f32 %v5457, 1.442695
    %v5465 = vpow.pop %v5464
    %v5466 = vadd.f32 %v5459, 1.0
    %v5467 = vadd.f32 %v5461, 1.0
    %v5468 = vadd.f32 %v5463, 1.0
    %v5469 = vadd.f32 %v5465, 1.0
    %v5470 = vrcp.pop %v5466
    %v5471 = vmul.f32 %v5466, %v5470
    %v5472 = vsub.f32 1.0, %v5471
    %v5473 = vmul.f32 %v5470, %v5472
    %v5474 = vadd.f32 %v5470, %v5473
    %vm5475 = vweird.f32 %v5466
    %vm5476 = vweird.f32 %v5470
    %vm5477 = vmor %vm5475, %vm5476
    %v5478 = vsel %vm5477, %v5470, %v5474
    %v5479 = vand.u32 2147483647, %v5466
    %vm5480 = vcmp.eq.f32.partialorder %v5479, 8.507059e+37
    %v5481 = vand.u32 %v5466, 2147483648
    %v5482 = vor.u32 1.1754944e-38, %v5481
    %v5483 = vsel %vm5480, %v5482, %v5478
    %v5484 = vmul.f32 1.0, %v5483
    %v5485 = vrcp.pop %v5467
    %v5486 = vmul.f32 %v5467, %v5485
    %v5487 = vsub.f32 1.0, %v5486
    %v5488 = vmul.f32 %v5485, %v5487
    %v5489 = vadd.f32 %v5485, %v5488
    %vm5490 = vweird.f32 %v5467
    %vm5491 = vweird.f32 %v5485
    %vm5492 = vmor %vm5490, %vm5491
    %v5493 = vsel %vm5492, %v5485, %v5489
    %v5494 = vand.u32 2147483647, %v5467
    %vm5495 = vcmp.eq.f32.partialorder %v5494, 8.507059e+37
    %v5496 = vand.u32 %v5467, 2147483648
    %v5497 = vor.u32 1.1754944e-38, %v5496
    %v5498 = vsel %vm5495, %v5497, %v5493
    %v5499 = vmul.f32 1.0, %v5498
    %v5500 = vrcp.pop %v5468
    %v5501 = vmul.f32 %v5468, %v5500
    %v5502 = vsub.f32 1.0, %v5501
    %v5503 = vmul.f32 %v5500, %v5502
    %v5504 = vadd.f32 %v5500, %v5503
    %vm5505 = vweird.f32 %v5468
    %vm5506 = vweird.f32 %v5500
    %vm5507 = vmor %vm5505, %vm5506
    %v5508 = vsel %vm5507, %v5500, %v5504
    %v5509 = vand.u32 2147483647, %v5468
    %vm5510 = vcmp.eq.f32.partialorder %v5509, 8.507059e+37
    %v5511 = vand.u32 %v5468, 2147483648
    %v5512 = vor.u32 1.1754944e-38, %v5511
    %v5513 = vsel %vm5510, %v5512, %v5508
    %v5514 = vmul.f32 1.0, %v5513
    %v5515 = vrcp.pop %v5469
    %v5516 = vmul.f32 %v5469, %v5515
    %v5517 = vsub.f32 1.0, %v5516
    %v5518 = vmul.f32 %v5515, %v5517
    %v5519 = vadd.f32 %v5515, %v5518
    %vm5520 = vweird.f32 %v5469
    %vm5521 = vweird.f32 %v5515
    %vm5522 = vmor %vm5520, %vm5521
    %v5523 = vsel %vm5522, %v5515, %v5519
    %v5524 = vand.u32 2147483647, %v5469
    %vm5525 = vcmp.eq.f32.partialorder %v5524, 8.507059e+37
    %v5526 = vand.u32 %v5469, 2147483648
    %v5527 = vor.u32 1.1754944e-38, %v5526
    %v5528 = vsel %vm5525, %v5527, %v5523
    %v5529 = vmul.f32 1.0, %v5528
    %v5530 = vtanh.pop %v5370
    %v5531 = vtanh.pop %v5371
    %v5532 = vtanh.pop %v5372
    %v5533 = vtanh.pop %v5373
    %v5534 = vxor.u32 %v5374, 2147483648
    %v5535 = vxor.u32 %v5375, 2147483648
    %v5536 = vxor.u32 %v5376, 2147483648
    %v5537 = vxor.u32 %v5377, 2147483648
    %v5538 = vmul.f32 %v5534, 1.442695
    %v5539 = vpow.pop %v5538
    %v5540 = vmul.f32 %v5535, 1.442695
    %v5541 = vpow.pop %v5540
    %v5542 = vmul.f32 %v5536, 1.442695
    %v5543 = vpow.pop %v5542
    %v5544 = vmul.f32 %v5537, 1.442695
    %v5545 = vpow.pop %v5544
    %v5546 = vadd.f32 %v5539, 1.0
    %v5547 = vadd.f32 %v5541, 1.0
    %v5548 = vadd.f32 %v5543, 1.0
    %v5549 = vadd.f32 %v5545, 1.0
    %v5550 = vrcp.pop %v5546
    %v5551 = vmul.f32 %v5546, %v5550
    %v5552 = vsub.f32 1.0, %v5551
    %v5553 = vmul.f32 %v5550, %v5552
    %v5554 = vadd.f32 %v5550, %v5553
    %vm5555 = vweird.f32 %v5546
    %vm5556 = vweird.f32 %v5550
    %vm5557 = vmor %vm5555, %vm5556
    %v5558 = vsel %vm5557, %v5550, %v5554
    %v5559 = vand.u32 2147483647, %v5546
    %vm5560 = vcmp.eq.f32.partialorder %v5559, 8.507059e+37
    %v5561 = vand.u32 %v5546, 2147483648
    %v5562 = vor.u32 1.1754944e-38, %v5561
    %v5563 = vsel %vm5560, %v5562, %v5558
    %v5564 = vmul.f32 1.0, %v5563
    %v5565 = vrcp.pop %v5547
    %v5566 = vmul.f32 %v5547, %v5565
    %v5567 = vsub.f32 1.0, %v5566
    %v5568 = vmul.f32 %v5565, %v5567
    %v5569 = vadd.f32 %v5565, %v5568
    %vm5570 = vweird.f32 %v5547
    %vm5571 = vweird.f32 %v5565
    %vm5572 = vmor %vm5570, %vm5571
    %v5573 = vsel %vm5572, %v5565, %v5569
    %v5574 = vand.u32 2147483647, %v5547
    %vm5575 = vcmp.eq.f32.partialorder %v5574, 8.507059e+37
    %v5576 = vand.u32 %v5547, 2147483648
    %v5577 = vor.u32 1.1754944e-38, %v5576
    %v5578 = vsel %vm5575, %v5577, %v5573
    %v5579 = vmul.f32 1.0, %v5578
    %v5580 = vrcp.pop %v5548
    %v5581 = vmul.f32 %v5548, %v5580
    %v5582 = vsub.f32 1.0, %v5581
    %v5583 = vmul.f32 %v5580, %v5582
    %v5584 = vadd.f32 %v5580, %v5583
    %vm5585 = vweird.f32 %v5548
    %vm5586 = vweird.f32 %v5580
    %vm5587 = vmor %vm5585, %vm5586
    %v5588 = vsel %vm5587, %v5580, %v5584
    %v5589 = vand.u32 2147483647, %v5548
    %vm5590 = vcmp.eq.f32.partialorder %v5589, 8.507059e+37
    %v5591 = vand.u32 %v5548, 2147483648
    %v5592 = vor.u32 1.1754944e-38, %v5591
    %v5593 = vsel %vm5590, %v5592, %v5588
    %v5594 = vmul.f32 1.0, %v5593
    %v5595 = vrcp.pop %v5549
    %v5596 = vmul.f32 %v5549, %v5595
    %v5597 = vsub.f32 1.0, %v5596
    %v5598 = vmul.f32 %v5595, %v5597
    %v5599 = vadd.f32 %v5595, %v5598
    %vm5600 = vweird.f32 %v5549
    %vm5601 = vweird.f32 %v5595
    %vm5602 = vmor %vm5600, %vm5601
    %v5603 = vsel %vm5602, %v5595, %v5599
    %v5604 = vand.u32 2147483647, %v5549
    %vm5605 = vcmp.eq.f32.partialorder %v5604, 8.507059e+37
    %v5606 = vand.u32 %v5549, 2147483648
    %v5607 = vor.u32 1.1754944e-38, %v5606
    %v5608 = vsel %vm5605, %v5607, %v5603
    %v5609 = vmul.f32 1.0, %v5608
    %v5610 = vmul.f32 %v5484, %v4512
    %v5611 = vmul.f32 %v5499, %v4513
    %v5612 = vmul.f32 %v5514, %v4514
    %v5613 = vmul.f32 %v5529, %v4515
    %v5614 = vmul.f32 %v5408, %v5530
    %v5615 = vmul.f32 %v5423, %v5531
    %v5616 = vmul.f32 %v5438, %v5532
    %v5617 = vmul.f32 %v5453, %v5533
    %v5618 = vadd.f32 %v5610, %v5614
    %v5619 = vadd.f32 %v5611, %v5615
    %v5620 = vadd.f32 %v5612, %v5616
    %v5621 = vadd.f32 %v5613, %v5617
    %v5622 = vtanh.pop %v5618
    %v5623 = vtanh.pop %v5619
    %v5624 = vtanh.pop %v5620
    %v5625 = vtanh.pop %v5621
    %v5626 = vmul.f32 %v5564, %v5622
    %v5627 = vmul.f32 %v5579, %v5623
    %v5628 = vmul.f32 %v5594, %v5624
    %v5629 = vmul.f32 %v5609, %v5625
    %5630 = vmatpush.msra.mxu0 0.0
    %5631 = vmatpush.msra.mxu0 0.0
    %5632 = vmatpush.msra.mxu0 0.0
    %5633 = vmatpush.msra.mxu0 0.0
    %5634 = vmatpush.msra.mxu0 0.0
    %5635 = vmatpush.msra.mxu0 0.0
    %5636 = vmatpush.msra.mxu0 0.0
    %5637 = vmatpush.msra.mxu0 0.0
    %5638 = vmatpush.msra.mxu0 0.0
    %5639 = vmatpush.msra.mxu0 0.0
    %5640 = vmatpush.msra.mxu0 0.0
    %5641 = vmatpush.msra.mxu0 0.0
    %v5642 = vand.u32 %v5629, 4294901760
    %5643 = vmatpush.msra.mxu0 %v5642
    %v5644 = vand.u32 %v5628, 4294901760
    %5645 = vmatpush.msra.mxu0 %v5644
    %v5646 = vand.u32 %v5627, 4294901760
    %5647 = vmatpush.msra.mxu0 %v5646
    %v5648 = vand.u32 %v5626, 4294901760
    %5649 = vmatpush.msra.mxu0 %v5648
    %v5650 = vand.u32 %v4525, 4294901760
    %v5651 = vsub.f32 %v4525, %v5650
    %v5652 = vand.u32 %v5651, 4294901760
    %v5653 = vsub.f32 %v5651, %v5652
    %v5654 = vand.u32 %v5653, 4294901760
    %5655 = vmatmul.f32.gmra.mxu0 %v5654
    %v5656 = vpop.f32.mrf.mxu0
    %v5657 = vadd.f32 0.0, %v5656
    %5658 = vdwg.mxu0
    %5659 = vmatpush.msra.mxu0 0.0
    %5660 = vmatpush.msra.mxu0 0.0
    %5661 = vmatpush.msra.mxu0 0.0
    %5662 = vmatpush.msra.mxu0 0.0
    %5663 = vmatpush.msra.mxu0 0.0
    %5664 = vmatpush.msra.mxu0 0.0
    %5665 = vmatpush.msra.mxu0 0.0
    %5666 = vmatpush.msra.mxu0 0.0
    %5667 = vmatpush.msra.mxu0 0.0
    %5668 = vmatpush.msra.mxu0 0.0
    %5669 = vmatpush.msra.mxu0 0.0
    %5670 = vmatpush.msra.mxu0 0.0
    %v5671 = vand.u32 %v5629, 4294901760
    %v5672 = vsub.f32 %v5629, %v5671
    %v5673 = vand.u32 %v5672, 4294901760
    %v5674 = vsub.f32 %v5672, %v5673
    %v5675 = vand.u32 %v5674, 4294901760
    %5676 = vmatpush.msra.mxu0 %v5675
    %v5677 = vand.u32 %v5628, 4294901760
    %v5678 = vsub.f32 %v5628, %v5677
    %v5679 = vand.u32 %v5678, 4294901760
    %v5680 = vsub.f32 %v5678, %v5679
    %v5681 = vand.u32 %v5680, 4294901760
    %5682 = vmatpush.msra.mxu0 %v5681
    %v5683 = vand.u32 %v5627, 4294901760
    %v5684 = vsub.f32 %v5627, %v5683
    %v5685 = vand.u32 %v5684, 4294901760
    %v5686 = vsub.f32 %v5684, %v5685
    %v5687 = vand.u32 %v5686, 4294901760
    %5688 = vmatpush.msra.mxu0 %v5687
    %v5689 = vand.u32 %v5626, 4294901760
    %v5690 = vsub.f32 %v5626, %v5689
    %v5691 = vand.u32 %v5690, 4294901760
    %v5692 = vsub.f32 %v5690, %v5691
    %v5693 = vand.u32 %v5692, 4294901760
    %5694 = vmatpush.msra.mxu0 %v5693
    %v5695 = vand.u32 %v4525, 4294901760
    %5696 = vmatmul.f32.gmra.mxu0 %v5695
    %v5697 = vpop.f32.mrf.mxu0
    %v5698 = vadd.f32 %v5657, %v5697
    %5699 = vdwg.mxu0
    %5700 = vmatpush.msra.mxu0 0.0
    %5701 = vmatpush.msra.mxu0 0.0
    %5702 = vmatpush.msra.mxu0 0.0
    %5703 = vmatpush.msra.mxu0 0.0
    %5704 = vmatpush.msra.mxu0 0.0
    %5705 = vmatpush.msra.mxu0 0.0
    %5706 = vmatpush.msra.mxu0 0.0
    %5707 = vmatpush.msra.mxu0 0.0
    %5708 = vmatpush.msra.mxu0 0.0
    %5709 = vmatpush.msra.mxu0 0.0
    %5710 = vmatpush.msra.mxu0 0.0
    %5711 = vmatpush.msra.mxu0 0.0
    %v5712 = vand.u32 %v5629, 4294901760
    %v5713 = vsub.f32 %v5629, %v5712
    %5714 = vmatpush.msra.mxu0 %v5713
    %v5715 = vand.u32 %v5628, 4294901760
    %v5716 = vsub.f32 %v5628, %v5715
    %5717 = vmatpush.msra.mxu0 %v5716
    %v5718 = vand.u32 %v5627, 4294901760
    %v5719 = vsub.f32 %v5627, %v5718
    %5720 = vmatpush.msra.mxu0 %v5719
    %v5721 = vand.u32 %v5626, 4294901760
    %v5722 = vsub.f32 %v5626, %v5721
    %5723 = vmatpush.msra.mxu0 %v5722
    %v5724 = vand.u32 %v4525, 4294901760
    %v5725 = vsub.f32 %v4525, %v5724
    %5726 = vmatmul.f32.gmra.mxu0 %v5725
    %v5727 = vpop.f32.mrf.mxu0
    %v5728 = vadd.f32 %v5698, %v5727
    %5729 = vdwg.mxu0
    %5730 = vmatpush.msra.mxu0 0.0
    %5731 = vmatpush.msra.mxu0 0.0
    %5732 = vmatpush.msra.mxu0 0.0
    %5733 = vmatpush.msra.mxu0 0.0
    %5734 = vmatpush.msra.mxu0 0.0
    %5735 = vmatpush.msra.mxu0 0.0
    %5736 = vmatpush.msra.mxu0 0.0
    %5737 = vmatpush.msra.mxu0 0.0
    %5738 = vmatpush.msra.mxu0 0.0
    %5739 = vmatpush.msra.mxu0 0.0
    %5740 = vmatpush.msra.mxu0 0.0
    %5741 = vmatpush.msra.mxu0 0.0
    %v5742 = vand.u32 %v5629, 4294901760
    %5743 = vmatpush.msra.mxu0 %v5742
    %v5744 = vand.u32 %v5628, 4294901760
    %5745 = vmatpush.msra.mxu0 %v5744
    %v5746 = vand.u32 %v5627, 4294901760
    %5747 = vmatpush.msra.mxu0 %v5746
    %v5748 = vand.u32 %v5626, 4294901760
    %5749 = vmatpush.msra.mxu0 %v5748
    %v5750 = vand.u32 %v4525, 4294901760
    %v5751 = vsub.f32 %v4525, %v5750
    %v5752 = vand.u32 %v5751, 4294901760
    %5753 = vmatmul.f32.gmra.mxu0 %v5752
    %v5754 = vpop.f32.mrf.mxu0
    %v5755 = vadd.f32 %v5728, %v5754
    %5756 = vdwg.mxu0
    %5757 = vmatpush.msra.mxu0 0.0
    %5758 = vmatpush.msra.mxu0 0.0
    %5759 = vmatpush.msra.mxu0 0.0
    %5760 = vmatpush.msra.mxu0 0.0
    %5761 = vmatpush.msra.mxu0 0.0
    %5762 = vmatpush.msra.mxu0 0.0
    %5763 = vmatpush.msra.mxu0 0.0
    %5764 = vmatpush.msra.mxu0 0.0
    %5765 = vmatpush.msra.mxu0 0.0
    %5766 = vmatpush.msra.mxu0 0.0
    %5767 = vmatpush.msra.mxu0 0.0
    %5768 = vmatpush.msra.mxu0 0.0
    %v5769 = vand.u32 %v5629, 4294901760
    %v5770 = vsub.f32 %v5629, %v5769
    %v5771 = vand.u32 %v5770, 4294901760
    %5772 = vmatpush.msra.mxu0 %v5771
    %v5773 = vand.u32 %v5628, 4294901760
    %v5774 = vsub.f32 %v5628, %v5773
    %v5775 = vand.u32 %v5774, 4294901760
    %5776 = vmatpush.msra.mxu0 %v5775
    %v5777 = vand.u32 %v5627, 4294901760
    %v5778 = vsub.f32 %v5627, %v5777
    %v5779 = vand.u32 %v5778, 4294901760
    %5780 = vmatpush.msra.mxu0 %v5779
    %v5781 = vand.u32 %v5626, 4294901760
    %v5782 = vsub.f32 %v5626, %v5781
    %v5783 = vand.u32 %v5782, 4294901760
    %5784 = vmatpush.msra.mxu0 %v5783
    %v5785 = vand.u32 %v4525, 4294901760
    %5786 = vmatmul.f32.gmra.mxu0 %v5785
    %v5787 = vpop.f32.mrf.mxu0
    %v5788 = vadd.f32 %v5755, %v5787
    %5789 = vdwg.mxu0
    %5790 = vmatpush.msra.mxu0 0.0
    %5791 = vmatpush.msra.mxu0 0.0
    %5792 = vmatpush.msra.mxu0 0.0
    %5793 = vmatpush.msra.mxu0 0.0
    %5794 = vmatpush.msra.mxu0 0.0
    %5795 = vmatpush.msra.mxu0 0.0
    %5796 = vmatpush.msra.mxu0 0.0
    %5797 = vmatpush.msra.mxu0 0.0
    %5798 = vmatpush.msra.mxu0 0.0
    %5799 = vmatpush.msra.mxu0 0.0
    %5800 = vmatpush.msra.mxu0 0.0
    %5801 = vmatpush.msra.mxu0 0.0
    %v5802 = vand.u32 %v5629, 4294901760
    %5803 = vmatpush.msra.mxu0 %v5802
    %v5804 = vand.u32 %v5628, 4294901760
    %5805 = vmatpush.msra.mxu0 %v5804
    %v5806 = vand.u32 %v5627, 4294901760
    %5807 = vmatpush.msra.mxu0 %v5806
    %v5808 = vand.u32 %v5626, 4294901760
    %5809 = vmatpush.msra.mxu0 %v5808
    %v5810 = vand.u32 %v4525, 4294901760
    %5811 = vmatmul.f32.gmra.mxu0 %v5810
    %v5812 = vpop.f32.mrf.mxu0
    %v5813 = vadd.f32 %v5788, %v5812
    %5814 = vdwg.mxu0
    %5815 = vmatpush.msra.mxu0 0.0
    %5816 = vmatpush.msra.mxu0 0.0
    %5817 = vmatpush.msra.mxu0 0.0
    %5818 = vmatpush.msra.mxu0 0.0
    %5819 = vmatpush.msra.mxu0 0.0
    %5820 = vmatpush.msra.mxu0 0.0
    %5821 = vmatpush.msra.mxu0 0.0
    %5822 = vmatpush.msra.mxu0 0.0
    %5823 = vmatpush.msra.mxu0 0.0
    %5824 = vmatpush.msra.mxu0 0.0
    %5825 = vmatpush.msra.mxu0 0.0
    %5826 = vmatpush.msra.mxu0 0.0
    %v5827 = vand.u32 %v5629, 4294901760
    %5828 = vmatpush.msra.mxu0 %v5827
    %v5829 = vand.u32 %v5628, 4294901760
    %5830 = vmatpush.msra.mxu0 %v5829
    %v5831 = vand.u32 %v5627, 4294901760
    %5832 = vmatpush.msra.mxu0 %v5831
    %v5833 = vand.u32 %v5626, 4294901760
    %5834 = vmatpush.msra.mxu0 %v5833
    %v5835 = vand.u32 %v3611, 4294901760
    %v5836 = vsub.f32 %v3611, %v5835
    %v5837 = vand.u32 %v5836, 4294901760
    %v5838 = vsub.f32 %v5836, %v5837
    %v5839 = vand.u32 %v5838, 4294901760
    %5840 = vmatmul.f32.gmra.mxu0 %v5839
    %v5841 = vpop.f32.mrf.mxu0
    %v5842 = vadd.f32 0.0, %v5841
    %v5843 = vand.u32 %v3614, 4294901760
    %v5844 = vsub.f32 %v3614, %v5843
    %v5845 = vand.u32 %v5844, 4294901760
    %v5846 = vsub.f32 %v5844, %v5845
    %v5847 = vand.u32 %v5846, 4294901760
    %5848 = vmatmul.f32.gmra.mxu0 %v5847
    %v5849 = vpop.f32.mrf.mxu0
    %v5850 = vadd.f32 0.0, %v5849
    %v5851 = vand.u32 %v3617, 4294901760
    %v5852 = vsub.f32 %v3617, %v5851
    %v5853 = vand.u32 %v5852, 4294901760
    %v5854 = vsub.f32 %v5852, %v5853
    %v5855 = vand.u32 %v5854, 4294901760
    %5856 = vmatmul.f32.gmra.mxu0 %v5855
    %v5857 = vpop.f32.mrf.mxu0
    %v5858 = vadd.f32 0.0, %v5857
    %v5859 = vand.u32 %v3620, 4294901760
    %v5860 = vsub.f32 %v3620, %v5859
    %v5861 = vand.u32 %v5860, 4294901760
    %v5862 = vsub.f32 %v5860, %v5861
    %v5863 = vand.u32 %v5862, 4294901760
    %5864 = vmatmul.f32.gmra.mxu0 %v5863
    %v5865 = vpop.f32.mrf.mxu0
    %v5866 = vadd.f32 0.0, %v5865
    %v5867 = vand.u32 %v3623, 4294901760
    %v5868 = vsub.f32 %v3623, %v5867
    %v5869 = vand.u32 %v5868, 4294901760
    %v5870 = vsub.f32 %v5868, %v5869
    %v5871 = vand.u32 %v5870, 4294901760
    %5872 = vmatmul.f32.gmra.mxu0 %v5871
    %v5873 = vpop.f32.mrf.mxu0
    %v5874 = vadd.f32 0.0, %v5873
    %v5875 = vand.u32 %v3626, 4294901760
    %v5876 = vsub.f32 %v3626, %v5875
    %v5877 = vand.u32 %v5876, 4294901760
    %v5878 = vsub.f32 %v5876, %v5877
    %v5879 = vand.u32 %v5878, 4294901760
    %5880 = vmatmul.f32.gmra.mxu0 %v5879
    %v5881 = vpop.f32.mrf.mxu0
    %v5882 = vadd.f32 0.0, %v5881
    %v5883 = vand.u32 %v3629, 4294901760
    %v5884 = vsub.f32 %v3629, %v5883
    %v5885 = vand.u32 %v5884, 4294901760
    %v5886 = vsub.f32 %v5884, %v5885
    %v5887 = vand.u32 %v5886, 4294901760
    %5888 = vmatmul.f32.gmra.mxu0 %v5887
    %v5889 = vpop.f32.mrf.mxu0
    %v5890 = vadd.f32 0.0, %v5889
    %v5891 = vand.u32 %v3632, 4294901760
    %v5892 = vsub.f32 %v3632, %v5891
    %v5893 = vand.u32 %v5892, 4294901760
    %v5894 = vsub.f32 %v5892, %v5893
    %v5895 = vand.u32 %v5894, 4294901760
    %5896 = vmatmul.f32.gmra.mxu0 %v5895
    %v5897 = vpop.f32.mrf.mxu0
    %v5898 = vadd.f32 0.0, %v5897
    %v5899 = vand.u32 %v3635, 4294901760
    %v5900 = vsub.f32 %v3635, %v5899
    %v5901 = vand.u32 %v5900, 4294901760
    %v5902 = vsub.f32 %v5900, %v5901
    %v5903 = vand.u32 %v5902, 4294901760
    %5904 = vmatmul.f32.gmra.mxu0 %v5903
    %v5905 = vpop.f32.mrf.mxu0
    %v5906 = vadd.f32 0.0, %v5905
    %v5907 = vand.u32 %v3638, 4294901760
    %v5908 = vsub.f32 %v3638, %v5907
    %v5909 = vand.u32 %v5908, 4294901760
    %v5910 = vsub.f32 %v5908, %v5909
    %v5911 = vand.u32 %v5910, 4294901760
    %5912 = vmatmul.f32.gmra.mxu0 %v5911
    %v5913 = vpop.f32.mrf.mxu0
    %v5914 = vadd.f32 0.0, %v5913
    %v5915 = vand.u32 %v3641, 4294901760
    %v5916 = vsub.f32 %v3641, %v5915
    %v5917 = vand.u32 %v5916, 4294901760
    %v5918 = vsub.f32 %v5916, %v5917
    %v5919 = vand.u32 %v5918, 4294901760
    %5920 = vmatmul.f32.gmra.mxu0 %v5919
    %v5921 = vpop.f32.mrf.mxu0
    %v5922 = vadd.f32 0.0, %v5921
    %v5923 = vand.u32 %v3644, 4294901760
    %v5924 = vsub.f32 %v3644, %v5923
    %v5925 = vand.u32 %v5924, 4294901760
    %v5926 = vsub.f32 %v5924, %v5925
    %v5927 = vand.u32 %v5926, 4294901760
    %5928 = vmatmul.f32.gmra.mxu0 %v5927
    %v5929 = vpop.f32.mrf.mxu0
    %v5930 = vadd.f32 0.0, %v5929
    %v5931 = vand.u32 %v3647, 4294901760
    %v5932 = vsub.f32 %v3647, %v5931
    %v5933 = vand.u32 %v5932, 4294901760
    %v5934 = vsub.f32 %v5932, %v5933
    %v5935 = vand.u32 %v5934, 4294901760
    %5936 = vmatmul.f32.gmra.mxu0 %v5935
    %v5937 = vpop.f32.mrf.mxu0
    %v5938 = vadd.f32 0.0, %v5937
    %v5939 = vand.u32 %v3650, 4294901760
    %v5940 = vsub.f32 %v3650, %v5939
    %v5941 = vand.u32 %v5940, 4294901760
    %v5942 = vsub.f32 %v5940, %v5941
    %v5943 = vand.u32 %v5942, 4294901760
    %5944 = vmatmul.f32.gmra.mxu0 %v5943
    %v5945 = vpop.f32.mrf.mxu0
    %v5946 = vadd.f32 0.0, %v5945
    %v5947 = vand.u32 %v3653, 4294901760
    %v5948 = vsub.f32 %v3653, %v5947
    %v5949 = vand.u32 %v5948, 4294901760
    %v5950 = vsub.f32 %v5948, %v5949
    %v5951 = vand.u32 %v5950, 4294901760
    %5952 = vmatmul.f32.gmra.mxu0 %v5951
    %v5953 = vpop.f32.mrf.mxu0
    %v5954 = vadd.f32 0.0, %v5953
    %v5955 = vand.u32 %v3656, 4294901760
    %v5956 = vsub.f32 %v3656, %v5955
    %v5957 = vand.u32 %v5956, 4294901760
    %v5958 = vsub.f32 %v5956, %v5957
    %v5959 = vand.u32 %v5958, 4294901760
    %5960 = vmatmul.f32.gmra.mxu0 %v5959
    %v5961 = vpop.f32.mrf.mxu0
    %v5962 = vadd.f32 0.0, %v5961
    %5963 = vdwg.mxu0
    %5964 = vmatpush.msra.mxu0 0.0
    %5965 = vmatpush.msra.mxu0 0.0
    %5966 = vmatpush.msra.mxu0 0.0
    %5967 = vmatpush.msra.mxu0 0.0
    %5968 = vmatpush.msra.mxu0 0.0
    %5969 = vmatpush.msra.mxu0 0.0
    %5970 = vmatpush.msra.mxu0 0.0
    %5971 = vmatpush.msra.mxu0 0.0
    %5972 = vmatpush.msra.mxu0 0.0
    %5973 = vmatpush.msra.mxu0 0.0
    %5974 = vmatpush.msra.mxu0 0.0
    %5975 = vmatpush.msra.mxu0 0.0
    %v5976 = vand.u32 %v5629, 4294901760
    %v5977 = vsub.f32 %v5629, %v5976
    %v5978 = vand.u32 %v5977, 4294901760
    %v5979 = vsub.f32 %v5977, %v5978
    %v5980 = vand.u32 %v5979, 4294901760
    %5981 = vmatpush.msra.mxu0 %v5980
    %v5982 = vand.u32 %v5628, 4294901760
    %v5983 = vsub.f32 %v5628, %v5982
    %v5984 = vand.u32 %v5983, 4294901760
    %v5985 = vsub.f32 %v5983, %v5984
    %v5986 = vand.u32 %v5985, 4294901760
    %5987 = vmatpush.msra.mxu0 %v5986
    %v5988 = vand.u32 %v5627, 4294901760
    %v5989 = vsub.f32 %v5627, %v5988
    %v5990 = vand.u32 %v5989, 4294901760
    %v5991 = vsub.f32 %v5989, %v5990
    %v5992 = vand.u32 %v5991, 4294901760
    %5993 = vmatpush.msra.mxu0 %v5992
    %v5994 = vand.u32 %v5626, 4294901760
    %v5995 = vsub.f32 %v5626, %v5994
    %v5996 = vand.u32 %v5995, 4294901760
    %v5997 = vsub.f32 %v5995, %v5996
    %v5998 = vand.u32 %v5997, 4294901760
    %5999 = vmatpush.msra.mxu0 %v5998
    %v6000 = vand.u32 %v3611, 4294901760
    %6001 = vmatmul.f32.gmra.mxu0 %v6000
    %v6002 = vpop.f32.mrf.mxu0
    %v6003 = vadd.f32 %v5842, %v6002
    %v6004 = vand.u32 %v3614, 4294901760
    %6005 = vmatmul.f32.gmra.mxu0 %v6004
    %v6006 = vpop.f32.mrf.mxu0
    %v6007 = vadd.f32 %v5850, %v6006
    %v6008 = vand.u32 %v3617, 4294901760
    %6009 = vmatmul.f32.gmra.mxu0 %v6008
    %v6010 = vpop.f32.mrf.mxu0
    %v6011 = vadd.f32 %v5858, %v6010
    %v6012 = vand.u32 %v3620, 4294901760
    %6013 = vmatmul.f32.gmra.mxu0 %v6012
    %v6014 = vpop.f32.mrf.mxu0
    %v6015 = vadd.f32 %v5866, %v6014
    %v6016 = vand.u32 %v3623, 4294901760
    %6017 = vmatmul.f32.gmra.mxu0 %v6016
    %v6018 = vpop.f32.mrf.mxu0
    %v6019 = vadd.f32 %v5874, %v6018
    %v6020 = vand.u32 %v3626, 4294901760
    %6021 = vmatmul.f32.gmra.mxu0 %v6020
    %v6022 = vpop.f32.mrf.mxu0
    %v6023 = vadd.f32 %v5882, %v6022
    %v6024 = vand.u32 %v3629, 4294901760
    %6025 = vmatmul.f32.gmra.mxu0 %v6024
    %v6026 = vpop.f32.mrf.mxu0
    %v6027 = vadd.f32 %v5890, %v6026
    %v6028 = vand.u32 %v3632, 4294901760
    %6029 = vmatmul.f32.gmra.mxu0 %v6028
    %v6030 = vpop.f32.mrf.mxu0
    %v6031 = vadd.f32 %v5898, %v6030
    %v6032 = vand.u32 %v3635, 4294901760
    %6033 = vmatmul.f32.gmra.mxu0 %v6032
    %v6034 = vpop.f32.mrf.mxu0
    %v6035 = vadd.f32 %v5906, %v6034
    %v6036 = vand.u32 %v3638, 4294901760
    %6037 = vmatmul.f32.gmra.mxu0 %v6036
    %v6038 = vpop.f32.mrf.mxu0
    %v6039 = vadd.f32 %v5914, %v6038
    %v6040 = vand.u32 %v3641, 4294901760
    %6041 = vmatmul.f32.gmra.mxu0 %v6040
    %v6042 = vpop.f32.mrf.mxu0
    %v6043 = vadd.f32 %v5922, %v6042
    %v6044 = vand.u32 %v3644, 4294901760
    %6045 = vmatmul.f32.gmra.mxu0 %v6044
    %v6046 = vpop.f32.mrf.mxu0
    %v6047 = vadd.f32 %v5930, %v6046
    %v6048 = vand.u32 %v3647, 4294901760
    %6049 = vmatmul.f32.gmra.mxu0 %v6048
    %v6050 = vpop.f32.mrf.mxu0
    %v6051 = vadd.f32 %v5938, %v6050
    %v6052 = vand.u32 %v3650, 4294901760
    %6053 = vmatmul.f32.gmra.mxu0 %v6052
    %v6054 = vpop.f32.mrf.mxu0
    %v6055 = vadd.f32 %v5946, %v6054
    %v6056 = vand.u32 %v3653, 4294901760
    %6057 = vmatmul.f32.gmra.mxu0 %v6056
    %v6058 = vpop.f32.mrf.mxu0
    %v6059 = vadd.f32 %v5954, %v6058
    %v6060 = vand.u32 %v3656, 4294901760
    %6061 = vmatmul.f32.gmra.mxu0 %v6060
    %v6062 = vpop.f32.mrf.mxu0
    %v6063 = vadd.f32 %v5962, %v6062
    %6064 = vdwg.mxu0
    %6065 = vmatpush.msra.mxu0 0.0
    %6066 = vmatpush.msra.mxu0 0.0
    %6067 = vmatpush.msra.mxu0 0.0
    %6068 = vmatpush.msra.mxu0 0.0
    %6069 = vmatpush.msra.mxu0 0.0
    %6070 = vmatpush.msra.mxu0 0.0
    %6071 = vmatpush.msra.mxu0 0.0
    %6072 = vmatpush.msra.mxu0 0.0
    %6073 = vmatpush.msra.mxu0 0.0
    %6074 = vmatpush.msra.mxu0 0.0
    %6075 = vmatpush.msra.mxu0 0.0
    %6076 = vmatpush.msra.mxu0 0.0
    %v6077 = vand.u32 %v5629, 4294901760
    %v6078 = vsub.f32 %v5629, %v6077
    %6079 = vmatpush.msra.mxu0 %v6078
    %v6080 = vand.u32 %v5628, 4294901760
    %v6081 = vsub.f32 %v5628, %v6080
    %6082 = vmatpush.msra.mxu0 %v6081
    %v6083 = vand.u32 %v5627, 4294901760
    %v6084 = vsub.f32 %v5627, %v6083
    %6085 = vmatpush.msra.mxu0 %v6084
    %v6086 = vand.u32 %v5626, 4294901760
    %v6087 = vsub.f32 %v5626, %v6086
    %6088 = vmatpush.msra.mxu0 %v6087
    %v6089 = vand.u32 %v3611, 4294901760
    %v6090 = vsub.f32 %v3611, %v6089
    %6091 = vmatmul.f32.gmra.mxu0 %v6090
    %v6092 = vpop.f32.mrf.mxu0
    %v6093 = vadd.f32 %v6003, %v6092
    %v6094 = vand.u32 %v3614, 4294901760
    %v6095 = vsub.f32 %v3614, %v6094
    %6096 = vmatmul.f32.gmra.mxu0 %v6095
    %v6097 = vpop.f32.mrf.mxu0
    %v6098 = vadd.f32 %v6007, %v6097
    %v6099 = vand.u32 %v3617, 4294901760
    %v6100 = vsub.f32 %v3617, %v6099
    %6101 = vmatmul.f32.gmra.mxu0 %v6100
    %v6102 = vpop.f32.mrf.mxu0
    %v6103 = vadd.f32 %v6011, %v6102
    %v6104 = vand.u32 %v3620, 4294901760
    %v6105 = vsub.f32 %v3620, %v6104
    %6106 = vmatmul.f32.gmra.mxu0 %v6105
    %v6107 = vpop.f32.mrf.mxu0
    %v6108 = vadd.f32 %v6015, %v6107
    %v6109 = vand.u32 %v3623, 4294901760
    %v6110 = vsub.f32 %v3623, %v6109
    %6111 = vmatmul.f32.gmra.mxu0 %v6110
    %v6112 = vpop.f32.mrf.mxu0
    %v6113 = vadd.f32 %v6019, %v6112
    %v6114 = vand.u32 %v3626, 4294901760
    %v6115 = vsub.f32 %v3626, %v6114
    %6116 = vmatmul.f32.gmra.mxu0 %v6115
    %v6117 = vpop.f32.mrf.mxu0
    %v6118 = vadd.f32 %v6023, %v6117
    %v6119 = vand.u32 %v3629, 4294901760
    %v6120 = vsub.f32 %v3629, %v6119
    %6121 = vmatmul.f32.gmra.mxu0 %v6120
    %v6122 = vpop.f32.mrf.mxu0
    %v6123 = vadd.f32 %v6027, %v6122
    %v6124 = vand.u32 %v3632, 4294901760
    %v6125 = vsub.f32 %v3632, %v6124
    %6126 = vmatmul.f32.gmra.mxu0 %v6125
    %v6127 = vpop.f32.mrf.mxu0
    %v6128 = vadd.f32 %v6031, %v6127
    %v6129 = vand.u32 %v3635, 4294901760
    %v6130 = vsub.f32 %v3635, %v6129
    %6131 = vmatmul.f32.gmra.mxu0 %v6130
    %v6132 = vpop.f32.mrf.mxu0
    %v6133 = vadd.f32 %v6035, %v6132
    %v6134 = vand.u32 %v3638, 4294901760
    %v6135 = vsub.f32 %v3638, %v6134
    %6136 = vmatmul.f32.gmra.mxu0 %v6135
    %v6137 = vpop.f32.mrf.mxu0
    %v6138 = vadd.f32 %v6039, %v6137
    %v6139 = vand.u32 %v3641, 4294901760
    %v6140 = vsub.f32 %v3641, %v6139
    %6141 = vmatmul.f32.gmra.mxu0 %v6140
    %v6142 = vpop.f32.mrf.mxu0
    %v6143 = vadd.f32 %v6043, %v6142
    %v6144 = vand.u32 %v3644, 4294901760
    %v6145 = vsub.f32 %v3644, %v6144
    %6146 = vmatmul.f32.gmra.mxu0 %v6145
    %v6147 = vpop.f32.mrf.mxu0
    %v6148 = vadd.f32 %v6047, %v6147
    %v6149 = vand.u32 %v3647, 4294901760
    %v6150 = vsub.f32 %v3647, %v6149
    %6151 = vmatmul.f32.gmra.mxu0 %v6150
    %v6152 = vpop.f32.mrf.mxu0
    %v6153 = vadd.f32 %v6051, %v6152
    %v6154 = vand.u32 %v3650, 4294901760
    %v6155 = vsub.f32 %v3650, %v6154
    %6156 = vmatmul.f32.gmra.mxu0 %v6155
    %v6157 = vpop.f32.mrf.mxu0
    %v6158 = vadd.f32 %v6055, %v6157
    %v6159 = vand.u32 %v3653, 4294901760
    %v6160 = vsub.f32 %v3653, %v6159
    %6161 = vmatmul.f32.gmra.mxu0 %v6160
    %v6162 = vpop.f32.mrf.mxu0
    %v6163 = vadd.f32 %v6059, %v6162
    %v6164 = vand.u32 %v3656, 4294901760
    %v6165 = vsub.f32 %v3656, %v6164
    %6166 = vmatmul.f32.gmra.mxu0 %v6165
    %v6167 = vpop.f32.mrf.mxu0
    %v6168 = vadd.f32 %v6063, %v6167
    %6169 = vdwg.mxu0
    %6170 = vmatpush.msra.mxu0 0.0
    %6171 = vmatpush.msra.mxu0 0.0
    %6172 = vmatpush.msra.mxu0 0.0
    %6173 = vmatpush.msra.mxu0 0.0
    %6174 = vmatpush.msra.mxu0 0.0
    %6175 = vmatpush.msra.mxu0 0.0
    %6176 = vmatpush.msra.mxu0 0.0
    %6177 = vmatpush.msra.mxu0 0.0
    %6178 = vmatpush.msra.mxu0 0.0
    %6179 = vmatpush.msra.mxu0 0.0
    %6180 = vmatpush.msra.mxu0 0.0
    %6181 = vmatpush.msra.mxu0 0.0
    %v6182 = vand.u32 %v5629, 4294901760
    %6183 = vmatpush.msra.mxu0 %v6182
    %v6184 = vand.u32 %v5628, 4294901760
    %6185 = vmatpush.msra.mxu0 %v6184
    %v6186 = vand.u32 %v5627, 4294901760
    %6187 = vmatpush.msra.mxu0 %v6186
    %v6188 = vand.u32 %v5626, 4294901760
    %6189 = vmatpush.msra.mxu0 %v6188
    %v6190 = vand.u32 %v3611, 4294901760
    %v6191 = vsub.f32 %v3611, %v6190
    %v6192 = vand.u32 %v6191, 4294901760
    %6193 = vmatmul.f32.gmra.mxu0 %v6192
    %v6194 = vpop.f32.mrf.mxu0
    %v6195 = vadd.f32 %v6093, %v6194
    %v6196 = vand.u32 %v3614, 4294901760
    %v6197 = vsub.f32 %v3614, %v6196
    %v6198 = vand.u32 %v6197, 4294901760
    %6199 = vmatmul.f32.gmra.mxu0 %v6198
    %v6200 = vpop.f32.mrf.mxu0
    %v6201 = vadd.f32 %v6098, %v6200
    %v6202 = vand.u32 %v3617, 4294901760
    %v6203 = vsub.f32 %v3617, %v6202
    %v6204 = vand.u32 %v6203, 4294901760
    %6205 = vmatmul.f32.gmra.mxu0 %v6204
    %v6206 = vpop.f32.mrf.mxu0
    %v6207 = vadd.f32 %v6103, %v6206
    %v6208 = vand.u32 %v3620, 4294901760
    %v6209 = vsub.f32 %v3620, %v6208
    %v6210 = vand.u32 %v6209, 4294901760
    %6211 = vmatmul.f32.gmra.mxu0 %v6210
    %v6212 = vpop.f32.mrf.mxu0
    %v6213 = vadd.f32 %v6108, %v6212
    %v6214 = vand.u32 %v3623, 4294901760
    %v6215 = vsub.f32 %v3623, %v6214
    %v6216 = vand.u32 %v6215, 4294901760
    %6217 = vmatmul.f32.gmra.mxu0 %v6216
    %v6218 = vpop.f32.mrf.mxu0
    %v6219 = vadd.f32 %v6113, %v6218
    %v6220 = vand.u32 %v3626, 4294901760
    %v6221 = vsub.f32 %v3626, %v6220
    %v6222 = vand.u32 %v6221, 4294901760
    %6223 = vmatmul.f32.gmra.mxu0 %v6222
    %v6224 = vpop.f32.mrf.mxu0
    %v6225 = vadd.f32 %v6118, %v6224
    %v6226 = vand.u32 %v3629, 4294901760
    %v6227 = vsub.f32 %v3629, %v6226
    %v6228 = vand.u32 %v6227, 4294901760
    %6229 = vmatmul.f32.gmra.mxu0 %v6228
    %v6230 = vpop.f32.mrf.mxu0
    %v6231 = vadd.f32 %v6123, %v6230
    %v6232 = vand.u32 %v3632, 4294901760
    %v6233 = vsub.f32 %v3632, %v6232
    %v6234 = vand.u32 %v6233, 4294901760
    %6235 = vmatmul.f32.gmra.mxu0 %v6234
    %v6236 = vpop.f32.mrf.mxu0
    %v6237 = vadd.f32 %v6128, %v6236
    %v6238 = vand.u32 %v3635, 4294901760
    %v6239 = vsub.f32 %v3635, %v6238
    %v6240 = vand.u32 %v6239, 4294901760
    %6241 = vmatmul.f32.gmra.mxu0 %v6240
    %v6242 = vpop.f32.mrf.mxu0
    %v6243 = vadd.f32 %v6133, %v6242
    %v6244 = vand.u32 %v3638, 4294901760
    %v6245 = vsub.f32 %v3638, %v6244
    %v6246 = vand.u32 %v6245, 4294901760
    %6247 = vmatmul.f32.gmra.mxu0 %v6246
    %v6248 = vpop.f32.mrf.mxu0
    %v6249 = vadd.f32 %v6138, %v6248
    %v6250 = vand.u32 %v3641, 4294901760
    %v6251 = vsub.f32 %v3641, %v6250
    %v6252 = vand.u32 %v6251, 4294901760
    %6253 = vmatmul.f32.gmra.mxu0 %v6252
    %v6254 = vpop.f32.mrf.mxu0
    %v6255 = vadd.f32 %v6143, %v6254
    %v6256 = vand.u32 %v3644, 4294901760
    %v6257 = vsub.f32 %v3644, %v6256
    %v6258 = vand.u32 %v6257, 4294901760
    %6259 = vmatmul.f32.gmra.mxu0 %v6258
    %v6260 = vpop.f32.mrf.mxu0
    %v6261 = vadd.f32 %v6148, %v6260
    %v6262 = vand.u32 %v3647, 4294901760
    %v6263 = vsub.f32 %v3647, %v6262
    %v6264 = vand.u32 %v6263, 4294901760
    %6265 = vmatmul.f32.gmra.mxu0 %v6264
    %v6266 = vpop.f32.mrf.mxu0
    %v6267 = vadd.f32 %v6153, %v6266
    %v6268 = vand.u32 %v3650, 4294901760
    %v6269 = vsub.f32 %v3650, %v6268
    %v6270 = vand.u32 %v6269, 4294901760
    %6271 = vmatmul.f32.gmra.mxu0 %v6270
    %v6272 = vpop.f32.mrf.mxu0
    %v6273 = vadd.f32 %v6158, %v6272
    %v6274 = vand.u32 %v3653, 4294901760
    %v6275 = vsub.f32 %v3653, %v6274
    %v6276 = vand.u32 %v6275, 4294901760
    %6277 = vmatmul.f32.gmra.mxu0 %v6276
    %v6278 = vpop.f32.mrf.mxu0
    %v6279 = vadd.f32 %v6163, %v6278
    %v6280 = vand.u32 %v3656, 4294901760
    %v6281 = vsub.f32 %v3656, %v6280
    %v6282 = vand.u32 %v6281, 4294901760
    %6283 = vmatmul.f32.gmra.mxu0 %v6282
    %v6284 = vpop.f32.mrf.mxu0
    %v6285 = vadd.f32 %v6168, %v6284
    %6286 = vdwg.mxu0
    %6287 = vmatpush.msra.mxu0 0.0
    %6288 = vmatpush.msra.mxu0 0.0
    %6289 = vmatpush.msra.mxu0 0.0
    %6290 = vmatpush.msra.mxu0 0.0
    %6291 = vmatpush.msra.mxu0 0.0
    %6292 = vmatpush.msra.mxu0 0.0
    %6293 = vmatpush.msra.mxu0 0.0
    %6294 = vmatpush.msra.mxu0 0.0
    %6295 = vmatpush.msra.mxu0 0.0
    %6296 = vmatpush.msra.mxu0 0.0
    %6297 = vmatpush.msra.mxu0 0.0
    %6298 = vmatpush.msra.mxu0 0.0
    %v6299 = vand.u32 %v5629, 4294901760
    %v6300 = vsub.f32 %v5629, %v6299
    %v6301 = vand.u32 %v6300, 4294901760
    %6302 = vmatpush.msra.mxu0 %v6301
    %v6303 = vand.u32 %v5628, 4294901760
    %v6304 = vsub.f32 %v5628, %v6303
    %v6305 = vand.u32 %v6304, 4294901760
    %6306 = vmatpush.msra.mxu0 %v6305
    %v6307 = vand.u32 %v5627, 4294901760
    %v6308 = vsub.f32 %v5627, %v6307
    %v6309 = vand.u32 %v6308, 4294901760
    %6310 = vmatpush.msra.mxu0 %v6309
    %v6311 = vand.u32 %v5626, 4294901760
    %v6312 = vsub.f32 %v5626, %v6311
    %v6313 = vand.u32 %v6312, 4294901760
    %6314 = vmatpush.msra.mxu0 %v6313
    %v6315 = vand.u32 %v3611, 4294901760
    %6316 = vmatmul.f32.gmra.mxu0 %v6315
    %v6317 = vpop.f32.mrf.mxu0
    %v6318 = vadd.f32 %v6195, %v6317
    %v6319 = vand.u32 %v3614, 4294901760
    %6320 = vmatmul.f32.gmra.mxu0 %v6319
    %v6321 = vpop.f32.mrf.mxu0
    %v6322 = vadd.f32 %v6201, %v6321
    %v6323 = vand.u32 %v3617, 4294901760
    %6324 = vmatmul.f32.gmra.mxu0 %v6323
    %v6325 = vpop.f32.mrf.mxu0
    %v6326 = vadd.f32 %v6207, %v6325
    %v6327 = vand.u32 %v3620, 4294901760
    %6328 = vmatmul.f32.gmra.mxu0 %v6327
    %v6329 = vpop.f32.mrf.mxu0
    %v6330 = vadd.f32 %v6213, %v6329
    %v6331 = vand.u32 %v3623, 4294901760
    %6332 = vmatmul.f32.gmra.mxu0 %v6331
    %v6333 = vpop.f32.mrf.mxu0
    %v6334 = vadd.f32 %v6219, %v6333
    %v6335 = vand.u32 %v3626, 4294901760
    %6336 = vmatmul.f32.gmra.mxu0 %v6335
    %v6337 = vpop.f32.mrf.mxu0
    %v6338 = vadd.f32 %v6225, %v6337
    %v6339 = vand.u32 %v3629, 4294901760
    %6340 = vmatmul.f32.gmra.mxu0 %v6339
    %v6341 = vpop.f32.mrf.mxu0
    %v6342 = vadd.f32 %v6231, %v6341
    %v6343 = vand.u32 %v3632, 4294901760
    %6344 = vmatmul.f32.gmra.mxu0 %v6343
    %v6345 = vpop.f32.mrf.mxu0
    %v6346 = vadd.f32 %v6237, %v6345
    %v6347 = vand.u32 %v3635, 4294901760
    %6348 = vmatmul.f32.gmra.mxu0 %v6347
    %v6349 = vpop.f32.mrf.mxu0
    %v6350 = vadd.f32 %v6243, %v6349
    %v6351 = vand.u32 %v3638, 4294901760
    %6352 = vmatmul.f32.gmra.mxu0 %v6351
    %v6353 = vpop.f32.mrf.mxu0
    %v6354 = vadd.f32 %v6249, %v6353
    %v6355 = vand.u32 %v3641, 4294901760
    %6356 = vmatmul.f32.gmra.mxu0 %v6355
    %v6357 = vpop.f32.mrf.mxu0
    %v6358 = vadd.f32 %v6255, %v6357
    %v6359 = vand.u32 %v3644, 4294901760
    %6360 = vmatmul.f32.gmra.mxu0 %v6359
    %v6361 = vpop.f32.mrf.mxu0
    %v6362 = vadd.f32 %v6261, %v6361
    %v6363 = vand.u32 %v3647, 4294901760
    %6364 = vmatmul.f32.gmra.mxu0 %v6363
    %v6365 = vpop.f32.mrf.mxu0
    %v6366 = vadd.f32 %v6267, %v6365
    %v6367 = vand.u32 %v3650, 4294901760
    %6368 = vmatmul.f32.gmra.mxu0 %v6367
    %v6369 = vpop.f32.mrf.mxu0
    %v6370 = vadd.f32 %v6273, %v6369
    %v6371 = vand.u32 %v3653, 4294901760
    %6372 = vmatmul.f32.gmra.mxu0 %v6371
    %v6373 = vpop.f32.mrf.mxu0
    %v6374 = vadd.f32 %v6279, %v6373
    %v6375 = vand.u32 %v3656, 4294901760
    %6376 = vmatmul.f32.gmra.mxu0 %v6375
    %v6377 = vpop.f32.mrf.mxu0
    %v6378 = vadd.f32 %v6285, %v6377
    %6379 = vdwg.mxu0
    %6380 = vmatpush.msra.mxu0 0.0
    %6381 = vmatpush.msra.mxu0 0.0
    %6382 = vmatpush.msra.mxu0 0.0
    %6383 = vmatpush.msra.mxu0 0.0
    %6384 = vmatpush.msra.mxu0 0.0
    %6385 = vmatpush.msra.mxu0 0.0
    %6386 = vmatpush.msra.mxu0 0.0
    %6387 = vmatpush.msra.mxu0 0.0
    %6388 = vmatpush.msra.mxu0 0.0
    %6389 = vmatpush.msra.mxu0 0.0
    %6390 = vmatpush.msra.mxu0 0.0
    %6391 = vmatpush.msra.mxu0 0.0
    %v6392 = vand.u32 %v5629, 4294901760
    %6393 = vmatpush.msra.mxu0 %v6392
    %v6394 = vand.u32 %v5628, 4294901760
    %6395 = vmatpush.msra.mxu0 %v6394
    %v6396 = vand.u32 %v5627, 4294901760
    %6397 = vmatpush.msra.mxu0 %v6396
    %v6398 = vand.u32 %v5626, 4294901760
    %6399 = vmatpush.msra.mxu0 %v6398
    %v6400 = vand.u32 %v3611, 4294901760
    %6401 = vmatmul.f32.gmra.mxu0 %v6400
    %v6402 = vpop.f32.mrf.mxu0
    %v6403 = vadd.f32 %v6318, %v6402
    %v6404 = vand.u32 %v3614, 4294901760
    %6405 = vmatmul.f32.gmra.mxu0 %v6404
    %v6406 = vpop.f32.mrf.mxu0
    %v6407 = vadd.f32 %v6322, %v6406
    %v6408 = vand.u32 %v3617, 4294901760
    %6409 = vmatmul.f32.gmra.mxu0 %v6408
    %v6410 = vpop.f32.mrf.mxu0
    %v6411 = vadd.f32 %v6326, %v6410
    %v6412 = vand.u32 %v3620, 4294901760
    %6413 = vmatmul.f32.gmra.mxu0 %v6412
    %v6414 = vpop.f32.mrf.mxu0
    %v6415 = vadd.f32 %v6330, %v6414
    %v6416 = vand.u32 %v3623, 4294901760
    %6417 = vmatmul.f32.gmra.mxu0 %v6416
    %v6418 = vpop.f32.mrf.mxu0
    %v6419 = vadd.f32 %v6334, %v6418
    %v6420 = vand.u32 %v3626, 4294901760
    %6421 = vmatmul.f32.gmra.mxu0 %v6420
    %v6422 = vpop.f32.mrf.mxu0
    %v6423 = vadd.f32 %v6338, %v6422
    %v6424 = vand.u32 %v3629, 4294901760
    %6425 = vmatmul.f32.gmra.mxu0 %v6424
    %v6426 = vpop.f32.mrf.mxu0
    %v6427 = vadd.f32 %v6342, %v6426
    %v6428 = vand.u32 %v3632, 4294901760
    %6429 = vmatmul.f32.gmra.mxu0 %v6428
    %v6430 = vpop.f32.mrf.mxu0
    %v6431 = vadd.f32 %v6346, %v6430
    %v6432 = vand.u32 %v3635, 4294901760
    %6433 = vmatmul.f32.gmra.mxu0 %v6432
    %v6434 = vpop.f32.mrf.mxu0
    %v6435 = vadd.f32 %v6350, %v6434
    %v6436 = vand.u32 %v3638, 4294901760
    %6437 = vmatmul.f32.gmra.mxu0 %v6436
    %v6438 = vpop.f32.mrf.mxu0
    %v6439 = vadd.f32 %v6354, %v6438
    %v6440 = vand.u32 %v3641, 4294901760
    %6441 = vmatmul.f32.gmra.mxu0 %v6440
    %v6442 = vpop.f32.mrf.mxu0
    %v6443 = vadd.f32 %v6358, %v6442
    %v6444 = vand.u32 %v3644, 4294901760
    %6445 = vmatmul.f32.gmra.mxu0 %v6444
    %v6446 = vpop.f32.mrf.mxu0
    %v6447 = vadd.f32 %v6362, %v6446
    %v6448 = vand.u32 %v3647, 4294901760
    %6449 = vmatmul.f32.gmra.mxu0 %v6448
    %v6450 = vpop.f32.mrf.mxu0
    %v6451 = vadd.f32 %v6366, %v6450
    %v6452 = vand.u32 %v3650, 4294901760
    %6453 = vmatmul.f32.gmra.mxu0 %v6452
    %v6454 = vpop.f32.mrf.mxu0
    %v6455 = vadd.f32 %v6370, %v6454
    %v6456 = vand.u32 %v3653, 4294901760
    %6457 = vmatmul.f32.gmra.mxu0 %v6456
    %v6458 = vpop.f32.mrf.mxu0
    %v6459 = vadd.f32 %v6374, %v6458
    %v6460 = vand.u32 %v3656, 4294901760
    %6461 = vmatmul.f32.gmra.mxu0 %v6460
    %v6462 = vpop.f32.mrf.mxu0
    %v6463 = vadd.f32 %v6378, %v6462
    %6464 = vdwg.mxu0
    %v6465 = vadd.f32 %v3526, %v6403
    %v6466 = vadd.f32 %v3527, %v6407
    %v6467 = vadd.f32 %v3528, %v6411
    %v6468 = vadd.f32 %v3529, %v6415
    %v6469 = vadd.f32 %v3530, %v6419
    %v6470 = vadd.f32 %v3531, %v6423
    %v6471 = vadd.f32 %v3532, %v6427
    %v6472 = vadd.f32 %v3533, %v6431
    %v6473 = vadd.f32 %v3534, %v6435
    %v6474 = vadd.f32 %v3535, %v6439
    %v6475 = vadd.f32 %v3536, %v6443
    %v6476 = vadd.f32 %v3537, %v6447
    %v6477 = vadd.f32 %v3538, %v6451
    %v6478 = vadd.f32 %v3539, %v6455
    %v6479 = vadd.f32 %v3540, %v6459
    %v6480 = vadd.f32 %v3541, %v6463
    %v6481 = vxor.u32 %v6465, 2147483648
    %v6482 = vxor.u32 %v6466, 2147483648
    %v6483 = vxor.u32 %v6467, 2147483648
    %v6484 = vxor.u32 %v6468, 2147483648
    %v6485 = vmul.f32 %v6481, 1.442695
    %v6486 = vpow.pop %v6485
    %v6487 = vmul.f32 %v6482, 1.442695
    %v6488 = vpow.pop %v6487
    %v6489 = vmul.f32 %v6483, 1.442695
    %v6490 = vpow.pop %v6489
    %v6491 = vmul.f32 %v6484, 1.442695
    %v6492 = vpow.pop %v6491
    %v6493 = vadd.f32 %v6486, 1.0
    %v6494 = vadd.f32 %v6488, 1.0
    %v6495 = vadd.f32 %v6490, 1.0
    %v6496 = vadd.f32 %v6492, 1.0
    %v6497 = vrcp.pop %v6493
    %v6498 = vmul.f32 %v6493, %v6497
    %v6499 = vsub.f32 1.0, %v6498
    %v6500 = vmul.f32 %v6497, %v6499
    %v6501 = vadd.f32 %v6497, %v6500
    %vm6502 = vweird.f32 %v6493
    %vm6503 = vweird.f32 %v6497
    %vm6504 = vmor %vm6502, %vm6503
    %v6505 = vsel %vm6504, %v6497, %v6501
    %v6506 = vand.u32 2147483647, %v6493
    %vm6507 = vcmp.eq.f32.partialorder %v6506, 8.507059e+37
    %v6508 = vand.u32 %v6493, 2147483648
    %v6509 = vor.u32 1.1754944e-38, %v6508
    %v6510 = vsel %vm6507, %v6509, %v6505
    %v6511 = vmul.f32 1.0, %v6510
    %v6512 = vrcp.pop %v6494
    %v6513 = vmul.f32 %v6494, %v6512
    %v6514 = vsub.f32 1.0, %v6513
    %v6515 = vmul.f32 %v6512, %v6514
    %v6516 = vadd.f32 %v6512, %v6515
    %vm6517 = vweird.f32 %v6494
    %vm6518 = vweird.f32 %v6512
    %vm6519 = vmor %vm6517, %vm6518
    %v6520 = vsel %vm6519, %v6512, %v6516
    %v6521 = vand.u32 2147483647, %v6494
    %vm6522 = vcmp.eq.f32.partialorder %v6521, 8.507059e+37
    %v6523 = vand.u32 %v6494, 2147483648
    %v6524 = vor.u32 1.1754944e-38, %v6523
    %v6525 = vsel %vm6522, %v6524, %v6520
    %v6526 = vmul.f32 1.0, %v6525
    %v6527 = vrcp.pop %v6495
    %v6528 = vmul.f32 %v6495, %v6527
    %v6529 = vsub.f32 1.0, %v6528
    %v6530 = vmul.f32 %v6527, %v6529
    %v6531 = vadd.f32 %v6527, %v6530
    %vm6532 = vweird.f32 %v6495
    %vm6533 = vweird.f32 %v6527
    %vm6534 = vmor %vm6532, %vm6533
    %v6535 = vsel %vm6534, %v6527, %v6531
    %v6536 = vand.u32 2147483647, %v6495
    %vm6537 = vcmp.eq.f32.partialorder %v6536, 8.507059e+37
    %v6538 = vand.u32 %v6495, 2147483648
    %v6539 = vor.u32 1.1754944e-38, %v6538
    %v6540 = vsel %vm6537, %v6539, %v6535
    %v6541 = vmul.f32 1.0, %v6540
    %v6542 = vrcp.pop %v6496
    %v6543 = vmul.f32 %v6496, %v6542
    %v6544 = vsub.f32 1.0, %v6543
    %v6545 = vmul.f32 %v6542, %v6544
    %v6546 = vadd.f32 %v6542, %v6545
    %vm6547 = vweird.f32 %v6496
    %vm6548 = vweird.f32 %v6542
    %vm6549 = vmor %vm6547, %vm6548
    %v6550 = vsel %vm6549, %v6542, %v6546
    %v6551 = vand.u32 2147483647, %v6496
    %vm6552 = vcmp.eq.f32.partialorder %v6551, 8.507059e+37
    %v6553 = vand.u32 %v6496, 2147483648
    %v6554 = vor.u32 1.1754944e-38, %v6553
    %v6555 = vsel %vm6552, %v6554, %v6550
    %v6556 = vmul.f32 1.0, %v6555
    %v6557 = vxor.u32 %v6469, 2147483648
    %v6558 = vxor.u32 %v6470, 2147483648
    %v6559 = vxor.u32 %v6471, 2147483648
    %v6560 = vxor.u32 %v6472, 2147483648
    %v6561 = vmul.f32 %v6557, 1.442695
    %v6562 = vpow.pop %v6561
    %v6563 = vmul.f32 %v6558, 1.442695
    %v6564 = vpow.pop %v6563
    %v6565 = vmul.f32 %v6559, 1.442695
    %v6566 = vpow.pop %v6565
    %v6567 = vmul.f32 %v6560, 1.442695
    %v6568 = vpow.pop %v6567
    %v6569 = vadd.f32 %v6562, 1.0
    %v6570 = vadd.f32 %v6564, 1.0
    %v6571 = vadd.f32 %v6566, 1.0
    %v6572 = vadd.f32 %v6568, 1.0
    %v6573 = vrcp.pop %v6569
    %v6574 = vmul.f32 %v6569, %v6573
    %v6575 = vsub.f32 1.0, %v6574
    %v6576 = vmul.f32 %v6573, %v6575
    %v6577 = vadd.f32 %v6573, %v6576
    %vm6578 = vweird.f32 %v6569
    %vm6579 = vweird.f32 %v6573
    %vm6580 = vmor %vm6578, %vm6579
    %v6581 = vsel %vm6580, %v6573, %v6577
    %v6582 = vand.u32 2147483647, %v6569
    %vm6583 = vcmp.eq.f32.partialorder %v6582, 8.507059e+37
    %v6584 = vand.u32 %v6569, 2147483648
    %v6585 = vor.u32 1.1754944e-38, %v6584
    %v6586 = vsel %vm6583, %v6585, %v6581
    %v6587 = vmul.f32 1.0, %v6586
    %v6588 = vrcp.pop %v6570
    %v6589 = vmul.f32 %v6570, %v6588
    %v6590 = vsub.f32 1.0, %v6589
    %v6591 = vmul.f32 %v6588, %v6590
    %v6592 = vadd.f32 %v6588, %v6591
    %vm6593 = vweird.f32 %v6570
    %vm6594 = vweird.f32 %v6588
    %vm6595 = vmor %vm6593, %vm6594
    %v6596 = vsel %vm6595, %v6588, %v6592
    %v6597 = vand.u32 2147483647, %v6570
    %vm6598 = vcmp.eq.f32.partialorder %v6597, 8.507059e+37
    %v6599 = vand.u32 %v6570, 2147483648
    %v6600 = vor.u32 1.1754944e-38, %v6599
    %v6601 = vsel %vm6598, %v6600, %v6596
    %v6602 = vmul.f32 1.0, %v6601
    %v6603 = vrcp.pop %v6571
    %v6604 = vmul.f32 %v6571, %v6603
    %v6605 = vsub.f32 1.0, %v6604
    %v6606 = vmul.f32 %v6603, %v6605
    %v6607 = vadd.f32 %v6603, %v6606
    %vm6608 = vweird.f32 %v6571
    %vm6609 = vweird.f32 %v6603
    %vm6610 = vmor %vm6608, %vm6609
    %v6611 = vsel %vm6610, %v6603, %v6607
    %v6612 = vand.u32 2147483647, %v6571
    %vm6613 = vcmp.eq.f32.partialorder %v6612, 8.507059e+37
    %v6614 = vand.u32 %v6571, 2147483648
    %v6615 = vor.u32 1.1754944e-38, %v6614
    %v6616 = vsel %vm6613, %v6615, %v6611
    %v6617 = vmul.f32 1.0, %v6616
    %v6618 = vrcp.pop %v6572
    %v6619 = vmul.f32 %v6572, %v6618
    %v6620 = vsub.f32 1.0, %v6619
    %v6621 = vmul.f32 %v6618, %v6620
    %v6622 = vadd.f32 %v6618, %v6621
    %vm6623 = vweird.f32 %v6572
    %vm6624 = vweird.f32 %v6618
    %vm6625 = vmor %vm6623, %vm6624
    %v6626 = vsel %vm6625, %v6618, %v6622
    %v6627 = vand.u32 2147483647, %v6572
    %vm6628 = vcmp.eq.f32.partialorder %v6627, 8.507059e+37
    %v6629 = vand.u32 %v6572, 2147483648
    %v6630 = vor.u32 1.1754944e-38, %v6629
    %v6631 = vsel %vm6628, %v6630, %v6626
    %v6632 = vmul.f32 1.0, %v6631
    %v6633 = vtanh.pop %v6473
    %v6634 = vtanh.pop %v6474
    %v6635 = vtanh.pop %v6475
    %v6636 = vtanh.pop %v6476
    %v6637 = vxor.u32 %v6477, 2147483648
    %v6638 = vxor.u32 %v6478, 2147483648
    %v6639 = vxor.u32 %v6479, 2147483648
    %v6640 = vxor.u32 %v6480, 2147483648
    %v6641 = vmul.f32 %v6637, 1.442695
    %v6642 = vpow.pop %v6641
    %v6643 = vmul.f32 %v6638, 1.442695
    %v6644 = vpow.pop %v6643
    %v6645 = vmul.f32 %v6639, 1.442695
    %v6646 = vpow.pop %v6645
    %v6647 = vmul.f32 %v6640, 1.442695
    %v6648 = vpow.pop %v6647
    %v6649 = vadd.f32 %v6642, 1.0
    %v6650 = vadd.f32 %v6644, 1.0
    %v6651 = vadd.f32 %v6646, 1.0
    %v6652 = vadd.f32 %v6648, 1.0
    %v6653 = vrcp.pop %v6649
    %v6654 = vmul.f32 %v6649, %v6653
    %v6655 = vsub.f32 1.0, %v6654
    %v6656 = vmul.f32 %v6653, %v6655
    %v6657 = vadd.f32 %v6653, %v6656
    %vm6658 = vweird.f32 %v6649
    %vm6659 = vweird.f32 %v6653
    %vm6660 = vmor %vm6658, %vm6659
    %v6661 = vsel %vm6660, %v6653, %v6657
    %v6662 = vand.u32 2147483647, %v6649
    %vm6663 = vcmp.eq.f32.partialorder %v6662, 8.507059e+37
    %v6664 = vand.u32 %v6649, 2147483648
    %v6665 = vor.u32 1.1754944e-38, %v6664
    %v6666 = vsel %vm6663, %v6665, %v6661
    %v6667 = vmul.f32 1.0, %v6666
    %v6668 = vrcp.pop %v6650
    %v6669 = vmul.f32 %v6650, %v6668
    %v6670 = vsub.f32 1.0, %v6669
    %v6671 = vmul.f32 %v6668, %v6670
    %v6672 = vadd.f32 %v6668, %v6671
    %vm6673 = vweird.f32 %v6650
    %vm6674 = vweird.f32 %v6668
    %vm6675 = vmor %vm6673, %vm6674
    %v6676 = vsel %vm6675, %v6668, %v6672
    %v6677 = vand.u32 2147483647, %v6650
    %vm6678 = vcmp.eq.f32.partialorder %v6677, 8.507059e+37
    %v6679 = vand.u32 %v6650, 2147483648
    %v6680 = vor.u32 1.1754944e-38, %v6679
    %v6681 = vsel %vm6678, %v6680, %v6676
    %v6682 = vmul.f32 1.0, %v6681
    %v6683 = vrcp.pop %v6651
    %v6684 = vmul.f32 %v6651, %v6683
    %v6685 = vsub.f32 1.0, %v6684
    %v6686 = vmul.f32 %v6683, %v6685
    %v6687 = vadd.f32 %v6683, %v6686
    %vm6688 = vweird.f32 %v6651
    %vm6689 = vweird.f32 %v6683
    %vm6690 = vmor %vm6688, %vm6689
    %v6691 = vsel %vm6690, %v6683, %v6687
    %v6692 = vand.u32 2147483647, %v6651
    %vm6693 = vcmp.eq.f32.partialorder %v6692, 8.507059e+37
    %v6694 = vand.u32 %v6651, 2147483648
    %v6695 = vor.u32 1.1754944e-38, %v6694
    %v6696 = vsel %vm6693, %v6695, %v6691
    %v6697 = vmul.f32 1.0, %v6696
    %v6698 = vrcp.pop %v6652
    %v6699 = vmul.f32 %v6652, %v6698
    %v6700 = vsub.f32 1.0, %v6699
    %v6701 = vmul.f32 %v6698, %v6700
    %v6702 = vadd.f32 %v6698, %v6701
    %vm6703 = vweird.f32 %v6652
    %vm6704 = vweird.f32 %v6698
    %vm6705 = vmor %vm6703, %vm6704
    %v6706 = vsel %vm6705, %v6698, %v6702
    %v6707 = vand.u32 2147483647, %v6652
    %vm6708 = vcmp.eq.f32.partialorder %v6707, 8.507059e+37
    %v6709 = vand.u32 %v6652, 2147483648
    %v6710 = vor.u32 1.1754944e-38, %v6709
    %v6711 = vsel %vm6708, %v6710, %v6706
    %v6712 = vmul.f32 1.0, %v6711
    %v6713 = vmul.f32 %v6587, %v5618
    %v6714 = vmul.f32 %v6602, %v5619
    %v6715 = vmul.f32 %v6617, %v5620
    %v6716 = vmul.f32 %v6632, %v5621
    %v6717 = vmul.f32 %v6511, %v6633
    %v6718 = vmul.f32 %v6526, %v6634
    %v6719 = vmul.f32 %v6541, %v6635
    %v6720 = vmul.f32 %v6556, %v6636
    %v6721 = vadd.f32 %v6713, %v6717
    %v6722 = vadd.f32 %v6714, %v6718
    %v6723 = vadd.f32 %v6715, %v6719
    %v6724 = vadd.f32 %v6716, %v6720
    %v6725 = vtanh.pop %v6721
    %v6726 = vtanh.pop %v6722
    %v6727 = vtanh.pop %v6723
    %v6728 = vtanh.pop %v6724
    %v6729 = vmul.f32 %v6667, %v6725
    %v6730 = vmul.f32 %v6682, %v6726
    %v6731 = vmul.f32 %v6697, %v6727
    %v6732 = vmul.f32 %v6712, %v6728
    %6733 = vmatpush.msra.mxu0 0.0
    %6734 = vmatpush.msra.mxu0 0.0
    %6735 = vmatpush.msra.mxu0 0.0
    %6736 = vmatpush.msra.mxu0 0.0
    %6737 = vmatpush.msra.mxu0 0.0
    %6738 = vmatpush.msra.mxu0 0.0
    %6739 = vmatpush.msra.mxu0 0.0
    %6740 = vmatpush.msra.mxu0 0.0
    %6741 = vmatpush.msra.mxu0 0.0
    %6742 = vmatpush.msra.mxu0 0.0
    %6743 = vmatpush.msra.mxu0 0.0
    %6744 = vmatpush.msra.mxu0 0.0
    %v6745 = vand.u32 %v6732, 4294901760
    %6746 = vmatpush.msra.mxu0 %v6745
    %v6747 = vand.u32 %v6731, 4294901760
    %6748 = vmatpush.msra.mxu0 %v6747
    %v6749 = vand.u32 %v6730, 4294901760
    %6750 = vmatpush.msra.mxu0 %v6749
    %v6751 = vand.u32 %v6729, 4294901760
    %6752 = vmatpush.msra.mxu0 %v6751
    %v6753 = vand.u32 %v4525, 4294901760
    %v6754 = vsub.f32 %v4525, %v6753
    %v6755 = vand.u32 %v6754, 4294901760
    %v6756 = vsub.f32 %v6754, %v6755
    %v6757 = vand.u32 %v6756, 4294901760
    %6758 = vmatmul.f32.gmra.mxu0 %v6757
    %v6759 = vpop.f32.mrf.mxu0
    %v6760 = vadd.f32 0.0, %v6759
    %6761 = vdwg.mxu0
    %6762 = vmatpush.msra.mxu0 0.0
    %6763 = vmatpush.msra.mxu0 0.0
    %6764 = vmatpush.msra.mxu0 0.0
    %6765 = vmatpush.msra.mxu0 0.0
    %6766 = vmatpush.msra.mxu0 0.0
    %6767 = vmatpush.msra.mxu0 0.0
    %6768 = vmatpush.msra.mxu0 0.0
    %6769 = vmatpush.msra.mxu0 0.0
    %6770 = vmatpush.msra.mxu0 0.0
    %6771 = vmatpush.msra.mxu0 0.0
    %6772 = vmatpush.msra.mxu0 0.0
    %6773 = vmatpush.msra.mxu0 0.0
    %v6774 = vand.u32 %v6732, 4294901760
    %v6775 = vsub.f32 %v6732, %v6774
    %v6776 = vand.u32 %v6775, 4294901760
    %v6777 = vsub.f32 %v6775, %v6776
    %v6778 = vand.u32 %v6777, 4294901760
    %6779 = vmatpush.msra.mxu0 %v6778
    %v6780 = vand.u32 %v6731, 4294901760
    %v6781 = vsub.f32 %v6731, %v6780
    %v6782 = vand.u32 %v6781, 4294901760
    %v6783 = vsub.f32 %v6781, %v6782
    %v6784 = vand.u32 %v6783, 4294901760
    %6785 = vmatpush.msra.mxu0 %v6784
    %v6786 = vand.u32 %v6730, 4294901760
    %v6787 = vsub.f32 %v6730, %v6786
    %v6788 = vand.u32 %v6787, 4294901760
    %v6789 = vsub.f32 %v6787, %v6788
    %v6790 = vand.u32 %v6789, 4294901760
    %6791 = vmatpush.msra.mxu0 %v6790
    %v6792 = vand.u32 %v6729, 4294901760
    %v6793 = vsub.f32 %v6729, %v6792
    %v6794 = vand.u32 %v6793, 4294901760
    %v6795 = vsub.f32 %v6793, %v6794
    %v6796 = vand.u32 %v6795, 4294901760
    %6797 = vmatpush.msra.mxu0 %v6796
    %v6798 = vand.u32 %v4525, 4294901760
    %6799 = vmatmul.f32.gmra.mxu0 %v6798
    %v6800 = vpop.f32.mrf.mxu0
    %v6801 = vadd.f32 %v6760, %v6800
    %6802 = vdwg.mxu0
    %6803 = vmatpush.msra.mxu0 0.0
    %6804 = vmatpush.msra.mxu0 0.0
    %6805 = vmatpush.msra.mxu0 0.0
    %6806 = vmatpush.msra.mxu0 0.0
    %6807 = vmatpush.msra.mxu0 0.0
    %6808 = vmatpush.msra.mxu0 0.0
    %6809 = vmatpush.msra.mxu0 0.0
    %6810 = vmatpush.msra.mxu0 0.0
    %6811 = vmatpush.msra.mxu0 0.0
    %6812 = vmatpush.msra.mxu0 0.0
    %6813 = vmatpush.msra.mxu0 0.0
    %6814 = vmatpush.msra.mxu0 0.0
    %v6815 = vand.u32 %v6732, 4294901760
    %v6816 = vsub.f32 %v6732, %v6815
    %6817 = vmatpush.msra.mxu0 %v6816
    %v6818 = vand.u32 %v6731, 4294901760
    %v6819 = vsub.f32 %v6731, %v6818
    %6820 = vmatpush.msra.mxu0 %v6819
    %v6821 = vand.u32 %v6730, 4294901760
    %v6822 = vsub.f32 %v6730, %v6821
    %6823 = vmatpush.msra.mxu0 %v6822
    %v6824 = vand.u32 %v6729, 4294901760
    %v6825 = vsub.f32 %v6729, %v6824
    %6826 = vmatpush.msra.mxu0 %v6825
    %v6827 = vand.u32 %v4525, 4294901760
    %v6828 = vsub.f32 %v4525, %v6827
    %6829 = vmatmul.f32.gmra.mxu0 %v6828
    %v6830 = vpop.f32.mrf.mxu0
    %v6831 = vadd.f32 %v6801, %v6830
    %6832 = vdwg.mxu0
    %6833 = vmatpush.msra.mxu0 0.0
    %6834 = vmatpush.msra.mxu0 0.0
    %6835 = vmatpush.msra.mxu0 0.0
    %6836 = vmatpush.msra.mxu0 0.0
    %6837 = vmatpush.msra.mxu0 0.0
    %6838 = vmatpush.msra.mxu0 0.0
    %6839 = vmatpush.msra.mxu0 0.0
    %6840 = vmatpush.msra.mxu0 0.0
    %6841 = vmatpush.msra.mxu0 0.0
    %6842 = vmatpush.msra.mxu0 0.0
    %6843 = vmatpush.msra.mxu0 0.0
    %6844 = vmatpush.msra.mxu0 0.0
    %v6845 = vand.u32 %v6732, 4294901760
    %6846 = vmatpush.msra.mxu0 %v6845
    %v6847 = vand.u32 %v6731, 4294901760
    %6848 = vmatpush.msra.mxu0 %v6847
    %v6849 = vand.u32 %v6730, 4294901760
    %6850 = vmatpush.msra.mxu0 %v6849
    %v6851 = vand.u32 %v6729, 4294901760
    %6852 = vmatpush.msra.mxu0 %v6851
    %v6853 = vand.u32 %v4525, 4294901760
    %v6854 = vsub.f32 %v4525, %v6853
    %v6855 = vand.u32 %v6854, 4294901760
    %6856 = vmatmul.f32.gmra.mxu0 %v6855
    %v6857 = vpop.f32.mrf.mxu0
    %v6858 = vadd.f32 %v6831, %v6857
    %6859 = vdwg.mxu0
    %6860 = vmatpush.msra.mxu0 0.0
    %6861 = vmatpush.msra.mxu0 0.0
    %6862 = vmatpush.msra.mxu0 0.0
    %6863 = vmatpush.msra.mxu0 0.0
    %6864 = vmatpush.msra.mxu0 0.0
    %6865 = vmatpush.msra.mxu0 0.0
    %6866 = vmatpush.msra.mxu0 0.0
    %6867 = vmatpush.msra.mxu0 0.0
    %6868 = vmatpush.msra.mxu0 0.0
    %6869 = vmatpush.msra.mxu0 0.0
    %6870 = vmatpush.msra.mxu0 0.0
    %6871 = vmatpush.msra.mxu0 0.0
    %v6872 = vand.u32 %v6732, 4294901760
    %v6873 = vsub.f32 %v6732, %v6872
    %v6874 = vand.u32 %v6873, 4294901760
    %6875 = vmatpush.msra.mxu0 %v6874
    %v6876 = vand.u32 %v6731, 4294901760
    %v6877 = vsub.f32 %v6731, %v6876
    %v6878 = vand.u32 %v6877, 4294901760
    %6879 = vmatpush.msra.mxu0 %v6878
    %v6880 = vand.u32 %v6730, 4294901760
    %v6881 = vsub.f32 %v6730, %v6880
    %v6882 = vand.u32 %v6881, 4294901760
    %6883 = vmatpush.msra.mxu0 %v6882
    %v6884 = vand.u32 %v6729, 4294901760
    %v6885 = vsub.f32 %v6729, %v6884
    %v6886 = vand.u32 %v6885, 4294901760
    %6887 = vmatpush.msra.mxu0 %v6886
    %v6888 = vand.u32 %v4525, 4294901760
    %6889 = vmatmul.f32.gmra.mxu0 %v6888
    %v6890 = vpop.f32.mrf.mxu0
    %v6891 = vadd.f32 %v6858, %v6890
    %6892 = vdwg.mxu0
    %6893 = vmatpush.msra.mxu0 0.0
    %6894 = vmatpush.msra.mxu0 0.0
    %6895 = vmatpush.msra.mxu0 0.0
    %6896 = vmatpush.msra.mxu0 0.0
    %6897 = vmatpush.msra.mxu0 0.0
    %6898 = vmatpush.msra.mxu0 0.0
    %6899 = vmatpush.msra.mxu0 0.0
    %6900 = vmatpush.msra.mxu0 0.0
    %6901 = vmatpush.msra.mxu0 0.0
    %6902 = vmatpush.msra.mxu0 0.0
    %6903 = vmatpush.msra.mxu0 0.0
    %6904 = vmatpush.msra.mxu0 0.0
    %v6905 = vand.u32 %v6732, 4294901760
    %6906 = vmatpush.msra.mxu0 %v6905
    %v6907 = vand.u32 %v6731, 4294901760
    %6908 = vmatpush.msra.mxu0 %v6907
    %v6909 = vand.u32 %v6730, 4294901760
    %6910 = vmatpush.msra.mxu0 %v6909
    %v6911 = vand.u32 %v6729, 4294901760
    %6912 = vmatpush.msra.mxu0 %v6911
    %v6913 = vand.u32 %v4525, 4294901760
    %6914 = vmatmul.f32.gmra.mxu0 %v6913
    %v6915 = vpop.f32.mrf.mxu0
    %v6916 = vadd.f32 %v6891, %v6915
    %6917 = vdwg.mxu0
    %6918 = vmatpush.msra.mxu0 0.0
    %6919 = vmatpush.msra.mxu0 0.0
    %6920 = vmatpush.msra.mxu0 0.0
    %6921 = vmatpush.msra.mxu0 0.0
    %6922 = vmatpush.msra.mxu0 0.0
    %6923 = vmatpush.msra.mxu0 0.0
    %6924 = vmatpush.msra.mxu0 0.0
    %6925 = vmatpush.msra.mxu0 0.0
    %6926 = vmatpush.msra.mxu0 0.0
    %6927 = vmatpush.msra.mxu0 0.0
    %6928 = vmatpush.msra.mxu0 0.0
    %6929 = vmatpush.msra.mxu0 0.0
    %v6930 = vand.u32 %v6732, 4294901760
    %6931 = vmatpush.msra.mxu0 %v6930
    %v6932 = vand.u32 %v6731, 4294901760
    %6933 = vmatpush.msra.mxu0 %v6932
    %v6934 = vand.u32 %v6730, 4294901760
    %6935 = vmatpush.msra.mxu0 %v6934
    %v6936 = vand.u32 %v6729, 4294901760
    %6937 = vmatpush.msra.mxu0 %v6936
    %v6938 = vand.u32 %v3611, 4294901760
    %v6939 = vsub.f32 %v3611, %v6938
    %v6940 = vand.u32 %v6939, 4294901760
    %v6941 = vsub.f32 %v6939, %v6940
    %v6942 = vand.u32 %v6941, 4294901760
    %6943 = vmatmul.f32.gmra.mxu0 %v6942
    %v6944 = vpop.f32.mrf.mxu0
    %v6945 = vadd.f32 0.0, %v6944
    %v6946 = vand.u32 %v3614, 4294901760
    %v6947 = vsub.f32 %v3614, %v6946
    %v6948 = vand.u32 %v6947, 4294901760
    %v6949 = vsub.f32 %v6947, %v6948
    %v6950 = vand.u32 %v6949, 4294901760
    %6951 = vmatmul.f32.gmra.mxu0 %v6950
    %v6952 = vpop.f32.mrf.mxu0
    %v6953 = vadd.f32 0.0, %v6952
    %v6954 = vand.u32 %v3617, 4294901760
    %v6955 = vsub.f32 %v3617, %v6954
    %v6956 = vand.u32 %v6955, 4294901760
    %v6957 = vsub.f32 %v6955, %v6956
    %v6958 = vand.u32 %v6957, 4294901760
    %6959 = vmatmul.f32.gmra.mxu0 %v6958
    %v6960 = vpop.f32.mrf.mxu0
    %v6961 = vadd.f32 0.0, %v6960
    %v6962 = vand.u32 %v3620, 4294901760
    %v6963 = vsub.f32 %v3620, %v6962
    %v6964 = vand.u32 %v6963, 4294901760
    %v6965 = vsub.f32 %v6963, %v6964
    %v6966 = vand.u32 %v6965, 4294901760
    %6967 = vmatmul.f32.gmra.mxu0 %v6966
    %v6968 = vpop.f32.mrf.mxu0
    %v6969 = vadd.f32 0.0, %v6968
    %v6970 = vand.u32 %v3623, 4294901760
    %v6971 = vsub.f32 %v3623, %v6970
    %v6972 = vand.u32 %v6971, 4294901760
    %v6973 = vsub.f32 %v6971, %v6972
    %v6974 = vand.u32 %v6973, 4294901760
    %6975 = vmatmul.f32.gmra.mxu0 %v6974
    %v6976 = vpop.f32.mrf.mxu0
    %v6977 = vadd.f32 0.0, %v6976
    %v6978 = vand.u32 %v3626, 4294901760
    %v6979 = vsub.f32 %v3626, %v6978
    %v6980 = vand.u32 %v6979, 4294901760
    %v6981 = vsub.f32 %v6979, %v6980
    %v6982 = vand.u32 %v6981, 4294901760
    %6983 = vmatmul.f32.gmra.mxu0 %v6982
    %v6984 = vpop.f32.mrf.mxu0
    %v6985 = vadd.f32 0.0, %v6984
    %v6986 = vand.u32 %v3629, 4294901760
    %v6987 = vsub.f32 %v3629, %v6986
    %v6988 = vand.u32 %v6987, 4294901760
    %v6989 = vsub.f32 %v6987, %v6988
    %v6990 = vand.u32 %v6989, 4294901760
    %6991 = vmatmul.f32.gmra.mxu0 %v6990
    %v6992 = vpop.f32.mrf.mxu0
    %v6993 = vadd.f32 0.0, %v6992
    %v6994 = vand.u32 %v3632, 4294901760
    %v6995 = vsub.f32 %v3632, %v6994
    %v6996 = vand.u32 %v6995, 4294901760
    %v6997 = vsub.f32 %v6995, %v6996
    %v6998 = vand.u32 %v6997, 4294901760
    %6999 = vmatmul.f32.gmra.mxu0 %v6998
    %v7000 = vpop.f32.mrf.mxu0
    %v7001 = vadd.f32 0.0, %v7000
    %v7002 = vand.u32 %v3635, 4294901760
    %v7003 = vsub.f32 %v3635, %v7002
    %v7004 = vand.u32 %v7003, 4294901760
    %v7005 = vsub.f32 %v7003, %v7004
    %v7006 = vand.u32 %v7005, 4294901760
    %7007 = vmatmul.f32.gmra.mxu0 %v7006
    %v7008 = vpop.f32.mrf.mxu0
    %v7009 = vadd.f32 0.0, %v7008
    %v7010 = vand.u32 %v3638, 4294901760
    %v7011 = vsub.f32 %v3638, %v7010
    %v7012 = vand.u32 %v7011, 4294901760
    %v7013 = vsub.f32 %v7011, %v7012
    %v7014 = vand.u32 %v7013, 4294901760
    %7015 = vmatmul.f32.gmra.mxu0 %v7014
    %v7016 = vpop.f32.mrf.mxu0
    %v7017 = vadd.f32 0.0, %v7016
    %v7018 = vand.u32 %v3641, 4294901760
    %v7019 = vsub.f32 %v3641, %v7018
    %v7020 = vand.u32 %v7019, 4294901760
    %v7021 = vsub.f32 %v7019, %v7020
    %v7022 = vand.u32 %v7021, 4294901760
    %7023 = vmatmul.f32.gmra.mxu0 %v7022
    %v7024 = vpop.f32.mrf.mxu0
    %v7025 = vadd.f32 0.0, %v7024
    %v7026 = vand.u32 %v3644, 4294901760
    %v7027 = vsub.f32 %v3644, %v7026
    %v7028 = vand.u32 %v7027, 4294901760
    %v7029 = vsub.f32 %v7027, %v7028
    %v7030 = vand.u32 %v7029, 4294901760
    %7031 = vmatmul.f32.gmra.mxu0 %v7030
    %v7032 = vpop.f32.mrf.mxu0
    %v7033 = vadd.f32 0.0, %v7032
    %v7034 = vand.u32 %v3647, 4294901760
    %v7035 = vsub.f32 %v3647, %v7034
    %v7036 = vand.u32 %v7035, 4294901760
    %v7037 = vsub.f32 %v7035, %v7036
    %v7038 = vand.u32 %v7037, 4294901760
    %7039 = vmatmul.f32.gmra.mxu0 %v7038
    %v7040 = vpop.f32.mrf.mxu0
    %v7041 = vadd.f32 0.0, %v7040
    %v7042 = vand.u32 %v3650, 4294901760
    %v7043 = vsub.f32 %v3650, %v7042
    %v7044 = vand.u32 %v7043, 4294901760
    %v7045 = vsub.f32 %v7043, %v7044
    %v7046 = vand.u32 %v7045, 4294901760
    %7047 = vmatmul.f32.gmra.mxu0 %v7046
    %v7048 = vpop.f32.mrf.mxu0
    %v7049 = vadd.f32 0.0, %v7048
    %v7050 = vand.u32 %v3653, 4294901760
    %v7051 = vsub.f32 %v3653, %v7050
    %v7052 = vand.u32 %v7051, 4294901760
    %v7053 = vsub.f32 %v7051, %v7052
    %v7054 = vand.u32 %v7053, 4294901760
    %7055 = vmatmul.f32.gmra.mxu0 %v7054
    %v7056 = vpop.f32.mrf.mxu0
    %v7057 = vadd.f32 0.0, %v7056
    %v7058 = vand.u32 %v3656, 4294901760
    %v7059 = vsub.f32 %v3656, %v7058
    %v7060 = vand.u32 %v7059, 4294901760
    %v7061 = vsub.f32 %v7059, %v7060
    %v7062 = vand.u32 %v7061, 4294901760
    %7063 = vmatmul.f32.gmra.mxu0 %v7062
    %v7064 = vpop.f32.mrf.mxu0
    %v7065 = vadd.f32 0.0, %v7064
    %7066 = vdwg.mxu0
    %7067 = vmatpush.msra.mxu0 0.0
    %7068 = vmatpush.msra.mxu0 0.0
    %7069 = vmatpush.msra.mxu0 0.0
    %7070 = vmatpush.msra.mxu0 0.0
    %7071 = vmatpush.msra.mxu0 0.0
    %7072 = vmatpush.msra.mxu0 0.0
    %7073 = vmatpush.msra.mxu0 0.0
    %7074 = vmatpush.msra.mxu0 0.0
    %7075 = vmatpush.msra.mxu0 0.0
    %7076 = vmatpush.msra.mxu0 0.0
    %7077 = vmatpush.msra.mxu0 0.0
    %7078 = vmatpush.msra.mxu0 0.0
    %v7079 = vand.u32 %v6732, 4294901760
    %v7080 = vsub.f32 %v6732, %v7079
    %v7081 = vand.u32 %v7080, 4294901760
    %v7082 = vsub.f32 %v7080, %v7081
    %v7083 = vand.u32 %v7082, 4294901760
    %7084 = vmatpush.msra.mxu0 %v7083
    %v7085 = vand.u32 %v6731, 4294901760
    %v7086 = vsub.f32 %v6731, %v7085
    %v7087 = vand.u32 %v7086, 4294901760
    %v7088 = vsub.f32 %v7086, %v7087
    %v7089 = vand.u32 %v7088, 4294901760
    %7090 = vmatpush.msra.mxu0 %v7089
    %v7091 = vand.u32 %v6730, 4294901760
    %v7092 = vsub.f32 %v6730, %v7091
    %v7093 = vand.u32 %v7092, 4294901760
    %v7094 = vsub.f32 %v7092, %v7093
    %v7095 = vand.u32 %v7094, 4294901760
    %7096 = vmatpush.msra.mxu0 %v7095
    %v7097 = vand.u32 %v6729, 4294901760
    %v7098 = vsub.f32 %v6729, %v7097
    %v7099 = vand.u32 %v7098, 4294901760
    %v7100 = vsub.f32 %v7098, %v7099
    %v7101 = vand.u32 %v7100, 4294901760
    %7102 = vmatpush.msra.mxu0 %v7101
    %v7103 = vand.u32 %v3611, 4294901760
    %7104 = vmatmul.f32.gmra.mxu0 %v7103
    %v7105 = vpop.f32.mrf.mxu0
    %v7106 = vadd.f32 %v6945, %v7105
    %v7107 = vand.u32 %v3614, 4294901760
    %7108 = vmatmul.f32.gmra.mxu0 %v7107
    %v7109 = vpop.f32.mrf.mxu0
    %v7110 = vadd.f32 %v6953, %v7109
    %v7111 = vand.u32 %v3617, 4294901760
    %7112 = vmatmul.f32.gmra.mxu0 %v7111
    %v7113 = vpop.f32.mrf.mxu0
    %v7114 = vadd.f32 %v6961, %v7113
    %v7115 = vand.u32 %v3620, 4294901760
    %7116 = vmatmul.f32.gmra.mxu0 %v7115
    %v7117 = vpop.f32.mrf.mxu0
    %v7118 = vadd.f32 %v6969, %v7117
    %v7119 = vand.u32 %v3623, 4294901760
    %7120 = vmatmul.f32.gmra.mxu0 %v7119
    %v7121 = vpop.f32.mrf.mxu0
    %v7122 = vadd.f32 %v6977, %v7121
    %v7123 = vand.u32 %v3626, 4294901760
    %7124 = vmatmul.f32.gmra.mxu0 %v7123
    %v7125 = vpop.f32.mrf.mxu0
    %v7126 = vadd.f32 %v6985, %v7125
    %v7127 = vand.u32 %v3629, 4294901760
    %7128 = vmatmul.f32.gmra.mxu0 %v7127
    %v7129 = vpop.f32.mrf.mxu0
    %v7130 = vadd.f32 %v6993, %v7129
    %v7131 = vand.u32 %v3632, 4294901760
    %7132 = vmatmul.f32.gmra.mxu0 %v7131
    %v7133 = vpop.f32.mrf.mxu0
    %v7134 = vadd.f32 %v7001, %v7133
    %v7135 = vand.u32 %v3635, 4294901760
    %7136 = vmatmul.f32.gmra.mxu0 %v7135
    %v7137 = vpop.f32.mrf.mxu0
    %v7138 = vadd.f32 %v7009, %v7137
    %v7139 = vand.u32 %v3638, 4294901760
    %7140 = vmatmul.f32.gmra.mxu0 %v7139
    %v7141 = vpop.f32.mrf.mxu0
    %v7142 = vadd.f32 %v7017, %v7141
    %v7143 = vand.u32 %v3641, 4294901760
    %7144 = vmatmul.f32.gmra.mxu0 %v7143
    %v7145 = vpop.f32.mrf.mxu0
    %v7146 = vadd.f32 %v7025, %v7145
    %v7147 = vand.u32 %v3644, 4294901760
    %7148 = vmatmul.f32.gmra.mxu0 %v7147
    %v7149 = vpop.f32.mrf.mxu0
    %v7150 = vadd.f32 %v7033, %v7149
    %v7151 = vand.u32 %v3647, 4294901760
    %7152 = vmatmul.f32.gmra.mxu0 %v7151
    %v7153 = vpop.f32.mrf.mxu0
    %v7154 = vadd.f32 %v7041, %v7153
    %v7155 = vand.u32 %v3650, 4294901760
    %7156 = vmatmul.f32.gmra.mxu0 %v7155
    %v7157 = vpop.f32.mrf.mxu0
    %v7158 = vadd.f32 %v7049, %v7157
    %v7159 = vand.u32 %v3653, 4294901760
    %7160 = vmatmul.f32.gmra.mxu0 %v7159
    %v7161 = vpop.f32.mrf.mxu0
    %v7162 = vadd.f32 %v7057, %v7161
    %v7163 = vand.u32 %v3656, 4294901760
    %7164 = vmatmul.f32.gmra.mxu0 %v7163
    %v7165 = vpop.f32.mrf.mxu0
    %v7166 = vadd.f32 %v7065, %v7165
    %7167 = vdwg.mxu0
    %7168 = vmatpush.msra.mxu0 0.0
    %7169 = vmatpush.msra.mxu0 0.0
    %7170 = vmatpush.msra.mxu0 0.0
    %7171 = vmatpush.msra.mxu0 0.0
    %7172 = vmatpush.msra.mxu0 0.0
    %7173 = vmatpush.msra.mxu0 0.0
    %7174 = vmatpush.msra.mxu0 0.0
    %7175 = vmatpush.msra.mxu0 0.0
    %7176 = vmatpush.msra.mxu0 0.0
    %7177 = vmatpush.msra.mxu0 0.0
    %7178 = vmatpush.msra.mxu0 0.0
    %7179 = vmatpush.msra.mxu0 0.0
    %v7180 = vand.u32 %v6732, 4294901760
    %v7181 = vsub.f32 %v6732, %v7180
    %7182 = vmatpush.msra.mxu0 %v7181
    %v7183 = vand.u32 %v6731, 4294901760
    %v7184 = vsub.f32 %v6731, %v7183
    %7185 = vmatpush.msra.mxu0 %v7184
    %v7186 = vand.u32 %v6730, 4294901760
    %v7187 = vsub.f32 %v6730, %v7186
    %7188 = vmatpush.msra.mxu0 %v7187
    %v7189 = vand.u32 %v6729, 4294901760
    %v7190 = vsub.f32 %v6729, %v7189
    %7191 = vmatpush.msra.mxu0 %v7190
    %v7192 = vand.u32 %v3611, 4294901760
    %v7193 = vsub.f32 %v3611, %v7192
    %7194 = vmatmul.f32.gmra.mxu0 %v7193
    %v7195 = vpop.f32.mrf.mxu0
    %v7196 = vadd.f32 %v7106, %v7195
    %v7197 = vand.u32 %v3614, 4294901760
    %v7198 = vsub.f32 %v3614, %v7197
    %7199 = vmatmul.f32.gmra.mxu0 %v7198
    %v7200 = vpop.f32.mrf.mxu0
    %v7201 = vadd.f32 %v7110, %v7200
    %v7202 = vand.u32 %v3617, 4294901760
    %v7203 = vsub.f32 %v3617, %v7202
    %7204 = vmatmul.f32.gmra.mxu0 %v7203
    %v7205 = vpop.f32.mrf.mxu0
    %v7206 = vadd.f32 %v7114, %v7205
    %v7207 = vand.u32 %v3620, 4294901760
    %v7208 = vsub.f32 %v3620, %v7207
    %7209 = vmatmul.f32.gmra.mxu0 %v7208
    %v7210 = vpop.f32.mrf.mxu0
    %v7211 = vadd.f32 %v7118, %v7210
    %v7212 = vand.u32 %v3623, 4294901760
    %v7213 = vsub.f32 %v3623, %v7212
    %7214 = vmatmul.f32.gmra.mxu0 %v7213
    %v7215 = vpop.f32.mrf.mxu0
    %v7216 = vadd.f32 %v7122, %v7215
    %v7217 = vand.u32 %v3626, 4294901760
    %v7218 = vsub.f32 %v3626, %v7217
    %7219 = vmatmul.f32.gmra.mxu0 %v7218
    %v7220 = vpop.f32.mrf.mxu0
    %v7221 = vadd.f32 %v7126, %v7220
    %v7222 = vand.u32 %v3629, 4294901760
    %v7223 = vsub.f32 %v3629, %v7222
    %7224 = vmatmul.f32.gmra.mxu0 %v7223
    %v7225 = vpop.f32.mrf.mxu0
    %v7226 = vadd.f32 %v7130, %v7225
    %v7227 = vand.u32 %v3632, 4294901760
    %v7228 = vsub.f32 %v3632, %v7227
    %7229 = vmatmul.f32.gmra.mxu0 %v7228
    %v7230 = vpop.f32.mrf.mxu0
    %v7231 = vadd.f32 %v7134, %v7230
    %v7232 = vand.u32 %v3635, 4294901760
    %v7233 = vsub.f32 %v3635, %v7232
    %7234 = vmatmul.f32.gmra.mxu0 %v7233
    %v7235 = vpop.f32.mrf.mxu0
    %v7236 = vadd.f32 %v7138, %v7235
    %v7237 = vand.u32 %v3638, 4294901760
    %v7238 = vsub.f32 %v3638, %v7237
    %7239 = vmatmul.f32.gmra.mxu0 %v7238
    %v7240 = vpop.f32.mrf.mxu0
    %v7241 = vadd.f32 %v7142, %v7240
    %v7242 = vand.u32 %v3641, 4294901760
    %v7243 = vsub.f32 %v3641, %v7242
    %7244 = vmatmul.f32.gmra.mxu0 %v7243
    %v7245 = vpop.f32.mrf.mxu0
    %v7246 = vadd.f32 %v7146, %v7245
    %v7247 = vand.u32 %v3644, 4294901760
    %v7248 = vsub.f32 %v3644, %v7247
    %7249 = vmatmul.f32.gmra.mxu0 %v7248
    %v7250 = vpop.f32.mrf.mxu0
    %v7251 = vadd.f32 %v7150, %v7250
    %v7252 = vand.u32 %v3647, 4294901760
    %v7253 = vsub.f32 %v3647, %v7252
    %7254 = vmatmul.f32.gmra.mxu0 %v7253
    %v7255 = vpop.f32.mrf.mxu0
    %v7256 = vadd.f32 %v7154, %v7255
    %v7257 = vand.u32 %v3650, 4294901760
    %v7258 = vsub.f32 %v3650, %v7257
    %7259 = vmatmul.f32.gmra.mxu0 %v7258
    %v7260 = vpop.f32.mrf.mxu0
    %v7261 = vadd.f32 %v7158, %v7260
    %v7262 = vand.u32 %v3653, 4294901760
    %v7263 = vsub.f32 %v3653, %v7262
    %7264 = vmatmul.f32.gmra.mxu0 %v7263
    %v7265 = vpop.f32.mrf.mxu0
    %v7266 = vadd.f32 %v7162, %v7265
    %v7267 = vand.u32 %v3656, 4294901760
    %v7268 = vsub.f32 %v3656, %v7267
    %7269 = vmatmul.f32.gmra.mxu0 %v7268
    %v7270 = vpop.f32.mrf.mxu0
    %v7271 = vadd.f32 %v7166, %v7270
    %7272 = vdwg.mxu0
    %7273 = vmatpush.msra.mxu0 0.0
    %7274 = vmatpush.msra.mxu0 0.0
    %7275 = vmatpush.msra.mxu0 0.0
    %7276 = vmatpush.msra.mxu0 0.0
    %7277 = vmatpush.msra.mxu0 0.0
    %7278 = vmatpush.msra.mxu0 0.0
    %7279 = vmatpush.msra.mxu0 0.0
    %7280 = vmatpush.msra.mxu0 0.0
    %7281 = vmatpush.msra.mxu0 0.0
    %7282 = vmatpush.msra.mxu0 0.0
    %7283 = vmatpush.msra.mxu0 0.0
    %7284 = vmatpush.msra.mxu0 0.0
    %v7285 = vand.u32 %v6732, 4294901760
    %7286 = vmatpush.msra.mxu0 %v7285
    %v7287 = vand.u32 %v6731, 4294901760
    %7288 = vmatpush.msra.mxu0 %v7287
    %v7289 = vand.u32 %v6730, 4294901760
    %7290 = vmatpush.msra.mxu0 %v7289
    %v7291 = vand.u32 %v6729, 4294901760
    %7292 = vmatpush.msra.mxu0 %v7291
    %v7293 = vand.u32 %v3611, 4294901760
    %v7294 = vsub.f32 %v3611, %v7293
    %v7295 = vand.u32 %v7294, 4294901760
    %7296 = vmatmul.f32.gmra.mxu0 %v7295
    %v7297 = vpop.f32.mrf.mxu0
    %v7298 = vadd.f32 %v7196, %v7297
    %v7299 = vand.u32 %v3614, 4294901760
    %v7300 = vsub.f32 %v3614, %v7299
    %v7301 = vand.u32 %v7300, 4294901760
    %7302 = vmatmul.f32.gmra.mxu0 %v7301
    %v7303 = vpop.f32.mrf.mxu0
    %v7304 = vadd.f32 %v7201, %v7303
    %v7305 = vand.u32 %v3617, 4294901760
    %v7306 = vsub.f32 %v3617, %v7305
    %v7307 = vand.u32 %v7306, 4294901760
    %7308 = vmatmul.f32.gmra.mxu0 %v7307
    %v7309 = vpop.f32.mrf.mxu0
    %v7310 = vadd.f32 %v7206, %v7309
    %v7311 = vand.u32 %v3620, 4294901760
    %v7312 = vsub.f32 %v3620, %v7311
    %v7313 = vand.u32 %v7312, 4294901760
    %7314 = vmatmul.f32.gmra.mxu0 %v7313
    %v7315 = vpop.f32.mrf.mxu0
    %v7316 = vadd.f32 %v7211, %v7315
    %v7317 = vand.u32 %v3623, 4294901760
    %v7318 = vsub.f32 %v3623, %v7317
    %v7319 = vand.u32 %v7318, 4294901760
    %7320 = vmatmul.f32.gmra.mxu0 %v7319
    %v7321 = vpop.f32.mrf.mxu0
    %v7322 = vadd.f32 %v7216, %v7321
    %v7323 = vand.u32 %v3626, 4294901760
    %v7324 = vsub.f32 %v3626, %v7323
    %v7325 = vand.u32 %v7324, 4294901760
    %7326 = vmatmul.f32.gmra.mxu0 %v7325
    %v7327 = vpop.f32.mrf.mxu0
    %v7328 = vadd.f32 %v7221, %v7327
    %v7329 = vand.u32 %v3629, 4294901760
    %v7330 = vsub.f32 %v3629, %v7329
    %v7331 = vand.u32 %v7330, 4294901760
    %7332 = vmatmul.f32.gmra.mxu0 %v7331
    %v7333 = vpop.f32.mrf.mxu0
    %v7334 = vadd.f32 %v7226, %v7333
    %v7335 = vand.u32 %v3632, 4294901760
    %v7336 = vsub.f32 %v3632, %v7335
    %v7337 = vand.u32 %v7336, 4294901760
    %7338 = vmatmul.f32.gmra.mxu0 %v7337
    %v7339 = vpop.f32.mrf.mxu0
    %v7340 = vadd.f32 %v7231, %v7339
    %v7341 = vand.u32 %v3635, 4294901760
    %v7342 = vsub.f32 %v3635, %v7341
    %v7343 = vand.u32 %v7342, 4294901760
    %7344 = vmatmul.f32.gmra.mxu0 %v7343
    %v7345 = vpop.f32.mrf.mxu0
    %v7346 = vadd.f32 %v7236, %v7345
    %v7347 = vand.u32 %v3638, 4294901760
    %v7348 = vsub.f32 %v3638, %v7347
    %v7349 = vand.u32 %v7348, 4294901760
    %7350 = vmatmul.f32.gmra.mxu0 %v7349
    %v7351 = vpop.f32.mrf.mxu0
    %v7352 = vadd.f32 %v7241, %v7351
    %v7353 = vand.u32 %v3641, 4294901760
    %v7354 = vsub.f32 %v3641, %v7353
    %v7355 = vand.u32 %v7354, 4294901760
    %7356 = vmatmul.f32.gmra.mxu0 %v7355
    %v7357 = vpop.f32.mrf.mxu0
    %v7358 = vadd.f32 %v7246, %v7357
    %v7359 = vand.u32 %v3644, 4294901760
    %v7360 = vsub.f32 %v3644, %v7359
    %v7361 = vand.u32 %v7360, 4294901760
    %7362 = vmatmul.f32.gmra.mxu0 %v7361
    %v7363 = vpop.f32.mrf.mxu0
    %v7364 = vadd.f32 %v7251, %v7363
    %v7365 = vand.u32 %v3647, 4294901760
    %v7366 = vsub.f32 %v3647, %v7365
    %v7367 = vand.u32 %v7366, 4294901760
    %7368 = vmatmul.f32.gmra.mxu0 %v7367
    %v7369 = vpop.f32.mrf.mxu0
    %v7370 = vadd.f32 %v7256, %v7369
    %v7371 = vand.u32 %v3650, 4294901760
    %v7372 = vsub.f32 %v3650, %v7371
    %v7373 = vand.u32 %v7372, 4294901760
    %7374 = vmatmul.f32.gmra.mxu0 %v7373
    %v7375 = vpop.f32.mrf.mxu0
    %v7376 = vadd.f32 %v7261, %v7375
    %v7377 = vand.u32 %v3653, 4294901760
    %v7378 = vsub.f32 %v3653, %v7377
    %v7379 = vand.u32 %v7378, 4294901760
    %7380 = vmatmul.f32.gmra.mxu0 %v7379
    %v7381 = vpop.f32.mrf.mxu0
    %v7382 = vadd.f32 %v7266, %v7381
    %v7383 = vand.u32 %v3656, 4294901760
    %v7384 = vsub.f32 %v3656, %v7383
    %v7385 = vand.u32 %v7384, 4294901760
    %7386 = vmatmul.f32.gmra.mxu0 %v7385
    %v7387 = vpop.f32.mrf.mxu0
    %v7388 = vadd.f32 %v7271, %v7387
    %7389 = vdwg.mxu0
    %7390 = vmatpush.msra.mxu0 0.0
    %7391 = vmatpush.msra.mxu0 0.0
    %7392 = vmatpush.msra.mxu0 0.0
    %7393 = vmatpush.msra.mxu0 0.0
    %7394 = vmatpush.msra.mxu0 0.0
    %7395 = vmatpush.msra.mxu0 0.0
    %7396 = vmatpush.msra.mxu0 0.0
    %7397 = vmatpush.msra.mxu0 0.0
    %7398 = vmatpush.msra.mxu0 0.0
    %7399 = vmatpush.msra.mxu0 0.0
    %7400 = vmatpush.msra.mxu0 0.0
    %7401 = vmatpush.msra.mxu0 0.0
    %v7402 = vand.u32 %v6732, 4294901760
    %v7403 = vsub.f32 %v6732, %v7402
    %v7404 = vand.u32 %v7403, 4294901760
    %7405 = vmatpush.msra.mxu0 %v7404
    %v7406 = vand.u32 %v6731, 4294901760
    %v7407 = vsub.f32 %v6731, %v7406
    %v7408 = vand.u32 %v7407, 4294901760
    %7409 = vmatpush.msra.mxu0 %v7408
    %v7410 = vand.u32 %v6730, 4294901760
    %v7411 = vsub.f32 %v6730, %v7410
    %v7412 = vand.u32 %v7411, 4294901760
    %7413 = vmatpush.msra.mxu0 %v7412
    %v7414 = vand.u32 %v6729, 4294901760
    %v7415 = vsub.f32 %v6729, %v7414
    %v7416 = vand.u32 %v7415, 4294901760
    %7417 = vmatpush.msra.mxu0 %v7416
    %v7418 = vand.u32 %v3611, 4294901760
    %7419 = vmatmul.f32.gmra.mxu0 %v7418
    %v7420 = vpop.f32.mrf.mxu0
    %v7421 = vadd.f32 %v7298, %v7420
    %v7422 = vand.u32 %v3614, 4294901760
    %7423 = vmatmul.f32.gmra.mxu0 %v7422
    %v7424 = vpop.f32.mrf.mxu0
    %v7425 = vadd.f32 %v7304, %v7424
    %v7426 = vand.u32 %v3617, 4294901760
    %7427 = vmatmul.f32.gmra.mxu0 %v7426
    %v7428 = vpop.f32.mrf.mxu0
    %v7429 = vadd.f32 %v7310, %v7428
    %v7430 = vand.u32 %v3620, 4294901760
    %7431 = vmatmul.f32.gmra.mxu0 %v7430
    %v7432 = vpop.f32.mrf.mxu0
    %v7433 = vadd.f32 %v7316, %v7432
    %v7434 = vand.u32 %v3623, 4294901760
    %7435 = vmatmul.f32.gmra.mxu0 %v7434
    %v7436 = vpop.f32.mrf.mxu0
    %v7437 = vadd.f32 %v7322, %v7436
    %v7438 = vand.u32 %v3626, 4294901760
    %7439 = vmatmul.f32.gmra.mxu0 %v7438
    %v7440 = vpop.f32.mrf.mxu0
    %v7441 = vadd.f32 %v7328, %v7440
    %v7442 = vand.u32 %v3629, 4294901760
    %7443 = vmatmul.f32.gmra.mxu0 %v7442
    %v7444 = vpop.f32.mrf.mxu0
    %v7445 = vadd.f32 %v7334, %v7444
    %v7446 = vand.u32 %v3632, 4294901760
    %7447 = vmatmul.f32.gmra.mxu0 %v7446
    %v7448 = vpop.f32.mrf.mxu0
    %v7449 = vadd.f32 %v7340, %v7448
    %v7450 = vand.u32 %v3635, 4294901760
    %7451 = vmatmul.f32.gmra.mxu0 %v7450
    %v7452 = vpop.f32.mrf.mxu0
    %v7453 = vadd.f32 %v7346, %v7452
    %v7454 = vand.u32 %v3638, 4294901760
    %7455 = vmatmul.f32.gmra.mxu0 %v7454
    %v7456 = vpop.f32.mrf.mxu0
    %v7457 = vadd.f32 %v7352, %v7456
    %v7458 = vand.u32 %v3641, 4294901760
    %7459 = vmatmul.f32.gmra.mxu0 %v7458
    %v7460 = vpop.f32.mrf.mxu0
    %v7461 = vadd.f32 %v7358, %v7460
    %v7462 = vand.u32 %v3644, 4294901760
    %7463 = vmatmul.f32.gmra.mxu0 %v7462
    %v7464 = vpop.f32.mrf.mxu0
    %v7465 = vadd.f32 %v7364, %v7464
    %v7466 = vand.u32 %v3647, 4294901760
    %7467 = vmatmul.f32.gmra.mxu0 %v7466
    %v7468 = vpop.f32.mrf.mxu0
    %v7469 = vadd.f32 %v7370, %v7468
    %v7470 = vand.u32 %v3650, 4294901760
    %7471 = vmatmul.f32.gmra.mxu0 %v7470
    %v7472 = vpop.f32.mrf.mxu0
    %v7473 = vadd.f32 %v7376, %v7472
    %v7474 = vand.u32 %v3653, 4294901760
    %7475 = vmatmul.f32.gmra.mxu0 %v7474
    %v7476 = vpop.f32.mrf.mxu0
    %v7477 = vadd.f32 %v7382, %v7476
    %v7478 = vand.u32 %v3656, 4294901760
    %7479 = vmatmul.f32.gmra.mxu0 %v7478
    %v7480 = vpop.f32.mrf.mxu0
    %v7481 = vadd.f32 %v7388, %v7480
    %7482 = vdwg.mxu0
    %7483 = vmatpush.msra.mxu0 0.0
    %7484 = vmatpush.msra.mxu0 0.0
    %7485 = vmatpush.msra.mxu0 0.0
    %7486 = vmatpush.msra.mxu0 0.0
    %7487 = vmatpush.msra.mxu0 0.0
    %7488 = vmatpush.msra.mxu0 0.0
    %7489 = vmatpush.msra.mxu0 0.0
    %7490 = vmatpush.msra.mxu0 0.0
    %7491 = vmatpush.msra.mxu0 0.0
    %7492 = vmatpush.msra.mxu0 0.0
    %7493 = vmatpush.msra.mxu0 0.0
    %7494 = vmatpush.msra.mxu0 0.0
    %v7495 = vand.u32 %v6732, 4294901760
    %7496 = vmatpush.msra.mxu0 %v7495
    %v7497 = vand.u32 %v6731, 4294901760
    %7498 = vmatpush.msra.mxu0 %v7497
    %v7499 = vand.u32 %v6730, 4294901760
    %7500 = vmatpush.msra.mxu0 %v7499
    %v7501 = vand.u32 %v6729, 4294901760
    %7502 = vmatpush.msra.mxu0 %v7501
    %v7503 = vand.u32 %v3611, 4294901760
    %7504 = vmatmul.f32.gmra.mxu0 %v7503
    %v7505 = vpop.f32.mrf.mxu0
    %v7506 = vadd.f32 %v7421, %v7505
    %v7507 = vand.u32 %v3614, 4294901760
    %7508 = vmatmul.f32.gmra.mxu0 %v7507
    %v7509 = vpop.f32.mrf.mxu0
    %v7510 = vadd.f32 %v7425, %v7509
    %v7511 = vand.u32 %v3617, 4294901760
    %7512 = vmatmul.f32.gmra.mxu0 %v7511
    %v7513 = vpop.f32.mrf.mxu0
    %v7514 = vadd.f32 %v7429, %v7513
    %v7515 = vand.u32 %v3620, 4294901760
    %7516 = vmatmul.f32.gmra.mxu0 %v7515
    %v7517 = vpop.f32.mrf.mxu0
    %v7518 = vadd.f32 %v7433, %v7517
    %v7519 = vand.u32 %v3623, 4294901760
    %7520 = vmatmul.f32.gmra.mxu0 %v7519
    %v7521 = vpop.f32.mrf.mxu0
    %v7522 = vadd.f32 %v7437, %v7521
    %v7523 = vand.u32 %v3626, 4294901760
    %7524 = vmatmul.f32.gmra.mxu0 %v7523
    %v7525 = vpop.f32.mrf.mxu0
    %v7526 = vadd.f32 %v7441, %v7525
    %v7527 = vand.u32 %v3629, 4294901760
    %7528 = vmatmul.f32.gmra.mxu0 %v7527
    %v7529 = vpop.f32.mrf.mxu0
    %v7530 = vadd.f32 %v7445, %v7529
    %v7531 = vand.u32 %v3632, 4294901760
    %7532 = vmatmul.f32.gmra.mxu0 %v7531
    %v7533 = vpop.f32.mrf.mxu0
    %v7534 = vadd.f32 %v7449, %v7533
    %v7535 = vand.u32 %v3635, 4294901760
    %7536 = vmatmul.f32.gmra.mxu0 %v7535
    %v7537 = vpop.f32.mrf.mxu0
    %v7538 = vadd.f32 %v7453, %v7537
    %v7539 = vand.u32 %v3638, 4294901760
    %7540 = vmatmul.f32.gmra.mxu0 %v7539
    %v7541 = vpop.f32.mrf.mxu0
    %v7542 = vadd.f32 %v7457, %v7541
    %v7543 = vand.u32 %v3641, 4294901760
    %7544 = vmatmul.f32.gmra.mxu0 %v7543
    %v7545 = vpop.f32.mrf.mxu0
    %v7546 = vadd.f32 %v7461, %v7545
    %v7547 = vand.u32 %v3644, 4294901760
    %7548 = vmatmul.f32.gmra.mxu0 %v7547
    %v7549 = vpop.f32.mrf.mxu0
    %v7550 = vadd.f32 %v7465, %v7549
    %v7551 = vand.u32 %v3647, 4294901760
    %7552 = vmatmul.f32.gmra.mxu0 %v7551
    %v7553 = vpop.f32.mrf.mxu0
    %v7554 = vadd.f32 %v7469, %v7553
    %v7555 = vand.u32 %v3650, 4294901760
    %7556 = vmatmul.f32.gmra.mxu0 %v7555
    %v7557 = vpop.f32.mrf.mxu0
    %v7558 = vadd.f32 %v7473, %v7557
    %v7559 = vand.u32 %v3653, 4294901760
    %7560 = vmatmul.f32.gmra.mxu0 %v7559
    %v7561 = vpop.f32.mrf.mxu0
    %v7562 = vadd.f32 %v7477, %v7561
    %v7563 = vand.u32 %v3656, 4294901760
    %7564 = vmatmul.f32.gmra.mxu0 %v7563
    %v7565 = vpop.f32.mrf.mxu0
    %v7566 = vadd.f32 %v7481, %v7565
    %7567 = vdwg.mxu0
    %v7568 = vadd.f32 %v3560, %v7506
    %v7569 = vadd.f32 %v3561, %v7510
    %v7570 = vadd.f32 %v3562, %v7514
    %v7571 = vadd.f32 %v3563, %v7518
    %v7572 = vadd.f32 %v3564, %v7522
    %v7573 = vadd.f32 %v3565, %v7526
    %v7574 = vadd.f32 %v3566, %v7530
    %v7575 = vadd.f32 %v3567, %v7534
    %v7576 = vadd.f32 %v3568, %v7538
    %v7577 = vadd.f32 %v3569, %v7542
    %v7578 = vadd.f32 %v3570, %v7546
    %v7579 = vadd.f32 %v3571, %v7550
    %v7580 = vadd.f32 %v3572, %v7554
    %v7581 = vadd.f32 %v3573, %v7558
    %v7582 = vadd.f32 %v3574, %v7562
    %v7583 = vadd.f32 %v3575, %v7566
    %v7584 = vxor.u32 %v7568, 2147483648
    %v7585 = vxor.u32 %v7569, 2147483648
    %v7586 = vxor.u32 %v7570, 2147483648
    %v7587 = vxor.u32 %v7571, 2147483648
    %v7588 = vmul.f32 %v7584, 1.442695
    %v7589 = vpow.pop %v7588
    %v7590 = vmul.f32 %v7585, 1.442695
    %v7591 = vpow.pop %v7590
    %v7592 = vmul.f32 %v7586, 1.442695
    %v7593 = vpow.pop %v7592
    %v7594 = vmul.f32 %v7587, 1.442695
    %v7595 = vpow.pop %v7594
    %v7596 = vadd.f32 %v7589, 1.0
    %v7597 = vadd.f32 %v7591, 1.0
    %v7598 = vadd.f32 %v7593, 1.0
    %v7599 = vadd.f32 %v7595, 1.0
    %v7600 = vrcp.pop %v7596
    %v7601 = vmul.f32 %v7596, %v7600
    %v7602 = vsub.f32 1.0, %v7601
    %v7603 = vmul.f32 %v7600, %v7602
    %v7604 = vadd.f32 %v7600, %v7603
    %vm7605 = vweird.f32 %v7596
    %vm7606 = vweird.f32 %v7600
    %vm7607 = vmor %vm7605, %vm7606
    %v7608 = vsel %vm7607, %v7600, %v7604
    %v7609 = vand.u32 2147483647, %v7596
    %vm7610 = vcmp.eq.f32.partialorder %v7609, 8.507059e+37
    %v7611 = vand.u32 %v7596, 2147483648
    %v7612 = vor.u32 1.1754944e-38, %v7611
    %v7613 = vsel %vm7610, %v7612, %v7608
    %v7614 = vmul.f32 1.0, %v7613
    %v7615 = vrcp.pop %v7597
    %v7616 = vmul.f32 %v7597, %v7615
    %v7617 = vsub.f32 1.0, %v7616
    %v7618 = vmul.f32 %v7615, %v7617
    %v7619 = vadd.f32 %v7615, %v7618
    %vm7620 = vweird.f32 %v7597
    %vm7621 = vweird.f32 %v7615
    %vm7622 = vmor %vm7620, %vm7621
    %v7623 = vsel %vm7622, %v7615, %v7619
    %v7624 = vand.u32 2147483647, %v7597
    %vm7625 = vcmp.eq.f32.partialorder %v7624, 8.507059e+37
    %v7626 = vand.u32 %v7597, 2147483648
    %v7627 = vor.u32 1.1754944e-38, %v7626
    %v7628 = vsel %vm7625, %v7627, %v7623
    %v7629 = vmul.f32 1.0, %v7628
    %v7630 = vrcp.pop %v7598
    %v7631 = vmul.f32 %v7598, %v7630
    %v7632 = vsub.f32 1.0, %v7631
    %v7633 = vmul.f32 %v7630, %v7632
    %v7634 = vadd.f32 %v7630, %v7633
    %vm7635 = vweird.f32 %v7598
    %vm7636 = vweird.f32 %v7630
    %vm7637 = vmor %vm7635, %vm7636
    %v7638 = vsel %vm7637, %v7630, %v7634
    %v7639 = vand.u32 2147483647, %v7598
    %vm7640 = vcmp.eq.f32.partialorder %v7639, 8.507059e+37
    %v7641 = vand.u32 %v7598, 2147483648
    %v7642 = vor.u32 1.1754944e-38, %v7641
    %v7643 = vsel %vm7640, %v7642, %v7638
    %v7644 = vmul.f32 1.0, %v7643
    %v7645 = vrcp.pop %v7599
    %v7646 = vmul.f32 %v7599, %v7645
    %v7647 = vsub.f32 1.0, %v7646
    %v7648 = vmul.f32 %v7645, %v7647
    %v7649 = vadd.f32 %v7645, %v7648
    %vm7650 = vweird.f32 %v7599
    %vm7651 = vweird.f32 %v7645
    %vm7652 = vmor %vm7650, %vm7651
    %v7653 = vsel %vm7652, %v7645, %v7649
    %v7654 = vand.u32 2147483647, %v7599
    %vm7655 = vcmp.eq.f32.partialorder %v7654, 8.507059e+37
    %v7656 = vand.u32 %v7599, 2147483648
    %v7657 = vor.u32 1.1754944e-38, %v7656
    %v7658 = vsel %vm7655, %v7657, %v7653
    %v7659 = vmul.f32 1.0, %v7658
    %v7660 = vxor.u32 %v7572, 2147483648
    %v7661 = vxor.u32 %v7573, 2147483648
    %v7662 = vxor.u32 %v7574, 2147483648
    %v7663 = vxor.u32 %v7575, 2147483648
    %v7664 = vmul.f32 %v7660, 1.442695
    %v7665 = vpow.pop %v7664
    %v7666 = vmul.f32 %v7661, 1.442695
    %v7667 = vpow.pop %v7666
    %v7668 = vmul.f32 %v7662, 1.442695
    %v7669 = vpow.pop %v7668
    %v7670 = vmul.f32 %v7663, 1.442695
    %v7671 = vpow.pop %v7670
    %v7672 = vadd.f32 %v7665, 1.0
    %v7673 = vadd.f32 %v7667, 1.0
    %v7674 = vadd.f32 %v7669, 1.0
    %v7675 = vadd.f32 %v7671, 1.0
    %v7676 = vrcp.pop %v7672
    %v7677 = vmul.f32 %v7672, %v7676
    %v7678 = vsub.f32 1.0, %v7677
    %v7679 = vmul.f32 %v7676, %v7678
    %v7680 = vadd.f32 %v7676, %v7679
    %vm7681 = vweird.f32 %v7672
    %vm7682 = vweird.f32 %v7676
    %vm7683 = vmor %vm7681, %vm7682
    %v7684 = vsel %vm7683, %v7676, %v7680
    %v7685 = vand.u32 2147483647, %v7672
    %vm7686 = vcmp.eq.f32.partialorder %v7685, 8.507059e+37
    %v7687 = vand.u32 %v7672, 2147483648
    %v7688 = vor.u32 1.1754944e-38, %v7687
    %v7689 = vsel %vm7686, %v7688, %v7684
    %v7690 = vmul.f32 1.0, %v7689
    %v7691 = vrcp.pop %v7673
    %v7692 = vmul.f32 %v7673, %v7691
    %v7693 = vsub.f32 1.0, %v7692
    %v7694 = vmul.f32 %v7691, %v7693
    %v7695 = vadd.f32 %v7691, %v7694
    %vm7696 = vweird.f32 %v7673
    %vm7697 = vweird.f32 %v7691
    %vm7698 = vmor %vm7696, %vm7697
    %v7699 = vsel %vm7698, %v7691, %v7695
    %v7700 = vand.u32 2147483647, %v7673
    %vm7701 = vcmp.eq.f32.partialorder %v7700, 8.507059e+37
    %v7702 = vand.u32 %v7673, 2147483648
    %v7703 = vor.u32 1.1754944e-38, %v7702
    %v7704 = vsel %vm7701, %v7703, %v7699
    %v7705 = vmul.f32 1.0, %v7704
    %v7706 = vrcp.pop %v7674
    %v7707 = vmul.f32 %v7674, %v7706
    %v7708 = vsub.f32 1.0, %v7707
    %v7709 = vmul.f32 %v7706, %v7708
    %v7710 = vadd.f32 %v7706, %v7709
    %vm7711 = vweird.f32 %v7674
    %vm7712 = vweird.f32 %v7706
    %vm7713 = vmor %vm7711, %vm7712
    %v7714 = vsel %vm7713, %v7706, %v7710
    %v7715 = vand.u32 2147483647, %v7674
    %vm7716 = vcmp.eq.f32.partialorder %v7715, 8.507059e+37
    %v7717 = vand.u32 %v7674, 2147483648
    %v7718 = vor.u32 1.1754944e-38, %v7717
    %v7719 = vsel %vm7716, %v7718, %v7714
    %v7720 = vmul.f32 1.0, %v7719
    %v7721 = vrcp.pop %v7675
    %v7722 = vmul.f32 %v7675, %v7721
    %v7723 = vsub.f32 1.0, %v7722
    %v7724 = vmul.f32 %v7721, %v7723
    %v7725 = vadd.f32 %v7721, %v7724
    %vm7726 = vweird.f32 %v7675
    %vm7727 = vweird.f32 %v7721
    %vm7728 = vmor %vm7726, %vm7727
    %v7729 = vsel %vm7728, %v7721, %v7725
    %v7730 = vand.u32 2147483647, %v7675
    %vm7731 = vcmp.eq.f32.partialorder %v7730, 8.507059e+37
    %v7732 = vand.u32 %v7675, 2147483648
    %v7733 = vor.u32 1.1754944e-38, %v7732
    %v7734 = vsel %vm7731, %v7733, %v7729
    %v7735 = vmul.f32 1.0, %v7734
    %v7736 = vtanh.pop %v7576
    %v7737 = vtanh.pop %v7577
    %v7738 = vtanh.pop %v7578
    %v7739 = vtanh.pop %v7579
    %v7740 = vxor.u32 %v7580, 2147483648
    %v7741 = vxor.u32 %v7581, 2147483648
    %v7742 = vxor.u32 %v7582, 2147483648
    %v7743 = vxor.u32 %v7583, 2147483648
    %v7744 = vmul.f32 %v7740, 1.442695
    %v7745 = vpow.pop %v7744
    %v7746 = vmul.f32 %v7741, 1.442695
    %v7747 = vpow.pop %v7746
    %v7748 = vmul.f32 %v7742, 1.442695
    %v7749 = vpow.pop %v7748
    %v7750 = vmul.f32 %v7743, 1.442695
    %v7751 = vpow.pop %v7750
    %v7752 = vadd.f32 %v7745, 1.0
    %v7753 = vadd.f32 %v7747, 1.0
    %v7754 = vadd.f32 %v7749, 1.0
    %v7755 = vadd.f32 %v7751, 1.0
    %v7756 = vrcp.pop %v7752
    %v7757 = vmul.f32 %v7752, %v7756
    %v7758 = vsub.f32 1.0, %v7757
    %v7759 = vmul.f32 %v7756, %v7758
    %v7760 = vadd.f32 %v7756, %v7759
    %vm7761 = vweird.f32 %v7752
    %vm7762 = vweird.f32 %v7756
    %vm7763 = vmor %vm7761, %vm7762
    %v7764 = vsel %vm7763, %v7756, %v7760
    %v7765 = vand.u32 2147483647, %v7752
    %vm7766 = vcmp.eq.f32.partialorder %v7765, 8.507059e+37
    %v7767 = vand.u32 %v7752, 2147483648
    %v7768 = vor.u32 1.1754944e-38, %v7767
    %v7769 = vsel %vm7766, %v7768, %v7764
    %v7770 = vmul.f32 1.0, %v7769
    %v7771 = vrcp.pop %v7753
    %v7772 = vmul.f32 %v7753, %v7771
    %v7773 = vsub.f32 1.0, %v7772
    %v7774 = vmul.f32 %v7771, %v7773
    %v7775 = vadd.f32 %v7771, %v7774
    %vm7776 = vweird.f32 %v7753
    %vm7777 = vweird.f32 %v7771
    %vm7778 = vmor %vm7776, %vm7777
    %v7779 = vsel %vm7778, %v7771, %v7775
    %v7780 = vand.u32 2147483647, %v7753
    %vm7781 = vcmp.eq.f32.partialorder %v7780, 8.507059e+37
    %v7782 = vand.u32 %v7753, 2147483648
    %v7783 = vor.u32 1.1754944e-38, %v7782
    %v7784 = vsel %vm7781, %v7783, %v7779
    %v7785 = vmul.f32 1.0, %v7784
    %v7786 = vrcp.pop %v7754
    %v7787 = vmul.f32 %v7754, %v7786
    %v7788 = vsub.f32 1.0, %v7787
    %v7789 = vmul.f32 %v7786, %v7788
    %v7790 = vadd.f32 %v7786, %v7789
    %vm7791 = vweird.f32 %v7754
    %vm7792 = vweird.f32 %v7786
    %vm7793 = vmor %vm7791, %vm7792
    %v7794 = vsel %vm7793, %v7786, %v7790
    %v7795 = vand.u32 2147483647, %v7754
    %vm7796 = vcmp.eq.f32.partialorder %v7795, 8.507059e+37
    %v7797 = vand.u32 %v7754, 2147483648
    %v7798 = vor.u32 1.1754944e-38, %v7797
    %v7799 = vsel %vm7796, %v7798, %v7794
    %v7800 = vmul.f32 1.0, %v7799
    %v7801 = vrcp.pop %v7755
    %v7802 = vmul.f32 %v7755, %v7801
    %v7803 = vsub.f32 1.0, %v7802
    %v7804 = vmul.f32 %v7801, %v7803
    %v7805 = vadd.f32 %v7801, %v7804
    %vm7806 = vweird.f32 %v7755
    %vm7807 = vweird.f32 %v7801
    %vm7808 = vmor %vm7806, %vm7807
    %v7809 = vsel %vm7808, %v7801, %v7805
    %v7810 = vand.u32 2147483647, %v7755
    %vm7811 = vcmp.eq.f32.partialorder %v7810, 8.507059e+37
    %v7812 = vand.u32 %v7755, 2147483648
    %v7813 = vor.u32 1.1754944e-38, %v7812
    %v7814 = vsel %vm7811, %v7813, %v7809
    %v7815 = vmul.f32 1.0, %v7814
    %v7816 = vmul.f32 %v7690, %v6721
    %v7817 = vmul.f32 %v7705, %v6722
    %v7818 = vmul.f32 %v7720, %v6723
    %v7819 = vmul.f32 %v7735, %v6724
    %v7820 = vmul.f32 %v7614, %v7736
    %v7821 = vmul.f32 %v7629, %v7737
    %v7822 = vmul.f32 %v7644, %v7738
    %v7823 = vmul.f32 %v7659, %v7739
    %v7824 = vadd.f32 %v7816, %v7820
    %v7825 = vadd.f32 %v7817, %v7821
    %v7826 = vadd.f32 %v7818, %v7822
    %v7827 = vadd.f32 %v7819, %v7823
    %v7828 = vtanh.pop %v7824
    %v7829 = vtanh.pop %v7825
    %v7830 = vtanh.pop %v7826
    %v7831 = vtanh.pop %v7827
    %v7832 = vmul.f32 %v7770, %v7828
    %v7833 = vmul.f32 %v7785, %v7829
    %v7834 = vmul.f32 %v7800, %v7830
    %v7835 = vmul.f32 %v7815, %v7831
    %7836 = vmatpush.msra.mxu0 0.0
    %7837 = vmatpush.msra.mxu0 0.0
    %7838 = vmatpush.msra.mxu0 0.0
    %7839 = vmatpush.msra.mxu0 0.0
    %7840 = vmatpush.msra.mxu0 0.0
    %7841 = vmatpush.msra.mxu0 0.0
    %7842 = vmatpush.msra.mxu0 0.0
    %7843 = vmatpush.msra.mxu0 0.0
    %7844 = vmatpush.msra.mxu0 0.0
    %7845 = vmatpush.msra.mxu0 0.0
    %7846 = vmatpush.msra.mxu0 0.0
    %7847 = vmatpush.msra.mxu0 0.0
    %v7848 = vand.u32 %v7835, 4294901760
    %7849 = vmatpush.msra.mxu0 %v7848
    %v7850 = vand.u32 %v7834, 4294901760
    %7851 = vmatpush.msra.mxu0 %v7850
    %v7852 = vand.u32 %v7833, 4294901760
    %7853 = vmatpush.msra.mxu0 %v7852
    %v7854 = vand.u32 %v7832, 4294901760
    %7855 = vmatpush.msra.mxu0 %v7854
    %v7856 = vand.u32 %v4525, 4294901760
    %v7857 = vsub.f32 %v4525, %v7856
    %v7858 = vand.u32 %v7857, 4294901760
    %v7859 = vsub.f32 %v7857, %v7858
    %v7860 = vand.u32 %v7859, 4294901760
    %7861 = vmatmul.f32.gmra.mxu0 %v7860
    %v7862 = vpop.f32.mrf.mxu0
    %v7863 = vadd.f32 0.0, %v7862
    %7864 = vdwg.mxu0
    %7865 = vmatpush.msra.mxu0 0.0
    %7866 = vmatpush.msra.mxu0 0.0
    %7867 = vmatpush.msra.mxu0 0.0
    %7868 = vmatpush.msra.mxu0 0.0
    %7869 = vmatpush.msra.mxu0 0.0
    %7870 = vmatpush.msra.mxu0 0.0
    %7871 = vmatpush.msra.mxu0 0.0
    %7872 = vmatpush.msra.mxu0 0.0
    %7873 = vmatpush.msra.mxu0 0.0
    %7874 = vmatpush.msra.mxu0 0.0
    %7875 = vmatpush.msra.mxu0 0.0
    %7876 = vmatpush.msra.mxu0 0.0
    %v7877 = vand.u32 %v7835, 4294901760
    %v7878 = vsub.f32 %v7835, %v7877
    %v7879 = vand.u32 %v7878, 4294901760
    %v7880 = vsub.f32 %v7878, %v7879
    %v7881 = vand.u32 %v7880, 4294901760
    %7882 = vmatpush.msra.mxu0 %v7881
    %v7883 = vand.u32 %v7834, 4294901760
    %v7884 = vsub.f32 %v7834, %v7883
    %v7885 = vand.u32 %v7884, 4294901760
    %v7886 = vsub.f32 %v7884, %v7885
    %v7887 = vand.u32 %v7886, 4294901760
    %7888 = vmatpush.msra.mxu0 %v7887
    %v7889 = vand.u32 %v7833, 4294901760
    %v7890 = vsub.f32 %v7833, %v7889
    %v7891 = vand.u32 %v7890, 4294901760
    %v7892 = vsub.f32 %v7890, %v7891
    %v7893 = vand.u32 %v7892, 4294901760
    %7894 = vmatpush.msra.mxu0 %v7893
    %v7895 = vand.u32 %v7832, 4294901760
    %v7896 = vsub.f32 %v7832, %v7895
    %v7897 = vand.u32 %v7896, 4294901760
    %v7898 = vsub.f32 %v7896, %v7897
    %v7899 = vand.u32 %v7898, 4294901760
    %7900 = vmatpush.msra.mxu0 %v7899
    %v7901 = vand.u32 %v4525, 4294901760
    %7902 = vmatmul.f32.gmra.mxu0 %v7901
    %v7903 = vpop.f32.mrf.mxu0
    %v7904 = vadd.f32 %v7863, %v7903
    %7905 = vdwg.mxu0
    %7906 = vmatpush.msra.mxu0 0.0
    %7907 = vmatpush.msra.mxu0 0.0
    %7908 = vmatpush.msra.mxu0 0.0
    %7909 = vmatpush.msra.mxu0 0.0
    %7910 = vmatpush.msra.mxu0 0.0
    %7911 = vmatpush.msra.mxu0 0.0
    %7912 = vmatpush.msra.mxu0 0.0
    %7913 = vmatpush.msra.mxu0 0.0
    %7914 = vmatpush.msra.mxu0 0.0
    %7915 = vmatpush.msra.mxu0 0.0
    %7916 = vmatpush.msra.mxu0 0.0
    %7917 = vmatpush.msra.mxu0 0.0
    %v7918 = vand.u32 %v7835, 4294901760
    %v7919 = vsub.f32 %v7835, %v7918
    %7920 = vmatpush.msra.mxu0 %v7919
    %v7921 = vand.u32 %v7834, 4294901760
    %v7922 = vsub.f32 %v7834, %v7921
    %7923 = vmatpush.msra.mxu0 %v7922
    %v7924 = vand.u32 %v7833, 4294901760
    %v7925 = vsub.f32 %v7833, %v7924
    %7926 = vmatpush.msra.mxu0 %v7925
    %v7927 = vand.u32 %v7832, 4294901760
    %v7928 = vsub.f32 %v7832, %v7927
    %7929 = vmatpush.msra.mxu0 %v7928
    %v7930 = vand.u32 %v4525, 4294901760
    %v7931 = vsub.f32 %v4525, %v7930
    %7932 = vmatmul.f32.gmra.mxu0 %v7931
    %v7933 = vpop.f32.mrf.mxu0
    %v7934 = vadd.f32 %v7904, %v7933
    %7935 = vdwg.mxu0
    %7936 = vmatpush.msra.mxu0 0.0
    %7937 = vmatpush.msra.mxu0 0.0
    %7938 = vmatpush.msra.mxu0 0.0
    %7939 = vmatpush.msra.mxu0 0.0
    %7940 = vmatpush.msra.mxu0 0.0
    %7941 = vmatpush.msra.mxu0 0.0
    %7942 = vmatpush.msra.mxu0 0.0
    %7943 = vmatpush.msra.mxu0 0.0
    %7944 = vmatpush.msra.mxu0 0.0
    %7945 = vmatpush.msra.mxu0 0.0
    %7946 = vmatpush.msra.mxu0 0.0
    %7947 = vmatpush.msra.mxu0 0.0
    %v7948 = vand.u32 %v7835, 4294901760
    %7949 = vmatpush.msra.mxu0 %v7948
    %v7950 = vand.u32 %v7834, 4294901760
    %7951 = vmatpush.msra.mxu0 %v7950
    %v7952 = vand.u32 %v7833, 4294901760
    %7953 = vmatpush.msra.mxu0 %v7952
    %v7954 = vand.u32 %v7832, 4294901760
    %7955 = vmatpush.msra.mxu0 %v7954
    %v7956 = vand.u32 %v4525, 4294901760
    %v7957 = vsub.f32 %v4525, %v7956
    %v7958 = vand.u32 %v7957, 4294901760
    %7959 = vmatmul.f32.gmra.mxu0 %v7958
    %v7960 = vpop.f32.mrf.mxu0
    %v7961 = vadd.f32 %v7934, %v7960
    %7962 = vdwg.mxu0
    %7963 = vmatpush.msra.mxu0 0.0
    %7964 = vmatpush.msra.mxu0 0.0
    %7965 = vmatpush.msra.mxu0 0.0
    %7966 = vmatpush.msra.mxu0 0.0
    %7967 = vmatpush.msra.mxu0 0.0
    %7968 = vmatpush.msra.mxu0 0.0
    %7969 = vmatpush.msra.mxu0 0.0
    %7970 = vmatpush.msra.mxu0 0.0
    %7971 = vmatpush.msra.mxu0 0.0
    %7972 = vmatpush.msra.mxu0 0.0
    %7973 = vmatpush.msra.mxu0 0.0
    %7974 = vmatpush.msra.mxu0 0.0
    %v7975 = vand.u32 %v7835, 4294901760
    %v7976 = vsub.f32 %v7835, %v7975
    %v7977 = vand.u32 %v7976, 4294901760
    %7978 = vmatpush.msra.mxu0 %v7977
    %v7979 = vand.u32 %v7834, 4294901760
    %v7980 = vsub.f32 %v7834, %v7979
    %v7981 = vand.u32 %v7980, 4294901760
    %7982 = vmatpush.msra.mxu0 %v7981
    %v7983 = vand.u32 %v7833, 4294901760
    %v7984 = vsub.f32 %v7833, %v7983
    %v7985 = vand.u32 %v7984, 4294901760
    %7986 = vmatpush.msra.mxu0 %v7985
    %v7987 = vand.u32 %v7832, 4294901760
    %v7988 = vsub.f32 %v7832, %v7987
    %v7989 = vand.u32 %v7988, 4294901760
    %7990 = vmatpush.msra.mxu0 %v7989
    %v7991 = vand.u32 %v4525, 4294901760
    %7992 = vmatmul.f32.gmra.mxu0 %v7991
    %v7993 = vpop.f32.mrf.mxu0
    %v7994 = vadd.f32 %v7961, %v7993
    %7995 = vdwg.mxu0
    %7996 = vmatpush.msra.mxu0 0.0
    %7997 = vmatpush.msra.mxu0 0.0
    %7998 = vmatpush.msra.mxu0 0.0
    %7999 = vmatpush.msra.mxu0 0.0
    %8000 = vmatpush.msra.mxu0 0.0
    %8001 = vmatpush.msra.mxu0 0.0
    %8002 = vmatpush.msra.mxu0 0.0
    %8003 = vmatpush.msra.mxu0 0.0
    %8004 = vmatpush.msra.mxu0 0.0
    %8005 = vmatpush.msra.mxu0 0.0
    %8006 = vmatpush.msra.mxu0 0.0
    %8007 = vmatpush.msra.mxu0 0.0
    %v8008 = vand.u32 %v7835, 4294901760
    %8009 = vmatpush.msra.mxu0 %v8008
    %v8010 = vand.u32 %v7834, 4294901760
    %8011 = vmatpush.msra.mxu0 %v8010
    %v8012 = vand.u32 %v7833, 4294901760
    %8013 = vmatpush.msra.mxu0 %v8012
    %v8014 = vand.u32 %v7832, 4294901760
    %8015 = vmatpush.msra.mxu0 %v8014
    %v8016 = vand.u32 %v4525, 4294901760
    %8017 = vmatmul.f32.gmra.mxu0 %v8016
    %v8018 = vpop.f32.mrf.mxu0
    %v8019 = vadd.f32 %v7994, %v8018
    %8020 = vdwg.mxu0
    %8021 = vmatpush.msra.mxu0 0.0
    %8022 = vmatpush.msra.mxu0 0.0
    %8023 = vmatpush.msra.mxu0 0.0
    %8024 = vmatpush.msra.mxu0 0.0
    %8025 = vmatpush.msra.mxu0 0.0
    %8026 = vmatpush.msra.mxu0 0.0
    %8027 = vmatpush.msra.mxu0 0.0
    %8028 = vmatpush.msra.mxu0 0.0
    %8029 = vmatpush.msra.mxu0 0.0
    %8030 = vmatpush.msra.mxu0 0.0
    %8031 = vmatpush.msra.mxu0 0.0
    %8032 = vmatpush.msra.mxu0 0.0
    %v8033 = vand.u32 %v7835, 4294901760
    %8034 = vmatpush.msra.mxu0 %v8033
    %v8035 = vand.u32 %v7834, 4294901760
    %8036 = vmatpush.msra.mxu0 %v8035
    %v8037 = vand.u32 %v7833, 4294901760
    %8038 = vmatpush.msra.mxu0 %v8037
    %v8039 = vand.u32 %v7832, 4294901760
    %8040 = vmatpush.msra.mxu0 %v8039
    %v8041 = vand.u32 %v3611, 4294901760
    %v8042 = vsub.f32 %v3611, %v8041
    %v8043 = vand.u32 %v8042, 4294901760
    %v8044 = vsub.f32 %v8042, %v8043
    %v8045 = vand.u32 %v8044, 4294901760
    %8046 = vmatmul.f32.gmra.mxu0 %v8045
    %v8047 = vpop.f32.mrf.mxu0
    %v8048 = vadd.f32 0.0, %v8047
    %v8049 = vand.u32 %v3614, 4294901760
    %v8050 = vsub.f32 %v3614, %v8049
    %v8051 = vand.u32 %v8050, 4294901760
    %v8052 = vsub.f32 %v8050, %v8051
    %v8053 = vand.u32 %v8052, 4294901760
    %8054 = vmatmul.f32.gmra.mxu0 %v8053
    %v8055 = vpop.f32.mrf.mxu0
    %v8056 = vadd.f32 0.0, %v8055
    %v8057 = vand.u32 %v3617, 4294901760
    %v8058 = vsub.f32 %v3617, %v8057
    %v8059 = vand.u32 %v8058, 4294901760
    %v8060 = vsub.f32 %v8058, %v8059
    %v8061 = vand.u32 %v8060, 4294901760
    %8062 = vmatmul.f32.gmra.mxu0 %v8061
    %v8063 = vpop.f32.mrf.mxu0
    %v8064 = vadd.f32 0.0, %v8063
    %v8065 = vand.u32 %v3620, 4294901760
    %v8066 = vsub.f32 %v3620, %v8065
    %v8067 = vand.u32 %v8066, 4294901760
    %v8068 = vsub.f32 %v8066, %v8067
    %v8069 = vand.u32 %v8068, 4294901760
    %8070 = vmatmul.f32.gmra.mxu0 %v8069
    %v8071 = vpop.f32.mrf.mxu0
    %v8072 = vadd.f32 0.0, %v8071
    %v8073 = vand.u32 %v3623, 4294901760
    %v8074 = vsub.f32 %v3623, %v8073
    %v8075 = vand.u32 %v8074, 4294901760
    %v8076 = vsub.f32 %v8074, %v8075
    %v8077 = vand.u32 %v8076, 4294901760
    %8078 = vmatmul.f32.gmra.mxu0 %v8077
    %v8079 = vpop.f32.mrf.mxu0
    %v8080 = vadd.f32 0.0, %v8079
    %v8081 = vand.u32 %v3626, 4294901760
    %v8082 = vsub.f32 %v3626, %v8081
    %v8083 = vand.u32 %v8082, 4294901760
    %v8084 = vsub.f32 %v8082, %v8083
    %v8085 = vand.u32 %v8084, 4294901760
    %8086 = vmatmul.f32.gmra.mxu0 %v8085
    %v8087 = vpop.f32.mrf.mxu0
    %v8088 = vadd.f32 0.0, %v8087
    %v8089 = vand.u32 %v3629, 4294901760
    %v8090 = vsub.f32 %v3629, %v8089
    %v8091 = vand.u32 %v8090, 4294901760
    %v8092 = vsub.f32 %v8090, %v8091
    %v8093 = vand.u32 %v8092, 4294901760
    %8094 = vmatmul.f32.gmra.mxu0 %v8093
    %v8095 = vpop.f32.mrf.mxu0
    %v8096 = vadd.f32 0.0, %v8095
    %v8097 = vand.u32 %v3632, 4294901760
    %v8098 = vsub.f32 %v3632, %v8097
    %v8099 = vand.u32 %v8098, 4294901760
    %v8100 = vsub.f32 %v8098, %v8099
    %v8101 = vand.u32 %v8100, 4294901760
    %8102 = vmatmul.f32.gmra.mxu0 %v8101
    %v8103 = vpop.f32.mrf.mxu0
    %v8104 = vadd.f32 0.0, %v8103
    %v8105 = vand.u32 %v3635, 4294901760
    %v8106 = vsub.f32 %v3635, %v8105
    %v8107 = vand.u32 %v8106, 4294901760
    %v8108 = vsub.f32 %v8106, %v8107
    %v8109 = vand.u32 %v8108, 4294901760
    %8110 = vmatmul.f32.gmra.mxu0 %v8109
    %v8111 = vpop.f32.mrf.mxu0
    %v8112 = vadd.f32 0.0, %v8111
    %v8113 = vand.u32 %v3638, 4294901760
    %v8114 = vsub.f32 %v3638, %v8113
    %v8115 = vand.u32 %v8114, 4294901760
    %v8116 = vsub.f32 %v8114, %v8115
    %v8117 = vand.u32 %v8116, 4294901760
    %8118 = vmatmul.f32.gmra.mxu0 %v8117
    %v8119 = vpop.f32.mrf.mxu0
    %v8120 = vadd.f32 0.0, %v8119
    %v8121 = vand.u32 %v3641, 4294901760
    %v8122 = vsub.f32 %v3641, %v8121
    %v8123 = vand.u32 %v8122, 4294901760
    %v8124 = vsub.f32 %v8122, %v8123
    %v8125 = vand.u32 %v8124, 4294901760
    %8126 = vmatmul.f32.gmra.mxu0 %v8125
    %v8127 = vpop.f32.mrf.mxu0
    %v8128 = vadd.f32 0.0, %v8127
    %v8129 = vand.u32 %v3644, 4294901760
    %v8130 = vsub.f32 %v3644, %v8129
    %v8131 = vand.u32 %v8130, 4294901760
    %v8132 = vsub.f32 %v8130, %v8131
    %v8133 = vand.u32 %v8132, 4294901760
    %8134 = vmatmul.f32.gmra.mxu0 %v8133
    %v8135 = vpop.f32.mrf.mxu0
    %v8136 = vadd.f32 0.0, %v8135
    %v8137 = vand.u32 %v3647, 4294901760
    %v8138 = vsub.f32 %v3647, %v8137
    %v8139 = vand.u32 %v8138, 4294901760
    %v8140 = vsub.f32 %v8138, %v8139
    %v8141 = vand.u32 %v8140, 4294901760
    %8142 = vmatmul.f32.gmra.mxu0 %v8141
    %v8143 = vpop.f32.mrf.mxu0
    %v8144 = vadd.f32 0.0, %v8143
    %v8145 = vand.u32 %v3650, 4294901760
    %v8146 = vsub.f32 %v3650, %v8145
    %v8147 = vand.u32 %v8146, 4294901760
    %v8148 = vsub.f32 %v8146, %v8147
    %v8149 = vand.u32 %v8148, 4294901760
    %8150 = vmatmul.f32.gmra.mxu0 %v8149
    %v8151 = vpop.f32.mrf.mxu0
    %v8152 = vadd.f32 0.0, %v8151
    %v8153 = vand.u32 %v3653, 4294901760
    %v8154 = vsub.f32 %v3653, %v8153
    %v8155 = vand.u32 %v8154, 4294901760
    %v8156 = vsub.f32 %v8154, %v8155
    %v8157 = vand.u32 %v8156, 4294901760
    %8158 = vmatmul.f32.gmra.mxu0 %v8157
    %v8159 = vpop.f32.mrf.mxu0
    %v8160 = vadd.f32 0.0, %v8159
    %v8161 = vand.u32 %v3656, 4294901760
    %v8162 = vsub.f32 %v3656, %v8161
    %v8163 = vand.u32 %v8162, 4294901760
    %v8164 = vsub.f32 %v8162, %v8163
    %v8165 = vand.u32 %v8164, 4294901760
    %8166 = vmatmul.f32.gmra.mxu0 %v8165
    %v8167 = vpop.f32.mrf.mxu0
    %v8168 = vadd.f32 0.0, %v8167
    %8169 = vdwg.mxu0
    %8170 = vmatpush.msra.mxu0 0.0
    %8171 = vmatpush.msra.mxu0 0.0
    %8172 = vmatpush.msra.mxu0 0.0
    %8173 = vmatpush.msra.mxu0 0.0
    %8174 = vmatpush.msra.mxu0 0.0
    %8175 = vmatpush.msra.mxu0 0.0
    %8176 = vmatpush.msra.mxu0 0.0
    %8177 = vmatpush.msra.mxu0 0.0
    %8178 = vmatpush.msra.mxu0 0.0
    %8179 = vmatpush.msra.mxu0 0.0
    %8180 = vmatpush.msra.mxu0 0.0
    %8181 = vmatpush.msra.mxu0 0.0
    %v8182 = vand.u32 %v7835, 4294901760
    %v8183 = vsub.f32 %v7835, %v8182
    %v8184 = vand.u32 %v8183, 4294901760
    %v8185 = vsub.f32 %v8183, %v8184
    %v8186 = vand.u32 %v8185, 4294901760
    %8187 = vmatpush.msra.mxu0 %v8186
    %v8188 = vand.u32 %v7834, 4294901760
    %v8189 = vsub.f32 %v7834, %v8188
    %v8190 = vand.u32 %v8189, 4294901760
    %v8191 = vsub.f32 %v8189, %v8190
    %v8192 = vand.u32 %v8191, 4294901760
    %8193 = vmatpush.msra.mxu0 %v8192
    %v8194 = vand.u32 %v7833, 4294901760
    %v8195 = vsub.f32 %v7833, %v8194
    %v8196 = vand.u32 %v8195, 4294901760
    %v8197 = vsub.f32 %v8195, %v8196
    %v8198 = vand.u32 %v8197, 4294901760
    %8199 = vmatpush.msra.mxu0 %v8198
    %v8200 = vand.u32 %v7832, 4294901760
    %v8201 = vsub.f32 %v7832, %v8200
    %v8202 = vand.u32 %v8201, 4294901760
    %v8203 = vsub.f32 %v8201, %v8202
    %v8204 = vand.u32 %v8203, 4294901760
    %8205 = vmatpush.msra.mxu0 %v8204
    %v8206 = vand.u32 %v3611, 4294901760
    %8207 = vmatmul.f32.gmra.mxu0 %v8206
    %v8208 = vpop.f32.mrf.mxu0
    %v8209 = vadd.f32 %v8048, %v8208
    %v8210 = vand.u32 %v3614, 4294901760
    %8211 = vmatmul.f32.gmra.mxu0 %v8210
    %v8212 = vpop.f32.mrf.mxu0
    %v8213 = vadd.f32 %v8056, %v8212
    %v8214 = vand.u32 %v3617, 4294901760
    %8215 = vmatmul.f32.gmra.mxu0 %v8214
    %v8216 = vpop.f32.mrf.mxu0
    %v8217 = vadd.f32 %v8064, %v8216
    %v8218 = vand.u32 %v3620, 4294901760
    %8219 = vmatmul.f32.gmra.mxu0 %v8218
    %v8220 = vpop.f32.mrf.mxu0
    %v8221 = vadd.f32 %v8072, %v8220
    %v8222 = vand.u32 %v3623, 4294901760
    %8223 = vmatmul.f32.gmra.mxu0 %v8222
    %v8224 = vpop.f32.mrf.mxu0
    %v8225 = vadd.f32 %v8080, %v8224
    %v8226 = vand.u32 %v3626, 4294901760
    %8227 = vmatmul.f32.gmra.mxu0 %v8226
    %v8228 = vpop.f32.mrf.mxu0
    %v8229 = vadd.f32 %v8088, %v8228
    %v8230 = vand.u32 %v3629, 4294901760
    %8231 = vmatmul.f32.gmra.mxu0 %v8230
    %v8232 = vpop.f32.mrf.mxu0
    %v8233 = vadd.f32 %v8096, %v8232
    %v8234 = vand.u32 %v3632, 4294901760
    %8235 = vmatmul.f32.gmra.mxu0 %v8234
    %v8236 = vpop.f32.mrf.mxu0
    %v8237 = vadd.f32 %v8104, %v8236
    %v8238 = vand.u32 %v3635, 4294901760
    %8239 = vmatmul.f32.gmra.mxu0 %v8238
    %v8240 = vpop.f32.mrf.mxu0
    %v8241 = vadd.f32 %v8112, %v8240
    %v8242 = vand.u32 %v3638, 4294901760
    %8243 = vmatmul.f32.gmra.mxu0 %v8242
    %v8244 = vpop.f32.mrf.mxu0
    %v8245 = vadd.f32 %v8120, %v8244
    %v8246 = vand.u32 %v3641, 4294901760
    %8247 = vmatmul.f32.gmra.mxu0 %v8246
    %v8248 = vpop.f32.mrf.mxu0
    %v8249 = vadd.f32 %v8128, %v8248
    %v8250 = vand.u32 %v3644, 4294901760
    %8251 = vmatmul.f32.gmra.mxu0 %v8250
    %v8252 = vpop.f32.mrf.mxu0
    %v8253 = vadd.f32 %v8136, %v8252
    %v8254 = vand.u32 %v3647, 4294901760
    %8255 = vmatmul.f32.gmra.mxu0 %v8254
    %v8256 = vpop.f32.mrf.mxu0
    %v8257 = vadd.f32 %v8144, %v8256
    %v8258 = vand.u32 %v3650, 4294901760
    %8259 = vmatmul.f32.gmra.mxu0 %v8258
    %v8260 = vpop.f32.mrf.mxu0
    %v8261 = vadd.f32 %v8152, %v8260
    %v8262 = vand.u32 %v3653, 4294901760
    %8263 = vmatmul.f32.gmra.mxu0 %v8262
    %v8264 = vpop.f32.mrf.mxu0
    %v8265 = vadd.f32 %v8160, %v8264
    %v8266 = vand.u32 %v3656, 4294901760
    %8267 = vmatmul.f32.gmra.mxu0 %v8266
    %v8268 = vpop.f32.mrf.mxu0
    %v8269 = vadd.f32 %v8168, %v8268
    %8270 = vdwg.mxu0
    %8271 = vmatpush.msra.mxu0 0.0
    %8272 = vmatpush.msra.mxu0 0.0
    %8273 = vmatpush.msra.mxu0 0.0
    %8274 = vmatpush.msra.mxu0 0.0
    %8275 = vmatpush.msra.mxu0 0.0
    %8276 = vmatpush.msra.mxu0 0.0
    %8277 = vmatpush.msra.mxu0 0.0
    %8278 = vmatpush.msra.mxu0 0.0
    %8279 = vmatpush.msra.mxu0 0.0
    %8280 = vmatpush.msra.mxu0 0.0
    %8281 = vmatpush.msra.mxu0 0.0
    %8282 = vmatpush.msra.mxu0 0.0
    %v8283 = vand.u32 %v7835, 4294901760
    %v8284 = vsub.f32 %v7835, %v8283
    %8285 = vmatpush.msra.mxu0 %v8284
    %v8286 = vand.u32 %v7834, 4294901760
    %v8287 = vsub.f32 %v7834, %v8286
    %8288 = vmatpush.msra.mxu0 %v8287
    %v8289 = vand.u32 %v7833, 4294901760
    %v8290 = vsub.f32 %v7833, %v8289
    %8291 = vmatpush.msra.mxu0 %v8290
    %v8292 = vand.u32 %v7832, 4294901760
    %v8293 = vsub.f32 %v7832, %v8292
    %8294 = vmatpush.msra.mxu0 %v8293
    %v8295 = vand.u32 %v3611, 4294901760
    %v8296 = vsub.f32 %v3611, %v8295
    %8297 = vmatmul.f32.gmra.mxu0 %v8296
    %v8298 = vpop.f32.mrf.mxu0
    %v8299 = vadd.f32 %v8209, %v8298
    %v8300 = vand.u32 %v3614, 4294901760
    %v8301 = vsub.f32 %v3614, %v8300
    %8302 = vmatmul.f32.gmra.mxu0 %v8301
    %v8303 = vpop.f32.mrf.mxu0
    %v8304 = vadd.f32 %v8213, %v8303
    %v8305 = vand.u32 %v3617, 4294901760
    %v8306 = vsub.f32 %v3617, %v8305
    %8307 = vmatmul.f32.gmra.mxu0 %v8306
    %v8308 = vpop.f32.mrf.mxu0
    %v8309 = vadd.f32 %v8217, %v8308
    %v8310 = vand.u32 %v3620, 4294901760
    %v8311 = vsub.f32 %v3620, %v8310
    %8312 = vmatmul.f32.gmra.mxu0 %v8311
    %v8313 = vpop.f32.mrf.mxu0
    %v8314 = vadd.f32 %v8221, %v8313
    %v8315 = vand.u32 %v3623, 4294901760
    %v8316 = vsub.f32 %v3623, %v8315
    %8317 = vmatmul.f32.gmra.mxu0 %v8316
    %v8318 = vpop.f32.mrf.mxu0
    %v8319 = vadd.f32 %v8225, %v8318
    %v8320 = vand.u32 %v3626, 4294901760
    %v8321 = vsub.f32 %v3626, %v8320
    %8322 = vmatmul.f32.gmra.mxu0 %v8321
    %v8323 = vpop.f32.mrf.mxu0
    %v8324 = vadd.f32 %v8229, %v8323
    %v8325 = vand.u32 %v3629, 4294901760
    %v8326 = vsub.f32 %v3629, %v8325
    %8327 = vmatmul.f32.gmra.mxu0 %v8326
    %v8328 = vpop.f32.mrf.mxu0
    %v8329 = vadd.f32 %v8233, %v8328
    %v8330 = vand.u32 %v3632, 4294901760
    %v8331 = vsub.f32 %v3632, %v8330
    %8332 = vmatmul.f32.gmra.mxu0 %v8331
    %v8333 = vpop.f32.mrf.mxu0
    %v8334 = vadd.f32 %v8237, %v8333
    %v8335 = vand.u32 %v3635, 4294901760
    %v8336 = vsub.f32 %v3635, %v8335
    %8337 = vmatmul.f32.gmra.mxu0 %v8336
    %v8338 = vpop.f32.mrf.mxu0
    %v8339 = vadd.f32 %v8241, %v8338
    %v8340 = vand.u32 %v3638, 4294901760
    %v8341 = vsub.f32 %v3638, %v8340
    %8342 = vmatmul.f32.gmra.mxu0 %v8341
    %v8343 = vpop.f32.mrf.mxu0
    %v8344 = vadd.f32 %v8245, %v8343
    %v8345 = vand.u32 %v3641, 4294901760
    %v8346 = vsub.f32 %v3641, %v8345
    %8347 = vmatmul.f32.gmra.mxu0 %v8346
    %v8348 = vpop.f32.mrf.mxu0
    %v8349 = vadd.f32 %v8249, %v8348
    %v8350 = vand.u32 %v3644, 4294901760
    %v8351 = vsub.f32 %v3644, %v8350
    %8352 = vmatmul.f32.gmra.mxu0 %v8351
    %v8353 = vpop.f32.mrf.mxu0
    %v8354 = vadd.f32 %v8253, %v8353
    %v8355 = vand.u32 %v3647, 4294901760
    %v8356 = vsub.f32 %v3647, %v8355
    %8357 = vmatmul.f32.gmra.mxu0 %v8356
    %v8358 = vpop.f32.mrf.mxu0
    %v8359 = vadd.f32 %v8257, %v8358
    %v8360 = vand.u32 %v3650, 4294901760
    %v8361 = vsub.f32 %v3650, %v8360
    %8362 = vmatmul.f32.gmra.mxu0 %v8361
    %v8363 = vpop.f32.mrf.mxu0
    %v8364 = vadd.f32 %v8261, %v8363
    %v8365 = vand.u32 %v3653, 4294901760
    %v8366 = vsub.f32 %v3653, %v8365
    %8367 = vmatmul.f32.gmra.mxu0 %v8366
    %v8368 = vpop.f32.mrf.mxu0
    %v8369 = vadd.f32 %v8265, %v8368
    %v8370 = vand.u32 %v3656, 4294901760
    %v8371 = vsub.f32 %v3656, %v8370
    %8372 = vmatmul.f32.gmra.mxu0 %v8371
    %v8373 = vpop.f32.mrf.mxu0
    %v8374 = vadd.f32 %v8269, %v8373
    %8375 = vdwg.mxu0
    %8376 = vmatpush.msra.mxu0 0.0
    %8377 = vmatpush.msra.mxu0 0.0
    %8378 = vmatpush.msra.mxu0 0.0
    %8379 = vmatpush.msra.mxu0 0.0
    %8380 = vmatpush.msra.mxu0 0.0
    %8381 = vmatpush.msra.mxu0 0.0
    %8382 = vmatpush.msra.mxu0 0.0
    %8383 = vmatpush.msra.mxu0 0.0
    %8384 = vmatpush.msra.mxu0 0.0
    %8385 = vmatpush.msra.mxu0 0.0
    %8386 = vmatpush.msra.mxu0 0.0
    %8387 = vmatpush.msra.mxu0 0.0
    %v8388 = vand.u32 %v7835, 4294901760
    %8389 = vmatpush.msra.mxu0 %v8388
    %v8390 = vand.u32 %v7834, 4294901760
    %8391 = vmatpush.msra.mxu0 %v8390
    %v8392 = vand.u32 %v7833, 4294901760
    %8393 = vmatpush.msra.mxu0 %v8392
    %v8394 = vand.u32 %v7832, 4294901760
    %8395 = vmatpush.msra.mxu0 %v8394
    %v8396 = vand.u32 %v3611, 4294901760
    %v8397 = vsub.f32 %v3611, %v8396
    %v8398 = vand.u32 %v8397, 4294901760
    %8399 = vmatmul.f32.gmra.mxu0 %v8398
    %v8400 = vpop.f32.mrf.mxu0
    %v8401 = vadd.f32 %v8299, %v8400
    %v8402 = vand.u32 %v3614, 4294901760
    %v8403 = vsub.f32 %v3614, %v8402
    %v8404 = vand.u32 %v8403, 4294901760
    %8405 = vmatmul.f32.gmra.mxu0 %v8404
    %v8406 = vpop.f32.mrf.mxu0
    %v8407 = vadd.f32 %v8304, %v8406
    %v8408 = vand.u32 %v3617, 4294901760
    %v8409 = vsub.f32 %v3617, %v8408
    %v8410 = vand.u32 %v8409, 4294901760
    %8411 = vmatmul.f32.gmra.mxu0 %v8410
    %v8412 = vpop.f32.mrf.mxu0
    %v8413 = vadd.f32 %v8309, %v8412
    %v8414 = vand.u32 %v3620, 4294901760
    %v8415 = vsub.f32 %v3620, %v8414
    %v8416 = vand.u32 %v8415, 4294901760
    %8417 = vmatmul.f32.gmra.mxu0 %v8416
    %v8418 = vpop.f32.mrf.mxu0
    %v8419 = vadd.f32 %v8314, %v8418
    %v8420 = vand.u32 %v3623, 4294901760
    %v8421 = vsub.f32 %v3623, %v8420
    %v8422 = vand.u32 %v8421, 4294901760
    %8423 = vmatmul.f32.gmra.mxu0 %v8422
    %v8424 = vpop.f32.mrf.mxu0
    %v8425 = vadd.f32 %v8319, %v8424
    %v8426 = vand.u32 %v3626, 4294901760
    %v8427 = vsub.f32 %v3626, %v8426
    %v8428 = vand.u32 %v8427, 4294901760
    %8429 = vmatmul.f32.gmra.mxu0 %v8428
    %v8430 = vpop.f32.mrf.mxu0
    %v8431 = vadd.f32 %v8324, %v8430
    %v8432 = vand.u32 %v3629, 4294901760
    %v8433 = vsub.f32 %v3629, %v8432
    %v8434 = vand.u32 %v8433, 4294901760
    %8435 = vmatmul.f32.gmra.mxu0 %v8434
    %v8436 = vpop.f32.mrf.mxu0
    %v8437 = vadd.f32 %v8329, %v8436
    %v8438 = vand.u32 %v3632, 4294901760
    %v8439 = vsub.f32 %v3632, %v8438
    %v8440 = vand.u32 %v8439, 4294901760
    %8441 = vmatmul.f32.gmra.mxu0 %v8440
    %v8442 = vpop.f32.mrf.mxu0
    %v8443 = vadd.f32 %v8334, %v8442
    %v8444 = vand.u32 %v3635, 4294901760
    %v8445 = vsub.f32 %v3635, %v8444
    %v8446 = vand.u32 %v8445, 4294901760
    %8447 = vmatmul.f32.gmra.mxu0 %v8446
    %v8448 = vpop.f32.mrf.mxu0
    %v8449 = vadd.f32 %v8339, %v8448
    %v8450 = vand.u32 %v3638, 4294901760
    %v8451 = vsub.f32 %v3638, %v8450
    %v8452 = vand.u32 %v8451, 4294901760
    %8453 = vmatmul.f32.gmra.mxu0 %v8452
    %v8454 = vpop.f32.mrf.mxu0
    %v8455 = vadd.f32 %v8344, %v8454
    %v8456 = vand.u32 %v3641, 4294901760
    %v8457 = vsub.f32 %v3641, %v8456
    %v8458 = vand.u32 %v8457, 4294901760
    %8459 = vmatmul.f32.gmra.mxu0 %v8458
    %v8460 = vpop.f32.mrf.mxu0
    %v8461 = vadd.f32 %v8349, %v8460
    %v8462 = vand.u32 %v3644, 4294901760
    %v8463 = vsub.f32 %v3644, %v8462
    %v8464 = vand.u32 %v8463, 4294901760
    %8465 = vmatmul.f32.gmra.mxu0 %v8464
    %v8466 = vpop.f32.mrf.mxu0
    %v8467 = vadd.f32 %v8354, %v8466
    %v8468 = vand.u32 %v3647, 4294901760
    %v8469 = vsub.f32 %v3647, %v8468
    %v8470 = vand.u32 %v8469, 4294901760
    %8471 = vmatmul.f32.gmra.mxu0 %v8470
    %v8472 = vpop.f32.mrf.mxu0
    %v8473 = vadd.f32 %v8359, %v8472
    %v8474 = vand.u32 %v3650, 4294901760
    %v8475 = vsub.f32 %v3650, %v8474
    %v8476 = vand.u32 %v8475, 4294901760
    %8477 = vmatmul.f32.gmra.mxu0 %v8476
    %v8478 = vpop.f32.mrf.mxu0
    %v8479 = vadd.f32 %v8364, %v8478
    %v8480 = vand.u32 %v3653, 4294901760
    %v8481 = vsub.f32 %v3653, %v8480
    %v8482 = vand.u32 %v8481, 4294901760
    %8483 = vmatmul.f32.gmra.mxu0 %v8482
    %v8484 = vpop.f32.mrf.mxu0
    %v8485 = vadd.f32 %v8369, %v8484
    %v8486 = vand.u32 %v3656, 4294901760
    %v8487 = vsub.f32 %v3656, %v8486
    %v8488 = vand.u32 %v8487, 4294901760
    %8489 = vmatmul.f32.gmra.mxu0 %v8488
    %v8490 = vpop.f32.mrf.mxu0
    %v8491 = vadd.f32 %v8374, %v8490
    %8492 = vdwg.mxu0
    %8493 = vmatpush.msra.mxu0 0.0
    %8494 = vmatpush.msra.mxu0 0.0
    %8495 = vmatpush.msra.mxu0 0.0
    %8496 = vmatpush.msra.mxu0 0.0
    %8497 = vmatpush.msra.mxu0 0.0
    %8498 = vmatpush.msra.mxu0 0.0
    %8499 = vmatpush.msra.mxu0 0.0
    %8500 = vmatpush.msra.mxu0 0.0
    %8501 = vmatpush.msra.mxu0 0.0
    %8502 = vmatpush.msra.mxu0 0.0
    %8503 = vmatpush.msra.mxu0 0.0
    %8504 = vmatpush.msra.mxu0 0.0
    %v8505 = vand.u32 %v7835, 4294901760
    %v8506 = vsub.f32 %v7835, %v8505
    %v8507 = vand.u32 %v8506, 4294901760
    %8508 = vmatpush.msra.mxu0 %v8507
    %v8509 = vand.u32 %v7834, 4294901760
    %v8510 = vsub.f32 %v7834, %v8509
    %v8511 = vand.u32 %v8510, 4294901760
    %8512 = vmatpush.msra.mxu0 %v8511
    %v8513 = vand.u32 %v7833, 4294901760
    %v8514 = vsub.f32 %v7833, %v8513
    %v8515 = vand.u32 %v8514, 4294901760
    %8516 = vmatpush.msra.mxu0 %v8515
    %v8517 = vand.u32 %v7832, 4294901760
    %v8518 = vsub.f32 %v7832, %v8517
    %v8519 = vand.u32 %v8518, 4294901760
    %8520 = vmatpush.msra.mxu0 %v8519
    %v8521 = vand.u32 %v3611, 4294901760
    %8522 = vmatmul.f32.gmra.mxu0 %v8521
    %v8523 = vpop.f32.mrf.mxu0
    %v8524 = vadd.f32 %v8401, %v8523
    %v8525 = vand.u32 %v3614, 4294901760
    %8526 = vmatmul.f32.gmra.mxu0 %v8525
    %v8527 = vpop.f32.mrf.mxu0
    %v8528 = vadd.f32 %v8407, %v8527
    %v8529 = vand.u32 %v3617, 4294901760
    %8530 = vmatmul.f32.gmra.mxu0 %v8529
    %v8531 = vpop.f32.mrf.mxu0
    %v8532 = vadd.f32 %v8413, %v8531
    %v8533 = vand.u32 %v3620, 4294901760
    %8534 = vmatmul.f32.gmra.mxu0 %v8533
    %v8535 = vpop.f32.mrf.mxu0
    %v8536 = vadd.f32 %v8419, %v8535
    %v8537 = vand.u32 %v3623, 4294901760
    %8538 = vmatmul.f32.gmra.mxu0 %v8537
    %v8539 = vpop.f32.mrf.mxu0
    %v8540 = vadd.f32 %v8425, %v8539
    %v8541 = vand.u32 %v3626, 4294901760
    %8542 = vmatmul.f32.gmra.mxu0 %v8541
    %v8543 = vpop.f32.mrf.mxu0
    %v8544 = vadd.f32 %v8431, %v8543
    %v8545 = vand.u32 %v3629, 4294901760
    %8546 = vmatmul.f32.gmra.mxu0 %v8545
    %v8547 = vpop.f32.mrf.mxu0
    %v8548 = vadd.f32 %v8437, %v8547
    %v8549 = vand.u32 %v3632, 4294901760
    %8550 = vmatmul.f32.gmra.mxu0 %v8549
    %v8551 = vpop.f32.mrf.mxu0
    %v8552 = vadd.f32 %v8443, %v8551
    %v8553 = vand.u32 %v3635, 4294901760
    %8554 = vmatmul.f32.gmra.mxu0 %v8553
    %v8555 = vpop.f32.mrf.mxu0
    %v8556 = vadd.f32 %v8449, %v8555
    %v8557 = vand.u32 %v3638, 4294901760
    %8558 = vmatmul.f32.gmra.mxu0 %v8557
    %v8559 = vpop.f32.mrf.mxu0
    %v8560 = vadd.f32 %v8455, %v8559
    %v8561 = vand.u32 %v3641, 4294901760
    %8562 = vmatmul.f32.gmra.mxu0 %v8561
    %v8563 = vpop.f32.mrf.mxu0
    %v8564 = vadd.f32 %v8461, %v8563
    %v8565 = vand.u32 %v3644, 4294901760
    %8566 = vmatmul.f32.gmra.mxu0 %v8565
    %v8567 = vpop.f32.mrf.mxu0
    %v8568 = vadd.f32 %v8467, %v8567
    %v8569 = vand.u32 %v3647, 4294901760
    %8570 = vmatmul.f32.gmra.mxu0 %v8569
    %v8571 = vpop.f32.mrf.mxu0
    %v8572 = vadd.f32 %v8473, %v8571
    %v8573 = vand.u32 %v3650, 4294901760
    %8574 = vmatmul.f32.gmra.mxu0 %v8573
    %v8575 = vpop.f32.mrf.mxu0
    %v8576 = vadd.f32 %v8479, %v8575
    %v8577 = vand.u32 %v3653, 4294901760
    %8578 = vmatmul.f32.gmra.mxu0 %v8577
    %v8579 = vpop.f32.mrf.mxu0
    %v8580 = vadd.f32 %v8485, %v8579
    %v8581 = vand.u32 %v3656, 4294901760
    %8582 = vmatmul.f32.gmra.mxu0 %v8581
    %v8583 = vpop.f32.mrf.mxu0
    %v8584 = vadd.f32 %v8491, %v8583
    %8585 = vdwg.mxu0
    %8586 = vmatpush.msra.mxu0 0.0
    %8587 = vmatpush.msra.mxu0 0.0
    %8588 = vmatpush.msra.mxu0 0.0
    %8589 = vmatpush.msra.mxu0 0.0
    %8590 = vmatpush.msra.mxu0 0.0
    %8591 = vmatpush.msra.mxu0 0.0
    %8592 = vmatpush.msra.mxu0 0.0
    %8593 = vmatpush.msra.mxu0 0.0
    %8594 = vmatpush.msra.mxu0 0.0
    %8595 = vmatpush.msra.mxu0 0.0
    %8596 = vmatpush.msra.mxu0 0.0
    %8597 = vmatpush.msra.mxu0 0.0
    %v8598 = vand.u32 %v7835, 4294901760
    %8599 = vmatpush.msra.mxu0 %v8598
    %v8600 = vand.u32 %v7834, 4294901760
    %8601 = vmatpush.msra.mxu0 %v8600
    %v8602 = vand.u32 %v7833, 4294901760
    %8603 = vmatpush.msra.mxu0 %v8602
    %v8604 = vand.u32 %v7832, 4294901760
    %8605 = vmatpush.msra.mxu0 %v8604
    %v8606 = vand.u32 %v3611, 4294901760
    %8607 = vmatmul.f32.gmra.mxu0 %v8606
    %v8608 = vpop.f32.mrf.mxu0
    %v8609 = vadd.f32 %v8524, %v8608
    %v8610 = vand.u32 %v3614, 4294901760
    %8611 = vmatmul.f32.gmra.mxu0 %v8610
    %v8612 = vpop.f32.mrf.mxu0
    %v8613 = vadd.f32 %v8528, %v8612
    %v8614 = vand.u32 %v3617, 4294901760
    %8615 = vmatmul.f32.gmra.mxu0 %v8614
    %v8616 = vpop.f32.mrf.mxu0
    %v8617 = vadd.f32 %v8532, %v8616
    %v8618 = vand.u32 %v3620, 4294901760
    %8619 = vmatmul.f32.gmra.mxu0 %v8618
    %v8620 = vpop.f32.mrf.mxu0
    %v8621 = vadd.f32 %v8536, %v8620
    %v8622 = vand.u32 %v3623, 4294901760
    %8623 = vmatmul.f32.gmra.mxu0 %v8622
    %v8624 = vpop.f32.mrf.mxu0
    %v8625 = vadd.f32 %v8540, %v8624
    %v8626 = vand.u32 %v3626, 4294901760
    %8627 = vmatmul.f32.gmra.mxu0 %v8626
    %v8628 = vpop.f32.mrf.mxu0
    %v8629 = vadd.f32 %v8544, %v8628
    %v8630 = vand.u32 %v3629, 4294901760
    %8631 = vmatmul.f32.gmra.mxu0 %v8630
    %v8632 = vpop.f32.mrf.mxu0
    %v8633 = vadd.f32 %v8548, %v8632
    %v8634 = vand.u32 %v3632, 4294901760
    %8635 = vmatmul.f32.gmra.mxu0 %v8634
    %v8636 = vpop.f32.mrf.mxu0
    %v8637 = vadd.f32 %v8552, %v8636
    %v8638 = vand.u32 %v3635, 4294901760
    %8639 = vmatmul.f32.gmra.mxu0 %v8638
    %v8640 = vpop.f32.mrf.mxu0
    %v8641 = vadd.f32 %v8556, %v8640
    %v8642 = vand.u32 %v3638, 4294901760
    %8643 = vmatmul.f32.gmra.mxu0 %v8642
    %v8644 = vpop.f32.mrf.mxu0
    %v8645 = vadd.f32 %v8560, %v8644
    %v8646 = vand.u32 %v3641, 4294901760
    %8647 = vmatmul.f32.gmra.mxu0 %v8646
    %v8648 = vpop.f32.mrf.mxu0
    %v8649 = vadd.f32 %v8564, %v8648
    %v8650 = vand.u32 %v3644, 4294901760
    %8651 = vmatmul.f32.gmra.mxu0 %v8650
    %v8652 = vpop.f32.mrf.mxu0
    %v8653 = vadd.f32 %v8568, %v8652
    %v8654 = vand.u32 %v3647, 4294901760
    %8655 = vmatmul.f32.gmra.mxu0 %v8654
    %v8656 = vpop.f32.mrf.mxu0
    %v8657 = vadd.f32 %v8572, %v8656
    %v8658 = vand.u32 %v3650, 4294901760
    %8659 = vmatmul.f32.gmra.mxu0 %v8658
    %v8660 = vpop.f32.mrf.mxu0
    %v8661 = vadd.f32 %v8576, %v8660
    %v8662 = vand.u32 %v3653, 4294901760
    %8663 = vmatmul.f32.gmra.mxu0 %v8662
    %v8664 = vpop.f32.mrf.mxu0
    %v8665 = vadd.f32 %v8580, %v8664
    %v8666 = vand.u32 %v3656, 4294901760
    %8667 = vmatmul.f32.gmra.mxu0 %v8666
    %v8668 = vpop.f32.mrf.mxu0
    %v8669 = vadd.f32 %v8584, %v8668
    %8670 = vdwg.mxu0
    %v8671 = vadd.f32 %v3594, %v8609
    %v8672 = vadd.f32 %v3595, %v8613
    %v8673 = vadd.f32 %v3596, %v8617
    %v8674 = vadd.f32 %v3597, %v8621
    %v8675 = vadd.f32 %v3598, %v8625
    %v8676 = vadd.f32 %v3599, %v8629
    %v8677 = vadd.f32 %v3600, %v8633
    %v8678 = vadd.f32 %v3601, %v8637
    %v8679 = vadd.f32 %v3602, %v8641
    %v8680 = vadd.f32 %v3603, %v8645
    %v8681 = vadd.f32 %v3604, %v8649
    %v8682 = vadd.f32 %v3605, %v8653
    %v8683 = vadd.f32 %v3606, %v8657
    %v8684 = vadd.f32 %v3607, %v8661
    %v8685 = vadd.f32 %v3608, %v8665
    %v8686 = vadd.f32 %v3609, %v8669
    %v8687 = vxor.u32 %v8671, 2147483648
    %v8688 = vxor.u32 %v8672, 2147483648
    %v8689 = vxor.u32 %v8673, 2147483648
    %v8690 = vxor.u32 %v8674, 2147483648
    %v8691 = vmul.f32 %v8687, 1.442695
    %v8692 = vpow.pop %v8691
    %v8693 = vmul.f32 %v8688, 1.442695
    %v8694 = vpow.pop %v8693
    %v8695 = vmul.f32 %v8689, 1.442695
    %v8696 = vpow.pop %v8695
    %v8697 = vmul.f32 %v8690, 1.442695
    %v8698 = vpow.pop %v8697
    %v8699 = vadd.f32 %v8692, 1.0
    %v8700 = vadd.f32 %v8694, 1.0
    %v8701 = vadd.f32 %v8696, 1.0
    %v8702 = vadd.f32 %v8698, 1.0
    %v8703 = vrcp.pop %v8699
    %v8704 = vmul.f32 %v8699, %v8703
    %v8705 = vsub.f32 1.0, %v8704
    %v8706 = vmul.f32 %v8703, %v8705
    %v8707 = vadd.f32 %v8703, %v8706
    %vm8708 = vweird.f32 %v8699
    %vm8709 = vweird.f32 %v8703
    %vm8710 = vmor %vm8708, %vm8709
    %v8711 = vsel %vm8710, %v8703, %v8707
    %v8712 = vand.u32 2147483647, %v8699
    %vm8713 = vcmp.eq.f32.partialorder %v8712, 8.507059e+37
    %v8714 = vand.u32 %v8699, 2147483648
    %v8715 = vor.u32 1.1754944e-38, %v8714
    %v8716 = vsel %vm8713, %v8715, %v8711
    %v8717 = vmul.f32 1.0, %v8716
    %v8718 = vrcp.pop %v8700
    %v8719 = vmul.f32 %v8700, %v8718
    %v8720 = vsub.f32 1.0, %v8719
    %v8721 = vmul.f32 %v8718, %v8720
    %v8722 = vadd.f32 %v8718, %v8721
    %vm8723 = vweird.f32 %v8700
    %vm8724 = vweird.f32 %v8718
    %vm8725 = vmor %vm8723, %vm8724
    %v8726 = vsel %vm8725, %v8718, %v8722
    %v8727 = vand.u32 2147483647, %v8700
    %vm8728 = vcmp.eq.f32.partialorder %v8727, 8.507059e+37
    %v8729 = vand.u32 %v8700, 2147483648
    %v8730 = vor.u32 1.1754944e-38, %v8729
    %v8731 = vsel %vm8728, %v8730, %v8726
    %v8732 = vmul.f32 1.0, %v8731
    %v8733 = vrcp.pop %v8701
    %v8734 = vmul.f32 %v8701, %v8733
    %v8735 = vsub.f32 1.0, %v8734
    %v8736 = vmul.f32 %v8733, %v8735
    %v8737 = vadd.f32 %v8733, %v8736
    %vm8738 = vweird.f32 %v8701
    %vm8739 = vweird.f32 %v8733
    %vm8740 = vmor %vm8738, %vm8739
    %v8741 = vsel %vm8740, %v8733, %v8737
    %v8742 = vand.u32 2147483647, %v8701
    %vm8743 = vcmp.eq.f32.partialorder %v8742, 8.507059e+37
    %v8744 = vand.u32 %v8701, 2147483648
    %v8745 = vor.u32 1.1754944e-38, %v8744
    %v8746 = vsel %vm8743, %v8745, %v8741
    %v8747 = vmul.f32 1.0, %v8746
    %v8748 = vrcp.pop %v8702
    %v8749 = vmul.f32 %v8702, %v8748
    %v8750 = vsub.f32 1.0, %v8749
    %v8751 = vmul.f32 %v8748, %v8750
    %v8752 = vadd.f32 %v8748, %v8751
    %vm8753 = vweird.f32 %v8702
    %vm8754 = vweird.f32 %v8748
    %vm8755 = vmor %vm8753, %vm8754
    %v8756 = vsel %vm8755, %v8748, %v8752
    %v8757 = vand.u32 2147483647, %v8702
    %vm8758 = vcmp.eq.f32.partialorder %v8757, 8.507059e+37
    %v8759 = vand.u32 %v8702, 2147483648
    %v8760 = vor.u32 1.1754944e-38, %v8759
    %v8761 = vsel %vm8758, %v8760, %v8756
    %v8762 = vmul.f32 1.0, %v8761
    %v8763 = vxor.u32 %v8675, 2147483648
    %v8764 = vxor.u32 %v8676, 2147483648
    %v8765 = vxor.u32 %v8677, 2147483648
    %v8766 = vxor.u32 %v8678, 2147483648
    %v8767 = vmul.f32 %v8763, 1.442695
    %v8768 = vpow.pop %v8767
    %v8769 = vmul.f32 %v8764, 1.442695
    %v8770 = vpow.pop %v8769
    %v8771 = vmul.f32 %v8765, 1.442695
    %v8772 = vpow.pop %v8771
    %v8773 = vmul.f32 %v8766, 1.442695
    %v8774 = vpow.pop %v8773
    %v8775 = vadd.f32 %v8768, 1.0
    %v8776 = vadd.f32 %v8770, 1.0
    %v8777 = vadd.f32 %v8772, 1.0
    %v8778 = vadd.f32 %v8774, 1.0
    %v8779 = vrcp.pop %v8775
    %v8780 = vmul.f32 %v8775, %v8779
    %v8781 = vsub.f32 1.0, %v8780
    %v8782 = vmul.f32 %v8779, %v8781
    %v8783 = vadd.f32 %v8779, %v8782
    %vm8784 = vweird.f32 %v8775
    %vm8785 = vweird.f32 %v8779
    %vm8786 = vmor %vm8784, %vm8785
    %v8787 = vsel %vm8786, %v8779, %v8783
    %v8788 = vand.u32 2147483647, %v8775
    %vm8789 = vcmp.eq.f32.partialorder %v8788, 8.507059e+37
    %v8790 = vand.u32 %v8775, 2147483648
    %v8791 = vor.u32 1.1754944e-38, %v8790
    %v8792 = vsel %vm8789, %v8791, %v8787
    %v8793 = vmul.f32 1.0, %v8792
    %v8794 = vrcp.pop %v8776
    %v8795 = vmul.f32 %v8776, %v8794
    %v8796 = vsub.f32 1.0, %v8795
    %v8797 = vmul.f32 %v8794, %v8796
    %v8798 = vadd.f32 %v8794, %v8797
    %vm8799 = vweird.f32 %v8776
    %vm8800 = vweird.f32 %v8794
    %vm8801 = vmor %vm8799, %vm8800
    %v8802 = vsel %vm8801, %v8794, %v8798
    %v8803 = vand.u32 2147483647, %v8776
    %vm8804 = vcmp.eq.f32.partialorder %v8803, 8.507059e+37
    %v8805 = vand.u32 %v8776, 2147483648
    %v8806 = vor.u32 1.1754944e-38, %v8805
    %v8807 = vsel %vm8804, %v8806, %v8802
    %v8808 = vmul.f32 1.0, %v8807
    %v8809 = vrcp.pop %v8777
    %v8810 = vmul.f32 %v8777, %v8809
    %v8811 = vsub.f32 1.0, %v8810
    %v8812 = vmul.f32 %v8809, %v8811
    %v8813 = vadd.f32 %v8809, %v8812
    %vm8814 = vweird.f32 %v8777
    %vm8815 = vweird.f32 %v8809
    %vm8816 = vmor %vm8814, %vm8815
    %v8817 = vsel %vm8816, %v8809, %v8813
    %v8818 = vand.u32 2147483647, %v8777
    %vm8819 = vcmp.eq.f32.partialorder %v8818, 8.507059e+37
    %v8820 = vand.u32 %v8777, 2147483648
    %v8821 = vor.u32 1.1754944e-38, %v8820
    %v8822 = vsel %vm8819, %v8821, %v8817
    %v8823 = vmul.f32 1.0, %v8822
    %v8824 = vrcp.pop %v8778
    %v8825 = vmul.f32 %v8778, %v8824
    %v8826 = vsub.f32 1.0, %v8825
    %v8827 = vmul.f32 %v8824, %v8826
    %v8828 = vadd.f32 %v8824, %v8827
    %vm8829 = vweird.f32 %v8778
    %vm8830 = vweird.f32 %v8824
    %vm8831 = vmor %vm8829, %vm8830
    %v8832 = vsel %vm8831, %v8824, %v8828
    %v8833 = vand.u32 2147483647, %v8778
    %vm8834 = vcmp.eq.f32.partialorder %v8833, 8.507059e+37
    %v8835 = vand.u32 %v8778, 2147483648
    %v8836 = vor.u32 1.1754944e-38, %v8835
    %v8837 = vsel %vm8834, %v8836, %v8832
    %v8838 = vmul.f32 1.0, %v8837
    %v8839 = vtanh.pop %v8679
    %v8840 = vtanh.pop %v8680
    %v8841 = vtanh.pop %v8681
    %v8842 = vtanh.pop %v8682
    %v8843 = vxor.u32 %v8683, 2147483648
    %v8844 = vxor.u32 %v8684, 2147483648
    %v8845 = vxor.u32 %v8685, 2147483648
    %v8846 = vxor.u32 %v8686, 2147483648
    %v8847 = vmul.f32 %v8843, 1.442695
    %v8848 = vpow.pop %v8847
    %v8849 = vmul.f32 %v8844, 1.442695
    %v8850 = vpow.pop %v8849
    %v8851 = vmul.f32 %v8845, 1.442695
    %v8852 = vpow.pop %v8851
    %v8853 = vmul.f32 %v8846, 1.442695
    %v8854 = vpow.pop %v8853
    %v8855 = vadd.f32 %v8848, 1.0
    %v8856 = vadd.f32 %v8850, 1.0
    %v8857 = vadd.f32 %v8852, 1.0
    %v8858 = vadd.f32 %v8854, 1.0
    %v8859 = vrcp.pop %v8855
    %v8860 = vmul.f32 %v8855, %v8859
    %v8861 = vsub.f32 1.0, %v8860
    %v8862 = vmul.f32 %v8859, %v8861
    %v8863 = vadd.f32 %v8859, %v8862
    %vm8864 = vweird.f32 %v8855
    %vm8865 = vweird.f32 %v8859
    %vm8866 = vmor %vm8864, %vm8865
    %v8867 = vsel %vm8866, %v8859, %v8863
    %v8868 = vand.u32 2147483647, %v8855
    %vm8869 = vcmp.eq.f32.partialorder %v8868, 8.507059e+37
    %v8870 = vand.u32 %v8855, 2147483648
    %v8871 = vor.u32 1.1754944e-38, %v8870
    %v8872 = vsel %vm8869, %v8871, %v8867
    %v8873 = vmul.f32 1.0, %v8872
    %v8874 = vrcp.pop %v8856
    %v8875 = vmul.f32 %v8856, %v8874
    %v8876 = vsub.f32 1.0, %v8875
    %v8877 = vmul.f32 %v8874, %v8876
    %v8878 = vadd.f32 %v8874, %v8877
    %vm8879 = vweird.f32 %v8856
    %vm8880 = vweird.f32 %v8874
    %vm8881 = vmor %vm8879, %vm8880
    %v8882 = vsel %vm8881, %v8874, %v8878
    %v8883 = vand.u32 2147483647, %v8856
    %vm8884 = vcmp.eq.f32.partialorder %v8883, 8.507059e+37
    %v8885 = vand.u32 %v8856, 2147483648
    %v8886 = vor.u32 1.1754944e-38, %v8885
    %v8887 = vsel %vm8884, %v8886, %v8882
    %v8888 = vmul.f32 1.0, %v8887
    %v8889 = vrcp.pop %v8857
    %v8890 = vmul.f32 %v8857, %v8889
    %v8891 = vsub.f32 1.0, %v8890
    %v8892 = vmul.f32 %v8889, %v8891
    %v8893 = vadd.f32 %v8889, %v8892
    %vm8894 = vweird.f32 %v8857
    %vm8895 = vweird.f32 %v8889
    %vm8896 = vmor %vm8894, %vm8895
    %v8897 = vsel %vm8896, %v8889, %v8893
    %v8898 = vand.u32 2147483647, %v8857
    %vm8899 = vcmp.eq.f32.partialorder %v8898, 8.507059e+37
    %v8900 = vand.u32 %v8857, 2147483648
    %v8901 = vor.u32 1.1754944e-38, %v8900
    %v8902 = vsel %vm8899, %v8901, %v8897
    %v8903 = vmul.f32 1.0, %v8902
    %v8904 = vrcp.pop %v8858
    %v8905 = vmul.f32 %v8858, %v8904
    %v8906 = vsub.f32 1.0, %v8905
    %v8907 = vmul.f32 %v8904, %v8906
    %v8908 = vadd.f32 %v8904, %v8907
    %vm8909 = vweird.f32 %v8858
    %vm8910 = vweird.f32 %v8904
    %vm8911 = vmor %vm8909, %vm8910
    %v8912 = vsel %vm8911, %v8904, %v8908
    %v8913 = vand.u32 2147483647, %v8858
    %vm8914 = vcmp.eq.f32.partialorder %v8913, 8.507059e+37
    %v8915 = vand.u32 %v8858, 2147483648
    %v8916 = vor.u32 1.1754944e-38, %v8915
    %v8917 = vsel %vm8914, %v8916, %v8912
    %v8918 = vmul.f32 1.0, %v8917
    %v8919 = vmul.f32 %v8793, %v7824
    %v8920 = vmul.f32 %v8808, %v7825
    %v8921 = vmul.f32 %v8823, %v7826
    %v8922 = vmul.f32 %v8838, %v7827
    %v8923 = vmul.f32 %v8717, %v8839
    %v8924 = vmul.f32 %v8732, %v8840
    %v8925 = vmul.f32 %v8747, %v8841
    %v8926 = vmul.f32 %v8762, %v8842
    %v8927 = vadd.f32 %v8919, %v8923
    %v8928 = vadd.f32 %v8920, %v8924
    %v8929 = vadd.f32 %v8921, %v8925
    %v8930 = vadd.f32 %v8922, %v8926
    %v8931 = vtanh.pop %v8927
    %v8932 = vtanh.pop %v8928
    %v8933 = vtanh.pop %v8929
    %v8934 = vtanh.pop %v8930
    %v8935 = vmul.f32 %v8873, %v8931
    %v8936 = vmul.f32 %v8888, %v8932
    %v8937 = vmul.f32 %v8903, %v8933
    %v8938 = vmul.f32 %v8918, %v8934
    %8939 = vmatpush.msra.mxu0 0.0
    %8940 = vmatpush.msra.mxu0 0.0
    %8941 = vmatpush.msra.mxu0 0.0
    %8942 = vmatpush.msra.mxu0 0.0
    %8943 = vmatpush.msra.mxu0 0.0
    %8944 = vmatpush.msra.mxu0 0.0
    %8945 = vmatpush.msra.mxu0 0.0
    %8946 = vmatpush.msra.mxu0 0.0
    %8947 = vmatpush.msra.mxu0 0.0
    %8948 = vmatpush.msra.mxu0 0.0
    %8949 = vmatpush.msra.mxu0 0.0
    %8950 = vmatpush.msra.mxu0 0.0
    %v8951 = vand.u32 %v8938, 4294901760
    %8952 = vmatpush.msra.mxu0 %v8951
    %v8953 = vand.u32 %v8937, 4294901760
    %8954 = vmatpush.msra.mxu0 %v8953
    %v8955 = vand.u32 %v8936, 4294901760
    %8956 = vmatpush.msra.mxu0 %v8955
    %v8957 = vand.u32 %v8935, 4294901760
    %8958 = vmatpush.msra.mxu0 %v8957
    %v8959 = vand.u32 %v4525, 4294901760
    %v8960 = vsub.f32 %v4525, %v8959
    %v8961 = vand.u32 %v8960, 4294901760
    %v8962 = vsub.f32 %v8960, %v8961
    %v8963 = vand.u32 %v8962, 4294901760
    %8964 = vmatmul.f32.gmra.mxu0 %v8963
    %v8965 = vpop.f32.mrf.mxu0
    %v8966 = vadd.f32 0.0, %v8965
    %8967 = vdwg.mxu0
    %8968 = vmatpush.msra.mxu0 0.0
    %8969 = vmatpush.msra.mxu0 0.0
    %8970 = vmatpush.msra.mxu0 0.0
    %8971 = vmatpush.msra.mxu0 0.0
    %8972 = vmatpush.msra.mxu0 0.0
    %8973 = vmatpush.msra.mxu0 0.0
    %8974 = vmatpush.msra.mxu0 0.0
    %8975 = vmatpush.msra.mxu0 0.0
    %8976 = vmatpush.msra.mxu0 0.0
    %8977 = vmatpush.msra.mxu0 0.0
    %8978 = vmatpush.msra.mxu0 0.0
    %8979 = vmatpush.msra.mxu0 0.0
    %v8980 = vand.u32 %v8938, 4294901760
    %v8981 = vsub.f32 %v8938, %v8980
    %v8982 = vand.u32 %v8981, 4294901760
    %v8983 = vsub.f32 %v8981, %v8982
    %v8984 = vand.u32 %v8983, 4294901760
    %8985 = vmatpush.msra.mxu0 %v8984
    %v8986 = vand.u32 %v8937, 4294901760
    %v8987 = vsub.f32 %v8937, %v8986
    %v8988 = vand.u32 %v8987, 4294901760
    %v8989 = vsub.f32 %v8987, %v8988
    %v8990 = vand.u32 %v8989, 4294901760
    %8991 = vmatpush.msra.mxu0 %v8990
    %v8992 = vand.u32 %v8936, 4294901760
    %v8993 = vsub.f32 %v8936, %v8992
    %v8994 = vand.u32 %v8993, 4294901760
    %v8995 = vsub.f32 %v8993, %v8994
    %v8996 = vand.u32 %v8995, 4294901760
    %8997 = vmatpush.msra.mxu0 %v8996
    %v8998 = vand.u32 %v8935, 4294901760
    %v8999 = vsub.f32 %v8935, %v8998
    %v9000 = vand.u32 %v8999, 4294901760
    %v9001 = vsub.f32 %v8999, %v9000
    %v9002 = vand.u32 %v9001, 4294901760
    %9003 = vmatpush.msra.mxu0 %v9002
    %v9004 = vand.u32 %v4525, 4294901760
    %9005 = vmatmul.f32.gmra.mxu0 %v9004
    %v9006 = vpop.f32.mrf.mxu0
    %v9007 = vadd.f32 %v8966, %v9006
    %9008 = vdwg.mxu0
    %9009 = vmatpush.msra.mxu0 0.0
    %9010 = vmatpush.msra.mxu0 0.0
    %9011 = vmatpush.msra.mxu0 0.0
    %9012 = vmatpush.msra.mxu0 0.0
    %9013 = vmatpush.msra.mxu0 0.0
    %9014 = vmatpush.msra.mxu0 0.0
    %9015 = vmatpush.msra.mxu0 0.0
    %9016 = vmatpush.msra.mxu0 0.0
    %9017 = vmatpush.msra.mxu0 0.0
    %9018 = vmatpush.msra.mxu0 0.0
    %9019 = vmatpush.msra.mxu0 0.0
    %9020 = vmatpush.msra.mxu0 0.0
    %v9021 = vand.u32 %v8938, 4294901760
    %v9022 = vsub.f32 %v8938, %v9021
    %9023 = vmatpush.msra.mxu0 %v9022
    %v9024 = vand.u32 %v8937, 4294901760
    %v9025 = vsub.f32 %v8937, %v9024
    %9026 = vmatpush.msra.mxu0 %v9025
    %v9027 = vand.u32 %v8936, 4294901760
    %v9028 = vsub.f32 %v8936, %v9027
    %9029 = vmatpush.msra.mxu0 %v9028
    %v9030 = vand.u32 %v8935, 4294901760
    %v9031 = vsub.f32 %v8935, %v9030
    %9032 = vmatpush.msra.mxu0 %v9031
    %v9033 = vand.u32 %v4525, 4294901760
    %v9034 = vsub.f32 %v4525, %v9033
    %9035 = vmatmul.f32.gmra.mxu0 %v9034
    %v9036 = vpop.f32.mrf.mxu0
    %v9037 = vadd.f32 %v9007, %v9036
    %9038 = vdwg.mxu0
    %9039 = vmatpush.msra.mxu0 0.0
    %9040 = vmatpush.msra.mxu0 0.0
    %9041 = vmatpush.msra.mxu0 0.0
    %9042 = vmatpush.msra.mxu0 0.0
    %9043 = vmatpush.msra.mxu0 0.0
    %9044 = vmatpush.msra.mxu0 0.0
    %9045 = vmatpush.msra.mxu0 0.0
    %9046 = vmatpush.msra.mxu0 0.0
    %9047 = vmatpush.msra.mxu0 0.0
    %9048 = vmatpush.msra.mxu0 0.0
    %9049 = vmatpush.msra.mxu0 0.0
    %9050 = vmatpush.msra.mxu0 0.0
    %v9051 = vand.u32 %v8938, 4294901760
    %9052 = vmatpush.msra.mxu0 %v9051
    %v9053 = vand.u32 %v8937, 4294901760
    %9054 = vmatpush.msra.mxu0 %v9053
    %v9055 = vand.u32 %v8936, 4294901760
    %9056 = vmatpush.msra.mxu0 %v9055
    %v9057 = vand.u32 %v8935, 4294901760
    %9058 = vmatpush.msra.mxu0 %v9057
    %v9059 = vand.u32 %v4525, 4294901760
    %v9060 = vsub.f32 %v4525, %v9059
    %v9061 = vand.u32 %v9060, 4294901760
    %9062 = vmatmul.f32.gmra.mxu0 %v9061
    %v9063 = vpop.f32.mrf.mxu0
    %v9064 = vadd.f32 %v9037, %v9063
    %9065 = vdwg.mxu0
    %9066 = vmatpush.msra.mxu0 0.0
    %9067 = vmatpush.msra.mxu0 0.0
    %9068 = vmatpush.msra.mxu0 0.0
    %9069 = vmatpush.msra.mxu0 0.0
    %9070 = vmatpush.msra.mxu0 0.0
    %9071 = vmatpush.msra.mxu0 0.0
    %9072 = vmatpush.msra.mxu0 0.0
    %9073 = vmatpush.msra.mxu0 0.0
    %9074 = vmatpush.msra.mxu0 0.0
    %9075 = vmatpush.msra.mxu0 0.0
    %9076 = vmatpush.msra.mxu0 0.0
    %9077 = vmatpush.msra.mxu0 0.0
    %v9078 = vand.u32 %v8938, 4294901760
    %v9079 = vsub.f32 %v8938, %v9078
    %v9080 = vand.u32 %v9079, 4294901760
    %9081 = vmatpush.msra.mxu0 %v9080
    %v9082 = vand.u32 %v8937, 4294901760
    %v9083 = vsub.f32 %v8937, %v9082
    %v9084 = vand.u32 %v9083, 4294901760
    %9085 = vmatpush.msra.mxu0 %v9084
    %v9086 = vand.u32 %v8936, 4294901760
    %v9087 = vsub.f32 %v8936, %v9086
    %v9088 = vand.u32 %v9087, 4294901760
    %9089 = vmatpush.msra.mxu0 %v9088
    %v9090 = vand.u32 %v8935, 4294901760
    %v9091 = vsub.f32 %v8935, %v9090
    %v9092 = vand.u32 %v9091, 4294901760
    %9093 = vmatpush.msra.mxu0 %v9092
    %v9094 = vand.u32 %v4525, 4294901760
    %9095 = vmatmul.f32.gmra.mxu0 %v9094
    %v9096 = vpop.f32.mrf.mxu0
    %v9097 = vadd.f32 %v9064, %v9096
    %9098 = vdwg.mxu0
    %9099 = vmatpush.msra.mxu0 0.0
    %9100 = vmatpush.msra.mxu0 0.0
    %9101 = vmatpush.msra.mxu0 0.0
    %9102 = vmatpush.msra.mxu0 0.0
    %9103 = vmatpush.msra.mxu0 0.0
    %9104 = vmatpush.msra.mxu0 0.0
    %9105 = vmatpush.msra.mxu0 0.0
    %9106 = vmatpush.msra.mxu0 0.0
    %9107 = vmatpush.msra.mxu0 0.0
    %9108 = vmatpush.msra.mxu0 0.0
    %9109 = vmatpush.msra.mxu0 0.0
    %9110 = vmatpush.msra.mxu0 0.0
    %v9111 = vand.u32 %v8938, 4294901760
    %9112 = vmatpush.msra.mxu0 %v9111
    %v9113 = vand.u32 %v8937, 4294901760
    %9114 = vmatpush.msra.mxu0 %v9113
    %v9115 = vand.u32 %v8936, 4294901760
    %9116 = vmatpush.msra.mxu0 %v9115
    %v9117 = vand.u32 %v8935, 4294901760
    %9118 = vmatpush.msra.mxu0 %v9117
    %v9119 = vand.u32 %v4525, 4294901760
    %9120 = vmatmul.f32.gmra.mxu0 %v9119
    %v9121 = vpop.f32.mrf.mxu0
    %v9122 = vadd.f32 %v9097, %v9121
    %9123 = vdwg.mxu0
    %v9124 = vmax.f32 %v4710, %v5813
    %v9125 = vmax.f32 %v9124, %v6916
    %v9126 = vmax.f32 %v9125, %v8019
    %v9127 = vmax.f32 %v9126, %v9122
    %v9128 = vsub.f32 %v4710, %v9127
    %v9129 = vmul.f32 %v9128, 1.442695
    %v9130 = vpow.pop %v9129
    %v9131 = vsub.f32 %v5813, %v9127
    %v9132 = vmul.f32 %v9131, 1.442695
    %v9133 = vpow.pop %v9132
    %v9134 = vsub.f32 %v6916, %v9127
    %v9135 = vmul.f32 %v9134, 1.442695
    %v9136 = vpow.pop %v9135
    %v9137 = vsub.f32 %v8019, %v9127
    %v9138 = vmul.f32 %v9137, 1.442695
    %v9139 = vpow.pop %v9138
    %v9140 = vsub.f32 %v9122, %v9127
    %v9141 = vmul.f32 %v9140, 1.442695
    %v9142 = vpow.pop %v9141
    %v9143 = vperm.slane %v9130, 0
    %v9144 = vmul.f32 %v9143, %v4520
    %v9145 = vmul.f32 %v9143, %v4521
    %v9146 = vmul.f32 %v9143, %v4522
    %v9147 = vmul.f32 %v9143, %v4523
    %v9148 = vadd.f32 %v9130, %v9133
    %v9149 = vperm.slane %v9133, 0
    %v9150 = vmul.f32 %v9149, %v5626
    %v9151 = vmul.f32 %v9149, %v5627
    %v9152 = vmul.f32 %v9149, %v5628
    %v9153 = vmul.f32 %v9149, %v5629
    %v9154 = vadd.f32 %v9144, %v9150
    %v9155 = vadd.f32 %v9145, %v9151
    %v9156 = vadd.f32 %v9146, %v9152
    %v9157 = vadd.f32 %v9147, %v9153
    %v9158 = vadd.f32 %v9148, %v9136
    %v9159 = vperm.slane %v9136, 0
    %v9160 = vmul.f32 %v9159, %v6729
    %v9161 = vmul.f32 %v9159, %v6730
    %v9162 = vmul.f32 %v9159, %v6731
    %v9163 = vmul.f32 %v9159, %v6732
    %v9164 = vadd.f32 %v9154, %v9160
    %v9165 = vadd.f32 %v9155, %v9161
    %v9166 = vadd.f32 %v9156, %v9162
    %v9167 = vadd.f32 %v9157, %v9163
    %v9168 = vadd.f32 %v9158, %v9139
    %v9169 = vperm.slane %v9139, 0
    %v9170 = vmul.f32 %v9169, %v7832
    %v9171 = vmul.f32 %v9169, %v7833
    %v9172 = vmul.f32 %v9169, %v7834
    %v9173 = vmul.f32 %v9169, %v7835
    %v9174 = vadd.f32 %v9164, %v9170
    %v9175 = vadd.f32 %v9165, %v9171
    %v9176 = vadd.f32 %v9166, %v9172
    %v9177 = vadd.f32 %v9167, %v9173
    %v9178 = vadd.f32 %v9168, %v9142
    %v9179 = vperm.slane %v9142, 0
    %v9180 = vmul.f32 %v9179, %v8935
    %v9181 = vmul.f32 %v9179, %v8936
    %v9182 = vmul.f32 %v9179, %v8937
    %v9183 = vmul.f32 %v9179, %v8938
    %v9184 = vadd.f32 %v9174, %v9180
    %v9185 = vadd.f32 %v9175, %v9181
    %v9186 = vadd.f32 %v9176, %v9182
    %v9187 = vadd.f32 %v9177, %v9183
    %v9188 = vperm.slane %v9178, 0
    %v9189 = vrcp.pop %v9188
    %v9190 = vmul.f32 %v9188, %v9189
    %v9191 = vsub.f32 1.0, %v9190
    %v9192 = vmul.f32 %v9189, %v9191
    %v9193 = vadd.f32 %v9189, %v9192
    %vm9194 = vweird.f32 %v9188
    %vm9195 = vweird.f32 %v9189
    %vm9196 = vmor %vm9194, %vm9195
    %v9197 = vsel %vm9196, %v9189, %v9193
    %v9198 = vand.u32 2147483647, %v9188
    %vm9199 = vcmp.eq.f32.partialorder %v9198, 8.507059e+37
    %v9200 = vand.u32 %v9188, 2147483648
    %v9201 = vor.u32 1.1754944e-38, %v9200
    %v9202 = vsel %vm9199, %v9201, %v9197
    %v9203 = vmul.f32 %v9184, %v9202
    %v9204 = vmul.f32 %v9185, %v9202
    %v9205 = vmul.f32 %v9186, %v9202
    %v9206 = vmul.f32 %v9187, %v9202
    %v9208 = vsel %vm677, %v86, 0
    %9210 = vmatpush.msra.mxu0 0.0
    %9211 = vmatpush.msra.mxu0 0.0
    %9212 = vmatpush.msra.mxu0 0.0
    %9213 = vmatpush.msra.mxu0 0.0
    %9214 = vmatpush.msra.mxu0 0.0
    %9215 = vmatpush.msra.mxu0 0.0
    %9216 = vmatpush.msra.mxu0 0.0
    %9217 = vmatpush.msra.mxu0 0.0
    %9218 = vmatpush.msra.mxu0 0.0
    %9219 = vmatpush.msra.mxu0 0.0
    %9220 = vmatpush.msra.mxu0 0.0
    %9221 = vmatpush.msra.mxu0 0.0
    %v9222 = vand.u32 %v9206, 4294901760
    %9223 = vmatpush.msra.mxu0 %v9222
    %v9224 = vand.u32 %v9205, 4294901760
    %9225 = vmatpush.msra.mxu0 %v9224
    %v9226 = vand.u32 %v9204, 4294901760
    %9227 = vmatpush.msra.mxu0 %v9226
    %v9228 = vand.u32 %v9203, 4294901760
    %9229 = vmatpush.msra.mxu0 %v9228
    %v9230 = vand.u32 %v9208, 4294901760
    %v9231 = vsub.f32 %v9208, %v9230
    %v9232 = vand.u32 %v9231, 4294901760
    %v9233 = vsub.f32 %v9231, %v9232
    %v9234 = vand.u32 %v9233, 4294901760
    %9235 = vmatmul.f32.gmra.mxu0 %v9234
    %v9236 = vpop.f32.mrf.mxu0
    %v9237 = vadd.f32 0.0, %v9236
    %9238 = vdwg.mxu0
    %9239 = vmatpush.msra.mxu0 0.0
    %9240 = vmatpush.msra.mxu0 0.0
    %9241 = vmatpush.msra.mxu0 0.0
    %9242 = vmatpush.msra.mxu0 0.0
    %9243 = vmatpush.msra.mxu0 0.0
    %9244 = vmatpush.msra.mxu0 0.0
    %9245 = vmatpush.msra.mxu0 0.0
    %9246 = vmatpush.msra.mxu0 0.0
    %9247 = vmatpush.msra.mxu0 0.0
    %9248 = vmatpush.msra.mxu0 0.0
    %9249 = vmatpush.msra.mxu0 0.0
    %9250 = vmatpush.msra.mxu0 0.0
    %v9251 = vand.u32 %v9206, 4294901760
    %v9252 = vsub.f32 %v9206, %v9251
    %v9253 = vand.u32 %v9252, 4294901760
    %v9254 = vsub.f32 %v9252, %v9253
    %v9255 = vand.u32 %v9254, 4294901760
    %9256 = vmatpush.msra.mxu0 %v9255
    %v9257 = vand.u32 %v9205, 4294901760
    %v9258 = vsub.f32 %v9205, %v9257
    %v9259 = vand.u32 %v9258, 4294901760
    %v9260 = vsub.f32 %v9258, %v9259
    %v9261 = vand.u32 %v9260, 4294901760
    %9262 = vmatpush.msra.mxu0 %v9261
    %v9263 = vand.u32 %v9204, 4294901760
    %v9264 = vsub.f32 %v9204, %v9263
    %v9265 = vand.u32 %v9264, 4294901760
    %v9266 = vsub.f32 %v9264, %v9265
    %v9267 = vand.u32 %v9266, 4294901760
    %9268 = vmatpush.msra.mxu0 %v9267
    %v9269 = vand.u32 %v9203, 4294901760
    %v9270 = vsub.f32 %v9203, %v9269
    %v9271 = vand.u32 %v9270, 4294901760
    %v9272 = vsub.f32 %v9270, %v9271
    %v9273 = vand.u32 %v9272, 4294901760
    %9274 = vmatpush.msra.mxu0 %v9273
    %v9275 = vand.u32 %v9208, 4294901760
    %9276 = vmatmul.f32.gmra.mxu0 %v9275
    %v9277 = vpop.f32.mrf.mxu0
    %v9278 = vadd.f32 %v9237, %v9277
    %9279 = vdwg.mxu0
    %9280 = vmatpush.msra.mxu0 0.0
    %9281 = vmatpush.msra.mxu0 0.0
    %9282 = vmatpush.msra.mxu0 0.0
    %9283 = vmatpush.msra.mxu0 0.0
    %9284 = vmatpush.msra.mxu0 0.0
    %9285 = vmatpush.msra.mxu0 0.0
    %9286 = vmatpush.msra.mxu0 0.0
    %9287 = vmatpush.msra.mxu0 0.0
    %9288 = vmatpush.msra.mxu0 0.0
    %9289 = vmatpush.msra.mxu0 0.0
    %9290 = vmatpush.msra.mxu0 0.0
    %9291 = vmatpush.msra.mxu0 0.0
    %v9292 = vand.u32 %v9206, 4294901760
    %v9293 = vsub.f32 %v9206, %v9292
    %9294 = vmatpush.msra.mxu0 %v9293
    %v9295 = vand.u32 %v9205, 4294901760
    %v9296 = vsub.f32 %v9205, %v9295
    %9297 = vmatpush.msra.mxu0 %v9296
    %v9298 = vand.u32 %v9204, 4294901760
    %v9299 = vsub.f32 %v9204, %v9298
    %9300 = vmatpush.msra.mxu0 %v9299
    %v9301 = vand.u32 %v9203, 4294901760
    %v9302 = vsub.f32 %v9203, %v9301
    %9303 = vmatpush.msra.mxu0 %v9302
    %v9304 = vand.u32 %v9208, 4294901760
    %v9305 = vsub.f32 %v9208, %v9304
    %9306 = vmatmul.f32.gmra.mxu0 %v9305
    %v9307 = vpop.f32.mrf.mxu0
    %v9308 = vadd.f32 %v9278, %v9307
    %9309 = vdwg.mxu0
    %9310 = vmatpush.msra.mxu0 0.0
    %9311 = vmatpush.msra.mxu0 0.0
    %9312 = vmatpush.msra.mxu0 0.0
    %9313 = vmatpush.msra.mxu0 0.0
    %9314 = vmatpush.msra.mxu0 0.0
    %9315 = vmatpush.msra.mxu0 0.0
    %9316 = vmatpush.msra.mxu0 0.0
    %9317 = vmatpush.msra.mxu0 0.0
    %9318 = vmatpush.msra.mxu0 0.0
    %9319 = vmatpush.msra.mxu0 0.0
    %9320 = vmatpush.msra.mxu0 0.0
    %9321 = vmatpush.msra.mxu0 0.0
    %v9322 = vand.u32 %v9206, 4294901760
    %9323 = vmatpush.msra.mxu0 %v9322
    %v9324 = vand.u32 %v9205, 4294901760
    %9325 = vmatpush.msra.mxu0 %v9324
    %v9326 = vand.u32 %v9204, 4294901760
    %9327 = vmatpush.msra.mxu0 %v9326
    %v9328 = vand.u32 %v9203, 4294901760
    %9329 = vmatpush.msra.mxu0 %v9328
    %v9330 = vand.u32 %v9208, 4294901760
    %v9331 = vsub.f32 %v9208, %v9330
    %v9332 = vand.u32 %v9331, 4294901760
    %9333 = vmatmul.f32.gmra.mxu0 %v9332
    %v9334 = vpop.f32.mrf.mxu0
    %v9335 = vadd.f32 %v9308, %v9334
    %9336 = vdwg.mxu0
    %9337 = vmatpush.msra.mxu0 0.0
    %9338 = vmatpush.msra.mxu0 0.0
    %9339 = vmatpush.msra.mxu0 0.0
    %9340 = vmatpush.msra.mxu0 0.0
    %9341 = vmatpush.msra.mxu0 0.0
    %9342 = vmatpush.msra.mxu0 0.0
    %9343 = vmatpush.msra.mxu0 0.0
    %9344 = vmatpush.msra.mxu0 0.0
    %9345 = vmatpush.msra.mxu0 0.0
    %9346 = vmatpush.msra.mxu0 0.0
    %9347 = vmatpush.msra.mxu0 0.0
    %9348 = vmatpush.msra.mxu0 0.0
    %v9349 = vand.u32 %v9206, 4294901760
    %v9350 = vsub.f32 %v9206, %v9349
    %v9351 = vand.u32 %v9350, 4294901760
    %9352 = vmatpush.msra.mxu0 %v9351
    %v9353 = vand.u32 %v9205, 4294901760
    %v9354 = vsub.f32 %v9205, %v9353
    %v9355 = vand.u32 %v9354, 4294901760
    %9356 = vmatpush.msra.mxu0 %v9355
    %v9357 = vand.u32 %v9204, 4294901760
    %v9358 = vsub.f32 %v9204, %v9357
    %v9359 = vand.u32 %v9358, 4294901760
    %9360 = vmatpush.msra.mxu0 %v9359
    %v9361 = vand.u32 %v9203, 4294901760
    %v9362 = vsub.f32 %v9203, %v9361
    %v9363 = vand.u32 %v9362, 4294901760
    %9364 = vmatpush.msra.mxu0 %v9363
    %v9365 = vand.u32 %v9208, 4294901760
    %9366 = vmatmul.f32.gmra.mxu0 %v9365
    %v9367 = vpop.f32.mrf.mxu0
    %v9368 = vadd.f32 %v9335, %v9367
    %9369 = vdwg.mxu0
    %9370 = vmatpush.msra.mxu0 0.0
    %9371 = vmatpush.msra.mxu0 0.0
    %9372 = vmatpush.msra.mxu0 0.0
    %9373 = vmatpush.msra.mxu0 0.0
    %9374 = vmatpush.msra.mxu0 0.0
    %9375 = vmatpush.msra.mxu0 0.0
    %9376 = vmatpush.msra.mxu0 0.0
    %9377 = vmatpush.msra.mxu0 0.0
    %9378 = vmatpush.msra.mxu0 0.0
    %9379 = vmatpush.msra.mxu0 0.0
    %9380 = vmatpush.msra.mxu0 0.0
    %9381 = vmatpush.msra.mxu0 0.0
    %v9382 = vand.u32 %v9206, 4294901760
    %9383 = vmatpush.msra.mxu0 %v9382
    %v9384 = vand.u32 %v9205, 4294901760
    %9385 = vmatpush.msra.mxu0 %v9384
    %v9386 = vand.u32 %v9204, 4294901760
    %9387 = vmatpush.msra.mxu0 %v9386
    %v9388 = vand.u32 %v9203, 4294901760
    %9389 = vmatpush.msra.mxu0 %v9388
    %v9390 = vand.u32 %v9208, 4294901760
    %9391 = vmatmul.f32.gmra.mxu0 %v9390
    %v9392 = vpop.f32.mrf.mxu0
    %v9393 = vadd.f32 %v9368, %v9392
    %9394 = vdwg.mxu0
    %vm9395 = vcmask 523264
    %v9397 = vsel %vm9395, %v85, 0
    %9399 = vmatpush.msra.mxu0 0.0
    %9400 = vmatpush.msra.mxu0 0.0
    %9401 = vmatpush.msra.mxu0 0.0
    %9402 = vmatpush.msra.mxu0 0.0
    %9403 = vmatpush.msra.mxu0 0.0
    %9404 = vmatpush.msra.mxu0 0.0
    %9405 = vmatpush.msra.mxu0 0.0
    %9406 = vmatpush.msra.mxu0 0.0
    %v9407 = vand.u32 %v3311, 4294901760
    %9408 = vmatpush.msra.mxu0 %v9407
    %v9409 = vand.u32 %v3310, 4294901760
    %9410 = vmatpush.msra.mxu0 %v9409
    %v9411 = vand.u32 %v3309, 4294901760
    %9412 = vmatpush.msra.mxu0 %v9411
    %v9413 = vand.u32 %v3308, 4294901760
    %9414 = vmatpush.msra.mxu0 %v9413
    %v9415 = vand.u32 %v3307, 4294901760
    %9416 = vmatpush.msra.mxu0 %v9415
    %v9417 = vand.u32 %v3306, 4294901760
    %9418 = vmatpush.msra.mxu0 %v9417
    %v9419 = vand.u32 %v3305, 4294901760
    %9420 = vmatpush.msra.mxu0 %v9419
    %v9421 = vand.u32 %v3304, 4294901760
    %9422 = vmatpush.msra.mxu0 %v9421
    %v9423 = vand.u32 %v9397, 4294901760
    %v9424 = vsub.f32 %v9397, %v9423
    %v9425 = vand.u32 %v9424, 4294901760
    %v9426 = vsub.f32 %v9424, %v9425
    %v9427 = vand.u32 %v9426, 4294901760
    %9428 = vmatmul.f32.gmra.mxu0 %v9427
    %v9429 = vpop.f32.mrf.mxu0
    %v9430 = vadd.f32 %v9393, %v9429
    %9431 = vdwg.mxu0
    %9432 = vmatpush.msra.mxu0 0.0
    %9433 = vmatpush.msra.mxu0 0.0
    %9434 = vmatpush.msra.mxu0 0.0
    %9435 = vmatpush.msra.mxu0 0.0
    %9436 = vmatpush.msra.mxu0 0.0
    %9437 = vmatpush.msra.mxu0 0.0
    %9438 = vmatpush.msra.mxu0 0.0
    %9439 = vmatpush.msra.mxu0 0.0
    %v9440 = vand.u32 %v3311, 4294901760
    %v9441 = vsub.f32 %v3311, %v9440
    %v9442 = vand.u32 %v9441, 4294901760
    %v9443 = vsub.f32 %v9441, %v9442
    %v9444 = vand.u32 %v9443, 4294901760
    %9445 = vmatpush.msra.mxu0 %v9444
    %v9446 = vand.u32 %v3310, 4294901760
    %v9447 = vsub.f32 %v3310, %v9446
    %v9448 = vand.u32 %v9447, 4294901760
    %v9449 = vsub.f32 %v9447, %v9448
    %v9450 = vand.u32 %v9449, 4294901760
    %9451 = vmatpush.msra.mxu0 %v9450
    %v9452 = vand.u32 %v3309, 4294901760
    %v9453 = vsub.f32 %v3309, %v9452
    %v9454 = vand.u32 %v9453, 4294901760
    %v9455 = vsub.f32 %v9453, %v9454
    %v9456 = vand.u32 %v9455, 4294901760
    %9457 = vmatpush.msra.mxu0 %v9456
    %v9458 = vand.u32 %v3308, 4294901760
    %v9459 = vsub.f32 %v3308, %v9458
    %v9460 = vand.u32 %v9459, 4294901760
    %v9461 = vsub.f32 %v9459, %v9460
    %v9462 = vand.u32 %v9461, 4294901760
    %9463 = vmatpush.msra.mxu0 %v9462
    %v9464 = vand.u32 %v3307, 4294901760
    %v9465 = vsub.f32 %v3307, %v9464
    %v9466 = vand.u32 %v9465, 4294901760
    %v9467 = vsub.f32 %v9465, %v9466
    %v9468 = vand.u32 %v9467, 4294901760
    %9469 = vmatpush.msra.mxu0 %v9468
    %v9470 = vand.u32 %v3306, 4294901760
    %v9471 = vsub.f32 %v3306, %v9470
    %v9472 = vand.u32 %v9471, 4294901760
    %v9473 = vsub.f32 %v9471, %v9472
    %v9474 = vand.u32 %v9473, 4294901760
    %9475 = vmatpush.msra.mxu0 %v9474
    %v9476 = vand.u32 %v3305, 4294901760
    %v9477 = vsub.f32 %v3305, %v9476
    %v9478 = vand.u32 %v9477, 4294901760
    %v9479 = vsub.f32 %v9477, %v9478
    %v9480 = vand.u32 %v9479, 4294901760
    %9481 = vmatpush.msra.mxu0 %v9480
    %v9482 = vand.u32 %v3304, 4294901760
    %v9483 = vsub.f32 %v3304, %v9482
    %v9484 = vand.u32 %v9483, 4294901760
    %v9485 = vsub.f32 %v9483, %v9484
    %v9486 = vand.u32 %v9485, 4294901760
    %9487 = vmatpush.msra.mxu0 %v9486
    %v9488 = vand.u32 %v9397, 4294901760
    %9489 = vmatmul.f32.gmra.mxu0 %v9488
    %v9490 = vpop.f32.mrf.mxu0
    %v9491 = vadd.f32 %v9430, %v9490
    %9492 = vdwg.mxu0
    %9493 = vmatpush.msra.mxu0 0.0
    %9494 = vmatpush.msra.mxu0 0.0
    %9495 = vmatpush.msra.mxu0 0.0
    %9496 = vmatpush.msra.mxu0 0.0
    %9497 = vmatpush.msra.mxu0 0.0
    %9498 = vmatpush.msra.mxu0 0.0
    %9499 = vmatpush.msra.mxu0 0.0
    %9500 = vmatpush.msra.mxu0 0.0
    %v9501 = vand.u32 %v3311, 4294901760
    %v9502 = vsub.f32 %v3311, %v9501
    %9503 = vmatpush.msra.mxu0 %v9502
    %v9504 = vand.u32 %v3310, 4294901760
    %v9505 = vsub.f32 %v3310, %v9504
    %9506 = vmatpush.msra.mxu0 %v9505
    %v9507 = vand.u32 %v3309, 4294901760
    %v9508 = vsub.f32 %v3309, %v9507
    %9509 = vmatpush.msra.mxu0 %v9508
    %v9510 = vand.u32 %v3308, 4294901760
    %v9511 = vsub.f32 %v3308, %v9510
    %9512 = vmatpush.msra.mxu0 %v9511
    %v9513 = vand.u32 %v3307, 4294901760
    %v9514 = vsub.f32 %v3307, %v9513
    %9515 = vmatpush.msra.mxu0 %v9514
    %v9516 = vand.u32 %v3306, 4294901760
    %v9517 = vsub.f32 %v3306, %v9516
    %9518 = vmatpush.msra.mxu0 %v9517
    %v9519 = vand.u32 %v3305, 4294901760
    %v9520 = vsub.f32 %v3305, %v9519
    %9521 = vmatpush.msra.mxu0 %v9520
    %v9522 = vand.u32 %v3304, 4294901760
    %v9523 = vsub.f32 %v3304, %v9522
    %9524 = vmatpush.msra.mxu0 %v9523
    %v9525 = vand.u32 %v9397, 4294901760
    %v9526 = vsub.f32 %v9397, %v9525
    %9527 = vmatmul.f32.gmra.mxu0 %v9526
    %v9528 = vpop.f32.mrf.mxu0
    %v9529 = vadd.f32 %v9491, %v9528
    %9530 = vdwg.mxu0
    %9531 = vmatpush.msra.mxu0 0.0
    %9532 = vmatpush.msra.mxu0 0.0
    %9533 = vmatpush.msra.mxu0 0.0
    %9534 = vmatpush.msra.mxu0 0.0
    %9535 = vmatpush.msra.mxu0 0.0
    %9536 = vmatpush.msra.mxu0 0.0
    %9537 = vmatpush.msra.mxu0 0.0
    %9538 = vmatpush.msra.mxu0 0.0
    %v9539 = vand.u32 %v3311, 4294901760
    %9540 = vmatpush.msra.mxu0 %v9539
    %v9541 = vand.u32 %v3310, 4294901760
    %9542 = vmatpush.msra.mxu0 %v9541
    %v9543 = vand.u32 %v3309, 4294901760
    %9544 = vmatpush.msra.mxu0 %v9543
    %v9545 = vand.u32 %v3308, 4294901760
    %9546 = vmatpush.msra.mxu0 %v9545
    %v9547 = vand.u32 %v3307, 4294901760
    %9548 = vmatpush.msra.mxu0 %v9547
    %v9549 = vand.u32 %v3306, 4294901760
    %9550 = vmatpush.msra.mxu0 %v9549
    %v9551 = vand.u32 %v3305, 4294901760
    %9552 = vmatpush.msra.mxu0 %v9551
    %v9553 = vand.u32 %v3304, 4294901760
    %9554 = vmatpush.msra.mxu0 %v9553
    %v9555 = vand.u32 %v9397, 4294901760
    %v9556 = vsub.f32 %v9397, %v9555
    %v9557 = vand.u32 %v9556, 4294901760
    %9558 = vmatmul.f32.gmra.mxu0 %v9557
    %v9559 = vpop.f32.mrf.mxu0
    %v9560 = vadd.f32 %v9529, %v9559
    %9561 = vdwg.mxu0
    %9562 = vmatpush.msra.mxu0 0.0
    %9563 = vmatpush.msra.mxu0 0.0
    %9564 = vmatpush.msra.mxu0 0.0
    %9565 = vmatpush.msra.mxu0 0.0
    %9566 = vmatpush.msra.mxu0 0.0
    %9567 = vmatpush.msra.mxu0 0.0
    %9568 = vmatpush.msra.mxu0 0.0
    %9569 = vmatpush.msra.mxu0 0.0
    %v9570 = vand.u32 %v3311, 4294901760
    %v9571 = vsub.f32 %v3311, %v9570
    %v9572 = vand.u32 %v9571, 4294901760
    %9573 = vmatpush.msra.mxu0 %v9572
    %v9574 = vand.u32 %v3310, 4294901760
    %v9575 = vsub.f32 %v3310, %v9574
    %v9576 = vand.u32 %v9575, 4294901760
    %9577 = vmatpush.msra.mxu0 %v9576
    %v9578 = vand.u32 %v3309, 4294901760
    %v9579 = vsub.f32 %v3309, %v9578
    %v9580 = vand.u32 %v9579, 4294901760
    %9581 = vmatpush.msra.mxu0 %v9580
    %v9582 = vand.u32 %v3308, 4294901760
    %v9583 = vsub.f32 %v3308, %v9582
    %v9584 = vand.u32 %v9583, 4294901760
    %9585 = vmatpush.msra.mxu0 %v9584
    %v9586 = vand.u32 %v3307, 4294901760
    %v9587 = vsub.f32 %v3307, %v9586
    %v9588 = vand.u32 %v9587, 4294901760
    %9589 = vmatpush.msra.mxu0 %v9588
    %v9590 = vand.u32 %v3306, 4294901760
    %v9591 = vsub.f32 %v3306, %v9590
    %v9592 = vand.u32 %v9591, 4294901760
    %9593 = vmatpush.msra.mxu0 %v9592
    %v9594 = vand.u32 %v3305, 4294901760
    %v9595 = vsub.f32 %v3305, %v9594
    %v9596 = vand.u32 %v9595, 4294901760
    %9597 = vmatpush.msra.mxu0 %v9596
    %v9598 = vand.u32 %v3304, 4294901760
    %v9599 = vsub.f32 %v3304, %v9598
    %v9600 = vand.u32 %v9599, 4294901760
    %9601 = vmatpush.msra.mxu0 %v9600
    %v9602 = vand.u32 %v9397, 4294901760
    %9603 = vmatmul.f32.gmra.mxu0 %v9602
    %v9604 = vpop.f32.mrf.mxu0
    %v9605 = vadd.f32 %v9560, %v9604
    %9606 = vdwg.mxu0
    %9607 = vmatpush.msra.mxu0 0.0
    %9608 = vmatpush.msra.mxu0 0.0
    %9609 = vmatpush.msra.mxu0 0.0
    %9610 = vmatpush.msra.mxu0 0.0
    %9611 = vmatpush.msra.mxu0 0.0
    %9612 = vmatpush.msra.mxu0 0.0
    %9613 = vmatpush.msra.mxu0 0.0
    %9614 = vmatpush.msra.mxu0 0.0
    %v9615 = vand.u32 %v3311, 4294901760
    %9616 = vmatpush.msra.mxu0 %v9615
    %v9617 = vand.u32 %v3310, 4294901760
    %9618 = vmatpush.msra.mxu0 %v9617
    %v9619 = vand.u32 %v3309, 4294901760
    %9620 = vmatpush.msra.mxu0 %v9619
    %v9621 = vand.u32 %v3308, 4294901760
    %9622 = vmatpush.msra.mxu0 %v9621
    %v9623 = vand.u32 %v3307, 4294901760
    %9624 = vmatpush.msra.mxu0 %v9623
    %v9625 = vand.u32 %v3306, 4294901760
    %9626 = vmatpush.msra.mxu0 %v9625
    %v9627 = vand.u32 %v3305, 4294901760
    %9628 = vmatpush.msra.mxu0 %v9627
    %v9629 = vand.u32 %v3304, 4294901760
    %9630 = vmatpush.msra.mxu0 %v9629
    %v9631 = vand.u32 %v9397, 4294901760
    %9632 = vmatmul.f32.gmra.mxu0 %v9631
    %v9633 = vpop.f32.mrf.mxu0
    %v9634 = vadd.f32 %v9605, %v9633
    %9635 = vdwg.mxu0
    %9637 = vset.pattern.permute.xlu0 6
    %9638 = vperm.xlu0 %9637, %v111
    %v9639 = vpop.permute.xlu0 %9638
    %v9641 = vadd.f32 %v9634, %v9639
    %9642 = vst [vmem:[#allocation2] sm:$0x1] %v9641
    // Predicated region
    $region26: #{tpu_custom_call.1} parent=1 // pred_check
      _
    $region27: #{tpu_custom_call.1} parent=1 // pred_check_branch
      %9644 = sbr.rel (0) target = $region29
    $region28: #{tpu_custom_call.1} parent=1 // pred_region
      %9646 = vsyncadd [#allocation3], 0
      %s9648 = sshll.u32 [#allocation2], 4
      %s9649 = int_to_ptr.vmem [resolvable:$true] %s9648
      %s9650 = sshll.u32 %s6, 4
      %s9651 = int_to_ptr.hbm [resolvable:$true] %s9650
      %9653 = dma.vmem_to_hbm [thread:$0]  %s9649, 16, %s9651, [#allocation3]
    $region29: #{tpu_custom_call.1} parent=1 // pred_fallthru
      _
    // Predicated region
    $region30: #{tpu_custom_call.1} parent=1 // pred_check
      _
    $region31: #{tpu_custom_call.1} parent=1 // pred_check_branch
      %9655 = sbr.rel (0) target = $region33
    $region32: #{tpu_custom_call.1} parent=1 // pred_region
      %9657 = dma.done [#allocation3], 16
    $region33: #{tpu_custom_call.1} parent=1 // pred_fallthru
      _
    %9658 = vsyncpa [#allocation3], 1

</llo_original>
